<compile_context>
chip_gen: v5e
topology: v5e:2x2
jax: 0.10.0
libtpu: 0.0.40
codegen_flags: <defaults>
</compile_context>

<pallas_src>
import jax
import jax.numpy as jnp
from jax.experimental import pallas as pl
from jax.experimental.pallas import tpu as pltpu

LN_EPS = 1e-5


def _round_up(x, m):
    return ((x + m - 1) // m) * m


def _make_simlpe_kernel(Bb, N_pad, D_pad, D_true, num_layers):
    inv_d = 1.0 / float(D_true)

    def kernel(x_ref, w_in_t_ref, b_in_ref, wt_t_ref, bt_ref, ab_ref,
               w_out_t_ref, b_out_ref, o_ref, zt_ref, yt_ref):
        # ---- motion_fc_in: Linear over D, batch*time folded into M ---------
        x2 = x_ref[...].reshape(Bb * N_pad, D_pad)           # free (N_pad % 8 == 0)
        y2 = jnp.dot(x2, w_in_t_ref[...],
                     preferred_element_type=jnp.float32) + b_in_ref[...]
        y3 = y2.reshape(Bb, N_pad, D_pad)

        # ---- arr0: one-time per-slab 2D transposes into (b, d, n) layout ---
        for b in range(Bb):
            zt_ref[b] = y3[b].T                               # (D_pad, N_pad)
        z = zt_ref[...]                                       # (Bb, D_pad, N_pad)

        # Sublane (spatial) validity mask for the padded D axis.
        d_idx = jax.lax.broadcasted_iota(jnp.int32, (D_pad, 1), 0)
        d_mask = (d_idx < D_true).astype(jnp.float32)         # (D_pad, 1)

        def layer(zc, wt_t_l, bt_l, ab_l):
            # Temporal_FC: ONE matmul, contraction over time.
            #   (Bb*D_pad, N_pad) @ (N_pad, N_pad) -- the reshape is a free view.
            z2 = zc.reshape(Bb * D_pad, N_pad)
            h2 = jnp.dot(z2, wt_t_l,
                         preferred_element_type=jnp.float32) + bt_l
            h3 = h2.reshape(Bb, D_pad, N_pad)

            # LayerNorm over the spatial (D) axis: masked two-pass statistics
            # over the true D rows (padded rows hold the broadcast bias).
            hm = h3 * d_mask
            mean = jnp.sum(hm, axis=1, keepdims=True) * inv_d   # (Bb, 1, N_pad)
            cen = (hm - mean) * d_mask
            var = jnp.sum(cen * cen, axis=1, keepdims=True) * inv_d
            rstd = jax.lax.rsqrt(var + LN_EPS)                   # EUP slot
            alpha = ab_l[:, 0:1]                                 # (D_pad, 1)
            beta = ab_l[:, 1:2]
            hn = cen * rstd * alpha + beta                       # padded rows -> 0
            return zc + hn                                       # residual

        if num_layers <= 8:
            for l in range(num_layers):                          # toy depth
                z = layer(z, wt_t_ref[l], bt_ref[l], ab_ref[l])
        else:
            # Real siMLPe depth (~48): rolled loop, partial unroll for overlap.
            def body(l, zc):
                return layer(zc, wt_t_ref[l], bt_ref[l], ab_ref[l])
            z = jax.lax.fori_loop(0, num_layers, body, z, unroll=2)

        # ---- arr1 + motion_fc_out (Linear over D), lane-dense store --------
        for b in range(Bb):
            yt_ref[b] = z[b].T                                  # (N_pad, D_pad)
        z2o = yt_ref[...].reshape(Bb * N_pad, D_pad)
        out2 = jnp.dot(z2o, w_out_t_ref[...],
                       preferred_element_type=jnp.float32) + b_out_ref[...]
        o_ref[...] = out2.reshape(Bb, N_pad, D_pad).astype(o_ref.dtype)

    return kernel


def _pick_batch_block(B):
    """v7x has two TensorCores per chip -> keep two parallel grid steps;
    v5e / v6e are single-TC -> one fat step (no per-step overhead)."""
    try:
        kind = jax.devices()[0].device_kind.lower()
    except Exception:
        kind = ""
    if "v7" in kind and B % 2 == 0:
        return B // 2
    return B


def simlpe_forward(x, params, *, batch_block=None):
    """x: (B, N, D) float32.  params: dict of PyTorch-layout weights."""
    B, N, D = x.shape
    L = params["wt"].shape[0]
    N_pad = _round_up(N, 8)         # sublane tile (f32)
    D_pad = _round_up(D, 128)       # lane tile -> dense stores & dense matmuls
    Bb = batch_block if batch_block is not None else _pick_batch_block(B)
    assert B % Bb == 0
    grid = (B // Bb,)
    f32 = jnp.float32

    # --- zero-pad activations / weights so padded lanes & rows stay inert ----
    x_p = jnp.zeros((B, N_pad, D_pad), f32).at[:, :N, :D].set(x.astype(f32))
    w_in_t = jnp.zeros((D_pad, D_pad), f32).at[:D, :D].set(params["w_in"].T)
    b_in = jnp.zeros((1, D_pad), f32).at[0, :D].set(params["b_in"])
    wt_t = jnp.zeros((L, N_pad, N_pad), f32).at[:, :N, :N].set(
        jnp.swapaxes(params["wt"], 1, 2))
    bt = jnp.zeros((L, 1, N_pad), f32).at[:, 0, :N].set(params["bt"])
    ab = (jnp.zeros((L, D_pad, 2), f32)
          .at[:, :D, 0].set(params["alpha"])
          .at[:, :D, 1].set(params["beta"]))
    w_out_t = jnp.zeros((D_pad, D_pad), f32).at[:D, :D].set(params["w_out"].T)
    b_out = jnp.zeros((1, D_pad), f32).at[0, :D].set(params["b_out"])

    full = lambda shape: pl.BlockSpec(shape, lambda b: (0,) * len(shape))

    # Advisory cost for the XLA scheduler around this latency-bound call.
    flops = int(2 * B * N_pad * D_pad * D_pad * 2
                + 2 * B * L * D_pad * N_pad * N_pad
                + 12 * B * L * D_pad * N_pad)
    transcendentals = int(B * L * N_pad)
    param_bytes = 4 * (2 * D_pad * D_pad + 2 * D_pad
                       + L * (N_pad * N_pad + N_pad + 2 * D_pad))
    bytes_accessed = int(4 * 2 * B * N_pad * D_pad + param_bytes)

    # Explicit scoped-VMEM budget: activation blocks (double-buffered) +
    # resident (tile-padded) weights + scratch + live copies, with headroom.
    lane = lambda n: max(_round_up(n, 128), 128)
    blk = Bb * N_pad * D_pad * 4
    scratch = Bb * D_pad * lane(N_pad) * 4 + Bb * N_pad * D_pad * 4
    weights = 4 * (2 * D_pad * D_pad + 2 * 8 * 128
                   + L * (N_pad * lane(N_pad) + 8 * lane(N_pad) + D_pad * 128))
    live = 10 * Bb * D_pad * lane(N_pad) * 4
    vmem_limit = int(min(max(4 * blk + 2 * scratch + weights + live + (8 << 20),
                             32 << 20), 60 << 20))

    out_p = pl.pallas_call(
        _make_simlpe_kernel(Bb, N_pad, D_pad, D, L),
        out_shape=jax.ShapeDtypeStruct((B, N_pad, D_pad), x.dtype),
        grid_spec=pltpu.PrefetchScalarGridSpec(
            num_scalar_prefetch=0,
            grid=grid,
            in_specs=[
                pl.BlockSpec((Bb, N_pad, D_pad), lambda b: (b, 0, 0)),  # x
                full((D_pad, D_pad)),        # w_in^T   (zero-padded)
                full((1, D_pad)),            # b_in
                full((L, N_pad, N_pad)),     # wt^T per layer
                full((L, 1, N_pad)),         # temporal-FC bias (lane-dense)
                full((L, D_pad, 2)),         # packed [alpha | beta] per layer
                full((D_pad, D_pad)),        # w_out^T
                full((1, D_pad)),            # b_out
            ],
            out_specs=pl.BlockSpec((Bb, N_pad, D_pad), lambda b: (b, 0, 0)),
            scratch_shapes=[
                pltpu.VMEM((Bb, D_pad, N_pad), f32),   # (b,d,n) working slab
                pltpu.VMEM((Bb, N_pad, D_pad), f32),   # back-transposed slab
            ],
        ),
        compiler_params=pltpu.CompilerParams(
            dimension_semantics=("parallel",),
            vmem_limit_bytes=vmem_limit),
        cost_estimate=pl.CostEstimate(
            flops=flops, transcendentals=transcendentals,
            bytes_accessed=bytes_accessed),
    )(x_p, w_in_t, b_in, wt_t, bt, ab, w_out_t, b_out)

    # Slice the lane/sublane padding off outside the kernel.
    return out_p[:, :N, :D]


def simlpe_reference(x, p):
    """Pure-JAX reference mirroring the PyTorch forward exactly."""
    y = x @ p["w_in"].T + p["b_in"]                      # motion_fc_in
    z = jnp.swapaxes(y, 1, 2)                            # arr0: (B, D, N)
    L = p["wt"].shape[0]
    for l in range(L):
        h = jnp.einsum("bdn,mn->bdm", z, p["wt"][l]) + p["bt"][l][None, None, :]
        mean = jnp.mean(h, axis=1, keepdims=True)
        var = jnp.mean((h - mean) ** 2, axis=1, keepdims=True)
        hn = (h - mean) / jnp.sqrt(var + LN_EPS)
        hn = hn * p["alpha"][l][None, :, None] + p["beta"][l][None, :, None]
        z = z + hn
    out = jnp.swapaxes(z, 1, 2)                          # arr1
    return out @ p["w_out"].T + p["b_out"]               # motion_fc_out


def make_params(key, N, D, L):
    ks = jax.random.split(key, 8)

    def xavier(k, shape):
        fan_out, fan_in = shape
        bound = jnp.sqrt(6.0 / (fan_in + fan_out))
        return jax.random.uniform(k, shape, jnp.float32, -bound, bound)

    # NOTE: the real siMLPe initializes motion_fc_out with xavier(gain=1e-8)
    # and zero bias.  We use O(1) magnitudes and non-zero biases so the
    # correctness check is not trivially satisfied by near-zero outputs.
    return {
        "w_in": xavier(ks[0], (D, D)),                          # PyTorch (out, in)
        "b_in": 0.1 * jax.random.normal(ks[1], (D,), jnp.float32),
        "wt": jax.vmap(lambda k: xavier(k, (N, N)))(jax.random.split(ks[2], L)),
        "bt": 0.1 * jax.random.normal(ks[3], (L, N), jnp.float32),
        "alpha": 1.0 + 0.1 * jax.random.normal(ks[4], (L, D), jnp.float32),
        "beta": 0.1 * jax.random.normal(ks[5], (L, D), jnp.float32),
        "w_out": xavier(ks[6], (D, D)),
        "b_out": 0.1 * jax.random.normal(ks[7], (D,), jnp.float32),
    }


if __name__ == "__main__":
    # batch, seq_len (dct length), motion dim, layers -- small toy config.
    B, N, D, L = 8, 8, 32, 3

    key = jax.random.PRNGKey(0)
    kx, kp = jax.random.split(key)
    x = jax.random.normal(kx, (B, N, D), jnp.float32)
    params = make_params(kp, N, D, L)

    out = simlpe_forward(x, params)
    out = jax.block_until_ready(out)

    ref = simlpe_reference(x, params)
    assert out.shape == (B, N, D)
    assert jnp.allclose(out, ref, atol=1e-4, rtol=1e-4), "mismatch vs reference"

    print("KERNEL_OK")
</pallas_src>

<mosaic_0001>
module attributes {stable_mosaic.version = 11 : i64} {
  func.func @kernel(%arg0: i32, %arg1: memref<8x8x128xf32, #tpu.memory_space<vmem>>, %arg2: memref<128x128xf32, #tpu.memory_space<vmem>>, %arg3: memref<1x128xf32, #tpu.memory_space<vmem>>, %arg4: memref<3x8x8xf32, #tpu.memory_space<vmem>>, %arg5: memref<3x1x8xf32, #tpu.memory_space<vmem>>, %arg6: memref<3x128x2xf32, #tpu.memory_space<vmem>>, %arg7: memref<128x128xf32, #tpu.memory_space<vmem>>, %arg8: memref<1x128xf32, #tpu.memory_space<vmem>>, %arg9: memref<8x8x128xf32, #tpu.memory_space<vmem>>, %arg10: memref<8x128x8xf32, #tpu.memory_space<vmem>>, %arg11: memref<8x8x128xf32, #tpu.memory_space<vmem>>) attributes {dimension_semantics = [#tpu.dimension_semantics<parallel>], iteration_bounds = array<i64: 1>, scalar_prefetch = 0 : i64, scratch_operands = 2 : i64, tpu.core_type = #tpu.core_type<tc>, window_params = [{transform_indices = @transform_0, window_bounds = array<i64: 8, 8, 128>}, {pipeline_mode = #tpu.pipeline_mode<synchronous>, transform_indices = @transform_1, window_bounds = array<i64: 128, 128>}, {pipeline_mode = #tpu.pipeline_mode<synchronous>, transform_indices = @transform_2, window_bounds = array<i64: 1, 128>}, {pipeline_mode = #tpu.pipeline_mode<synchronous>, transform_indices = @transform_3, window_bounds = array<i64: 3, 8, 8>}, {pipeline_mode = #tpu.pipeline_mode<synchronous>, transform_indices = @transform_4, window_bounds = array<i64: 3, 1, 8>}, {pipeline_mode = #tpu.pipeline_mode<synchronous>, transform_indices = @transform_5, window_bounds = array<i64: 3, 128, 2>}, {pipeline_mode = #tpu.pipeline_mode<synchronous>, transform_indices = @transform_6, window_bounds = array<i64: 128, 128>}, {pipeline_mode = #tpu.pipeline_mode<synchronous>, transform_indices = @transform_7, window_bounds = array<i64: 1, 128>}, {transform_indices = @transform_8, window_bounds = array<i64: 8, 8, 128>}]} {
    %c0 = arith.constant 0 : index
    %c0_0 = arith.constant 0 : index
    %c0_1 = arith.constant 0 : index
    %0 = vector.load %arg1[%c0, %c0_0, %c0_1] : memref<8x8x128xf32, #tpu.memory_space<vmem>>, vector<8x8x128xf32>
    %1 = vector.shape_cast %0 : vector<8x8x128xf32> to vector<64x128xf32>
    %c0_2 = arith.constant 0 : index
    %c0_3 = arith.constant 0 : index
    %2 = vector.load %arg2[%c0_2, %c0_3] : memref<128x128xf32, #tpu.memory_space<vmem>>, vector<128x128xf32>
    %cst = arith.constant dense<0.000000e+00> : vector<64x128xf32>
    %3 = tpu.matmul %1, %2, %cst {dimension_numbers = #tpu.dot_dimension_numbers<[1], [0], [0], [1], [0, 0, 1, 1], [], []>} : vector<64x128xf32>, vector<128x128xf32>, vector<64x128xf32> -> vector<64x128xf32>
    %c0_4 = arith.constant 0 : index
    %c0_5 = arith.constant 0 : index
    %4 = vector.load %arg3[%c0_4, %c0_5] : memref<1x128xf32, #tpu.memory_space<vmem>>, vector<1x128xf32>
    %5 = vector.broadcast %4 : vector<1x128xf32> to vector<64x128xf32>
    %6 = arith.addf %3, %5 : vector<64x128xf32>
    %7 = vector.shape_cast %6 : vector<64x128xf32> to vector<8x8x128xf32>
    %8 = vector.extract_strided_slice %7 {offsets = [0, 0, 0], sizes = [1, 8, 128], strides = [1, 1, 1]} : vector<8x8x128xf32> to vector<1x8x128xf32>
    %9 = vector.shape_cast %8 : vector<1x8x128xf32> to vector<8x128xf32>
    %10 = tpu.transpose %9, [1, 0] : vector<8x128xf32> -> vector<128x8xf32>
    %c0_6 = arith.constant 0 : index
    %c0_7 = arith.constant 0 : index
    %c0_8 = arith.constant 0 : index
    %11 = vector.load %arg10[%c0_6, %c0_7, %c0_8] : memref<8x128x8xf32, #tpu.memory_space<vmem>>, vector<1x128x8xf32>
    %12 = vector.shape_cast %11 : vector<1x128x8xf32> to vector<128x8xf32>
    %13 = vector.shape_cast %10 : vector<128x8xf32> to vector<1x128x8xf32>
    tpu.vector_store %arg10[%c0_6, %c0_7, %c0_8], %13 {strides = array<i32>} : memref<8x128x8xf32, #tpu.memory_space<vmem>>, vector<1x128x8xf32>,
    %14 = vector.extract_strided_slice %7 {offsets = [1, 0, 0], sizes = [1, 8, 128], strides = [1, 1, 1]} : vector<8x8x128xf32> to vector<1x8x128xf32>
    %15 = vector.shape_cast %14 : vector<1x8x128xf32> to vector<8x128xf32>
    %16 = tpu.transpose %15, [1, 0] : vector<8x128xf32> -> vector<128x8xf32>
    %c1 = arith.constant 1 : index
    %c0_9 = arith.constant 0 : index
    %c0_10 = arith.constant 0 : index
    %17 = vector.load %arg10[%c1, %c0_9, %c0_10] : memref<8x128x8xf32, #tpu.memory_space<vmem>>, vector<1x128x8xf32>
    %18 = vector.shape_cast %17 : vector<1x128x8xf32> to vector<128x8xf32>
    %19 = vector.shape_cast %16 : vector<128x8xf32> to vector<1x128x8xf32>
    tpu.vector_store %arg10[%c1, %c0_9, %c0_10], %19 {strides = array<i32>} : memref<8x128x8xf32, #tpu.memory_space<vmem>>, vector<1x128x8xf32>,
    %20 = vector.extract_strided_slice %7 {offsets = [2, 0, 0], sizes = [1, 8, 128], strides = [1, 1, 1]} : vector<8x8x128xf32> to vector<1x8x128xf32>
    %21 = vector.shape_cast %20 : vector<1x8x128xf32> to vector<8x128xf32>
    %22 = tpu.transpose %21, [1, 0] : vector<8x128xf32> -> vector<128x8xf32>
    %c2 = arith.constant 2 : index
    %c0_11 = arith.constant 0 : index
    %c0_12 = arith.constant 0 : index
    %23 = vector.load %arg10[%c2, %c0_11, %c0_12] : memref<8x128x8xf32, #tpu.memory_space<vmem>>, vector<1x128x8xf32>
    %24 = vector.shape_cast %23 : vector<1x128x8xf32> to vector<128x8xf32>
    %25 = vector.shape_cast %22 : vector<128x8xf32> to vector<1x128x8xf32>
    tpu.vector_store %arg10[%c2, %c0_11, %c0_12], %25 {strides = array<i32>} : memref<8x128x8xf32, #tpu.memory_space<vmem>>, vector<1x128x8xf32>,
    %26 = vector.extract_strided_slice %7 {offsets = [3, 0, 0], sizes = [1, 8, 128], strides = [1, 1, 1]} : vector<8x8x128xf32> to vector<1x8x128xf32>
    %27 = vector.shape_cast %26 : vector<1x8x128xf32> to vector<8x128xf32>
    %28 = tpu.transpose %27, [1, 0] : vector<8x128xf32> -> vector<128x8xf32>
    %c3 = arith.constant 3 : index
    %c0_13 = arith.constant 0 : index
    %c0_14 = arith.constant 0 : index
    %29 = vector.load %arg10[%c3, %c0_13, %c0_14] : memref<8x128x8xf32, #tpu.memory_space<vmem>>, vector<1x128x8xf32>
    %30 = vector.shape_cast %29 : vector<1x128x8xf32> to vector<128x8xf32>
    %31 = vector.shape_cast %28 : vector<128x8xf32> to vector<1x128x8xf32>
    tpu.vector_store %arg10[%c3, %c0_13, %c0_14], %31 {strides = array<i32>} : memref<8x128x8xf32, #tpu.memory_space<vmem>>, vector<1x128x8xf32>,
    %32 = vector.extract_strided_slice %7 {offsets = [4, 0, 0], sizes = [1, 8, 128], strides = [1, 1, 1]} : vector<8x8x128xf32> to vector<1x8x128xf32>
    %33 = vector.shape_cast %32 : vector<1x8x128xf32> to vector<8x128xf32>
    %34 = tpu.transpose %33, [1, 0] : vector<8x128xf32> -> vector<128x8xf32>
    %c4 = arith.constant 4 : index
    %c0_15 = arith.constant 0 : index
    %c0_16 = arith.constant 0 : index
    %35 = vector.load %arg10[%c4, %c0_15, %c0_16] : memref<8x128x8xf32, #tpu.memory_space<vmem>>, vector<1x128x8xf32>
    %36 = vector.shape_cast %35 : vector<1x128x8xf32> to vector<128x8xf32>
    %37 = vector.shape_cast %34 : vector<128x8xf32> to vector<1x128x8xf32>
    tpu.vector_store %arg10[%c4, %c0_15, %c0_16], %37 {strides = array<i32>} : memref<8x128x8xf32, #tpu.memory_space<vmem>>, vector<1x128x8xf32>,
    %38 = vector.extract_strided_slice %7 {offsets = [5, 0, 0], sizes = [1, 8, 128], strides = [1, 1, 1]} : vector<8x8x128xf32> to vector<1x8x128xf32>
    %39 = vector.shape_cast %38 : vector<1x8x128xf32> to vector<8x128xf32>
    %40 = tpu.transpose %39, [1, 0] : vector<8x128xf32> -> vector<128x8xf32>
    %c5 = arith.constant 5 : index
    %c0_17 = arith.constant 0 : index
    %c0_18 = arith.constant 0 : index
    %41 = vector.load %arg10[%c5, %c0_17, %c0_18] : memref<8x128x8xf32, #tpu.memory_space<vmem>>, vector<1x128x8xf32>
    %42 = vector.shape_cast %41 : vector<1x128x8xf32> to vector<128x8xf32>
    %43 = vector.shape_cast %40 : vector<128x8xf32> to vector<1x128x8xf32>
    tpu.vector_store %arg10[%c5, %c0_17, %c0_18], %43 {strides = array<i32>} : memref<8x128x8xf32, #tpu.memory_space<vmem>>, vector<1x128x8xf32>,
    %44 = vector.extract_strided_slice %7 {offsets = [6, 0, 0], sizes = [1, 8, 128], strides = [1, 1, 1]} : vector<8x8x128xf32> to vector<1x8x128xf32>
    %45 = vector.shape_cast %44 : vector<1x8x128xf32> to vector<8x128xf32>
    %46 = tpu.transpose %45, [1, 0] : vector<8x128xf32> -> vector<128x8xf32>
    %c6 = arith.constant 6 : index
    %c0_19 = arith.constant 0 : index
    %c0_20 = arith.constant 0 : index
    %47 = vector.load %arg10[%c6, %c0_19, %c0_20] : memref<8x128x8xf32, #tpu.memory_space<vmem>>, vector<1x128x8xf32>
    %48 = vector.shape_cast %47 : vector<1x128x8xf32> to vector<128x8xf32>
    %49 = vector.shape_cast %46 : vector<128x8xf32> to vector<1x128x8xf32>
    tpu.vector_store %arg10[%c6, %c0_19, %c0_20], %49 {strides = array<i32>} : memref<8x128x8xf32, #tpu.memory_space<vmem>>, vector<1x128x8xf32>,
    %50 = vector.extract_strided_slice %7 {offsets = [7, 0, 0], sizes = [1, 8, 128], strides = [1, 1, 1]} : vector<8x8x128xf32> to vector<1x8x128xf32>
    %51 = vector.shape_cast %50 : vector<1x8x128xf32> to vector<8x128xf32>
    %52 = tpu.transpose %51, [1, 0] : vector<8x128xf32> -> vector<128x8xf32>
    %c7 = arith.constant 7 : index
    %c0_21 = arith.constant 0 : index
    %c0_22 = arith.constant 0 : index
    %53 = vector.load %arg10[%c7, %c0_21, %c0_22] : memref<8x128x8xf32, #tpu.memory_space<vmem>>, vector<1x128x8xf32>
    %54 = vector.shape_cast %53 : vector<1x128x8xf32> to vector<128x8xf32>
    %55 = vector.shape_cast %52 : vector<128x8xf32> to vector<1x128x8xf32>
    tpu.vector_store %arg10[%c7, %c0_21, %c0_22], %55 {strides = array<i32>} : memref<8x128x8xf32, #tpu.memory_space<vmem>>, vector<1x128x8xf32>,
    %c0_23 = arith.constant 0 : index
    %c0_24 = arith.constant 0 : index
    %c0_25 = arith.constant 0 : index
    %56 = vector.load %arg10[%c0_23, %c0_24, %c0_25] : memref<8x128x8xf32, #tpu.memory_space<vmem>>, vector<8x128x8xf32>
    %57 = tpu.iota {dimensions = array<i32: 0>} : vector<128x1xi32>
    %c32_i32 = arith.constant 32 : i32
    %58 = vector.broadcast %c32_i32 : i32 to vector<128x1xi32>
    %59 = arith.cmpi slt, %57, %58 : vector<128x1xi32>
    %60 = arith.extui %59 : vector<128x1xi1> to vector<128x1xi32>
    %61 = arith.sitofp %60 : vector<128x1xi32> to vector<128x1xf32>
    %c0_26 = arith.constant 0 : index
    %c0_27 = arith.constant 0 : index
    %c0_28 = arith.constant 0 : index
    %62 = vector.load %arg4[%c0_26, %c0_27, %c0_28] : memref<3x8x8xf32, #tpu.memory_space<vmem>>, vector<1x8x8xf32>
    %63 = vector.shape_cast %62 : vector<1x8x8xf32> to vector<8x8xf32>
    %c0_29 = arith.constant 0 : index
    %c0_30 = arith.constant 0 : index
    %c0_31 = arith.constant 0 : index
    %64 = vector.load %arg5[%c0_29, %c0_30, %c0_31] : memref<3x1x8xf32, #tpu.memory_space<vmem>>, vector<1x1x8xf32>
    %65 = vector.shape_cast %64 : vector<1x1x8xf32> to vector<1x8xf32>
    %c0_32 = arith.constant 0 : index
    %c0_33 = arith.constant 0 : index
    %c0_34 = arith.constant 0 : index
    %66 = vector.load %arg6[%c0_32, %c0_33, %c0_34] : memref<3x128x2xf32, #tpu.memory_space<vmem>>, vector<1x128x2xf32>
    %67 = vector.shape_cast %66 : vector<1x128x2xf32> to vector<128x2xf32>
    %68 = vector.shape_cast %56 : vector<8x128x8xf32> to vector<1024x8xf32>
    %cst_35 = arith.constant dense<0.000000e+00> : vector<1024x8xf32>
    %69 = tpu.matmul %68, %63, %cst_35 {dimension_numbers = #tpu.dot_dimension_numbers<[1], [0], [0], [1], [0, 0, 1, 1], [], []>} : vector<1024x8xf32>, vector<8x8xf32>, vector<1024x8xf32> -> vector<1024x8xf32>
    %70 = vector.broadcast %65 : vector<1x8xf32> to vector<1024x8xf32>
    %71 = arith.addf %69, %70 : vector<1024x8xf32>
    %72 = vector.shape_cast %71 : vector<1024x8xf32> to vector<8x128x8xf32>
    %73 = vector.shape_cast %61 : vector<128x1xf32> to vector<1x128x1xf32>
    %74 = vector.broadcast %73 : vector<1x128x1xf32> to vector<8x128x8xf32>
    %75 = arith.mulf %72, %74 : vector<8x128x8xf32>
    %cst_36 = arith.constant dense<0.000000e+00> : vector<8x8xf32>
    %76 = vector.multi_reduction <add>, %75, %cst_36 [1] : vector<8x128x8xf32> to vector<8x8xf32>
    %77 = vector.shape_cast %76 : vector<8x8xf32> to vector<8x1x8xf32>
    %cst_37 = arith.constant 3.125000e-02 : f32
    %78 = vector.broadcast %cst_37 : f32 to vector<8x1x8xf32>
    %79 = arith.mulf %77, %78 : vector<8x1x8xf32>
    %80 = vector.broadcast %79 : vector<8x1x8xf32> to vector<8x128x8xf32>
    %81 = arith.subf %75, %80 : vector<8x128x8xf32>
    %82 = vector.shape_cast %61 : vector<128x1xf32> to vector<1x128x1xf32>
    %83 = vector.broadcast %82 : vector<1x128x1xf32> to vector<8x128x8xf32>
    %84 = arith.mulf %81, %83 : vector<8x128x8xf32>
    %85 = arith.mulf %84, %84 : vector<8x128x8xf32>
    %cst_38 = arith.constant dense<0.000000e+00> : vector<8x8xf32>
    %86 = vector.multi_reduction <add>, %85, %cst_38 [1] : vector<8x128x8xf32> to vector<8x8xf32>
    %87 = vector.shape_cast %86 : vector<8x8xf32> to vector<8x1x8xf32>
    %cst_39 = arith.constant 3.125000e-02 : f32
    %88 = vector.broadcast %cst_39 : f32 to vector<8x1x8xf32>
    %89 = arith.mulf %87, %88 : vector<8x1x8xf32>
    %cst_40 = arith.constant 9.99999974E-6 : f32
    %90 = vector.broadcast %cst_40 : f32 to vector<8x1x8xf32>
    %91 = arith.addf %89, %90 : vector<8x1x8xf32>
    %92 = math.rsqrt %91 : vector<8x1x8xf32>
    %93 = vector.extract_strided_slice %67 {offsets = [0, 0], sizes = [128, 1], strides = [1, 1]} : vector<128x2xf32> to vector<128x1xf32>
    %94 = vector.extract_strided_slice %67 {offsets = [0, 1], sizes = [128, 1], strides = [1, 1]} : vector<128x2xf32> to vector<128x1xf32>
    %95 = vector.broadcast %92 : vector<8x1x8xf32> to vector<8x128x8xf32>
    %96 = arith.mulf %84, %95 : vector<8x128x8xf32>
    %97 = vector.shape_cast %93 : vector<128x1xf32> to vector<1x128x1xf32>
    %98 = vector.broadcast %97 : vector<1x128x1xf32> to vector<8x128x8xf32>
    %99 = arith.mulf %96, %98 : vector<8x128x8xf32>
    %100 = vector.shape_cast %94 : vector<128x1xf32> to vector<1x128x1xf32>
    %101 = vector.broadcast %100 : vector<1x128x1xf32> to vector<8x128x8xf32>
    %102 = arith.addf %99, %101 : vector<8x128x8xf32>
    %103 = arith.addf %56, %102 : vector<8x128x8xf32>
    %c1_41 = arith.constant 1 : index
    %c0_42 = arith.constant 0 : index
    %c0_43 = arith.constant 0 : index
    %104 = vector.load %arg4[%c1_41, %c0_42, %c0_43] : memref<3x8x8xf32, #tpu.memory_space<vmem>>, vector<1x8x8xf32>
    %105 = vector.shape_cast %104 : vector<1x8x8xf32> to vector<8x8xf32>
    %c1_44 = arith.constant 1 : index
    %c0_45 = arith.constant 0 : index
    %c0_46 = arith.constant 0 : index
    %106 = vector.load %arg5[%c1_44, %c0_45, %c0_46] : memref<3x1x8xf32, #tpu.memory_space<vmem>>, vector<1x1x8xf32>
    %107 = vector.shape_cast %106 : vector<1x1x8xf32> to vector<1x8xf32>
    %c1_47 = arith.constant 1 : index
    %c0_48 = arith.constant 0 : index
    %c0_49 = arith.constant 0 : index
    %108 = vector.load %arg6[%c1_47, %c0_48, %c0_49] : memref<3x128x2xf32, #tpu.memory_space<vmem>>, vector<1x128x2xf32>
    %109 = vector.shape_cast %108 : vector<1x128x2xf32> to vector<128x2xf32>
    %110 = vector.shape_cast %103 : vector<8x128x8xf32> to vector<1024x8xf32>
    %cst_50 = arith.constant dense<0.000000e+00> : vector<1024x8xf32>
    %111 = tpu.matmul %110, %105, %cst_50 {dimension_numbers = #tpu.dot_dimension_numbers<[1], [0], [0], [1], [0, 0, 1, 1], [], []>} : vector<1024x8xf32>, vector<8x8xf32>, vector<1024x8xf32> -> vector<1024x8xf32>
    %112 = vector.broadcast %107 : vector<1x8xf32> to vector<1024x8xf32>
    %113 = arith.addf %111, %112 : vector<1024x8xf32>
    %114 = vector.shape_cast %113 : vector<1024x8xf32> to vector<8x128x8xf32>
    %115 = vector.shape_cast %61 : vector<128x1xf32> to vector<1x128x1xf32>
    %116 = vector.broadcast %115 : vector<1x128x1xf32> to vector<8x128x8xf32>
    %117 = arith.mulf %114, %116 : vector<8x128x8xf32>
    %cst_51 = arith.constant dense<0.000000e+00> : vector<8x8xf32>
    %118 = vector.multi_reduction <add>, %117, %cst_51 [1] : vector<8x128x8xf32> to vector<8x8xf32>
    %119 = vector.shape_cast %118 : vector<8x8xf32> to vector<8x1x8xf32>
    %cst_52 = arith.constant 3.125000e-02 : f32
    %120 = vector.broadcast %cst_52 : f32 to vector<8x1x8xf32>
    %121 = arith.mulf %119, %120 : vector<8x1x8xf32>
    %122 = vector.broadcast %121 : vector<8x1x8xf32> to vector<8x128x8xf32>
    %123 = arith.subf %117, %122 : vector<8x128x8xf32>
    %124 = vector.shape_cast %61 : vector<128x1xf32> to vector<1x128x1xf32>
    %125 = vector.broadcast %124 : vector<1x128x1xf32> to vector<8x128x8xf32>
    %126 = arith.mulf %123, %125 : vector<8x128x8xf32>
    %127 = arith.mulf %126, %126 : vector<8x128x8xf32>
    %cst_53 = arith.constant dense<0.000000e+00> : vector<8x8xf32>
    %128 = vector.multi_reduction <add>, %127, %cst_53 [1] : vector<8x128x8xf32> to vector<8x8xf32>
    %129 = vector.shape_cast %128 : vector<8x8xf32> to vector<8x1x8xf32>
    %cst_54 = arith.constant 3.125000e-02 : f32
    %130 = vector.broadcast %cst_54 : f32 to vector<8x1x8xf32>
    %131 = arith.mulf %129, %130 : vector<8x1x8xf32>
    %cst_55 = arith.constant 9.99999974E-6 : f32
    %132 = vector.broadcast %cst_55 : f32 to vector<8x1x8xf32>
    %133 = arith.addf %131, %132 : vector<8x1x8xf32>
    %134 = math.rsqrt %133 : vector<8x1x8xf32>
    %135 = vector.extract_strided_slice %109 {offsets = [0, 0], sizes = [128, 1], strides = [1, 1]} : vector<128x2xf32> to vector<128x1xf32>
    %136 = vector.extract_strided_slice %109 {offsets = [0, 1], sizes = [128, 1], strides = [1, 1]} : vector<128x2xf32> to vector<128x1xf32>
    %137 = vector.broadcast %134 : vector<8x1x8xf32> to vector<8x128x8xf32>
    %138 = arith.mulf %126, %137 : vector<8x128x8xf32>
    %139 = vector.shape_cast %135 : vector<128x1xf32> to vector<1x128x1xf32>
    %140 = vector.broadcast %139 : vector<1x128x1xf32> to vector<8x128x8xf32>
    %141 = arith.mulf %138, %140 : vector<8x128x8xf32>
    %142 = vector.shape_cast %136 : vector<128x1xf32> to vector<1x128x1xf32>
    %143 = vector.broadcast %142 : vector<1x128x1xf32> to vector<8x128x8xf32>
    %144 = arith.addf %141, %143 : vector<8x128x8xf32>
    %145 = arith.addf %103, %144 : vector<8x128x8xf32>
    %c2_56 = arith.constant 2 : index
    %c0_57 = arith.constant 0 : index
    %c0_58 = arith.constant 0 : index
    %146 = vector.load %arg4[%c2_56, %c0_57, %c0_58] : memref<3x8x8xf32, #tpu.memory_space<vmem>>, vector<1x8x8xf32>
    %147 = vector.shape_cast %146 : vector<1x8x8xf32> to vector<8x8xf32>
    %c2_59 = arith.constant 2 : index
    %c0_60 = arith.constant 0 : index
    %c0_61 = arith.constant 0 : index
    %148 = vector.load %arg5[%c2_59, %c0_60, %c0_61] : memref<3x1x8xf32, #tpu.memory_space<vmem>>, vector<1x1x8xf32>
    %149 = vector.shape_cast %148 : vector<1x1x8xf32> to vector<1x8xf32>
    %c2_62 = arith.constant 2 : index
    %c0_63 = arith.constant 0 : index
    %c0_64 = arith.constant 0 : index
    %150 = vector.load %arg6[%c2_62, %c0_63, %c0_64] : memref<3x128x2xf32, #tpu.memory_space<vmem>>, vector<1x128x2xf32>
    %151 = vector.shape_cast %150 : vector<1x128x2xf32> to vector<128x2xf32>
    %152 = vector.shape_cast %145 : vector<8x128x8xf32> to vector<1024x8xf32>
    %cst_65 = arith.constant dense<0.000000e+00> : vector<1024x8xf32>
    %153 = tpu.matmul %152, %147, %cst_65 {dimension_numbers = #tpu.dot_dimension_numbers<[1], [0], [0], [1], [0, 0, 1, 1], [], []>} : vector<1024x8xf32>, vector<8x8xf32>, vector<1024x8xf32> -> vector<1024x8xf32>
    %154 = vector.broadcast %149 : vector<1x8xf32> to vector<1024x8xf32>
    %155 = arith.addf %153, %154 : vector<1024x8xf32>
    %156 = vector.shape_cast %155 : vector<1024x8xf32> to vector<8x128x8xf32>
    %157 = vector.shape_cast %61 : vector<128x1xf32> to vector<1x128x1xf32>
    %158 = vector.broadcast %157 : vector<1x128x1xf32> to vector<8x128x8xf32>
    %159 = arith.mulf %156, %158 : vector<8x128x8xf32>
    %cst_66 = arith.constant dense<0.000000e+00> : vector<8x8xf32>
    %160 = vector.multi_reduction <add>, %159, %cst_66 [1] : vector<8x128x8xf32> to vector<8x8xf32>
    %161 = vector.shape_cast %160 : vector<8x8xf32> to vector<8x1x8xf32>
    %cst_67 = arith.constant 3.125000e-02 : f32
    %162 = vector.broadcast %cst_67 : f32 to vector<8x1x8xf32>
    %163 = arith.mulf %161, %162 : vector<8x1x8xf32>
    %164 = vector.broadcast %163 : vector<8x1x8xf32> to vector<8x128x8xf32>
    %165 = arith.subf %159, %164 : vector<8x128x8xf32>
    %166 = vector.shape_cast %61 : vector<128x1xf32> to vector<1x128x1xf32>
    %167 = vector.broadcast %166 : vector<1x128x1xf32> to vector<8x128x8xf32>
    %168 = arith.mulf %165, %167 : vector<8x128x8xf32>
    %169 = arith.mulf %168, %168 : vector<8x128x8xf32>
    %cst_68 = arith.constant dense<0.000000e+00> : vector<8x8xf32>
    %170 = vector.multi_reduction <add>, %169, %cst_68 [1] : vector<8x128x8xf32> to vector<8x8xf32>
    %171 = vector.shape_cast %170 : vector<8x8xf32> to vector<8x1x8xf32>
    %cst_69 = arith.constant 3.125000e-02 : f32
    %172 = vector.broadcast %cst_69 : f32 to vector<8x1x8xf32>
    %173 = arith.mulf %171, %172 : vector<8x1x8xf32>
    %cst_70 = arith.constant 9.99999974E-6 : f32
    %174 = vector.broadcast %cst_70 : f32 to vector<8x1x8xf32>
    %175 = arith.addf %173, %174 : vector<8x1x8xf32>
    %176 = math.rsqrt %175 : vector<8x1x8xf32>
    %177 = vector.extract_strided_slice %151 {offsets = [0, 0], sizes = [128, 1], strides = [1, 1]} : vector<128x2xf32> to vector<128x1xf32>
    %178 = vector.extract_strided_slice %151 {offsets = [0, 1], sizes = [128, 1], strides = [1, 1]} : vector<128x2xf32> to vector<128x1xf32>
    %179 = vector.broadcast %176 : vector<8x1x8xf32> to vector<8x128x8xf32>
    %180 = arith.mulf %168, %179 : vector<8x128x8xf32>
    %181 = vector.shape_cast %177 : vector<128x1xf32> to vector<1x128x1xf32>
    %182 = vector.broadcast %181 : vector<1x128x1xf32> to vector<8x128x8xf32>
    %183 = arith.mulf %180, %182 : vector<8x128x8xf32>
    %184 = vector.shape_cast %178 : vector<128x1xf32> to vector<1x128x1xf32>
    %185 = vector.broadcast %184 : vector<1x128x1xf32> to vector<8x128x8xf32>
    %186 = arith.addf %183, %185 : vector<8x128x8xf32>
    %187 = arith.addf %145, %186 : vector<8x128x8xf32>
    %188 = vector.extract_strided_slice %187 {offsets = [0, 0, 0], sizes = [1, 128, 8], strides = [1, 1, 1]} : vector<8x128x8xf32> to vector<1x128x8xf32>
    %189 = vector.shape_cast %188 : vector<1x128x8xf32> to vector<128x8xf32>
    %190 = tpu.transpose %189, [1, 0] : vector<128x8xf32> -> vector<8x128xf32>
    %c0_71 = arith.constant 0 : index
    %c0_72 = arith.constant 0 : index
    %c0_73 = arith.constant 0 : index
    %191 = vector.load %arg11[%c0_71, %c0_72, %c0_73] : memref<8x8x128xf32, #tpu.memory_space<vmem>>, vector<1x8x128xf32>
    %192 = vector.shape_cast %191 : vector<1x8x128xf32> to vector<8x128xf32>
    %193 = vector.shape_cast %190 : vector<8x128xf32> to vector<1x8x128xf32>
    tpu.vector_store %arg11[%c0_71, %c0_72, %c0_73], %193 {strides = array<i32>} : memref<8x8x128xf32, #tpu.memory_space<vmem>>, vector<1x8x128xf32>,
    %194 = vector.extract_strided_slice %187 {offsets = [1, 0, 0], sizes = [1, 128, 8], strides = [1, 1, 1]} : vector<8x128x8xf32> to vector<1x128x8xf32>
    %195 = vector.shape_cast %194 : vector<1x128x8xf32> to vector<128x8xf32>
    %196 = tpu.transpose %195, [1, 0] : vector<128x8xf32> -> vector<8x128xf32>
    %c1_74 = arith.constant 1 : index
    %c0_75 = arith.constant 0 : index
    %c0_76 = arith.constant 0 : index
    %197 = vector.load %arg11[%c1_74, %c0_75, %c0_76] : memref<8x8x128xf32, #tpu.memory_space<vmem>>, vector<1x8x128xf32>
    %198 = vector.shape_cast %197 : vector<1x8x128xf32> to vector<8x128xf32>
    %199 = vector.shape_cast %196 : vector<8x128xf32> to vector<1x8x128xf32>
    tpu.vector_store %arg11[%c1_74, %c0_75, %c0_76], %199 {strides = array<i32>} : memref<8x8x128xf32, #tpu.memory_space<vmem>>, vector<1x8x128xf32>,
    %200 = vector.extract_strided_slice %187 {offsets = [2, 0, 0], sizes = [1, 128, 8], strides = [1, 1, 1]} : vector<8x128x8xf32> to vector<1x128x8xf32>
    %201 = vector.shape_cast %200 : vector<1x128x8xf32> to vector<128x8xf32>
    %202 = tpu.transpose %201, [1, 0] : vector<128x8xf32> -> vector<8x128xf32>
    %c2_77 = arith.constant 2 : index
    %c0_78 = arith.constant 0 : index
    %c0_79 = arith.constant 0 : index
    %203 = vector.load %arg11[%c2_77, %c0_78, %c0_79] : memref<8x8x128xf32, #tpu.memory_space<vmem>>, vector<1x8x128xf32>
    %204 = vector.shape_cast %203 : vector<1x8x128xf32> to vector<8x128xf32>
    %205 = vector.shape_cast %202 : vector<8x128xf32> to vector<1x8x128xf32>
    tpu.vector_store %arg11[%c2_77, %c0_78, %c0_79], %205 {strides = array<i32>} : memref<8x8x128xf32, #tpu.memory_space<vmem>>, vector<1x8x128xf32>,
    %206 = vector.extract_strided_slice %187 {offsets = [3, 0, 0], sizes = [1, 128, 8], strides = [1, 1, 1]} : vector<8x128x8xf32> to vector<1x128x8xf32>
    %207 = vector.shape_cast %206 : vector<1x128x8xf32> to vector<128x8xf32>
    %208 = tpu.transpose %207, [1, 0] : vector<128x8xf32> -> vector<8x128xf32>
    %c3_80 = arith.constant 3 : index
    %c0_81 = arith.constant 0 : index
    %c0_82 = arith.constant 0 : index
    %209 = vector.load %arg11[%c3_80, %c0_81, %c0_82] : memref<8x8x128xf32, #tpu.memory_space<vmem>>, vector<1x8x128xf32>
    %210 = vector.shape_cast %209 : vector<1x8x128xf32> to vector<8x128xf32>
    %211 = vector.shape_cast %208 : vector<8x128xf32> to vector<1x8x128xf32>
    tpu.vector_store %arg11[%c3_80, %c0_81, %c0_82], %211 {strides = array<i32>} : memref<8x8x128xf32, #tpu.memory_space<vmem>>, vector<1x8x128xf32>,
    %212 = vector.extract_strided_slice %187 {offsets = [4, 0, 0], sizes = [1, 128, 8], strides = [1, 1, 1]} : vector<8x128x8xf32> to vector<1x128x8xf32>
    %213 = vector.shape_cast %212 : vector<1x128x8xf32> to vector<128x8xf32>
    %214 = tpu.transpose %213, [1, 0] : vector<128x8xf32> -> vector<8x128xf32>
    %c4_83 = arith.constant 4 : index
    %c0_84 = arith.constant 0 : index
    %c0_85 = arith.constant 0 : index
    %215 = vector.load %arg11[%c4_83, %c0_84, %c0_85] : memref<8x8x128xf32, #tpu.memory_space<vmem>>, vector<1x8x128xf32>
    %216 = vector.shape_cast %215 : vector<1x8x128xf32> to vector<8x128xf32>
    %217 = vector.shape_cast %214 : vector<8x128xf32> to vector<1x8x128xf32>
    tpu.vector_store %arg11[%c4_83, %c0_84, %c0_85], %217 {strides = array<i32>} : memref<8x8x128xf32, #tpu.memory_space<vmem>>, vector<1x8x128xf32>,
    %218 = vector.extract_strided_slice %187 {offsets = [5, 0, 0], sizes = [1, 128, 8], strides = [1, 1, 1]} : vector<8x128x8xf32> to vector<1x128x8xf32>
    %219 = vector.shape_cast %218 : vector<1x128x8xf32> to vector<128x8xf32>
    %220 = tpu.transpose %219, [1, 0] : vector<128x8xf32> -> vector<8x128xf32>
    %c5_86 = arith.constant 5 : index
    %c0_87 = arith.constant 0 : index
    %c0_88 = arith.constant 0 : index
    %221 = vector.load %arg11[%c5_86, %c0_87, %c0_88] : memref<8x8x128xf32, #tpu.memory_space<vmem>>, vector<1x8x128xf32>
    %222 = vector.shape_cast %221 : vector<1x8x128xf32> to vector<8x128xf32>
    %223 = vector.shape_cast %220 : vector<8x128xf32> to vector<1x8x128xf32>
    tpu.vector_store %arg11[%c5_86, %c0_87, %c0_88], %223 {strides = array<i32>} : memref<8x8x128xf32, #tpu.memory_space<vmem>>, vector<1x8x128xf32>,
    %224 = vector.extract_strided_slice %187 {offsets = [6, 0, 0], sizes = [1, 128, 8], strides = [1, 1, 1]} : vector<8x128x8xf32> to vector<1x128x8xf32>
    %225 = vector.shape_cast %224 : vector<1x128x8xf32> to vector<128x8xf32>
    %226 = tpu.transpose %225, [1, 0] : vector<128x8xf32> -> vector<8x128xf32>
    %c6_89 = arith.constant 6 : index
    %c0_90 = arith.constant 0 : index
    %c0_91 = arith.constant 0 : index
    %227 = vector.load %arg11[%c6_89, %c0_90, %c0_91] : memref<8x8x128xf32, #tpu.memory_space<vmem>>, vector<1x8x128xf32>
    %228 = vector.shape_cast %227 : vector<1x8x128xf32> to vector<8x128xf32>
    %229 = vector.shape_cast %226 : vector<8x128xf32> to vector<1x8x128xf32>
    tpu.vector_store %arg11[%c6_89, %c0_90, %c0_91], %229 {strides = array<i32>} : memref<8x8x128xf32, #tpu.memory_space<vmem>>, vector<1x8x128xf32>,
    %230 = vector.extract_strided_slice %187 {offsets = [7, 0, 0], sizes = [1, 128, 8], strides = [1, 1, 1]} : vector<8x128x8xf32> to vector<1x128x8xf32>
    %231 = vector.shape_cast %230 : vector<1x128x8xf32> to vector<128x8xf32>
    %232 = tpu.transpose %231, [1, 0] : vector<128x8xf32> -> vector<8x128xf32>
    %c7_92 = arith.constant 7 : index
    %c0_93 = arith.constant 0 : index
    %c0_94 = arith.constant 0 : index
    %233 = vector.load %arg11[%c7_92, %c0_93, %c0_94] : memref<8x8x128xf32, #tpu.memory_space<vmem>>, vector<1x8x128xf32>
    %234 = vector.shape_cast %233 : vector<1x8x128xf32> to vector<8x128xf32>
    %235 = vector.shape_cast %232 : vector<8x128xf32> to vector<1x8x128xf32>
    tpu.vector_store %arg11[%c7_92, %c0_93, %c0_94], %235 {strides = array<i32>} : memref<8x8x128xf32, #tpu.memory_space<vmem>>, vector<1x8x128xf32>,
    %c0_95 = arith.constant 0 : index
    %c0_96 = arith.constant 0 : index
    %c0_97 = arith.constant 0 : index
    %236 = vector.load %arg11[%c0_95, %c0_96, %c0_97] : memref<8x8x128xf32, #tpu.memory_space<vmem>>, vector<8x8x128xf32>
    %237 = vector.shape_cast %236 : vector<8x8x128xf32> to vector<64x128xf32>
    %c0_98 = arith.constant 0 : index
    %c0_99 = arith.constant 0 : index
    %238 = vector.load %arg7[%c0_98, %c0_99] : memref<128x128xf32, #tpu.memory_space<vmem>>, vector<128x128xf32>
    %cst_100 = arith.constant dense<0.000000e+00> : vector<64x128xf32>
    %239 = tpu.matmul %237, %238, %cst_100 {dimension_numbers = #tpu.dot_dimension_numbers<[1], [0], [0], [1], [0, 0, 1, 1], [], []>} : vector<64x128xf32>, vector<128x128xf32>, vector<64x128xf32> -> vector<64x128xf32>
    %c0_101 = arith.constant 0 : index
    %c0_102 = arith.constant 0 : index
    %240 = vector.load %arg8[%c0_101, %c0_102] : memref<1x128xf32, #tpu.memory_space<vmem>>, vector<1x128xf32>
    %241 = vector.broadcast %240 : vector<1x128xf32> to vector<64x128xf32>
    %242 = arith.addf %239, %241 : vector<64x128xf32>
    %243 = vector.shape_cast %242 : vector<64x128xf32> to vector<8x8x128xf32>
    %c0_103 = arith.constant 0 : index
    %c0_104 = arith.constant 0 : index
    %c0_105 = arith.constant 0 : index
    %244 = vector.load %arg9[%c0_103, %c0_104, %c0_105] : memref<8x8x128xf32, #tpu.memory_space<vmem>>, vector<8x8x128xf32>
    tpu.vector_store %arg9[%c0_103, %c0_104, %c0_105], %243 {strides = array<i32>} : memref<8x8x128xf32, #tpu.memory_space<vmem>>, vector<8x8x128xf32>,
    return
  }
  func.func @transform_0(%arg0: i32) -> (i32, i32, i32) {
    %c0_i32 = arith.constant 0 : i32
    %c0_i32_0 = arith.constant 0 : i32
    %c0_i32_1 = arith.constant 0 : i32
    return %arg0, %c0_i32, %c0_i32_0 : i32, i32, i32
  }
  func.func @transform_1(%arg0: i32) -> (i32, i32) {
    %c0_i32 = arith.constant 0 : i32
    %c0_i32_0 = arith.constant 0 : i32
    %c0_i32_1 = arith.constant 0 : i32
    return %c0_i32, %c0_i32_0 : i32, i32
  }
  func.func @transform_2(%arg0: i32) -> (i32, i32) {
    %c0_i32 = arith.constant 0 : i32
    %c0_i32_0 = arith.constant 0 : i32
    %c0_i32_1 = arith.constant 0 : i32
    return %c0_i32, %c0_i32_0 : i32, i32
  }
  func.func @transform_3(%arg0: i32) -> (i32, i32, i32) {
    %c0_i32 = arith.constant 0 : i32
    %c0_i32_0 = arith.constant 0 : i32
    %c0_i32_1 = arith.constant 0 : i32
    %c0_i32_2 = arith.constant 0 : i32
    return %c0_i32, %c0_i32_0, %c0_i32_1 : i32, i32, i32
  }
  func.func @transform_4(%arg0: i32) -> (i32, i32, i32) {
    %c0_i32 = arith.constant 0 : i32
    %c0_i32_0 = arith.constant 0 : i32
    %c0_i32_1 = arith.constant 0 : i32
    %c0_i32_2 = arith.constant 0 : i32
    return %c0_i32, %c0_i32_0, %c0_i32_1 : i32, i32, i32
  }
  func.func @transform_5(%arg0: i32) -> (i32, i32, i32) {
    %c0_i32 = arith.constant 0 : i32
    %c0_i32_0 = arith.constant 0 : i32
    %c0_i32_1 = arith.constant 0 : i32
    %c0_i32_2 = arith.constant 0 : i32
    return %c0_i32, %c0_i32_0, %c0_i32_1 : i32, i32, i32
  }
  func.func @transform_6(%arg0: i32) -> (i32, i32) {
    %c0_i32 = arith.constant 0 : i32
    %c0_i32_0 = arith.constant 0 : i32
    %c0_i32_1 = arith.constant 0 : i32
    return %c0_i32, %c0_i32_0 : i32, i32
  }
  func.func @transform_7(%arg0: i32) -> (i32, i32) {
    %c0_i32 = arith.constant 0 : i32
    %c0_i32_0 = arith.constant 0 : i32
    %c0_i32_1 = arith.constant 0 : i32
    return %c0_i32, %c0_i32_0 : i32, i32
  }
  func.func @transform_8(%arg0: i32) -> (i32, i32, i32) {
    %c0_i32 = arith.constant 0 : i32
    %c0_i32_0 = arith.constant 0 : i32
    %c0_i32_1 = arith.constant 0 : i32
    return %arg0, %c0_i32, %c0_i32_0 : i32, i32, i32
  }
}

</mosaic_0001>

<llo_original>
// kernel: tpu_custom_call.1
$region0: #{tpu_custom_call.1}
  #allocation0 [shape = 'u32[]', space=smem, size = 0x4, offset = 0x4, fixed_abs, tag = 'smem constant byte address 0x4 - core index']
  #allocation1 [shape = 'u32[72,128]{1,0:T(1,128)}', space=vmem, size = 0x9000, scoped, tag = 'internal scratch']
  #allocation2 [shape = 'f32[8,128,8]{2,1,0:T(8,128)}', space=vmem, size = 0x80000, scoped, tag = 'scratch operand']
  #allocation3 [shape = 'f32[8,8,128]{2,1,0:T(8,128)}', space=vmem, size = 0x8000, scoped, tag = 'scratch operand']
  %s0 = inlined_call_operand.vmem [shape: f32[8,8,128], index: 0, kind: input, shape index: {}]
  %s1 = inlined_call_operand.vmem [shape: f32[128,128], index: 1, kind: input, shape index: {}]
  %s2 = inlined_call_operand.vmem [shape: f32[1,128], index: 2, kind: input, shape index: {}]
  %s3 = inlined_call_operand.vmem [shape: f32[3,8,8], index: 3, kind: input, shape index: {}]
  %s4 = inlined_call_operand.vmem [shape: f32[3,1,8], index: 4, kind: input, shape index: {}]
  %s5 = inlined_call_operand.vmem [shape: f32[3,128,2], index: 5, kind: input, shape index: {}]
  %s6 = inlined_call_operand.vmem [shape: f32[128,128], index: 6, kind: input, shape index: {}]
  %s7 = inlined_call_operand.vmem [shape: f32[1,128], index: 7, kind: input, shape index: {}]
  %s8 = inlined_call_operand.hbm [shape: f32[8,8,128], index: 8, kind: output, shape index: {}]
  %s9 = sld [smem:[#allocation0]]
  $region42: #{tpu_custom_call.1} parent=0
    _
  %s11 = ssub.s32 1, %s9
  %s12 = scalar_select 0, %s11, %s9
  $region1: #{tpu_custom_call.1} parent=0
    #allocation4 [shape = 'u8[32768]{0}', space=vmem, size = 0x8000, scoped, tag = 'output window, operand 0, single buffered']
    #allocation5 [shape = 's32[1]{0}', space=sflag, size = 0x4, scoped, tag = 'scoped memory for tpu_custom_call.1']
    %13 = vsyncpa [#allocation5], 0
    // Predicated region
    $region2: #{tpu_custom_call.1} parent=1 // pred_check
      _
    $region3: #{tpu_custom_call.1} parent=1 // pred_check_branch
      %15 = sbr.rel (0) target = $region5
    $region4: #{tpu_custom_call.1} parent=1 // pred_region
      _
    $region5: #{tpu_custom_call.1} parent=1 // pred_fallthru
      _
    // Predicated region
    $region6: #{tpu_custom_call.1} parent=1 // pred_check
      _
    $region7: #{tpu_custom_call.1} parent=1 // pred_check_branch
      %17 = sbr.rel (0) target = $region9
    $region8: #{tpu_custom_call.1} parent=1 // pred_region
      _
    $region9: #{tpu_custom_call.1} parent=1 // pred_fallthru
      _
    // Predicated region
    $region10: #{tpu_custom_call.1} parent=1 // pred_check
      _
    $region11: #{tpu_custom_call.1} parent=1 // pred_check_branch
      %19 = sbr.rel (0) target = $region13
    $region12: #{tpu_custom_call.1} parent=1 // pred_region
      _
    $region13: #{tpu_custom_call.1} parent=1 // pred_fallthru
      _
    // Predicated region
    $region14: #{tpu_custom_call.1} parent=1 // pred_check
      _
    $region15: #{tpu_custom_call.1} parent=1 // pred_check_branch
      %21 = sbr.rel (0) target = $region17
    $region16: #{tpu_custom_call.1} parent=1 // pred_region
      _
    $region17: #{tpu_custom_call.1} parent=1 // pred_fallthru
      _
    // Predicated region
    $region18: #{tpu_custom_call.1} parent=1 // pred_check
      _
    $region19: #{tpu_custom_call.1} parent=1 // pred_check_branch
      %23 = sbr.rel (0) target = $region21
    $region20: #{tpu_custom_call.1} parent=1 // pred_region
      _
    $region21: #{tpu_custom_call.1} parent=1 // pred_fallthru
      _
    // Predicated region
    $region22: #{tpu_custom_call.1} parent=1 // pred_check
      _
    $region23: #{tpu_custom_call.1} parent=1 // pred_check_branch
      %25 = sbr.rel (0) target = $region25
    $region24: #{tpu_custom_call.1} parent=1 // pred_region
      _
    $region25: #{tpu_custom_call.1} parent=1 // pred_fallthru
      _
    // Predicated region
    $region26: #{tpu_custom_call.1} parent=1 // pred_check
      _
    $region27: #{tpu_custom_call.1} parent=1 // pred_check_branch
      %27 = sbr.rel (0) target = $region29
    $region28: #{tpu_custom_call.1} parent=1 // pred_region
      _
    $region29: #{tpu_custom_call.1} parent=1 // pred_fallthru
      _
    // Predicated region
    $region30: #{tpu_custom_call.1} parent=1 // pred_check
      _
    $region31: #{tpu_custom_call.1} parent=1 // pred_check_branch
      %29 = sbr.rel (0) target = $region33
    $region32: #{tpu_custom_call.1} parent=1 // pred_region
      _
    $region33: #{tpu_custom_call.1} parent=1 // pred_fallthru
      _
    %v30 = vld [vmem:[%s0] sm:$0xff]
    %v31 = vld [vmem:[%s0 + $0x8] sm:$0xff]
    %v32 = vld [vmem:[%s0 + $0x10] sm:$0xff]
    %v33 = vld [vmem:[%s0 + $0x18] sm:$0xff]
    %v34 = vld [vmem:[%s0 + $0x20] sm:$0xff]
    %v35 = vld [vmem:[%s0 + $0x28] sm:$0xff]
    %v36 = vld [vmem:[%s0 + $0x30] sm:$0xff]
    %v37 = vld [vmem:[%s0 + $0x38] sm:$0xff]
    %v38 = vld [vmem:[%s1] sm:$0xff]
    %v39 = vld [vmem:[%s1 + $0x8] sm:$0xff]
    %v40 = vld [vmem:[%s1 + $0x10] sm:$0xff]
    %v41 = vld [vmem:[%s1 + $0x18] sm:$0xff]
    %v42 = vld [vmem:[%s1 + $0x20] sm:$0xff]
    %v43 = vld [vmem:[%s1 + $0x28] sm:$0xff]
    %v44 = vld [vmem:[%s1 + $0x30] sm:$0xff]
    %v45 = vld [vmem:[%s1 + $0x38] sm:$0xff]
    %v46 = vld [vmem:[%s1 + $0x40] sm:$0xff]
    %v47 = vld [vmem:[%s1 + $0x48] sm:$0xff]
    %v48 = vld [vmem:[%s1 + $0x50] sm:$0xff]
    %v49 = vld [vmem:[%s1 + $0x58] sm:$0xff]
    %v50 = vld [vmem:[%s1 + $0x60] sm:$0xff]
    %v51 = vld [vmem:[%s1 + $0x68] sm:$0xff]
    %v52 = vld [vmem:[%s1 + $0x70] sm:$0xff]
    %v53 = vld [vmem:[%s1 + $0x78] sm:$0xff]
    %v54 = vld [vmem:[%s2] sm:$0x1]
    %v56 = vperm.slane %v54, 0
    %58 = vmatpush.msra.mxu0 %v53
    %59 = vmatpush.msra.mxu0 %v52
    %60 = vmatpush.msra.mxu0 %v51
    %61 = vmatpush.msra.mxu0 %v50
    %62 = vmatpush.msra.mxu0 %v49
    %63 = vmatpush.msra.mxu0 %v48
    %64 = vmatpush.msra.mxu0 %v47
    %65 = vmatpush.msra.mxu0 %v46
    %66 = vmatpush.msra.mxu0 %v45
    %67 = vmatpush.msra.mxu0 %v44
    %68 = vmatpush.msra.mxu0 %v43
    %69 = vmatpush.msra.mxu0 %v42
    %70 = vmatpush.msra.mxu0 %v41
    %71 = vmatpush.msra.mxu0 %v40
    %72 = vmatpush.msra.mxu0 %v39
    %73 = vmatpush.msra.mxu0 %v38
    %74 = vmatmul.f32.gmra.mxu0 %v30
    %v75 = vpop.f32.mrf.mxu0
    %v76 = vadd.f32 %v56, %v75
    %77 = vmatmul.f32.gmra.mxu0 %v31
    %v78 = vpop.f32.mrf.mxu0
    %v79 = vadd.f32 %v56, %v78
    %80 = vmatmul.f32.gmra.mxu0 %v32
    %v81 = vpop.f32.mrf.mxu0
    %v82 = vadd.f32 %v56, %v81
    %83 = vmatmul.f32.gmra.mxu0 %v33
    %v84 = vpop.f32.mrf.mxu0
    %v85 = vadd.f32 %v56, %v84
    %86 = vmatmul.f32.gmra.mxu0 %v34
    %v87 = vpop.f32.mrf.mxu0
    %v88 = vadd.f32 %v56, %v87
    %89 = vmatmul.f32.gmra.mxu0 %v35
    %v90 = vpop.f32.mrf.mxu0
    %v91 = vadd.f32 %v56, %v90
    %92 = vmatmul.f32.gmra.mxu0 %v36
    %v93 = vpop.f32.mrf.mxu0
    %v94 = vadd.f32 %v56, %v93
    %95 = vmatmul.f32.gmra.mxu0 %v37
    %v96 = vpop.f32.mrf.mxu0
    %v97 = vadd.f32 %v56, %v96
    %98 = vdwg.mxu0
    %99 = vxpose.xlu0.b32.start [1/16] %v76, 128
    %100 = vxpose.xlu0.b32.cont [2/16] 0.0, 128
    %101 = vxpose.xlu0.b32.cont [3/16] 0.0, 128
    %102 = vxpose.xlu0.b32.cont [4/16] 0.0, 128
    %103 = vxpose.xlu0.b32.cont [5/16] 0.0, 128
    %104 = vxpose.xlu0.b32.cont [6/16] 0.0, 128
    %105 = vxpose.xlu0.b32.cont [7/16] 0.0, 128
    %106 = vxpose.xlu0.b32.cont [8/16] 0.0, 128
    %107 = vxpose.xlu0.b32.cont [9/16] 0.0, 128
    %108 = vxpose.xlu0.b32.cont [10/16] 0.0, 128
    %109 = vxpose.xlu0.b32.cont [11/16] 0.0, 128
    %110 = vxpose.xlu0.b32.cont [12/16] 0.0, 128
    %111 = vxpose.xlu0.b32.cont [13/16] 0.0, 128
    %112 = vxpose.xlu0.b32.cont [14/16] 0.0, 128
    %113 = vxpose.xlu0.b32.cont [15/16] 0.0, 128
    %114 = vxpose.xlu0.b32.end [16/16] 0.0, 128
    %v115 = vpop.trf.xlu0
    %v116 = vpop.trf.xlu0
    %v117 = vpop.trf.xlu0
    %v118 = vpop.trf.xlu0
    %v119 = vpop.trf.xlu0
    %v120 = vpop.trf.xlu0
    %v121 = vpop.trf.xlu0
    %v122 = vpop.trf.xlu0
    %v123 = vpop.trf.xlu0
    %v124 = vpop.trf.xlu0
    %v125 = vpop.trf.xlu0
    %v126 = vpop.trf.xlu0
    %v127 = vpop.trf.xlu0
    %v128 = vpop.trf.xlu0
    %v129 = vpop.trf.xlu0
    %v130 = vpop.trf.xlu0
    %vm131 = vcmask 64512
    %132 = vst.msk [vmem:[#allocation2] sm:$0xff] %vm131, %v115
    %133 = vst.msk [vmem:[#allocation2 + $0x8] sm:$0xff] %vm131, %v116
    %134 = vst.msk [vmem:[#allocation2 + $0x10] sm:$0xff] %vm131, %v117
    %135 = vst.msk [vmem:[#allocation2 + $0x18] sm:$0xff] %vm131, %v118
    %136 = vst.msk [vmem:[#allocation2 + $0x20] sm:$0xff] %vm131, %v119
    %137 = vst.msk [vmem:[#allocation2 + $0x28] sm:$0xff] %vm131, %v120
    %138 = vst.msk [vmem:[#allocation2 + $0x30] sm:$0xff] %vm131, %v121
    %139 = vst.msk [vmem:[#allocation2 + $0x38] sm:$0xff] %vm131, %v122
    %140 = vst.msk [vmem:[#allocation2 + $0x40] sm:$0xff] %vm131, %v123
    %141 = vst.msk [vmem:[#allocation2 + $0x48] sm:$0xff] %vm131, %v124
    %142 = vst.msk [vmem:[#allocation2 + $0x50] sm:$0xff] %vm131, %v125
    %143 = vst.msk [vmem:[#allocation2 + $0x58] sm:$0xff] %vm131, %v126
    %144 = vst.msk [vmem:[#allocation2 + $0x60] sm:$0xff] %vm131, %v127
    %145 = vst.msk [vmem:[#allocation2 + $0x68] sm:$0xff] %vm131, %v128
    %146 = vst.msk [vmem:[#allocation2 + $0x70] sm:$0xff] %vm131, %v129
    %147 = vst.msk [vmem:[#allocation2 + $0x78] sm:$0xff] %vm131, %v130
    %148 = vxpose.xlu0.b32.start [1/16] %v79, 128
    %149 = vxpose.xlu0.b32.cont [2/16] 0.0, 128
    %150 = vxpose.xlu0.b32.cont [3/16] 0.0, 128
    %151 = vxpose.xlu0.b32.cont [4/16] 0.0, 128
    %152 = vxpose.xlu0.b32.cont [5/16] 0.0, 128
    %153 = vxpose.xlu0.b32.cont [6/16] 0.0, 128
    %154 = vxpose.xlu0.b32.cont [7/16] 0.0, 128
    %155 = vxpose.xlu0.b32.cont [8/16] 0.0, 128
    %156 = vxpose.xlu0.b32.cont [9/16] 0.0, 128
    %157 = vxpose.xlu0.b32.cont [10/16] 0.0, 128
    %158 = vxpose.xlu0.b32.cont [11/16] 0.0, 128
    %159 = vxpose.xlu0.b32.cont [12/16] 0.0, 128
    %160 = vxpose.xlu0.b32.cont [13/16] 0.0, 128
    %161 = vxpose.xlu0.b32.cont [14/16] 0.0, 128
    %162 = vxpose.xlu0.b32.cont [15/16] 0.0, 128
    %163 = vxpose.xlu0.b32.end [16/16] 0.0, 128
    %v164 = vpop.trf.xlu0
    %v165 = vpop.trf.xlu0
    %v166 = vpop.trf.xlu0
    %v167 = vpop.trf.xlu0
    %v168 = vpop.trf.xlu0
    %v169 = vpop.trf.xlu0
    %v170 = vpop.trf.xlu0
    %v171 = vpop.trf.xlu0
    %v172 = vpop.trf.xlu0
    %v173 = vpop.trf.xlu0
    %v174 = vpop.trf.xlu0
    %v175 = vpop.trf.xlu0
    %v176 = vpop.trf.xlu0
    %v177 = vpop.trf.xlu0
    %v178 = vpop.trf.xlu0
    %v179 = vpop.trf.xlu0
    %s180 = scalar_lea.vmem [#allocation2], 128
    %181 = vst.msk [vmem:[%s180] sm:$0xff] %vm131, %v164
    %182 = vst.msk [vmem:[%s180 + $0x8] sm:$0xff] %vm131, %v165
    %183 = vst.msk [vmem:[%s180 + $0x10] sm:$0xff] %vm131, %v166
    %184 = vst.msk [vmem:[%s180 + $0x18] sm:$0xff] %vm131, %v167
    %185 = vst.msk [vmem:[%s180 + $0x20] sm:$0xff] %vm131, %v168
    %186 = vst.msk [vmem:[%s180 + $0x28] sm:$0xff] %vm131, %v169
    %187 = vst.msk [vmem:[%s180 + $0x30] sm:$0xff] %vm131, %v170
    %188 = vst.msk [vmem:[%s180 + $0x38] sm:$0xff] %vm131, %v171
    %189 = vst.msk [vmem:[%s180 + $0x40] sm:$0xff] %vm131, %v172
    %190 = vst.msk [vmem:[%s180 + $0x48] sm:$0xff] %vm131, %v173
    %191 = vst.msk [vmem:[%s180 + $0x50] sm:$0xff] %vm131, %v174
    %192 = vst.msk [vmem:[%s180 + $0x58] sm:$0xff] %vm131, %v175
    %193 = vst.msk [vmem:[%s180 + $0x60] sm:$0xff] %vm131, %v176
    %194 = vst.msk [vmem:[%s180 + $0x68] sm:$0xff] %vm131, %v177
    %195 = vst.msk [vmem:[%s180 + $0x70] sm:$0xff] %vm131, %v178
    %196 = vst.msk [vmem:[%s180 + $0x78] sm:$0xff] %vm131, %v179
    %197 = vxpose.xlu0.b32.start [1/16] %v82, 128
    %198 = vxpose.xlu0.b32.cont [2/16] 0.0, 128
    %199 = vxpose.xlu0.b32.cont [3/16] 0.0, 128
    %200 = vxpose.xlu0.b32.cont [4/16] 0.0, 128
    %201 = vxpose.xlu0.b32.cont [5/16] 0.0, 128
    %202 = vxpose.xlu0.b32.cont [6/16] 0.0, 128
    %203 = vxpose.xlu0.b32.cont [7/16] 0.0, 128
    %204 = vxpose.xlu0.b32.cont [8/16] 0.0, 128
    %205 = vxpose.xlu0.b32.cont [9/16] 0.0, 128
    %206 = vxpose.xlu0.b32.cont [10/16] 0.0, 128
    %207 = vxpose.xlu0.b32.cont [11/16] 0.0, 128
    %208 = vxpose.xlu0.b32.cont [12/16] 0.0, 128
    %209 = vxpose.xlu0.b32.cont [13/16] 0.0, 128
    %210 = vxpose.xlu0.b32.cont [14/16] 0.0, 128
    %211 = vxpose.xlu0.b32.cont [15/16] 0.0, 128
    %212 = vxpose.xlu0.b32.end [16/16] 0.0, 128
    %v213 = vpop.trf.xlu0
    %v214 = vpop.trf.xlu0
    %v215 = vpop.trf.xlu0
    %v216 = vpop.trf.xlu0
    %v217 = vpop.trf.xlu0
    %v218 = vpop.trf.xlu0
    %v219 = vpop.trf.xlu0
    %v220 = vpop.trf.xlu0
    %v221 = vpop.trf.xlu0
    %v222 = vpop.trf.xlu0
    %v223 = vpop.trf.xlu0
    %v224 = vpop.trf.xlu0
    %v225 = vpop.trf.xlu0
    %v226 = vpop.trf.xlu0
    %v227 = vpop.trf.xlu0
    %v228 = vpop.trf.xlu0
    %s229 = scalar_lea.vmem [#allocation2], 256
    %230 = vst.msk [vmem:[%s229] sm:$0xff] %vm131, %v213
    %231 = vst.msk [vmem:[%s229 + $0x8] sm:$0xff] %vm131, %v214
    %232 = vst.msk [vmem:[%s229 + $0x10] sm:$0xff] %vm131, %v215
    %233 = vst.msk [vmem:[%s229 + $0x18] sm:$0xff] %vm131, %v216
    %234 = vst.msk [vmem:[%s229 + $0x20] sm:$0xff] %vm131, %v217
    %235 = vst.msk [vmem:[%s229 + $0x28] sm:$0xff] %vm131, %v218
    %236 = vst.msk [vmem:[%s229 + $0x30] sm:$0xff] %vm131, %v219
    %237 = vst.msk [vmem:[%s229 + $0x38] sm:$0xff] %vm131, %v220
    %238 = vst.msk [vmem:[%s229 + $0x40] sm:$0xff] %vm131, %v221
    %239 = vst.msk [vmem:[%s229 + $0x48] sm:$0xff] %vm131, %v222
    %240 = vst.msk [vmem:[%s229 + $0x50] sm:$0xff] %vm131, %v223
    %241 = vst.msk [vmem:[%s229 + $0x58] sm:$0xff] %vm131, %v224
    %242 = vst.msk [vmem:[%s229 + $0x60] sm:$0xff] %vm131, %v225
    %243 = vst.msk [vmem:[%s229 + $0x68] sm:$0xff] %vm131, %v226
    %244 = vst.msk [vmem:[%s229 + $0x70] sm:$0xff] %vm131, %v227
    %245 = vst.msk [vmem:[%s229 + $0x78] sm:$0xff] %vm131, %v228
    %246 = vxpose.xlu0.b32.start [1/16] %v85, 128
    %247 = vxpose.xlu0.b32.cont [2/16] 0.0, 128
    %248 = vxpose.xlu0.b32.cont [3/16] 0.0, 128
    %249 = vxpose.xlu0.b32.cont [4/16] 0.0, 128
    %250 = vxpose.xlu0.b32.cont [5/16] 0.0, 128
    %251 = vxpose.xlu0.b32.cont [6/16] 0.0, 128
    %252 = vxpose.xlu0.b32.cont [7/16] 0.0, 128
    %253 = vxpose.xlu0.b32.cont [8/16] 0.0, 128
    %254 = vxpose.xlu0.b32.cont [9/16] 0.0, 128
    %255 = vxpose.xlu0.b32.cont [10/16] 0.0, 128
    %256 = vxpose.xlu0.b32.cont [11/16] 0.0, 128
    %257 = vxpose.xlu0.b32.cont [12/16] 0.0, 128
    %258 = vxpose.xlu0.b32.cont [13/16] 0.0, 128
    %259 = vxpose.xlu0.b32.cont [14/16] 0.0, 128
    %260 = vxpose.xlu0.b32.cont [15/16] 0.0, 128
    %261 = vxpose.xlu0.b32.end [16/16] 0.0, 128
    %v262 = vpop.trf.xlu0
    %v263 = vpop.trf.xlu0
    %v264 = vpop.trf.xlu0
    %v265 = vpop.trf.xlu0
    %v266 = vpop.trf.xlu0
    %v267 = vpop.trf.xlu0
    %v268 = vpop.trf.xlu0
    %v269 = vpop.trf.xlu0
    %v270 = vpop.trf.xlu0
    %v271 = vpop.trf.xlu0
    %v272 = vpop.trf.xlu0
    %v273 = vpop.trf.xlu0
    %v274 = vpop.trf.xlu0
    %v275 = vpop.trf.xlu0
    %v276 = vpop.trf.xlu0
    %v277 = vpop.trf.xlu0
    %s278 = scalar_lea.vmem [#allocation2], 384
    %279 = vst.msk [vmem:[%s278] sm:$0xff] %vm131, %v262
    %280 = vst.msk [vmem:[%s278 + $0x8] sm:$0xff] %vm131, %v263
    %281 = vst.msk [vmem:[%s278 + $0x10] sm:$0xff] %vm131, %v264
    %282 = vst.msk [vmem:[%s278 + $0x18] sm:$0xff] %vm131, %v265
    %283 = vst.msk [vmem:[%s278 + $0x20] sm:$0xff] %vm131, %v266
    %284 = vst.msk [vmem:[%s278 + $0x28] sm:$0xff] %vm131, %v267
    %285 = vst.msk [vmem:[%s278 + $0x30] sm:$0xff] %vm131, %v268
    %286 = vst.msk [vmem:[%s278 + $0x38] sm:$0xff] %vm131, %v269
    %287 = vst.msk [vmem:[%s278 + $0x40] sm:$0xff] %vm131, %v270
    %288 = vst.msk [vmem:[%s278 + $0x48] sm:$0xff] %vm131, %v271
    %289 = vst.msk [vmem:[%s278 + $0x50] sm:$0xff] %vm131, %v272
    %290 = vst.msk [vmem:[%s278 + $0x58] sm:$0xff] %vm131, %v273
    %291 = vst.msk [vmem:[%s278 + $0x60] sm:$0xff] %vm131, %v274
    %292 = vst.msk [vmem:[%s278 + $0x68] sm:$0xff] %vm131, %v275
    %293 = vst.msk [vmem:[%s278 + $0x70] sm:$0xff] %vm131, %v276
    %294 = vst.msk [vmem:[%s278 + $0x78] sm:$0xff] %vm131, %v277
    %295 = vxpose.xlu0.b32.start [1/16] %v88, 128
    %296 = vxpose.xlu0.b32.cont [2/16] 0.0, 128
    %297 = vxpose.xlu0.b32.cont [3/16] 0.0, 128
    %298 = vxpose.xlu0.b32.cont [4/16] 0.0, 128
    %299 = vxpose.xlu0.b32.cont [5/16] 0.0, 128
    %300 = vxpose.xlu0.b32.cont [6/16] 0.0, 128
    %301 = vxpose.xlu0.b32.cont [7/16] 0.0, 128
    %302 = vxpose.xlu0.b32.cont [8/16] 0.0, 128
    %303 = vxpose.xlu0.b32.cont [9/16] 0.0, 128
    %304 = vxpose.xlu0.b32.cont [10/16] 0.0, 128
    %305 = vxpose.xlu0.b32.cont [11/16] 0.0, 128
    %306 = vxpose.xlu0.b32.cont [12/16] 0.0, 128
    %307 = vxpose.xlu0.b32.cont [13/16] 0.0, 128
    %308 = vxpose.xlu0.b32.cont [14/16] 0.0, 128
    %309 = vxpose.xlu0.b32.cont [15/16] 0.0, 128
    %310 = vxpose.xlu0.b32.end [16/16] 0.0, 128
    %v311 = vpop.trf.xlu0
    %v312 = vpop.trf.xlu0
    %v313 = vpop.trf.xlu0
    %v314 = vpop.trf.xlu0
    %v315 = vpop.trf.xlu0
    %v316 = vpop.trf.xlu0
    %v317 = vpop.trf.xlu0
    %v318 = vpop.trf.xlu0
    %v319 = vpop.trf.xlu0
    %v320 = vpop.trf.xlu0
    %v321 = vpop.trf.xlu0
    %v322 = vpop.trf.xlu0
    %v323 = vpop.trf.xlu0
    %v324 = vpop.trf.xlu0
    %v325 = vpop.trf.xlu0
    %v326 = vpop.trf.xlu0
    %s327 = scalar_lea.vmem [#allocation2], 512
    %328 = vst.msk [vmem:[%s327] sm:$0xff] %vm131, %v311
    %329 = vst.msk [vmem:[%s327 + $0x8] sm:$0xff] %vm131, %v312
    %330 = vst.msk [vmem:[%s327 + $0x10] sm:$0xff] %vm131, %v313
    %331 = vst.msk [vmem:[%s327 + $0x18] sm:$0xff] %vm131, %v314
    %332 = vst.msk [vmem:[%s327 + $0x20] sm:$0xff] %vm131, %v315
    %333 = vst.msk [vmem:[%s327 + $0x28] sm:$0xff] %vm131, %v316
    %334 = vst.msk [vmem:[%s327 + $0x30] sm:$0xff] %vm131, %v317
    %335 = vst.msk [vmem:[%s327 + $0x38] sm:$0xff] %vm131, %v318
    %336 = vst.msk [vmem:[%s327 + $0x40] sm:$0xff] %vm131, %v319
    %337 = vst.msk [vmem:[%s327 + $0x48] sm:$0xff] %vm131, %v320
    %338 = vst.msk [vmem:[%s327 + $0x50] sm:$0xff] %vm131, %v321
    %339 = vst.msk [vmem:[%s327 + $0x58] sm:$0xff] %vm131, %v322
    %340 = vst.msk [vmem:[%s327 + $0x60] sm:$0xff] %vm131, %v323
    %341 = vst.msk [vmem:[%s327 + $0x68] sm:$0xff] %vm131, %v324
    %342 = vst.msk [vmem:[%s327 + $0x70] sm:$0xff] %vm131, %v325
    %343 = vst.msk [vmem:[%s327 + $0x78] sm:$0xff] %vm131, %v326
    %344 = vxpose.xlu0.b32.start [1/16] %v91, 128
    %345 = vxpose.xlu0.b32.cont [2/16] 0.0, 128
    %346 = vxpose.xlu0.b32.cont [3/16] 0.0, 128
    %347 = vxpose.xlu0.b32.cont [4/16] 0.0, 128
    %348 = vxpose.xlu0.b32.cont [5/16] 0.0, 128
    %349 = vxpose.xlu0.b32.cont [6/16] 0.0, 128
    %350 = vxpose.xlu0.b32.cont [7/16] 0.0, 128
    %351 = vxpose.xlu0.b32.cont [8/16] 0.0, 128
    %352 = vxpose.xlu0.b32.cont [9/16] 0.0, 128
    %353 = vxpose.xlu0.b32.cont [10/16] 0.0, 128
    %354 = vxpose.xlu0.b32.cont [11/16] 0.0, 128
    %355 = vxpose.xlu0.b32.cont [12/16] 0.0, 128
    %356 = vxpose.xlu0.b32.cont [13/16] 0.0, 128
    %357 = vxpose.xlu0.b32.cont [14/16] 0.0, 128
    %358 = vxpose.xlu0.b32.cont [15/16] 0.0, 128
    %359 = vxpose.xlu0.b32.end [16/16] 0.0, 128
    %v360 = vpop.trf.xlu0
    %v361 = vpop.trf.xlu0
    %v362 = vpop.trf.xlu0
    %v363 = vpop.trf.xlu0
    %v364 = vpop.trf.xlu0
    %v365 = vpop.trf.xlu0
    %v366 = vpop.trf.xlu0
    %v367 = vpop.trf.xlu0
    %v368 = vpop.trf.xlu0
    %v369 = vpop.trf.xlu0
    %v370 = vpop.trf.xlu0
    %v371 = vpop.trf.xlu0
    %v372 = vpop.trf.xlu0
    %v373 = vpop.trf.xlu0
    %v374 = vpop.trf.xlu0
    %v375 = vpop.trf.xlu0
    %s376 = scalar_lea.vmem [#allocation2], 640
    %377 = vst.msk [vmem:[%s376] sm:$0xff] %vm131, %v360
    %378 = vst.msk [vmem:[%s376 + $0x8] sm:$0xff] %vm131, %v361
    %379 = vst.msk [vmem:[%s376 + $0x10] sm:$0xff] %vm131, %v362
    %380 = vst.msk [vmem:[%s376 + $0x18] sm:$0xff] %vm131, %v363
    %381 = vst.msk [vmem:[%s376 + $0x20] sm:$0xff] %vm131, %v364
    %382 = vst.msk [vmem:[%s376 + $0x28] sm:$0xff] %vm131, %v365
    %383 = vst.msk [vmem:[%s376 + $0x30] sm:$0xff] %vm131, %v366
    %384 = vst.msk [vmem:[%s376 + $0x38] sm:$0xff] %vm131, %v367
    %385 = vst.msk [vmem:[%s376 + $0x40] sm:$0xff] %vm131, %v368
    %386 = vst.msk [vmem:[%s376 + $0x48] sm:$0xff] %vm131, %v369
    %387 = vst.msk [vmem:[%s376 + $0x50] sm:$0xff] %vm131, %v370
    %388 = vst.msk [vmem:[%s376 + $0x58] sm:$0xff] %vm131, %v371
    %389 = vst.msk [vmem:[%s376 + $0x60] sm:$0xff] %vm131, %v372
    %390 = vst.msk [vmem:[%s376 + $0x68] sm:$0xff] %vm131, %v373
    %391 = vst.msk [vmem:[%s376 + $0x70] sm:$0xff] %vm131, %v374
    %392 = vst.msk [vmem:[%s376 + $0x78] sm:$0xff] %vm131, %v375
    %393 = vxpose.xlu0.b32.start [1/16] %v94, 128
    %394 = vxpose.xlu0.b32.cont [2/16] 0.0, 128
    %395 = vxpose.xlu0.b32.cont [3/16] 0.0, 128
    %396 = vxpose.xlu0.b32.cont [4/16] 0.0, 128
    %397 = vxpose.xlu0.b32.cont [5/16] 0.0, 128
    %398 = vxpose.xlu0.b32.cont [6/16] 0.0, 128
    %399 = vxpose.xlu0.b32.cont [7/16] 0.0, 128
    %400 = vxpose.xlu0.b32.cont [8/16] 0.0, 128
    %401 = vxpose.xlu0.b32.cont [9/16] 0.0, 128
    %402 = vxpose.xlu0.b32.cont [10/16] 0.0, 128
    %403 = vxpose.xlu0.b32.cont [11/16] 0.0, 128
    %404 = vxpose.xlu0.b32.cont [12/16] 0.0, 128
    %405 = vxpose.xlu0.b32.cont [13/16] 0.0, 128
    %406 = vxpose.xlu0.b32.cont [14/16] 0.0, 128
    %407 = vxpose.xlu0.b32.cont [15/16] 0.0, 128
    %408 = vxpose.xlu0.b32.end [16/16] 0.0, 128
    %v409 = vpop.trf.xlu0
    %v410 = vpop.trf.xlu0
    %v411 = vpop.trf.xlu0
    %v412 = vpop.trf.xlu0
    %v413 = vpop.trf.xlu0
    %v414 = vpop.trf.xlu0
    %v415 = vpop.trf.xlu0
    %v416 = vpop.trf.xlu0
    %v417 = vpop.trf.xlu0
    %v418 = vpop.trf.xlu0
    %v419 = vpop.trf.xlu0
    %v420 = vpop.trf.xlu0
    %v421 = vpop.trf.xlu0
    %v422 = vpop.trf.xlu0
    %v423 = vpop.trf.xlu0
    %v424 = vpop.trf.xlu0
    %s425 = scalar_lea.vmem [#allocation2], 768
    %426 = vst.msk [vmem:[%s425] sm:$0xff] %vm131, %v409
    %427 = vst.msk [vmem:[%s425 + $0x8] sm:$0xff] %vm131, %v410
    %428 = vst.msk [vmem:[%s425 + $0x10] sm:$0xff] %vm131, %v411
    %429 = vst.msk [vmem:[%s425 + $0x18] sm:$0xff] %vm131, %v412
    %430 = vst.msk [vmem:[%s425 + $0x20] sm:$0xff] %vm131, %v413
    %431 = vst.msk [vmem:[%s425 + $0x28] sm:$0xff] %vm131, %v414
    %432 = vst.msk [vmem:[%s425 + $0x30] sm:$0xff] %vm131, %v415
    %433 = vst.msk [vmem:[%s425 + $0x38] sm:$0xff] %vm131, %v416
    %434 = vst.msk [vmem:[%s425 + $0x40] sm:$0xff] %vm131, %v417
    %435 = vst.msk [vmem:[%s425 + $0x48] sm:$0xff] %vm131, %v418
    %436 = vst.msk [vmem:[%s425 + $0x50] sm:$0xff] %vm131, %v419
    %437 = vst.msk [vmem:[%s425 + $0x58] sm:$0xff] %vm131, %v420
    %438 = vst.msk [vmem:[%s425 + $0x60] sm:$0xff] %vm131, %v421
    %439 = vst.msk [vmem:[%s425 + $0x68] sm:$0xff] %vm131, %v422
    %440 = vst.msk [vmem:[%s425 + $0x70] sm:$0xff] %vm131, %v423
    %441 = vst.msk [vmem:[%s425 + $0x78] sm:$0xff] %vm131, %v424
    %442 = vxpose.xlu0.b32.start [1/16] %v97, 128
    %443 = vxpose.xlu0.b32.cont [2/16] 0.0, 128
    %444 = vxpose.xlu0.b32.cont [3/16] 0.0, 128
    %445 = vxpose.xlu0.b32.cont [4/16] 0.0, 128
    %446 = vxpose.xlu0.b32.cont [5/16] 0.0, 128
    %447 = vxpose.xlu0.b32.cont [6/16] 0.0, 128
    %448 = vxpose.xlu0.b32.cont [7/16] 0.0, 128
    %449 = vxpose.xlu0.b32.cont [8/16] 0.0, 128
    %450 = vxpose.xlu0.b32.cont [9/16] 0.0, 128
    %451 = vxpose.xlu0.b32.cont [10/16] 0.0, 128
    %452 = vxpose.xlu0.b32.cont [11/16] 0.0, 128
    %453 = vxpose.xlu0.b32.cont [12/16] 0.0, 128
    %454 = vxpose.xlu0.b32.cont [13/16] 0.0, 128
    %455 = vxpose.xlu0.b32.cont [14/16] 0.0, 128
    %456 = vxpose.xlu0.b32.cont [15/16] 0.0, 128
    %457 = vxpose.xlu0.b32.end [16/16] 0.0, 128
    %v458 = vpop.trf.xlu0
    %v459 = vpop.trf.xlu0
    %v460 = vpop.trf.xlu0
    %v461 = vpop.trf.xlu0
    %v462 = vpop.trf.xlu0
    %v463 = vpop.trf.xlu0
    %v464 = vpop.trf.xlu0
    %v465 = vpop.trf.xlu0
    %v466 = vpop.trf.xlu0
    %v467 = vpop.trf.xlu0
    %v468 = vpop.trf.xlu0
    %v469 = vpop.trf.xlu0
    %v470 = vpop.trf.xlu0
    %v471 = vpop.trf.xlu0
    %v472 = vpop.trf.xlu0
    %v473 = vpop.trf.xlu0
    %s474 = scalar_lea.vmem [#allocation2], 896
    %475 = vst.msk [vmem:[%s474] sm:$0xff] %vm131, %v458
    %476 = vst.msk [vmem:[%s474 + $0x8] sm:$0xff] %vm131, %v459
    %477 = vst.msk [vmem:[%s474 + $0x10] sm:$0xff] %vm131, %v460
    %478 = vst.msk [vmem:[%s474 + $0x18] sm:$0xff] %vm131, %v461
    %479 = vst.msk [vmem:[%s474 + $0x20] sm:$0xff] %vm131, %v462
    %480 = vst.msk [vmem:[%s474 + $0x28] sm:$0xff] %vm131, %v463
    %481 = vst.msk [vmem:[%s474 + $0x30] sm:$0xff] %vm131, %v464
    %482 = vst.msk [vmem:[%s474 + $0x38] sm:$0xff] %vm131, %v465
    %483 = vst.msk [vmem:[%s474 + $0x40] sm:$0xff] %vm131, %v466
    %484 = vst.msk [vmem:[%s474 + $0x48] sm:$0xff] %vm131, %v467
    %485 = vst.msk [vmem:[%s474 + $0x50] sm:$0xff] %vm131, %v468
    %486 = vst.msk [vmem:[%s474 + $0x58] sm:$0xff] %vm131, %v469
    %487 = vst.msk [vmem:[%s474 + $0x60] sm:$0xff] %vm131, %v470
    %488 = vst.msk [vmem:[%s474 + $0x68] sm:$0xff] %vm131, %v471
    %489 = vst.msk [vmem:[%s474 + $0x70] sm:$0xff] %vm131, %v472
    %490 = vst.msk [vmem:[%s474 + $0x78] sm:$0xff] %vm131, %v473
    %v491 = vld [vmem:[#allocation2] sm:$0xff]
    %v492 = vld [vmem:[#allocation2 + $0x8] sm:$0xff]
    %v493 = vld [vmem:[#allocation2 + $0x10] sm:$0xff]
    %v494 = vld [vmem:[#allocation2 + $0x18] sm:$0xff]
    %v495 = vld [vmem:[#allocation2 + $0x20] sm:$0xff]
    %v496 = vld [vmem:[#allocation2 + $0x28] sm:$0xff]
    %v497 = vld [vmem:[#allocation2 + $0x30] sm:$0xff]
    %v498 = vld [vmem:[#allocation2 + $0x38] sm:$0xff]
    %v499 = vld [vmem:[#allocation2 + $0x40] sm:$0xff]
    %v500 = vld [vmem:[#allocation2 + $0x48] sm:$0xff]
    %v501 = vld [vmem:[#allocation2 + $0x50] sm:$0xff]
    %v502 = vld [vmem:[#allocation2 + $0x58] sm:$0xff]
    %v503 = vld [vmem:[#allocation2 + $0x60] sm:$0xff]
    %v504 = vld [vmem:[#allocation2 + $0x68] sm:$0xff]
    %v505 = vld [vmem:[#allocation2 + $0x70] sm:$0xff]
    %v506 = vld [vmem:[#allocation2 + $0x78] sm:$0xff]
    %v507 = vld [vmem:[#allocation2 + $0x80] sm:$0xff]
    %v508 = vld [vmem:[#allocation2 + $0x88] sm:$0xff]
    %v509 = vld [vmem:[#allocation2 + $0x90] sm:$0xff]
    %v510 = vld [vmem:[#allocation2 + $0x98] sm:$0xff]
    %v511 = vld [vmem:[#allocation2 + $0xa0] sm:$0xff]
    %v512 = vld [vmem:[#allocation2 + $0xa8] sm:$0xff]
    %v513 = vld [vmem:[#allocation2 + $0xb0] sm:$0xff]
    %v514 = vld [vmem:[#allocation2 + $0xb8] sm:$0xff]
    %v515 = vld [vmem:[#allocation2 + $0xc0] sm:$0xff]
    %v516 = vld [vmem:[#allocation2 + $0xc8] sm:$0xff]
    %v517 = vld [vmem:[#allocation2 + $0xd0] sm:$0xff]
    %v518 = vld [vmem:[#allocation2 + $0xd8] sm:$0xff]
    %v519 = vld [vmem:[#allocation2 + $0xe0] sm:$0xff]
    %v520 = vld [vmem:[#allocation2 + $0xe8] sm:$0xff]
    %v521 = vld [vmem:[#allocation2 + $0xf0] sm:$0xff]
    %v522 = vld [vmem:[#allocation2 + $0xf8] sm:$0xff]
    %v523 = vld [vmem:[#allocation2 + $0x100] sm:$0xff]
    %v524 = vld [vmem:[#allocation2 + $0x108] sm:$0xff]
    %v525 = vld [vmem:[#allocation2 + $0x110] sm:$0xff]
    %v526 = vld [vmem:[#allocation2 + $0x118] sm:$0xff]
    %v527 = vld [vmem:[#allocation2 + $0x120] sm:$0xff]
    %v528 = vld [vmem:[#allocation2 + $0x128] sm:$0xff]
    %v529 = vld [vmem:[#allocation2 + $0x130] sm:$0xff]
    %v530 = vld [vmem:[#allocation2 + $0x138] sm:$0xff]
    %v531 = vld [vmem:[#allocation2 + $0x140] sm:$0xff]
    %v532 = vld [vmem:[#allocation2 + $0x148] sm:$0xff]
    %v533 = vld [vmem:[#allocation2 + $0x150] sm:$0xff]
    %v534 = vld [vmem:[#allocation2 + $0x158] sm:$0xff]
    %v535 = vld [vmem:[#allocation2 + $0x160] sm:$0xff]
    %v536 = vld [vmem:[#allocation2 + $0x168] sm:$0xff]
    %v537 = vld [vmem:[#allocation2 + $0x170] sm:$0xff]
    %v538 = vld [vmem:[#allocation2 + $0x178] sm:$0xff]
    %v539 = vld [vmem:[#allocation2 + $0x180] sm:$0xff]
    %v540 = vld [vmem:[#allocation2 + $0x188] sm:$0xff]
    %v541 = vld [vmem:[#allocation2 + $0x190] sm:$0xff]
    %v542 = vld [vmem:[#allocation2 + $0x198] sm:$0xff]
    %v543 = vld [vmem:[#allocation2 + $0x1a0] sm:$0xff]
    %v544 = vld [vmem:[#allocation2 + $0x1a8] sm:$0xff]
    %v545 = vld [vmem:[#allocation2 + $0x1b0] sm:$0xff]
    %v546 = vld [vmem:[#allocation2 + $0x1b8] sm:$0xff]
    %v547 = vld [vmem:[#allocation2 + $0x1c0] sm:$0xff]
    %v548 = vld [vmem:[#allocation2 + $0x1c8] sm:$0xff]
    %v549 = vld [vmem:[#allocation2 + $0x1d0] sm:$0xff]
    %v550 = vld [vmem:[#allocation2 + $0x1d8] sm:$0xff]
    %v551 = vld [vmem:[#allocation2 + $0x1e0] sm:$0xff]
    %v552 = vld [vmem:[#allocation2 + $0x1e8] sm:$0xff]
    %v553 = vld [vmem:[#allocation2 + $0x1f0] sm:$0xff]
    %v554 = vld [vmem:[#allocation2 + $0x1f8] sm:$0xff]
    %v555 = vld [vmem:[#allocation2 + $0x200] sm:$0xff]
    %v556 = vld [vmem:[#allocation2 + $0x208] sm:$0xff]
    %v557 = vld [vmem:[#allocation2 + $0x210] sm:$0xff]
    %v558 = vld [vmem:[#allocation2 + $0x218] sm:$0xff]
    %v559 = vld [vmem:[#allocation2 + $0x220] sm:$0xff]
    %v560 = vld [vmem:[#allocation2 + $0x228] sm:$0xff]
    %v561 = vld [vmem:[#allocation2 + $0x230] sm:$0xff]
    %v562 = vld [vmem:[#allocation2 + $0x238] sm:$0xff]
    %v563 = vld [vmem:[#allocation2 + $0x240] sm:$0xff]
    %v564 = vld [vmem:[#allocation2 + $0x248] sm:$0xff]
    %v565 = vld [vmem:[#allocation2 + $0x250] sm:$0xff]
    %v566 = vld [vmem:[#allocation2 + $0x258] sm:$0xff]
    %v567 = vld [vmem:[#allocation2 + $0x260] sm:$0xff]
    %v568 = vld [vmem:[#allocation2 + $0x268] sm:$0xff]
    %v569 = vld [vmem:[#allocation2 + $0x270] sm:$0xff]
    %v570 = vld [vmem:[#allocation2 + $0x278] sm:$0xff]
    %v571 = vld [vmem:[#allocation2 + $0x280] sm:$0xff]
    %v572 = vld [vmem:[#allocation2 + $0x288] sm:$0xff]
    %v573 = vld [vmem:[#allocation2 + $0x290] sm:$0xff]
    %v574 = vld [vmem:[#allocation2 + $0x298] sm:$0xff]
    %v575 = vld [vmem:[#allocation2 + $0x2a0] sm:$0xff]
    %v576 = vld [vmem:[#allocation2 + $0x2a8] sm:$0xff]
    %v577 = vld [vmem:[#allocation2 + $0x2b0] sm:$0xff]
    %v578 = vld [vmem:[#allocation2 + $0x2b8] sm:$0xff]
    %v579 = vld [vmem:[#allocation2 + $0x2c0] sm:$0xff]
    %v580 = vld [vmem:[#allocation2 + $0x2c8] sm:$0xff]
    %v581 = vld [vmem:[#allocation2 + $0x2d0] sm:$0xff]
    %v582 = vld [vmem:[#allocation2 + $0x2d8] sm:$0xff]
    %v583 = vld [vmem:[#allocation2 + $0x2e0] sm:$0xff]
    %v584 = vld [vmem:[#allocation2 + $0x2e8] sm:$0xff]
    %v585 = vld [vmem:[#allocation2 + $0x2f0] sm:$0xff]
    %v586 = vld [vmem:[#allocation2 + $0x2f8] sm:$0xff]
    %v587 = vld [vmem:[#allocation2 + $0x300] sm:$0xff]
    %v588 = vld [vmem:[#allocation2 + $0x308] sm:$0xff]
    %v589 = vld [vmem:[#allocation2 + $0x310] sm:$0xff]
    %v590 = vld [vmem:[#allocation2 + $0x318] sm:$0xff]
    %v591 = vld [vmem:[#allocation2 + $0x320] sm:$0xff]
    %v592 = vld [vmem:[#allocation2 + $0x328] sm:$0xff]
    %v593 = vld [vmem:[#allocation2 + $0x330] sm:$0xff]
    %v594 = vld [vmem:[#allocation2 + $0x338] sm:$0xff]
    %v595 = vld [vmem:[#allocation2 + $0x340] sm:$0xff]
    %v596 = vld [vmem:[#allocation2 + $0x348] sm:$0xff]
    %v597 = vld [vmem:[#allocation2 + $0x350] sm:$0xff]
    %v598 = vld [vmem:[#allocation2 + $0x358] sm:$0xff]
    %v599 = vld [vmem:[#allocation2 + $0x360] sm:$0xff]
    %v600 = vld [vmem:[#allocation2 + $0x368] sm:$0xff]
    %v601 = vld [vmem:[#allocation2 + $0x370] sm:$0xff]
    %v602 = vld [vmem:[#allocation2 + $0x378] sm:$0xff]
    %v603 = vld [vmem:[#allocation2 + $0x380] sm:$0xff]
    %v604 = vld [vmem:[#allocation2 + $0x388] sm:$0xff]
    %v605 = vld [vmem:[#allocation2 + $0x390] sm:$0xff]
    %v606 = vld [vmem:[#allocation2 + $0x398] sm:$0xff]
    %v607 = vld [vmem:[#allocation2 + $0x3a0] sm:$0xff]
    %v608 = vld [vmem:[#allocation2 + $0x3a8] sm:$0xff]
    %v609 = vld [vmem:[#allocation2 + $0x3b0] sm:$0xff]
    %v610 = vld [vmem:[#allocation2 + $0x3b8] sm:$0xff]
    %v611 = vld [vmem:[#allocation2 + $0x3c0] sm:$0xff]
    %v612 = vld [vmem:[#allocation2 + $0x3c8] sm:$0xff]
    %v613 = vld [vmem:[#allocation2 + $0x3d0] sm:$0xff]
    %v614 = vld [vmem:[#allocation2 + $0x3d8] sm:$0xff]
    %v615 = vld [vmem:[#allocation2 + $0x3e0] sm:$0xff]
    %v616 = vld [vmem:[#allocation2 + $0x3e8] sm:$0xff]
    %v617 = vld [vmem:[#allocation2 + $0x3f0] sm:$0xff]
    %v618 = vld [vmem:[#allocation2 + $0x3f8] sm:$0xff]
    %v619 = vlaneseq
    %v620 = vshrl.u32 %v619, 7
    %v621 = vadd.s32 %v620, 8
    %v622 = vadd.s32 %v620, 16
    %v623 = vadd.s32 %v620, 24
    %v624 = vadd.s32 %v620, 32
    %v625 = vadd.s32 %v620, 40
    %v626 = vadd.s32 %v620, 48
    %v627 = vadd.s32 %v620, 56
    %v628 = vadd.s32 %v620, 64
    %v629 = vadd.s32 %v620, 72
    %v630 = vadd.s32 %v620, 80
    %v631 = vadd.s32 %v620, 88
    %v632 = vadd.s32 %v620, 96
    %v633 = vadd.s32 %v620, 104
    %v634 = vadd.s32 %v620, 112
    %v635 = vadd.s32 %v620, 120
    %vm636 = vcmp.lt.s32.totalorder %v620, 32
    %vm637 = vcmp.lt.s32.totalorder %v621, 32
    %vm638 = vcmp.lt.s32.totalorder %v622, 32
    %vm639 = vcmp.lt.s32.totalorder %v623, 32
    %vm640 = vcmp.lt.s32.totalorder %v624, 32
    %vm641 = vcmp.lt.s32.totalorder %v625, 32
    %vm642 = vcmp.lt.s32.totalorder %v626, 32
    %vm643 = vcmp.lt.s32.totalorder %v627, 32
    %vm644 = vcmp.lt.s32.totalorder %v628, 32
    %vm645 = vcmp.lt.s32.totalorder %v629, 32
    %vm646 = vcmp.lt.s32.totalorder %v630, 32
    %vm647 = vcmp.lt.s32.totalorder %v631, 32
    %vm648 = vcmp.lt.s32.totalorder %v632, 32
    %vm649 = vcmp.lt.s32.totalorder %v633, 32
    %vm650 = vcmp.lt.s32.totalorder %v634, 32
    %vm651 = vcmp.lt.s32.totalorder %v635, 32
    %v652 = vsel %vm636, 1, 0
    %v653 = vsel %vm637, 1, 0
    %v654 = vsel %vm638, 1, 0
    %v655 = vsel %vm639, 1, 0
    %v656 = vsel %vm640, 1, 0
    %v657 = vsel %vm641, 1, 0
    %v658 = vsel %vm642, 1, 0
    %v659 = vsel %vm643, 1, 0
    %v660 = vsel %vm644, 1, 0
    %v661 = vsel %vm645, 1, 0
    %v662 = vsel %vm646, 1, 0
    %v663 = vsel %vm647, 1, 0
    %v664 = vsel %vm648, 1, 0
    %v665 = vsel %vm649, 1, 0
    %v666 = vsel %vm650, 1, 0
    %v667 = vsel %vm651, 1, 0
    %v668 = vcvt.s32.f32 %v652
    %v669 = vcvt.s32.f32 %v653
    %v670 = vcvt.s32.f32 %v654
    %v671 = vcvt.s32.f32 %v655
    %v672 = vcvt.s32.f32 %v656
    %v673 = vcvt.s32.f32 %v657
    %v674 = vcvt.s32.f32 %v658
    %v675 = vcvt.s32.f32 %v659
    %v676 = vcvt.s32.f32 %v660
    %v677 = vcvt.s32.f32 %v661
    %v678 = vcvt.s32.f32 %v662
    %v679 = vcvt.s32.f32 %v663
    %v680 = vcvt.s32.f32 %v664
    %v681 = vcvt.s32.f32 %v665
    %v682 = vcvt.s32.f32 %v666
    %v683 = vcvt.s32.f32 %v667
    %v684 = vld [vmem:[%s3] sm:$0xff]
    %v685 = vld [vmem:[%s4] sm:$0x1]
    %v686 = vld [vmem:[%s5] sm:$0xff]
    %v687 = vld [vmem:[%s5 + $0x8] sm:$0xff]
    %v688 = vld [vmem:[%s5 + $0x10] sm:$0xff]
    %v689 = vld [vmem:[%s5 + $0x18] sm:$0xff]
    %v690 = vld [vmem:[%s5 + $0x20] sm:$0xff]
    %v691 = vld [vmem:[%s5 + $0x28] sm:$0xff]
    %v692 = vld [vmem:[%s5 + $0x30] sm:$0xff]
    %v693 = vld [vmem:[%s5 + $0x38] sm:$0xff]
    %v694 = vld [vmem:[%s5 + $0x40] sm:$0xff]
    %v695 = vld [vmem:[%s5 + $0x48] sm:$0xff]
    %v696 = vld [vmem:[%s5 + $0x50] sm:$0xff]
    %v697 = vld [vmem:[%s5 + $0x58] sm:$0xff]
    %v698 = vld [vmem:[%s5 + $0x60] sm:$0xff]
    %v699 = vld [vmem:[%s5 + $0x68] sm:$0xff]
    %v700 = vld [vmem:[%s5 + $0x70] sm:$0xff]
    %v701 = vld [vmem:[%s5 + $0x78] sm:$0xff]
    %v703 = vperm.slane %v685, 0
    %v706 = vsel %vm131, %v491, 0
    %v709 = vsel %vm131, %v492, 0
    %v712 = vsel %vm131, %v493, 0
    %v715 = vsel %vm131, %v494, 0
    %v718 = vsel %vm131, %v495, 0
    %v721 = vsel %vm131, %v496, 0
    %v724 = vsel %vm131, %v497, 0
    %v727 = vsel %vm131, %v498, 0
    %v730 = vsel %vm131, %v499, 0
    %v733 = vsel %vm131, %v500, 0
    %v736 = vsel %vm131, %v501, 0
    %v739 = vsel %vm131, %v502, 0
    %v742 = vsel %vm131, %v503, 0
    %v745 = vsel %vm131, %v504, 0
    %v748 = vsel %vm131, %v505, 0
    %v751 = vsel %vm131, %v506, 0
    %v754 = vsel %vm131, %v507, 0
    %v757 = vsel %vm131, %v508, 0
    %v760 = vsel %vm131, %v509, 0
    %v763 = vsel %vm131, %v510, 0
    %v766 = vsel %vm131, %v511, 0
    %v769 = vsel %vm131, %v512, 0
    %v772 = vsel %vm131, %v513, 0
    %v775 = vsel %vm131, %v514, 0
    %v778 = vsel %vm131, %v515, 0
    %v781 = vsel %vm131, %v516, 0
    %v784 = vsel %vm131, %v517, 0
    %v787 = vsel %vm131, %v518, 0
    %v790 = vsel %vm131, %v519, 0
    %v793 = vsel %vm131, %v520, 0
    %v796 = vsel %vm131, %v521, 0
    %v799 = vsel %vm131, %v522, 0
    %v802 = vsel %vm131, %v523, 0
    %v805 = vsel %vm131, %v524, 0
    %v808 = vsel %vm131, %v525, 0
    %v811 = vsel %vm131, %v526, 0
    %v814 = vsel %vm131, %v527, 0
    %v817 = vsel %vm131, %v528, 0
    %v820 = vsel %vm131, %v529, 0
    %v823 = vsel %vm131, %v530, 0
    %v826 = vsel %vm131, %v531, 0
    %v829 = vsel %vm131, %v532, 0
    %v832 = vsel %vm131, %v533, 0
    %v835 = vsel %vm131, %v534, 0
    %v838 = vsel %vm131, %v535, 0
    %v841 = vsel %vm131, %v536, 0
    %v844 = vsel %vm131, %v537, 0
    %v847 = vsel %vm131, %v538, 0
    %v850 = vsel %vm131, %v539, 0
    %v853 = vsel %vm131, %v540, 0
    %v856 = vsel %vm131, %v541, 0
    %v859 = vsel %vm131, %v542, 0
    %v862 = vsel %vm131, %v543, 0
    %v865 = vsel %vm131, %v544, 0
    %v868 = vsel %vm131, %v545, 0
    %v871 = vsel %vm131, %v546, 0
    %v874 = vsel %vm131, %v547, 0
    %v877 = vsel %vm131, %v548, 0
    %v880 = vsel %vm131, %v549, 0
    %v883 = vsel %vm131, %v550, 0
    %v886 = vsel %vm131, %v551, 0
    %v889 = vsel %vm131, %v552, 0
    %v892 = vsel %vm131, %v553, 0
    %v895 = vsel %vm131, %v554, 0
    %v898 = vsel %vm131, %v555, 0
    %v901 = vsel %vm131, %v556, 0
    %v904 = vsel %vm131, %v557, 0
    %v907 = vsel %vm131, %v558, 0
    %v910 = vsel %vm131, %v559, 0
    %v913 = vsel %vm131, %v560, 0
    %v916 = vsel %vm131, %v561, 0
    %v919 = vsel %vm131, %v562, 0
    %v922 = vsel %vm131, %v563, 0
    %v925 = vsel %vm131, %v564, 0
    %v928 = vsel %vm131, %v565, 0
    %v931 = vsel %vm131, %v566, 0
    %v934 = vsel %vm131, %v567, 0
    %v937 = vsel %vm131, %v568, 0
    %v940 = vsel %vm131, %v569, 0
    %v943 = vsel %vm131, %v570, 0
    %v946 = vsel %vm131, %v571, 0
    %v949 = vsel %vm131, %v572, 0
    %v952 = vsel %vm131, %v573, 0
    %v955 = vsel %vm131, %v574, 0
    %v958 = vsel %vm131, %v575, 0
    %v961 = vsel %vm131, %v576, 0
    %v964 = vsel %vm131, %v577, 0
    %v967 = vsel %vm131, %v578, 0
    %v970 = vsel %vm131, %v579, 0
    %v973 = vsel %vm131, %v580, 0
    %v976 = vsel %vm131, %v581, 0
    %v979 = vsel %vm131, %v582, 0
    %v982 = vsel %vm131, %v583, 0
    %v985 = vsel %vm131, %v584, 0
    %v988 = vsel %vm131, %v585, 0
    %v991 = vsel %vm131, %v586, 0
    %v994 = vsel %vm131, %v587, 0
    %v997 = vsel %vm131, %v588, 0
    %v1000 = vsel %vm131, %v589, 0
    %v1003 = vsel %vm131, %v590, 0
    %v1006 = vsel %vm131, %v591, 0
    %v1009 = vsel %vm131, %v592, 0
    %v1012 = vsel %vm131, %v593, 0
    %v1015 = vsel %vm131, %v594, 0
    %v1018 = vsel %vm131, %v595, 0
    %v1021 = vsel %vm131, %v596, 0
    %v1024 = vsel %vm131, %v597, 0
    %v1027 = vsel %vm131, %v598, 0
    %v1030 = vsel %vm131, %v599, 0
    %v1033 = vsel %vm131, %v600, 0
    %v1036 = vsel %vm131, %v601, 0
    %v1039 = vsel %vm131, %v602, 0
    %v1042 = vsel %vm131, %v603, 0
    %v1045 = vsel %vm131, %v604, 0
    %v1048 = vsel %vm131, %v605, 0
    %v1051 = vsel %vm131, %v606, 0
    %v1054 = vsel %vm131, %v607, 0
    %v1057 = vsel %vm131, %v608, 0
    %v1060 = vsel %vm131, %v609, 0
    %v1063 = vsel %vm131, %v610, 0
    %v1066 = vsel %vm131, %v611, 0
    %v1069 = vsel %vm131, %v612, 0
    %v1072 = vsel %vm131, %v613, 0
    %v1075 = vsel %vm131, %v614, 0
    %v1078 = vsel %vm131, %v615, 0
    %v1081 = vsel %vm131, %v616, 0
    %v1084 = vsel %vm131, %v617, 0
    %v1087 = vsel %vm131, %v618, 0
    %1089 = vmatpush.msra.mxu0 0.0
    %1090 = vmatpush.msra.mxu0 0.0
    %1091 = vmatpush.msra.mxu0 0.0
    %1092 = vmatpush.msra.mxu0 0.0
    %1093 = vmatpush.msra.mxu0 0.0
    %1094 = vmatpush.msra.mxu0 0.0
    %1095 = vmatpush.msra.mxu0 0.0
    %1096 = vmatpush.msra.mxu0 0.0
    %1097 = vmatpush.msra.mxu0 0.0
    %1098 = vmatpush.msra.mxu0 0.0
    %1099 = vmatpush.msra.mxu0 0.0
    %1100 = vmatpush.msra.mxu0 0.0
    %1101 = vmatpush.msra.mxu0 0.0
    %1102 = vmatpush.msra.mxu0 0.0
    %1103 = vmatpush.msra.mxu0 0.0
    %1104 = vmatpush.msra.mxu0 %v684
    %1105 = vmatmul.f32.gmra.mxu0 %v706
    %v1106 = vpop.f32.mrf.mxu0
    %v1107 = vadd.f32 %v703, %v1106
    %1108 = vmatmul.f32.gmra.mxu0 %v709
    %v1109 = vpop.f32.mrf.mxu0
    %v1110 = vadd.f32 %v703, %v1109
    %1111 = vmatmul.f32.gmra.mxu0 %v712
    %v1112 = vpop.f32.mrf.mxu0
    %v1113 = vadd.f32 %v703, %v1112
    %1114 = vmatmul.f32.gmra.mxu0 %v715
    %v1115 = vpop.f32.mrf.mxu0
    %v1116 = vadd.f32 %v703, %v1115
    %1117 = vmatmul.f32.gmra.mxu0 %v718
    %v1118 = vpop.f32.mrf.mxu0
    %v1119 = vadd.f32 %v703, %v1118
    %1120 = vmatmul.f32.gmra.mxu0 %v721
    %v1121 = vpop.f32.mrf.mxu0
    %v1122 = vadd.f32 %v703, %v1121
    %1123 = vmatmul.f32.gmra.mxu0 %v724
    %v1124 = vpop.f32.mrf.mxu0
    %v1125 = vadd.f32 %v703, %v1124
    %1126 = vmatmul.f32.gmra.mxu0 %v727
    %v1127 = vpop.f32.mrf.mxu0
    %v1128 = vadd.f32 %v703, %v1127
    %1129 = vmatmul.f32.gmra.mxu0 %v730
    %v1130 = vpop.f32.mrf.mxu0
    %v1131 = vadd.f32 %v703, %v1130
    %1132 = vmatmul.f32.gmra.mxu0 %v733
    %v1133 = vpop.f32.mrf.mxu0
    %v1134 = vadd.f32 %v703, %v1133
    %1135 = vmatmul.f32.gmra.mxu0 %v736
    %v1136 = vpop.f32.mrf.mxu0
    %v1137 = vadd.f32 %v703, %v1136
    %1138 = vmatmul.f32.gmra.mxu0 %v739
    %v1139 = vpop.f32.mrf.mxu0
    %v1140 = vadd.f32 %v703, %v1139
    %1141 = vmatmul.f32.gmra.mxu0 %v742
    %v1142 = vpop.f32.mrf.mxu0
    %v1143 = vadd.f32 %v703, %v1142
    %1144 = vmatmul.f32.gmra.mxu0 %v745
    %v1145 = vpop.f32.mrf.mxu0
    %v1146 = vadd.f32 %v703, %v1145
    %1147 = vmatmul.f32.gmra.mxu0 %v748
    %v1148 = vpop.f32.mrf.mxu0
    %v1149 = vadd.f32 %v703, %v1148
    %1150 = vmatmul.f32.gmra.mxu0 %v751
    %v1151 = vpop.f32.mrf.mxu0
    %v1152 = vadd.f32 %v703, %v1151
    %1153 = vmatmul.f32.gmra.mxu0 %v754
    %v1154 = vpop.f32.mrf.mxu0
    %v1155 = vadd.f32 %v703, %v1154
    %1156 = vmatmul.f32.gmra.mxu0 %v757
    %v1157 = vpop.f32.mrf.mxu0
    %v1158 = vadd.f32 %v703, %v1157
    %1159 = vmatmul.f32.gmra.mxu0 %v760
    %v1160 = vpop.f32.mrf.mxu0
    %v1161 = vadd.f32 %v703, %v1160
    %1162 = vmatmul.f32.gmra.mxu0 %v763
    %v1163 = vpop.f32.mrf.mxu0
    %v1164 = vadd.f32 %v703, %v1163
    %1165 = vmatmul.f32.gmra.mxu0 %v766
    %v1166 = vpop.f32.mrf.mxu0
    %v1167 = vadd.f32 %v703, %v1166
    %1168 = vmatmul.f32.gmra.mxu0 %v769
    %v1169 = vpop.f32.mrf.mxu0
    %v1170 = vadd.f32 %v703, %v1169
    %1171 = vmatmul.f32.gmra.mxu0 %v772
    %v1172 = vpop.f32.mrf.mxu0
    %v1173 = vadd.f32 %v703, %v1172
    %1174 = vmatmul.f32.gmra.mxu0 %v775
    %v1175 = vpop.f32.mrf.mxu0
    %v1176 = vadd.f32 %v703, %v1175
    %1177 = vmatmul.f32.gmra.mxu0 %v778
    %v1178 = vpop.f32.mrf.mxu0
    %v1179 = vadd.f32 %v703, %v1178
    %1180 = vmatmul.f32.gmra.mxu0 %v781
    %v1181 = vpop.f32.mrf.mxu0
    %v1182 = vadd.f32 %v703, %v1181
    %1183 = vmatmul.f32.gmra.mxu0 %v784
    %v1184 = vpop.f32.mrf.mxu0
    %v1185 = vadd.f32 %v703, %v1184
    %1186 = vmatmul.f32.gmra.mxu0 %v787
    %v1187 = vpop.f32.mrf.mxu0
    %v1188 = vadd.f32 %v703, %v1187
    %1189 = vmatmul.f32.gmra.mxu0 %v790
    %v1190 = vpop.f32.mrf.mxu0
    %v1191 = vadd.f32 %v703, %v1190
    %1192 = vmatmul.f32.gmra.mxu0 %v793
    %v1193 = vpop.f32.mrf.mxu0
    %v1194 = vadd.f32 %v703, %v1193
    %1195 = vmatmul.f32.gmra.mxu0 %v796
    %v1196 = vpop.f32.mrf.mxu0
    %v1197 = vadd.f32 %v703, %v1196
    %1198 = vmatmul.f32.gmra.mxu0 %v799
    %v1199 = vpop.f32.mrf.mxu0
    %v1200 = vadd.f32 %v703, %v1199
    %1201 = vmatmul.f32.gmra.mxu0 %v802
    %v1202 = vpop.f32.mrf.mxu0
    %v1203 = vadd.f32 %v703, %v1202
    %1204 = vmatmul.f32.gmra.mxu0 %v805
    %v1205 = vpop.f32.mrf.mxu0
    %v1206 = vadd.f32 %v703, %v1205
    %1207 = vmatmul.f32.gmra.mxu0 %v808
    %v1208 = vpop.f32.mrf.mxu0
    %v1209 = vadd.f32 %v703, %v1208
    %1210 = vmatmul.f32.gmra.mxu0 %v811
    %v1211 = vpop.f32.mrf.mxu0
    %v1212 = vadd.f32 %v703, %v1211
    %1213 = vmatmul.f32.gmra.mxu0 %v814
    %v1214 = vpop.f32.mrf.mxu0
    %v1215 = vadd.f32 %v703, %v1214
    %1216 = vmatmul.f32.gmra.mxu0 %v817
    %v1217 = vpop.f32.mrf.mxu0
    %v1218 = vadd.f32 %v703, %v1217
    %1219 = vmatmul.f32.gmra.mxu0 %v820
    %v1220 = vpop.f32.mrf.mxu0
    %v1221 = vadd.f32 %v703, %v1220
    %1222 = vmatmul.f32.gmra.mxu0 %v823
    %v1223 = vpop.f32.mrf.mxu0
    %v1224 = vadd.f32 %v703, %v1223
    %1225 = vmatmul.f32.gmra.mxu0 %v826
    %v1226 = vpop.f32.mrf.mxu0
    %v1227 = vadd.f32 %v703, %v1226
    %1228 = vmatmul.f32.gmra.mxu0 %v829
    %v1229 = vpop.f32.mrf.mxu0
    %v1230 = vadd.f32 %v703, %v1229
    %1231 = vmatmul.f32.gmra.mxu0 %v832
    %v1232 = vpop.f32.mrf.mxu0
    %v1233 = vadd.f32 %v703, %v1232
    %1234 = vmatmul.f32.gmra.mxu0 %v835
    %v1235 = vpop.f32.mrf.mxu0
    %v1236 = vadd.f32 %v703, %v1235
    %1237 = vmatmul.f32.gmra.mxu0 %v838
    %v1238 = vpop.f32.mrf.mxu0
    %v1239 = vadd.f32 %v703, %v1238
    %1240 = vmatmul.f32.gmra.mxu0 %v841
    %v1241 = vpop.f32.mrf.mxu0
    %v1242 = vadd.f32 %v703, %v1241
    %1243 = vmatmul.f32.gmra.mxu0 %v844
    %v1244 = vpop.f32.mrf.mxu0
    %v1245 = vadd.f32 %v703, %v1244
    %1246 = vmatmul.f32.gmra.mxu0 %v847
    %v1247 = vpop.f32.mrf.mxu0
    %v1248 = vadd.f32 %v703, %v1247
    %1249 = vmatmul.f32.gmra.mxu0 %v850
    %v1250 = vpop.f32.mrf.mxu0
    %v1251 = vadd.f32 %v703, %v1250
    %1252 = vmatmul.f32.gmra.mxu0 %v853
    %v1253 = vpop.f32.mrf.mxu0
    %v1254 = vadd.f32 %v703, %v1253
    %1255 = vmatmul.f32.gmra.mxu0 %v856
    %v1256 = vpop.f32.mrf.mxu0
    %v1257 = vadd.f32 %v703, %v1256
    %1258 = vmatmul.f32.gmra.mxu0 %v859
    %v1259 = vpop.f32.mrf.mxu0
    %v1260 = vadd.f32 %v703, %v1259
    %1261 = vmatmul.f32.gmra.mxu0 %v862
    %v1262 = vpop.f32.mrf.mxu0
    %v1263 = vadd.f32 %v703, %v1262
    %1264 = vmatmul.f32.gmra.mxu0 %v865
    %v1265 = vpop.f32.mrf.mxu0
    %v1266 = vadd.f32 %v703, %v1265
    %1267 = vmatmul.f32.gmra.mxu0 %v868
    %v1268 = vpop.f32.mrf.mxu0
    %v1269 = vadd.f32 %v703, %v1268
    %1270 = vmatmul.f32.gmra.mxu0 %v871
    %v1271 = vpop.f32.mrf.mxu0
    %v1272 = vadd.f32 %v703, %v1271
    %1273 = vmatmul.f32.gmra.mxu0 %v874
    %v1274 = vpop.f32.mrf.mxu0
    %v1275 = vadd.f32 %v703, %v1274
    %1276 = vmatmul.f32.gmra.mxu0 %v877
    %v1277 = vpop.f32.mrf.mxu0
    %v1278 = vadd.f32 %v703, %v1277
    %1279 = vmatmul.f32.gmra.mxu0 %v880
    %v1280 = vpop.f32.mrf.mxu0
    %v1281 = vadd.f32 %v703, %v1280
    %1282 = vmatmul.f32.gmra.mxu0 %v883
    %v1283 = vpop.f32.mrf.mxu0
    %v1284 = vadd.f32 %v703, %v1283
    %1285 = vmatmul.f32.gmra.mxu0 %v886
    %v1286 = vpop.f32.mrf.mxu0
    %v1287 = vadd.f32 %v703, %v1286
    %1288 = vmatmul.f32.gmra.mxu0 %v889
    %v1289 = vpop.f32.mrf.mxu0
    %v1290 = vadd.f32 %v703, %v1289
    %1291 = vmatmul.f32.gmra.mxu0 %v892
    %v1292 = vpop.f32.mrf.mxu0
    %v1293 = vadd.f32 %v703, %v1292
    %1294 = vmatmul.f32.gmra.mxu0 %v895
    %v1295 = vpop.f32.mrf.mxu0
    %v1296 = vadd.f32 %v703, %v1295
    %1297 = vmatmul.f32.gmra.mxu0 %v898
    %v1298 = vpop.f32.mrf.mxu0
    %v1299 = vadd.f32 %v703, %v1298
    %1300 = vmatmul.f32.gmra.mxu0 %v901
    %v1301 = vpop.f32.mrf.mxu0
    %v1302 = vadd.f32 %v703, %v1301
    %1303 = vmatmul.f32.gmra.mxu0 %v904
    %v1304 = vpop.f32.mrf.mxu0
    %v1305 = vadd.f32 %v703, %v1304
    %1306 = vmatmul.f32.gmra.mxu0 %v907
    %v1307 = vpop.f32.mrf.mxu0
    %v1308 = vadd.f32 %v703, %v1307
    %1309 = vmatmul.f32.gmra.mxu0 %v910
    %v1310 = vpop.f32.mrf.mxu0
    %v1311 = vadd.f32 %v703, %v1310
    %1312 = vmatmul.f32.gmra.mxu0 %v913
    %v1313 = vpop.f32.mrf.mxu0
    %v1314 = vadd.f32 %v703, %v1313
    %1315 = vmatmul.f32.gmra.mxu0 %v916
    %v1316 = vpop.f32.mrf.mxu0
    %v1317 = vadd.f32 %v703, %v1316
    %1318 = vmatmul.f32.gmra.mxu0 %v919
    %v1319 = vpop.f32.mrf.mxu0
    %v1320 = vadd.f32 %v703, %v1319
    %1321 = vmatmul.f32.gmra.mxu0 %v922
    %v1322 = vpop.f32.mrf.mxu0
    %v1323 = vadd.f32 %v703, %v1322
    %1324 = vmatmul.f32.gmra.mxu0 %v925
    %v1325 = vpop.f32.mrf.mxu0
    %v1326 = vadd.f32 %v703, %v1325
    %1327 = vmatmul.f32.gmra.mxu0 %v928
    %v1328 = vpop.f32.mrf.mxu0
    %v1329 = vadd.f32 %v703, %v1328
    %1330 = vmatmul.f32.gmra.mxu0 %v931
    %v1331 = vpop.f32.mrf.mxu0
    %v1332 = vadd.f32 %v703, %v1331
    %1333 = vmatmul.f32.gmra.mxu0 %v934
    %v1334 = vpop.f32.mrf.mxu0
    %v1335 = vadd.f32 %v703, %v1334
    %1336 = vmatmul.f32.gmra.mxu0 %v937
    %v1337 = vpop.f32.mrf.mxu0
    %v1338 = vadd.f32 %v703, %v1337
    %1339 = vmatmul.f32.gmra.mxu0 %v940
    %v1340 = vpop.f32.mrf.mxu0
    %v1341 = vadd.f32 %v703, %v1340
    %1342 = vmatmul.f32.gmra.mxu0 %v943
    %v1343 = vpop.f32.mrf.mxu0
    %v1344 = vadd.f32 %v703, %v1343
    %1345 = vmatmul.f32.gmra.mxu0 %v946
    %v1346 = vpop.f32.mrf.mxu0
    %v1347 = vadd.f32 %v703, %v1346
    %1348 = vmatmul.f32.gmra.mxu0 %v949
    %v1349 = vpop.f32.mrf.mxu0
    %v1350 = vadd.f32 %v703, %v1349
    %1351 = vmatmul.f32.gmra.mxu0 %v952
    %v1352 = vpop.f32.mrf.mxu0
    %v1353 = vadd.f32 %v703, %v1352
    %1354 = vmatmul.f32.gmra.mxu0 %v955
    %v1355 = vpop.f32.mrf.mxu0
    %v1356 = vadd.f32 %v703, %v1355
    %1357 = vmatmul.f32.gmra.mxu0 %v958
    %v1358 = vpop.f32.mrf.mxu0
    %v1359 = vadd.f32 %v703, %v1358
    %1360 = vmatmul.f32.gmra.mxu0 %v961
    %v1361 = vpop.f32.mrf.mxu0
    %v1362 = vadd.f32 %v703, %v1361
    %1363 = vmatmul.f32.gmra.mxu0 %v964
    %v1364 = vpop.f32.mrf.mxu0
    %v1365 = vadd.f32 %v703, %v1364
    %1366 = vmatmul.f32.gmra.mxu0 %v967
    %v1367 = vpop.f32.mrf.mxu0
    %v1368 = vadd.f32 %v703, %v1367
    %1369 = vmatmul.f32.gmra.mxu0 %v970
    %v1370 = vpop.f32.mrf.mxu0
    %v1371 = vadd.f32 %v703, %v1370
    %1372 = vmatmul.f32.gmra.mxu0 %v973
    %v1373 = vpop.f32.mrf.mxu0
    %v1374 = vadd.f32 %v703, %v1373
    %1375 = vmatmul.f32.gmra.mxu0 %v976
    %v1376 = vpop.f32.mrf.mxu0
    %v1377 = vadd.f32 %v703, %v1376
    %1378 = vmatmul.f32.gmra.mxu0 %v979
    %v1379 = vpop.f32.mrf.mxu0
    %v1380 = vadd.f32 %v703, %v1379
    %1381 = vmatmul.f32.gmra.mxu0 %v982
    %v1382 = vpop.f32.mrf.mxu0
    %v1383 = vadd.f32 %v703, %v1382
    %1384 = vmatmul.f32.gmra.mxu0 %v985
    %v1385 = vpop.f32.mrf.mxu0
    %v1386 = vadd.f32 %v703, %v1385
    %1387 = vmatmul.f32.gmra.mxu0 %v988
    %v1388 = vpop.f32.mrf.mxu0
    %v1389 = vadd.f32 %v703, %v1388
    %1390 = vmatmul.f32.gmra.mxu0 %v991
    %v1391 = vpop.f32.mrf.mxu0
    %v1392 = vadd.f32 %v703, %v1391
    %1393 = vmatmul.f32.gmra.mxu0 %v994
    %v1394 = vpop.f32.mrf.mxu0
    %v1395 = vadd.f32 %v703, %v1394
    %1396 = vmatmul.f32.gmra.mxu0 %v997
    %v1397 = vpop.f32.mrf.mxu0
    %v1398 = vadd.f32 %v703, %v1397
    %1399 = vmatmul.f32.gmra.mxu0 %v1000
    %v1400 = vpop.f32.mrf.mxu0
    %v1401 = vadd.f32 %v703, %v1400
    %1402 = vmatmul.f32.gmra.mxu0 %v1003
    %v1403 = vpop.f32.mrf.mxu0
    %v1404 = vadd.f32 %v703, %v1403
    %1405 = vmatmul.f32.gmra.mxu0 %v1006
    %v1406 = vpop.f32.mrf.mxu0
    %v1407 = vadd.f32 %v703, %v1406
    %1408 = vmatmul.f32.gmra.mxu0 %v1009
    %v1409 = vpop.f32.mrf.mxu0
    %v1410 = vadd.f32 %v703, %v1409
    %1411 = vmatmul.f32.gmra.mxu0 %v1012
    %v1412 = vpop.f32.mrf.mxu0
    %v1413 = vadd.f32 %v703, %v1412
    %1414 = vmatmul.f32.gmra.mxu0 %v1015
    %v1415 = vpop.f32.mrf.mxu0
    %v1416 = vadd.f32 %v703, %v1415
    %1417 = vmatmul.f32.gmra.mxu0 %v1018
    %v1418 = vpop.f32.mrf.mxu0
    %v1419 = vadd.f32 %v703, %v1418
    %1420 = vmatmul.f32.gmra.mxu0 %v1021
    %v1421 = vpop.f32.mrf.mxu0
    %v1422 = vadd.f32 %v703, %v1421
    %1423 = vmatmul.f32.gmra.mxu0 %v1024
    %v1424 = vpop.f32.mrf.mxu0
    %v1425 = vadd.f32 %v703, %v1424
    %1426 = vmatmul.f32.gmra.mxu0 %v1027
    %v1427 = vpop.f32.mrf.mxu0
    %v1428 = vadd.f32 %v703, %v1427
    %1429 = vmatmul.f32.gmra.mxu0 %v1030
    %v1430 = vpop.f32.mrf.mxu0
    %v1431 = vadd.f32 %v703, %v1430
    %1432 = vmatmul.f32.gmra.mxu0 %v1033
    %v1433 = vpop.f32.mrf.mxu0
    %v1434 = vadd.f32 %v703, %v1433
    %1435 = vmatmul.f32.gmra.mxu0 %v1036
    %v1436 = vpop.f32.mrf.mxu0
    %v1437 = vadd.f32 %v703, %v1436
    %1438 = vmatmul.f32.gmra.mxu0 %v1039
    %v1439 = vpop.f32.mrf.mxu0
    %v1440 = vadd.f32 %v703, %v1439
    %1441 = vmatmul.f32.gmra.mxu0 %v1042
    %v1442 = vpop.f32.mrf.mxu0
    %v1443 = vadd.f32 %v703, %v1442
    %1444 = vmatmul.f32.gmra.mxu0 %v1045
    %v1445 = vpop.f32.mrf.mxu0
    %v1446 = vadd.f32 %v703, %v1445
    %1447 = vmatmul.f32.gmra.mxu0 %v1048
    %v1448 = vpop.f32.mrf.mxu0
    %v1449 = vadd.f32 %v703, %v1448
    %1450 = vmatmul.f32.gmra.mxu0 %v1051
    %v1451 = vpop.f32.mrf.mxu0
    %v1452 = vadd.f32 %v703, %v1451
    %1453 = vmatmul.f32.gmra.mxu0 %v1054
    %v1454 = vpop.f32.mrf.mxu0
    %v1455 = vadd.f32 %v703, %v1454
    %1456 = vmatmul.f32.gmra.mxu0 %v1057
    %v1457 = vpop.f32.mrf.mxu0
    %v1458 = vadd.f32 %v703, %v1457
    %1459 = vmatmul.f32.gmra.mxu0 %v1060
    %v1460 = vpop.f32.mrf.mxu0
    %v1461 = vadd.f32 %v703, %v1460
    %1462 = vmatmul.f32.gmra.mxu0 %v1063
    %v1463 = vpop.f32.mrf.mxu0
    %v1464 = vadd.f32 %v703, %v1463
    %1465 = vmatmul.f32.gmra.mxu0 %v1066
    %v1466 = vpop.f32.mrf.mxu0
    %v1467 = vadd.f32 %v703, %v1466
    %1468 = vmatmul.f32.gmra.mxu0 %v1069
    %v1469 = vpop.f32.mrf.mxu0
    %v1470 = vadd.f32 %v703, %v1469
    %1471 = vmatmul.f32.gmra.mxu0 %v1072
    %v1472 = vpop.f32.mrf.mxu0
    %v1473 = vadd.f32 %v703, %v1472
    %1474 = vmatmul.f32.gmra.mxu0 %v1075
    %v1475 = vpop.f32.mrf.mxu0
    %v1476 = vadd.f32 %v703, %v1475
    %1477 = vmatmul.f32.gmra.mxu0 %v1078
    %v1478 = vpop.f32.mrf.mxu0
    %v1479 = vadd.f32 %v703, %v1478
    %1480 = vmatmul.f32.gmra.mxu0 %v1081
    %v1481 = vpop.f32.mrf.mxu0
    %v1482 = vadd.f32 %v703, %v1481
    %1483 = vmatmul.f32.gmra.mxu0 %v1084
    %v1484 = vpop.f32.mrf.mxu0
    %v1485 = vadd.f32 %v703, %v1484
    %1486 = vmatmul.f32.gmra.mxu0 %v1087
    %v1487 = vpop.f32.mrf.mxu0
    %v1488 = vadd.f32 %v703, %v1487
    %1489 = vdwg.mxu0
    %v1490 = vmul.f32 %v1107, %v668
    %v1491 = vmul.f32 %v1110, %v669
    %v1492 = vmul.f32 %v1113, %v670
    %v1493 = vmul.f32 %v1116, %v671
    %v1494 = vmul.f32 %v1119, %v672
    %v1495 = vmul.f32 %v1122, %v673
    %v1496 = vmul.f32 %v1125, %v674
    %v1497 = vmul.f32 %v1128, %v675
    %v1498 = vmul.f32 %v1131, %v676
    %v1499 = vmul.f32 %v1134, %v677
    %v1500 = vmul.f32 %v1137, %v678
    %v1501 = vmul.f32 %v1140, %v679
    %v1502 = vmul.f32 %v1143, %v680
    %v1503 = vmul.f32 %v1146, %v681
    %v1504 = vmul.f32 %v1149, %v682
    %v1505 = vmul.f32 %v1152, %v683
    %v1506 = vmul.f32 %v1155, %v668
    %v1507 = vmul.f32 %v1158, %v669
    %v1508 = vmul.f32 %v1161, %v670
    %v1509 = vmul.f32 %v1164, %v671
    %v1510 = vmul.f32 %v1167, %v672
    %v1511 = vmul.f32 %v1170, %v673
    %v1512 = vmul.f32 %v1173, %v674
    %v1513 = vmul.f32 %v1176, %v675
    %v1514 = vmul.f32 %v1179, %v676
    %v1515 = vmul.f32 %v1182, %v677
    %v1516 = vmul.f32 %v1185, %v678
    %v1517 = vmul.f32 %v1188, %v679
    %v1518 = vmul.f32 %v1191, %v680
    %v1519 = vmul.f32 %v1194, %v681
    %v1520 = vmul.f32 %v1197, %v682
    %v1521 = vmul.f32 %v1200, %v683
    %v1522 = vmul.f32 %v1203, %v668
    %v1523 = vmul.f32 %v1206, %v669
    %v1524 = vmul.f32 %v1209, %v670
    %v1525 = vmul.f32 %v1212, %v671
    %v1526 = vmul.f32 %v1215, %v672
    %v1527 = vmul.f32 %v1218, %v673
    %v1528 = vmul.f32 %v1221, %v674
    %v1529 = vmul.f32 %v1224, %v675
    %v1530 = vmul.f32 %v1227, %v676
    %v1531 = vmul.f32 %v1230, %v677
    %v1532 = vmul.f32 %v1233, %v678
    %v1533 = vmul.f32 %v1236, %v679
    %v1534 = vmul.f32 %v1239, %v680
    %v1535 = vmul.f32 %v1242, %v681
    %v1536 = vmul.f32 %v1245, %v682
    %v1537 = vmul.f32 %v1248, %v683
    %v1538 = vmul.f32 %v1251, %v668
    %v1539 = vmul.f32 %v1254, %v669
    %v1540 = vmul.f32 %v1257, %v670
    %v1541 = vmul.f32 %v1260, %v671
    %v1542 = vmul.f32 %v1263, %v672
    %v1543 = vmul.f32 %v1266, %v673
    %v1544 = vmul.f32 %v1269, %v674
    %v1545 = vmul.f32 %v1272, %v675
    %v1546 = vmul.f32 %v1275, %v676
    %v1547 = vmul.f32 %v1278, %v677
    %v1548 = vmul.f32 %v1281, %v678
    %v1549 = vmul.f32 %v1284, %v679
    %v1550 = vmul.f32 %v1287, %v680
    %v1551 = vmul.f32 %v1290, %v681
    %v1552 = vmul.f32 %v1293, %v682
    %v1553 = vmul.f32 %v1296, %v683
    %v1554 = vmul.f32 %v1299, %v668
    %v1555 = vmul.f32 %v1302, %v669
    %v1556 = vmul.f32 %v1305, %v670
    %v1557 = vmul.f32 %v1308, %v671
    %v1558 = vmul.f32 %v1311, %v672
    %v1559 = vmul.f32 %v1314, %v673
    %v1560 = vmul.f32 %v1317, %v674
    %v1561 = vmul.f32 %v1320, %v675
    %v1562 = vmul.f32 %v1323, %v676
    %v1563 = vmul.f32 %v1326, %v677
    %v1564 = vmul.f32 %v1329, %v678
    %v1565 = vmul.f32 %v1332, %v679
    %v1566 = vmul.f32 %v1335, %v680
    %v1567 = vmul.f32 %v1338, %v681
    %v1568 = vmul.f32 %v1341, %v682
    %v1569 = vmul.f32 %v1344, %v683
    %v1570 = vmul.f32 %v1347, %v668
    %v1571 = vmul.f32 %v1350, %v669
    %v1572 = vmul.f32 %v1353, %v670
    %v1573 = vmul.f32 %v1356, %v671
    %v1574 = vmul.f32 %v1359, %v672
    %v1575 = vmul.f32 %v1362, %v673
    %v1576 = vmul.f32 %v1365, %v674
    %v1577 = vmul.f32 %v1368, %v675
    %v1578 = vmul.f32 %v1371, %v676
    %v1579 = vmul.f32 %v1374, %v677
    %v1580 = vmul.f32 %v1377, %v678
    %v1581 = vmul.f32 %v1380, %v679
    %v1582 = vmul.f32 %v1383, %v680
    %v1583 = vmul.f32 %v1386, %v681
    %v1584 = vmul.f32 %v1389, %v682
    %v1585 = vmul.f32 %v1392, %v683
    %v1586 = vmul.f32 %v1395, %v668
    %v1587 = vmul.f32 %v1398, %v669
    %v1588 = vmul.f32 %v1401, %v670
    %v1589 = vmul.f32 %v1404, %v671
    %v1590 = vmul.f32 %v1407, %v672
    %v1591 = vmul.f32 %v1410, %v673
    %v1592 = vmul.f32 %v1413, %v674
    %v1593 = vmul.f32 %v1416, %v675
    %v1594 = vmul.f32 %v1419, %v676
    %v1595 = vmul.f32 %v1422, %v677
    %v1596 = vmul.f32 %v1425, %v678
    %v1597 = vmul.f32 %v1428, %v679
    %v1598 = vmul.f32 %v1431, %v680
    %v1599 = vmul.f32 %v1434, %v681
    %v1600 = vmul.f32 %v1437, %v682
    %v1601 = vmul.f32 %v1440, %v683
    %v1602 = vmul.f32 %v1443, %v668
    %v1603 = vmul.f32 %v1446, %v669
    %v1604 = vmul.f32 %v1449, %v670
    %v1605 = vmul.f32 %v1452, %v671
    %v1606 = vmul.f32 %v1455, %v672
    %v1607 = vmul.f32 %v1458, %v673
    %v1608 = vmul.f32 %v1461, %v674
    %v1609 = vmul.f32 %v1464, %v675
    %v1610 = vmul.f32 %v1467, %v676
    %v1611 = vmul.f32 %v1470, %v677
    %v1612 = vmul.f32 %v1473, %v678
    %v1613 = vmul.f32 %v1476, %v679
    %v1614 = vmul.f32 %v1479, %v680
    %v1615 = vmul.f32 %v1482, %v681
    %v1616 = vmul.f32 %v1485, %v682
    %v1617 = vmul.f32 %v1488, %v683
    %v1618 = vsel %vm131, %v1490, 0.0
    %v1619 = vsel %vm131, %v1491, 0.0
    %v1620 = vadd.f32 %v1618, %v1619
    %v1621 = vsel %vm131, %v1492, 0.0
    %v1622 = vadd.f32 %v1620, %v1621
    %v1623 = vsel %vm131, %v1493, 0.0
    %v1624 = vadd.f32 %v1622, %v1623
    %v1625 = vsel %vm131, %v1494, 0.0
    %v1626 = vadd.f32 %v1624, %v1625
    %v1627 = vsel %vm131, %v1495, 0.0
    %v1628 = vadd.f32 %v1626, %v1627
    %v1629 = vsel %vm131, %v1496, 0.0
    %v1630 = vadd.f32 %v1628, %v1629
    %v1631 = vsel %vm131, %v1497, 0.0
    %v1632 = vadd.f32 %v1630, %v1631
    %v1633 = vsel %vm131, %v1498, 0.0
    %v1634 = vadd.f32 %v1632, %v1633
    %v1635 = vsel %vm131, %v1499, 0.0
    %v1636 = vadd.f32 %v1634, %v1635
    %v1637 = vsel %vm131, %v1500, 0.0
    %v1638 = vadd.f32 %v1636, %v1637
    %v1639 = vsel %vm131, %v1501, 0.0
    %v1640 = vadd.f32 %v1638, %v1639
    %v1641 = vsel %vm131, %v1502, 0.0
    %v1642 = vadd.f32 %v1640, %v1641
    %v1643 = vsel %vm131, %v1503, 0.0
    %v1644 = vadd.f32 %v1642, %v1643
    %v1645 = vsel %vm131, %v1504, 0.0
    %v1646 = vadd.f32 %v1644, %v1645
    %v1647 = vsel %vm131, %v1505, 0.0
    %v1648 = vadd.f32 %v1646, %v1647
    %v1649 = vrot.slane %v1648, 4
    %v1650 = vadd.f32 %v1648, %v1649
    %v1651 = vrot.slane %v1650, 2
    %v1652 = vadd.f32 %v1650, %v1651
    %v1653 = vrot.slane %v1652, 1
    %v1654 = vadd.f32 %v1652, %v1653
    %v1655 = vsel %vm131, %v1506, 0.0
    %v1656 = vsel %vm131, %v1507, 0.0
    %v1657 = vadd.f32 %v1655, %v1656
    %v1658 = vsel %vm131, %v1508, 0.0
    %v1659 = vadd.f32 %v1657, %v1658
    %v1660 = vsel %vm131, %v1509, 0.0
    %v1661 = vadd.f32 %v1659, %v1660
    %v1662 = vsel %vm131, %v1510, 0.0
    %v1663 = vadd.f32 %v1661, %v1662
    %v1664 = vsel %vm131, %v1511, 0.0
    %v1665 = vadd.f32 %v1663, %v1664
    %v1666 = vsel %vm131, %v1512, 0.0
    %v1667 = vadd.f32 %v1665, %v1666
    %v1668 = vsel %vm131, %v1513, 0.0
    %v1669 = vadd.f32 %v1667, %v1668
    %v1670 = vsel %vm131, %v1514, 0.0
    %v1671 = vadd.f32 %v1669, %v1670
    %v1672 = vsel %vm131, %v1515, 0.0
    %v1673 = vadd.f32 %v1671, %v1672
    %v1674 = vsel %vm131, %v1516, 0.0
    %v1675 = vadd.f32 %v1673, %v1674
    %v1676 = vsel %vm131, %v1517, 0.0
    %v1677 = vadd.f32 %v1675, %v1676
    %v1678 = vsel %vm131, %v1518, 0.0
    %v1679 = vadd.f32 %v1677, %v1678
    %v1680 = vsel %vm131, %v1519, 0.0
    %v1681 = vadd.f32 %v1679, %v1680
    %v1682 = vsel %vm131, %v1520, 0.0
    %v1683 = vadd.f32 %v1681, %v1682
    %v1684 = vsel %vm131, %v1521, 0.0
    %v1685 = vadd.f32 %v1683, %v1684
    %v1686 = vrot.slane %v1685, 4
    %v1687 = vadd.f32 %v1685, %v1686
    %v1688 = vrot.slane %v1687, 2
    %v1689 = vadd.f32 %v1687, %v1688
    %v1690 = vrot.slane %v1689, 1
    %v1691 = vadd.f32 %v1689, %v1690
    %v1692 = vsel %vm131, %v1522, 0.0
    %v1693 = vsel %vm131, %v1523, 0.0
    %v1694 = vadd.f32 %v1692, %v1693
    %v1695 = vsel %vm131, %v1524, 0.0
    %v1696 = vadd.f32 %v1694, %v1695
    %v1697 = vsel %vm131, %v1525, 0.0
    %v1698 = vadd.f32 %v1696, %v1697
    %v1699 = vsel %vm131, %v1526, 0.0
    %v1700 = vadd.f32 %v1698, %v1699
    %v1701 = vsel %vm131, %v1527, 0.0
    %v1702 = vadd.f32 %v1700, %v1701
    %v1703 = vsel %vm131, %v1528, 0.0
    %v1704 = vadd.f32 %v1702, %v1703
    %v1705 = vsel %vm131, %v1529, 0.0
    %v1706 = vadd.f32 %v1704, %v1705
    %v1707 = vsel %vm131, %v1530, 0.0
    %v1708 = vadd.f32 %v1706, %v1707
    %v1709 = vsel %vm131, %v1531, 0.0
    %v1710 = vadd.f32 %v1708, %v1709
    %v1711 = vsel %vm131, %v1532, 0.0
    %v1712 = vadd.f32 %v1710, %v1711
    %v1713 = vsel %vm131, %v1533, 0.0
    %v1714 = vadd.f32 %v1712, %v1713
    %v1715 = vsel %vm131, %v1534, 0.0
    %v1716 = vadd.f32 %v1714, %v1715
    %v1717 = vsel %vm131, %v1535, 0.0
    %v1718 = vadd.f32 %v1716, %v1717
    %v1719 = vsel %vm131, %v1536, 0.0
    %v1720 = vadd.f32 %v1718, %v1719
    %v1721 = vsel %vm131, %v1537, 0.0
    %v1722 = vadd.f32 %v1720, %v1721
    %v1723 = vrot.slane %v1722, 4
    %v1724 = vadd.f32 %v1722, %v1723
    %v1725 = vrot.slane %v1724, 2
    %v1726 = vadd.f32 %v1724, %v1725
    %v1727 = vrot.slane %v1726, 1
    %v1728 = vadd.f32 %v1726, %v1727
    %v1729 = vsel %vm131, %v1538, 0.0
    %v1730 = vsel %vm131, %v1539, 0.0
    %v1731 = vadd.f32 %v1729, %v1730
    %v1732 = vsel %vm131, %v1540, 0.0
    %v1733 = vadd.f32 %v1731, %v1732
    %v1734 = vsel %vm131, %v1541, 0.0
    %v1735 = vadd.f32 %v1733, %v1734
    %v1736 = vsel %vm131, %v1542, 0.0
    %v1737 = vadd.f32 %v1735, %v1736
    %v1738 = vsel %vm131, %v1543, 0.0
    %v1739 = vadd.f32 %v1737, %v1738
    %v1740 = vsel %vm131, %v1544, 0.0
    %v1741 = vadd.f32 %v1739, %v1740
    %v1742 = vsel %vm131, %v1545, 0.0
    %v1743 = vadd.f32 %v1741, %v1742
    %v1744 = vsel %vm131, %v1546, 0.0
    %v1745 = vadd.f32 %v1743, %v1744
    %v1746 = vsel %vm131, %v1547, 0.0
    %v1747 = vadd.f32 %v1745, %v1746
    %v1748 = vsel %vm131, %v1548, 0.0
    %v1749 = vadd.f32 %v1747, %v1748
    %v1750 = vsel %vm131, %v1549, 0.0
    %v1751 = vadd.f32 %v1749, %v1750
    %v1752 = vsel %vm131, %v1550, 0.0
    %v1753 = vadd.f32 %v1751, %v1752
    %v1754 = vsel %vm131, %v1551, 0.0
    %v1755 = vadd.f32 %v1753, %v1754
    %v1756 = vsel %vm131, %v1552, 0.0
    %v1757 = vadd.f32 %v1755, %v1756
    %v1758 = vsel %vm131, %v1553, 0.0
    %v1759 = vadd.f32 %v1757, %v1758
    %v1760 = vrot.slane %v1759, 4
    %v1761 = vadd.f32 %v1759, %v1760
    %v1762 = vrot.slane %v1761, 2
    %v1763 = vadd.f32 %v1761, %v1762
    %v1764 = vrot.slane %v1763, 1
    %v1765 = vadd.f32 %v1763, %v1764
    %v1766 = vsel %vm131, %v1554, 0.0
    %v1767 = vsel %vm131, %v1555, 0.0
    %v1768 = vadd.f32 %v1766, %v1767
    %v1769 = vsel %vm131, %v1556, 0.0
    %v1770 = vadd.f32 %v1768, %v1769
    %v1771 = vsel %vm131, %v1557, 0.0
    %v1772 = vadd.f32 %v1770, %v1771
    %v1773 = vsel %vm131, %v1558, 0.0
    %v1774 = vadd.f32 %v1772, %v1773
    %v1775 = vsel %vm131, %v1559, 0.0
    %v1776 = vadd.f32 %v1774, %v1775
    %v1777 = vsel %vm131, %v1560, 0.0
    %v1778 = vadd.f32 %v1776, %v1777
    %v1779 = vsel %vm131, %v1561, 0.0
    %v1780 = vadd.f32 %v1778, %v1779
    %v1781 = vsel %vm131, %v1562, 0.0
    %v1782 = vadd.f32 %v1780, %v1781
    %v1783 = vsel %vm131, %v1563, 0.0
    %v1784 = vadd.f32 %v1782, %v1783
    %v1785 = vsel %vm131, %v1564, 0.0
    %v1786 = vadd.f32 %v1784, %v1785
    %v1787 = vsel %vm131, %v1565, 0.0
    %v1788 = vadd.f32 %v1786, %v1787
    %v1789 = vsel %vm131, %v1566, 0.0
    %v1790 = vadd.f32 %v1788, %v1789
    %v1791 = vsel %vm131, %v1567, 0.0
    %v1792 = vadd.f32 %v1790, %v1791
    %v1793 = vsel %vm131, %v1568, 0.0
    %v1794 = vadd.f32 %v1792, %v1793
    %v1795 = vsel %vm131, %v1569, 0.0
    %v1796 = vadd.f32 %v1794, %v1795
    %v1797 = vrot.slane %v1796, 4
    %v1798 = vadd.f32 %v1796, %v1797
    %v1799 = vrot.slane %v1798, 2
    %v1800 = vadd.f32 %v1798, %v1799
    %v1801 = vrot.slane %v1800, 1
    %v1802 = vadd.f32 %v1800, %v1801
    %v1803 = vsel %vm131, %v1570, 0.0
    %v1804 = vsel %vm131, %v1571, 0.0
    %v1805 = vadd.f32 %v1803, %v1804
    %v1806 = vsel %vm131, %v1572, 0.0
    %v1807 = vadd.f32 %v1805, %v1806
    %v1808 = vsel %vm131, %v1573, 0.0
    %v1809 = vadd.f32 %v1807, %v1808
    %v1810 = vsel %vm131, %v1574, 0.0
    %v1811 = vadd.f32 %v1809, %v1810
    %v1812 = vsel %vm131, %v1575, 0.0
    %v1813 = vadd.f32 %v1811, %v1812
    %v1814 = vsel %vm131, %v1576, 0.0
    %v1815 = vadd.f32 %v1813, %v1814
    %v1816 = vsel %vm131, %v1577, 0.0
    %v1817 = vadd.f32 %v1815, %v1816
    %v1818 = vsel %vm131, %v1578, 0.0
    %v1819 = vadd.f32 %v1817, %v1818
    %v1820 = vsel %vm131, %v1579, 0.0
    %v1821 = vadd.f32 %v1819, %v1820
    %v1822 = vsel %vm131, %v1580, 0.0
    %v1823 = vadd.f32 %v1821, %v1822
    %v1824 = vsel %vm131, %v1581, 0.0
    %v1825 = vadd.f32 %v1823, %v1824
    %v1826 = vsel %vm131, %v1582, 0.0
    %v1827 = vadd.f32 %v1825, %v1826
    %v1828 = vsel %vm131, %v1583, 0.0
    %v1829 = vadd.f32 %v1827, %v1828
    %v1830 = vsel %vm131, %v1584, 0.0
    %v1831 = vadd.f32 %v1829, %v1830
    %v1832 = vsel %vm131, %v1585, 0.0
    %v1833 = vadd.f32 %v1831, %v1832
    %v1834 = vrot.slane %v1833, 4
    %v1835 = vadd.f32 %v1833, %v1834
    %v1836 = vrot.slane %v1835, 2
    %v1837 = vadd.f32 %v1835, %v1836
    %v1838 = vrot.slane %v1837, 1
    %v1839 = vadd.f32 %v1837, %v1838
    %v1840 = vsel %vm131, %v1586, 0.0
    %v1841 = vsel %vm131, %v1587, 0.0
    %v1842 = vadd.f32 %v1840, %v1841
    %v1843 = vsel %vm131, %v1588, 0.0
    %v1844 = vadd.f32 %v1842, %v1843
    %v1845 = vsel %vm131, %v1589, 0.0
    %v1846 = vadd.f32 %v1844, %v1845
    %v1847 = vsel %vm131, %v1590, 0.0
    %v1848 = vadd.f32 %v1846, %v1847
    %v1849 = vsel %vm131, %v1591, 0.0
    %v1850 = vadd.f32 %v1848, %v1849
    %v1851 = vsel %vm131, %v1592, 0.0
    %v1852 = vadd.f32 %v1850, %v1851
    %v1853 = vsel %vm131, %v1593, 0.0
    %v1854 = vadd.f32 %v1852, %v1853
    %v1855 = vsel %vm131, %v1594, 0.0
    %v1856 = vadd.f32 %v1854, %v1855
    %v1857 = vsel %vm131, %v1595, 0.0
    %v1858 = vadd.f32 %v1856, %v1857
    %v1859 = vsel %vm131, %v1596, 0.0
    %v1860 = vadd.f32 %v1858, %v1859
    %v1861 = vsel %vm131, %v1597, 0.0
    %v1862 = vadd.f32 %v1860, %v1861
    %v1863 = vsel %vm131, %v1598, 0.0
    %v1864 = vadd.f32 %v1862, %v1863
    %v1865 = vsel %vm131, %v1599, 0.0
    %v1866 = vadd.f32 %v1864, %v1865
    %v1867 = vsel %vm131, %v1600, 0.0
    %v1868 = vadd.f32 %v1866, %v1867
    %v1869 = vsel %vm131, %v1601, 0.0
    %v1870 = vadd.f32 %v1868, %v1869
    %v1871 = vrot.slane %v1870, 4
    %v1872 = vadd.f32 %v1870, %v1871
    %v1873 = vrot.slane %v1872, 2
    %v1874 = vadd.f32 %v1872, %v1873
    %v1875 = vrot.slane %v1874, 1
    %v1876 = vadd.f32 %v1874, %v1875
    %v1877 = vsel %vm131, %v1602, 0.0
    %v1878 = vsel %vm131, %v1603, 0.0
    %v1879 = vadd.f32 %v1877, %v1878
    %v1880 = vsel %vm131, %v1604, 0.0
    %v1881 = vadd.f32 %v1879, %v1880
    %v1882 = vsel %vm131, %v1605, 0.0
    %v1883 = vadd.f32 %v1881, %v1882
    %v1884 = vsel %vm131, %v1606, 0.0
    %v1885 = vadd.f32 %v1883, %v1884
    %v1886 = vsel %vm131, %v1607, 0.0
    %v1887 = vadd.f32 %v1885, %v1886
    %v1888 = vsel %vm131, %v1608, 0.0
    %v1889 = vadd.f32 %v1887, %v1888
    %v1890 = vsel %vm131, %v1609, 0.0
    %v1891 = vadd.f32 %v1889, %v1890
    %v1892 = vsel %vm131, %v1610, 0.0
    %v1893 = vadd.f32 %v1891, %v1892
    %v1894 = vsel %vm131, %v1611, 0.0
    %v1895 = vadd.f32 %v1893, %v1894
    %v1896 = vsel %vm131, %v1612, 0.0
    %v1897 = vadd.f32 %v1895, %v1896
    %v1898 = vsel %vm131, %v1613, 0.0
    %v1899 = vadd.f32 %v1897, %v1898
    %v1900 = vsel %vm131, %v1614, 0.0
    %v1901 = vadd.f32 %v1899, %v1900
    %v1902 = vsel %vm131, %v1615, 0.0
    %v1903 = vadd.f32 %v1901, %v1902
    %v1904 = vsel %vm131, %v1616, 0.0
    %v1905 = vadd.f32 %v1903, %v1904
    %v1906 = vsel %vm131, %v1617, 0.0
    %v1907 = vadd.f32 %v1905, %v1906
    %v1908 = vrot.slane %v1907, 4
    %v1909 = vadd.f32 %v1907, %v1908
    %v1910 = vrot.slane %v1909, 2
    %v1911 = vadd.f32 %v1909, %v1910
    %v1912 = vrot.slane %v1911, 1
    %v1913 = vadd.f32 %v1911, %v1912
    %v1914 = vmul.f32 %v1654, 0.03125
    %v1915 = vmul.f32 %v1691, 0.03125
    %v1916 = vmul.f32 %v1728, 0.03125
    %v1917 = vmul.f32 %v1765, 0.03125
    %v1918 = vmul.f32 %v1802, 0.03125
    %v1919 = vmul.f32 %v1839, 0.03125
    %v1920 = vmul.f32 %v1876, 0.03125
    %v1921 = vmul.f32 %v1913, 0.03125
    %v1922 = vsub.f32 %v1490, %v1914
    %v1923 = vsub.f32 %v1491, %v1914
    %v1924 = vsub.f32 %v1492, %v1914
    %v1925 = vsub.f32 %v1493, %v1914
    %v1926 = vsub.f32 %v1494, %v1914
    %v1927 = vsub.f32 %v1495, %v1914
    %v1928 = vsub.f32 %v1496, %v1914
    %v1929 = vsub.f32 %v1497, %v1914
    %v1930 = vsub.f32 %v1498, %v1914
    %v1931 = vsub.f32 %v1499, %v1914
    %v1932 = vsub.f32 %v1500, %v1914
    %v1933 = vsub.f32 %v1501, %v1914
    %v1934 = vsub.f32 %v1502, %v1914
    %v1935 = vsub.f32 %v1503, %v1914
    %v1936 = vsub.f32 %v1504, %v1914
    %v1937 = vsub.f32 %v1505, %v1914
    %v1938 = vsub.f32 %v1506, %v1915
    %v1939 = vsub.f32 %v1507, %v1915
    %v1940 = vsub.f32 %v1508, %v1915
    %v1941 = vsub.f32 %v1509, %v1915
    %v1942 = vsub.f32 %v1510, %v1915
    %v1943 = vsub.f32 %v1511, %v1915
    %v1944 = vsub.f32 %v1512, %v1915
    %v1945 = vsub.f32 %v1513, %v1915
    %v1946 = vsub.f32 %v1514, %v1915
    %v1947 = vsub.f32 %v1515, %v1915
    %v1948 = vsub.f32 %v1516, %v1915
    %v1949 = vsub.f32 %v1517, %v1915
    %v1950 = vsub.f32 %v1518, %v1915
    %v1951 = vsub.f32 %v1519, %v1915
    %v1952 = vsub.f32 %v1520, %v1915
    %v1953 = vsub.f32 %v1521, %v1915
    %v1954 = vsub.f32 %v1522, %v1916
    %v1955 = vsub.f32 %v1523, %v1916
    %v1956 = vsub.f32 %v1524, %v1916
    %v1957 = vsub.f32 %v1525, %v1916
    %v1958 = vsub.f32 %v1526, %v1916
    %v1959 = vsub.f32 %v1527, %v1916
    %v1960 = vsub.f32 %v1528, %v1916
    %v1961 = vsub.f32 %v1529, %v1916
    %v1962 = vsub.f32 %v1530, %v1916
    %v1963 = vsub.f32 %v1531, %v1916
    %v1964 = vsub.f32 %v1532, %v1916
    %v1965 = vsub.f32 %v1533, %v1916
    %v1966 = vsub.f32 %v1534, %v1916
    %v1967 = vsub.f32 %v1535, %v1916
    %v1968 = vsub.f32 %v1536, %v1916
    %v1969 = vsub.f32 %v1537, %v1916
    %v1970 = vsub.f32 %v1538, %v1917
    %v1971 = vsub.f32 %v1539, %v1917
    %v1972 = vsub.f32 %v1540, %v1917
    %v1973 = vsub.f32 %v1541, %v1917
    %v1974 = vsub.f32 %v1542, %v1917
    %v1975 = vsub.f32 %v1543, %v1917
    %v1976 = vsub.f32 %v1544, %v1917
    %v1977 = vsub.f32 %v1545, %v1917
    %v1978 = vsub.f32 %v1546, %v1917
    %v1979 = vsub.f32 %v1547, %v1917
    %v1980 = vsub.f32 %v1548, %v1917
    %v1981 = vsub.f32 %v1549, %v1917
    %v1982 = vsub.f32 %v1550, %v1917
    %v1983 = vsub.f32 %v1551, %v1917
    %v1984 = vsub.f32 %v1552, %v1917
    %v1985 = vsub.f32 %v1553, %v1917
    %v1986 = vsub.f32 %v1554, %v1918
    %v1987 = vsub.f32 %v1555, %v1918
    %v1988 = vsub.f32 %v1556, %v1918
    %v1989 = vsub.f32 %v1557, %v1918
    %v1990 = vsub.f32 %v1558, %v1918
    %v1991 = vsub.f32 %v1559, %v1918
    %v1992 = vsub.f32 %v1560, %v1918
    %v1993 = vsub.f32 %v1561, %v1918
    %v1994 = vsub.f32 %v1562, %v1918
    %v1995 = vsub.f32 %v1563, %v1918
    %v1996 = vsub.f32 %v1564, %v1918
    %v1997 = vsub.f32 %v1565, %v1918
    %v1998 = vsub.f32 %v1566, %v1918
    %v1999 = vsub.f32 %v1567, %v1918
    %v2000 = vsub.f32 %v1568, %v1918
    %v2001 = vsub.f32 %v1569, %v1918
    %v2002 = vsub.f32 %v1570, %v1919
    %v2003 = vsub.f32 %v1571, %v1919
    %v2004 = vsub.f32 %v1572, %v1919
    %v2005 = vsub.f32 %v1573, %v1919
    %v2006 = vsub.f32 %v1574, %v1919
    %v2007 = vsub.f32 %v1575, %v1919
    %v2008 = vsub.f32 %v1576, %v1919
    %v2009 = vsub.f32 %v1577, %v1919
    %v2010 = vsub.f32 %v1578, %v1919
    %v2011 = vsub.f32 %v1579, %v1919
    %v2012 = vsub.f32 %v1580, %v1919
    %v2013 = vsub.f32 %v1581, %v1919
    %v2014 = vsub.f32 %v1582, %v1919
    %v2015 = vsub.f32 %v1583, %v1919
    %v2016 = vsub.f32 %v1584, %v1919
    %v2017 = vsub.f32 %v1585, %v1919
    %v2018 = vsub.f32 %v1586, %v1920
    %v2019 = vsub.f32 %v1587, %v1920
    %v2020 = vsub.f32 %v1588, %v1920
    %v2021 = vsub.f32 %v1589, %v1920
    %v2022 = vsub.f32 %v1590, %v1920
    %v2023 = vsub.f32 %v1591, %v1920
    %v2024 = vsub.f32 %v1592, %v1920
    %v2025 = vsub.f32 %v1593, %v1920
    %v2026 = vsub.f32 %v1594, %v1920
    %v2027 = vsub.f32 %v1595, %v1920
    %v2028 = vsub.f32 %v1596, %v1920
    %v2029 = vsub.f32 %v1597, %v1920
    %v2030 = vsub.f32 %v1598, %v1920
    %v2031 = vsub.f32 %v1599, %v1920
    %v2032 = vsub.f32 %v1600, %v1920
    %v2033 = vsub.f32 %v1601, %v1920
    %v2034 = vsub.f32 %v1602, %v1921
    %v2035 = vsub.f32 %v1603, %v1921
    %v2036 = vsub.f32 %v1604, %v1921
    %v2037 = vsub.f32 %v1605, %v1921
    %v2038 = vsub.f32 %v1606, %v1921
    %v2039 = vsub.f32 %v1607, %v1921
    %v2040 = vsub.f32 %v1608, %v1921
    %v2041 = vsub.f32 %v1609, %v1921
    %v2042 = vsub.f32 %v1610, %v1921
    %v2043 = vsub.f32 %v1611, %v1921
    %v2044 = vsub.f32 %v1612, %v1921
    %v2045 = vsub.f32 %v1613, %v1921
    %v2046 = vsub.f32 %v1614, %v1921
    %v2047 = vsub.f32 %v1615, %v1921
    %v2048 = vsub.f32 %v1616, %v1921
    %v2049 = vsub.f32 %v1617, %v1921
    %v2050 = vmul.f32 %v1922, %v668
    %v2051 = vmul.f32 %v1923, %v669
    %v2052 = vmul.f32 %v1924, %v670
    %v2053 = vmul.f32 %v1925, %v671
    %v2054 = vmul.f32 %v1926, %v672
    %v2055 = vmul.f32 %v1927, %v673
    %v2056 = vmul.f32 %v1928, %v674
    %v2057 = vmul.f32 %v1929, %v675
    %v2058 = vmul.f32 %v1930, %v676
    %v2059 = vmul.f32 %v1931, %v677
    %v2060 = vmul.f32 %v1932, %v678
    %v2061 = vmul.f32 %v1933, %v679
    %v2062 = vmul.f32 %v1934, %v680
    %v2063 = vmul.f32 %v1935, %v681
    %v2064 = vmul.f32 %v1936, %v682
    %v2065 = vmul.f32 %v1937, %v683
    %v2066 = vmul.f32 %v1938, %v668
    %v2067 = vmul.f32 %v1939, %v669
    %v2068 = vmul.f32 %v1940, %v670
    %v2069 = vmul.f32 %v1941, %v671
    %v2070 = vmul.f32 %v1942, %v672
    %v2071 = vmul.f32 %v1943, %v673
    %v2072 = vmul.f32 %v1944, %v674
    %v2073 = vmul.f32 %v1945, %v675
    %v2074 = vmul.f32 %v1946, %v676
    %v2075 = vmul.f32 %v1947, %v677
    %v2076 = vmul.f32 %v1948, %v678
    %v2077 = vmul.f32 %v1949, %v679
    %v2078 = vmul.f32 %v1950, %v680
    %v2079 = vmul.f32 %v1951, %v681
    %v2080 = vmul.f32 %v1952, %v682
    %v2081 = vmul.f32 %v1953, %v683
    %v2082 = vmul.f32 %v1954, %v668
    %v2083 = vmul.f32 %v1955, %v669
    %v2084 = vmul.f32 %v1956, %v670
    %v2085 = vmul.f32 %v1957, %v671
    %v2086 = vmul.f32 %v1958, %v672
    %v2087 = vmul.f32 %v1959, %v673
    %v2088 = vmul.f32 %v1960, %v674
    %v2089 = vmul.f32 %v1961, %v675
    %v2090 = vmul.f32 %v1962, %v676
    %v2091 = vmul.f32 %v1963, %v677
    %v2092 = vmul.f32 %v1964, %v678
    %v2093 = vmul.f32 %v1965, %v679
    %v2094 = vmul.f32 %v1966, %v680
    %v2095 = vmul.f32 %v1967, %v681
    %v2096 = vmul.f32 %v1968, %v682
    %v2097 = vmul.f32 %v1969, %v683
    %v2098 = vmul.f32 %v1970, %v668
    %v2099 = vmul.f32 %v1971, %v669
    %v2100 = vmul.f32 %v1972, %v670
    %v2101 = vmul.f32 %v1973, %v671
    %v2102 = vmul.f32 %v1974, %v672
    %v2103 = vmul.f32 %v1975, %v673
    %v2104 = vmul.f32 %v1976, %v674
    %v2105 = vmul.f32 %v1977, %v675
    %v2106 = vmul.f32 %v1978, %v676
    %v2107 = vmul.f32 %v1979, %v677
    %v2108 = vmul.f32 %v1980, %v678
    %v2109 = vmul.f32 %v1981, %v679
    %v2110 = vmul.f32 %v1982, %v680
    %v2111 = vmul.f32 %v1983, %v681
    %v2112 = vmul.f32 %v1984, %v682
    %v2113 = vmul.f32 %v1985, %v683
    %v2114 = vmul.f32 %v1986, %v668
    %v2115 = vmul.f32 %v1987, %v669
    %v2116 = vmul.f32 %v1988, %v670
    %v2117 = vmul.f32 %v1989, %v671
    %v2118 = vmul.f32 %v1990, %v672
    %v2119 = vmul.f32 %v1991, %v673
    %v2120 = vmul.f32 %v1992, %v674
    %v2121 = vmul.f32 %v1993, %v675
    %v2122 = vmul.f32 %v1994, %v676
    %v2123 = vmul.f32 %v1995, %v677
    %v2124 = vmul.f32 %v1996, %v678
    %v2125 = vmul.f32 %v1997, %v679
    %v2126 = vmul.f32 %v1998, %v680
    %v2127 = vmul.f32 %v1999, %v681
    %v2128 = vmul.f32 %v2000, %v682
    %v2129 = vmul.f32 %v2001, %v683
    %v2130 = vmul.f32 %v2002, %v668
    %v2131 = vmul.f32 %v2003, %v669
    %v2132 = vmul.f32 %v2004, %v670
    %v2133 = vmul.f32 %v2005, %v671
    %v2134 = vmul.f32 %v2006, %v672
    %v2135 = vmul.f32 %v2007, %v673
    %v2136 = vmul.f32 %v2008, %v674
    %v2137 = vmul.f32 %v2009, %v675
    %v2138 = vmul.f32 %v2010, %v676
    %v2139 = vmul.f32 %v2011, %v677
    %v2140 = vmul.f32 %v2012, %v678
    %v2141 = vmul.f32 %v2013, %v679
    %v2142 = vmul.f32 %v2014, %v680
    %v2143 = vmul.f32 %v2015, %v681
    %v2144 = vmul.f32 %v2016, %v682
    %v2145 = vmul.f32 %v2017, %v683
    %v2146 = vmul.f32 %v2018, %v668
    %v2147 = vmul.f32 %v2019, %v669
    %v2148 = vmul.f32 %v2020, %v670
    %v2149 = vmul.f32 %v2021, %v671
    %v2150 = vmul.f32 %v2022, %v672
    %v2151 = vmul.f32 %v2023, %v673
    %v2152 = vmul.f32 %v2024, %v674
    %v2153 = vmul.f32 %v2025, %v675
    %v2154 = vmul.f32 %v2026, %v676
    %v2155 = vmul.f32 %v2027, %v677
    %v2156 = vmul.f32 %v2028, %v678
    %v2157 = vmul.f32 %v2029, %v679
    %v2158 = vmul.f32 %v2030, %v680
    %v2159 = vmul.f32 %v2031, %v681
    %v2160 = vmul.f32 %v2032, %v682
    %v2161 = vmul.f32 %v2033, %v683
    %v2162 = vmul.f32 %v2034, %v668
    %v2163 = vmul.f32 %v2035, %v669
    %v2164 = vmul.f32 %v2036, %v670
    %v2165 = vmul.f32 %v2037, %v671
    %v2166 = vmul.f32 %v2038, %v672
    %v2167 = vmul.f32 %v2039, %v673
    %v2168 = vmul.f32 %v2040, %v674
    %v2169 = vmul.f32 %v2041, %v675
    %v2170 = vmul.f32 %v2042, %v676
    %v2171 = vmul.f32 %v2043, %v677
    %v2172 = vmul.f32 %v2044, %v678
    %v2173 = vmul.f32 %v2045, %v679
    %v2174 = vmul.f32 %v2046, %v680
    %v2175 = vmul.f32 %v2047, %v681
    %v2176 = vmul.f32 %v2048, %v682
    %v2177 = vmul.f32 %v2049, %v683
    %v2178 = vmul.f32 %v2050, %v2050
    %v2179 = vmul.f32 %v2051, %v2051
    %v2180 = vmul.f32 %v2052, %v2052
    %v2181 = vmul.f32 %v2053, %v2053
    %v2182 = vmul.f32 %v2054, %v2054
    %v2183 = vmul.f32 %v2055, %v2055
    %v2184 = vmul.f32 %v2056, %v2056
    %v2185 = vmul.f32 %v2057, %v2057
    %v2186 = vmul.f32 %v2058, %v2058
    %v2187 = vmul.f32 %v2059, %v2059
    %v2188 = vmul.f32 %v2060, %v2060
    %v2189 = vmul.f32 %v2061, %v2061
    %v2190 = vmul.f32 %v2062, %v2062
    %v2191 = vmul.f32 %v2063, %v2063
    %v2192 = vmul.f32 %v2064, %v2064
    %v2193 = vmul.f32 %v2065, %v2065
    %v2194 = vmul.f32 %v2066, %v2066
    %v2195 = vmul.f32 %v2067, %v2067
    %v2196 = vmul.f32 %v2068, %v2068
    %v2197 = vmul.f32 %v2069, %v2069
    %v2198 = vmul.f32 %v2070, %v2070
    %v2199 = vmul.f32 %v2071, %v2071
    %v2200 = vmul.f32 %v2072, %v2072
    %v2201 = vmul.f32 %v2073, %v2073
    %v2202 = vmul.f32 %v2074, %v2074
    %v2203 = vmul.f32 %v2075, %v2075
    %v2204 = vmul.f32 %v2076, %v2076
    %v2205 = vmul.f32 %v2077, %v2077
    %v2206 = vmul.f32 %v2078, %v2078
    %v2207 = vmul.f32 %v2079, %v2079
    %v2208 = vmul.f32 %v2080, %v2080
    %v2209 = vmul.f32 %v2081, %v2081
    %v2210 = vmul.f32 %v2082, %v2082
    %v2211 = vmul.f32 %v2083, %v2083
    %v2212 = vmul.f32 %v2084, %v2084
    %v2213 = vmul.f32 %v2085, %v2085
    %v2214 = vmul.f32 %v2086, %v2086
    %v2215 = vmul.f32 %v2087, %v2087
    %v2216 = vmul.f32 %v2088, %v2088
    %v2217 = vmul.f32 %v2089, %v2089
    %v2218 = vmul.f32 %v2090, %v2090
    %v2219 = vmul.f32 %v2091, %v2091
    %v2220 = vmul.f32 %v2092, %v2092
    %v2221 = vmul.f32 %v2093, %v2093
    %v2222 = vmul.f32 %v2094, %v2094
    %v2223 = vmul.f32 %v2095, %v2095
    %v2224 = vmul.f32 %v2096, %v2096
    %v2225 = vmul.f32 %v2097, %v2097
    %v2226 = vmul.f32 %v2098, %v2098
    %v2227 = vmul.f32 %v2099, %v2099
    %v2228 = vmul.f32 %v2100, %v2100
    %v2229 = vmul.f32 %v2101, %v2101
    %v2230 = vmul.f32 %v2102, %v2102
    %v2231 = vmul.f32 %v2103, %v2103
    %v2232 = vmul.f32 %v2104, %v2104
    %v2233 = vmul.f32 %v2105, %v2105
    %v2234 = vmul.f32 %v2106, %v2106
    %v2235 = vmul.f32 %v2107, %v2107
    %v2236 = vmul.f32 %v2108, %v2108
    %v2237 = vmul.f32 %v2109, %v2109
    %v2238 = vmul.f32 %v2110, %v2110
    %v2239 = vmul.f32 %v2111, %v2111
    %v2240 = vmul.f32 %v2112, %v2112
    %v2241 = vmul.f32 %v2113, %v2113
    %v2242 = vmul.f32 %v2114, %v2114
    %v2243 = vmul.f32 %v2115, %v2115
    %v2244 = vmul.f32 %v2116, %v2116
    %v2245 = vmul.f32 %v2117, %v2117
    %v2246 = vmul.f32 %v2118, %v2118
    %v2247 = vmul.f32 %v2119, %v2119
    %v2248 = vmul.f32 %v2120, %v2120
    %v2249 = vmul.f32 %v2121, %v2121
    %v2250 = vmul.f32 %v2122, %v2122
    %v2251 = vmul.f32 %v2123, %v2123
    %v2252 = vmul.f32 %v2124, %v2124
    %v2253 = vmul.f32 %v2125, %v2125
    %v2254 = vmul.f32 %v2126, %v2126
    %v2255 = vmul.f32 %v2127, %v2127
    %v2256 = vmul.f32 %v2128, %v2128
    %v2257 = vmul.f32 %v2129, %v2129
    %v2258 = vmul.f32 %v2130, %v2130
    %v2259 = vmul.f32 %v2131, %v2131
    %v2260 = vmul.f32 %v2132, %v2132
    %v2261 = vmul.f32 %v2133, %v2133
    %v2262 = vmul.f32 %v2134, %v2134
    %v2263 = vmul.f32 %v2135, %v2135
    %v2264 = vmul.f32 %v2136, %v2136
    %v2265 = vmul.f32 %v2137, %v2137
    %v2266 = vmul.f32 %v2138, %v2138
    %v2267 = vmul.f32 %v2139, %v2139
    %v2268 = vmul.f32 %v2140, %v2140
    %v2269 = vmul.f32 %v2141, %v2141
    %v2270 = vmul.f32 %v2142, %v2142
    %v2271 = vmul.f32 %v2143, %v2143
    %v2272 = vmul.f32 %v2144, %v2144
    %v2273 = vmul.f32 %v2145, %v2145
    %v2274 = vmul.f32 %v2146, %v2146
    %v2275 = vmul.f32 %v2147, %v2147
    %v2276 = vmul.f32 %v2148, %v2148
    %v2277 = vmul.f32 %v2149, %v2149
    %v2278 = vmul.f32 %v2150, %v2150
    %v2279 = vmul.f32 %v2151, %v2151
    %v2280 = vmul.f32 %v2152, %v2152
    %v2281 = vmul.f32 %v2153, %v2153
    %v2282 = vmul.f32 %v2154, %v2154
    %v2283 = vmul.f32 %v2155, %v2155
    %v2284 = vmul.f32 %v2156, %v2156
    %v2285 = vmul.f32 %v2157, %v2157
    %v2286 = vmul.f32 %v2158, %v2158
    %v2287 = vmul.f32 %v2159, %v2159
    %v2288 = vmul.f32 %v2160, %v2160
    %v2289 = vmul.f32 %v2161, %v2161
    %v2290 = vmul.f32 %v2162, %v2162
    %v2291 = vmul.f32 %v2163, %v2163
    %v2292 = vmul.f32 %v2164, %v2164
    %v2293 = vmul.f32 %v2165, %v2165
    %v2294 = vmul.f32 %v2166, %v2166
    %v2295 = vmul.f32 %v2167, %v2167
    %v2296 = vmul.f32 %v2168, %v2168
    %v2297 = vmul.f32 %v2169, %v2169
    %v2298 = vmul.f32 %v2170, %v2170
    %v2299 = vmul.f32 %v2171, %v2171
    %v2300 = vmul.f32 %v2172, %v2172
    %v2301 = vmul.f32 %v2173, %v2173
    %v2302 = vmul.f32 %v2174, %v2174
    %v2303 = vmul.f32 %v2175, %v2175
    %v2304 = vmul.f32 %v2176, %v2176
    %v2305 = vmul.f32 %v2177, %v2177
    %v2306 = vsel %vm131, %v2178, 0.0
    %v2307 = vsel %vm131, %v2179, 0.0
    %v2308 = vadd.f32 %v2306, %v2307
    %v2309 = vsel %vm131, %v2180, 0.0
    %v2310 = vadd.f32 %v2308, %v2309
    %v2311 = vsel %vm131, %v2181, 0.0
    %v2312 = vadd.f32 %v2310, %v2311
    %v2313 = vsel %vm131, %v2182, 0.0
    %v2314 = vadd.f32 %v2312, %v2313
    %v2315 = vsel %vm131, %v2183, 0.0
    %v2316 = vadd.f32 %v2314, %v2315
    %v2317 = vsel %vm131, %v2184, 0.0
    %v2318 = vadd.f32 %v2316, %v2317
    %v2319 = vsel %vm131, %v2185, 0.0
    %v2320 = vadd.f32 %v2318, %v2319
    %v2321 = vsel %vm131, %v2186, 0.0
    %v2322 = vadd.f32 %v2320, %v2321
    %v2323 = vsel %vm131, %v2187, 0.0
    %v2324 = vadd.f32 %v2322, %v2323
    %v2325 = vsel %vm131, %v2188, 0.0
    %v2326 = vadd.f32 %v2324, %v2325
    %v2327 = vsel %vm131, %v2189, 0.0
    %v2328 = vadd.f32 %v2326, %v2327
    %v2329 = vsel %vm131, %v2190, 0.0
    %v2330 = vadd.f32 %v2328, %v2329
    %v2331 = vsel %vm131, %v2191, 0.0
    %v2332 = vadd.f32 %v2330, %v2331
    %v2333 = vsel %vm131, %v2192, 0.0
    %v2334 = vadd.f32 %v2332, %v2333
    %v2335 = vsel %vm131, %v2193, 0.0
    %v2336 = vadd.f32 %v2334, %v2335
    %v2337 = vrot.slane %v2336, 4
    %v2338 = vadd.f32 %v2336, %v2337
    %v2339 = vrot.slane %v2338, 2
    %v2340 = vadd.f32 %v2338, %v2339
    %v2341 = vrot.slane %v2340, 1
    %v2342 = vadd.f32 %v2340, %v2341
    %v2343 = vsel %vm131, %v2194, 0.0
    %v2344 = vsel %vm131, %v2195, 0.0
    %v2345 = vadd.f32 %v2343, %v2344
    %v2346 = vsel %vm131, %v2196, 0.0
    %v2347 = vadd.f32 %v2345, %v2346
    %v2348 = vsel %vm131, %v2197, 0.0
    %v2349 = vadd.f32 %v2347, %v2348
    %v2350 = vsel %vm131, %v2198, 0.0
    %v2351 = vadd.f32 %v2349, %v2350
    %v2352 = vsel %vm131, %v2199, 0.0
    %v2353 = vadd.f32 %v2351, %v2352
    %v2354 = vsel %vm131, %v2200, 0.0
    %v2355 = vadd.f32 %v2353, %v2354
    %v2356 = vsel %vm131, %v2201, 0.0
    %v2357 = vadd.f32 %v2355, %v2356
    %v2358 = vsel %vm131, %v2202, 0.0
    %v2359 = vadd.f32 %v2357, %v2358
    %v2360 = vsel %vm131, %v2203, 0.0
    %v2361 = vadd.f32 %v2359, %v2360
    %v2362 = vsel %vm131, %v2204, 0.0
    %v2363 = vadd.f32 %v2361, %v2362
    %v2364 = vsel %vm131, %v2205, 0.0
    %v2365 = vadd.f32 %v2363, %v2364
    %v2366 = vsel %vm131, %v2206, 0.0
    %v2367 = vadd.f32 %v2365, %v2366
    %v2368 = vsel %vm131, %v2207, 0.0
    %v2369 = vadd.f32 %v2367, %v2368
    %v2370 = vsel %vm131, %v2208, 0.0
    %v2371 = vadd.f32 %v2369, %v2370
    %v2372 = vsel %vm131, %v2209, 0.0
    %v2373 = vadd.f32 %v2371, %v2372
    %v2374 = vrot.slane %v2373, 4
    %v2375 = vadd.f32 %v2373, %v2374
    %v2376 = vrot.slane %v2375, 2
    %v2377 = vadd.f32 %v2375, %v2376
    %v2378 = vrot.slane %v2377, 1
    %v2379 = vadd.f32 %v2377, %v2378
    %v2380 = vsel %vm131, %v2210, 0.0
    %v2381 = vsel %vm131, %v2211, 0.0
    %v2382 = vadd.f32 %v2380, %v2381
    %v2383 = vsel %vm131, %v2212, 0.0
    %v2384 = vadd.f32 %v2382, %v2383
    %v2385 = vsel %vm131, %v2213, 0.0
    %v2386 = vadd.f32 %v2384, %v2385
    %v2387 = vsel %vm131, %v2214, 0.0
    %v2388 = vadd.f32 %v2386, %v2387
    %v2389 = vsel %vm131, %v2215, 0.0
    %v2390 = vadd.f32 %v2388, %v2389
    %v2391 = vsel %vm131, %v2216, 0.0
    %v2392 = vadd.f32 %v2390, %v2391
    %v2393 = vsel %vm131, %v2217, 0.0
    %v2394 = vadd.f32 %v2392, %v2393
    %v2395 = vsel %vm131, %v2218, 0.0
    %v2396 = vadd.f32 %v2394, %v2395
    %v2397 = vsel %vm131, %v2219, 0.0
    %v2398 = vadd.f32 %v2396, %v2397
    %v2399 = vsel %vm131, %v2220, 0.0
    %v2400 = vadd.f32 %v2398, %v2399
    %v2401 = vsel %vm131, %v2221, 0.0
    %v2402 = vadd.f32 %v2400, %v2401
    %v2403 = vsel %vm131, %v2222, 0.0
    %v2404 = vadd.f32 %v2402, %v2403
    %v2405 = vsel %vm131, %v2223, 0.0
    %v2406 = vadd.f32 %v2404, %v2405
    %v2407 = vsel %vm131, %v2224, 0.0
    %v2408 = vadd.f32 %v2406, %v2407
    %v2409 = vsel %vm131, %v2225, 0.0
    %v2410 = vadd.f32 %v2408, %v2409
    %v2411 = vrot.slane %v2410, 4
    %v2412 = vadd.f32 %v2410, %v2411
    %v2413 = vrot.slane %v2412, 2
    %v2414 = vadd.f32 %v2412, %v2413
    %v2415 = vrot.slane %v2414, 1
    %v2416 = vadd.f32 %v2414, %v2415
    %v2417 = vsel %vm131, %v2226, 0.0
    %v2418 = vsel %vm131, %v2227, 0.0
    %v2419 = vadd.f32 %v2417, %v2418
    %v2420 = vsel %vm131, %v2228, 0.0
    %v2421 = vadd.f32 %v2419, %v2420
    %v2422 = vsel %vm131, %v2229, 0.0
    %v2423 = vadd.f32 %v2421, %v2422
    %v2424 = vsel %vm131, %v2230, 0.0
    %v2425 = vadd.f32 %v2423, %v2424
    %v2426 = vsel %vm131, %v2231, 0.0
    %v2427 = vadd.f32 %v2425, %v2426
    %v2428 = vsel %vm131, %v2232, 0.0
    %v2429 = vadd.f32 %v2427, %v2428
    %v2430 = vsel %vm131, %v2233, 0.0
    %v2431 = vadd.f32 %v2429, %v2430
    %v2432 = vsel %vm131, %v2234, 0.0
    %v2433 = vadd.f32 %v2431, %v2432
    %v2434 = vsel %vm131, %v2235, 0.0
    %v2435 = vadd.f32 %v2433, %v2434
    %v2436 = vsel %vm131, %v2236, 0.0
    %v2437 = vadd.f32 %v2435, %v2436
    %v2438 = vsel %vm131, %v2237, 0.0
    %v2439 = vadd.f32 %v2437, %v2438
    %v2440 = vsel %vm131, %v2238, 0.0
    %v2441 = vadd.f32 %v2439, %v2440
    %v2442 = vsel %vm131, %v2239, 0.0
    %v2443 = vadd.f32 %v2441, %v2442
    %v2444 = vsel %vm131, %v2240, 0.0
    %v2445 = vadd.f32 %v2443, %v2444
    %v2446 = vsel %vm131, %v2241, 0.0
    %v2447 = vadd.f32 %v2445, %v2446
    %v2448 = vrot.slane %v2447, 4
    %v2449 = vadd.f32 %v2447, %v2448
    %v2450 = vrot.slane %v2449, 2
    %v2451 = vadd.f32 %v2449, %v2450
    %v2452 = vrot.slane %v2451, 1
    %v2453 = vadd.f32 %v2451, %v2452
    %v2454 = vsel %vm131, %v2242, 0.0
    %v2455 = vsel %vm131, %v2243, 0.0
    %v2456 = vadd.f32 %v2454, %v2455
    %v2457 = vsel %vm131, %v2244, 0.0
    %v2458 = vadd.f32 %v2456, %v2457
    %v2459 = vsel %vm131, %v2245, 0.0
    %v2460 = vadd.f32 %v2458, %v2459
    %v2461 = vsel %vm131, %v2246, 0.0
    %v2462 = vadd.f32 %v2460, %v2461
    %v2463 = vsel %vm131, %v2247, 0.0
    %v2464 = vadd.f32 %v2462, %v2463
    %v2465 = vsel %vm131, %v2248, 0.0
    %v2466 = vadd.f32 %v2464, %v2465
    %v2467 = vsel %vm131, %v2249, 0.0
    %v2468 = vadd.f32 %v2466, %v2467
    %v2469 = vsel %vm131, %v2250, 0.0
    %v2470 = vadd.f32 %v2468, %v2469
    %v2471 = vsel %vm131, %v2251, 0.0
    %v2472 = vadd.f32 %v2470, %v2471
    %v2473 = vsel %vm131, %v2252, 0.0
    %v2474 = vadd.f32 %v2472, %v2473
    %v2475 = vsel %vm131, %v2253, 0.0
    %v2476 = vadd.f32 %v2474, %v2475
    %v2477 = vsel %vm131, %v2254, 0.0
    %v2478 = vadd.f32 %v2476, %v2477
    %v2479 = vsel %vm131, %v2255, 0.0
    %v2480 = vadd.f32 %v2478, %v2479
    %v2481 = vsel %vm131, %v2256, 0.0
    %v2482 = vadd.f32 %v2480, %v2481
    %v2483 = vsel %vm131, %v2257, 0.0
    %v2484 = vadd.f32 %v2482, %v2483
    %v2485 = vrot.slane %v2484, 4
    %v2486 = vadd.f32 %v2484, %v2485
    %v2487 = vrot.slane %v2486, 2
    %v2488 = vadd.f32 %v2486, %v2487
    %v2489 = vrot.slane %v2488, 1
    %v2490 = vadd.f32 %v2488, %v2489
    %v2491 = vsel %vm131, %v2258, 0.0
    %v2492 = vsel %vm131, %v2259, 0.0
    %v2493 = vadd.f32 %v2491, %v2492
    %v2494 = vsel %vm131, %v2260, 0.0
    %v2495 = vadd.f32 %v2493, %v2494
    %v2496 = vsel %vm131, %v2261, 0.0
    %v2497 = vadd.f32 %v2495, %v2496
    %v2498 = vsel %vm131, %v2262, 0.0
    %v2499 = vadd.f32 %v2497, %v2498
    %v2500 = vsel %vm131, %v2263, 0.0
    %v2501 = vadd.f32 %v2499, %v2500
    %v2502 = vsel %vm131, %v2264, 0.0
    %v2503 = vadd.f32 %v2501, %v2502
    %v2504 = vsel %vm131, %v2265, 0.0
    %v2505 = vadd.f32 %v2503, %v2504
    %v2506 = vsel %vm131, %v2266, 0.0
    %v2507 = vadd.f32 %v2505, %v2506
    %v2508 = vsel %vm131, %v2267, 0.0
    %v2509 = vadd.f32 %v2507, %v2508
    %v2510 = vsel %vm131, %v2268, 0.0
    %v2511 = vadd.f32 %v2509, %v2510
    %v2512 = vsel %vm131, %v2269, 0.0
    %v2513 = vadd.f32 %v2511, %v2512
    %v2514 = vsel %vm131, %v2270, 0.0
    %v2515 = vadd.f32 %v2513, %v2514
    %v2516 = vsel %vm131, %v2271, 0.0
    %v2517 = vadd.f32 %v2515, %v2516
    %v2518 = vsel %vm131, %v2272, 0.0
    %v2519 = vadd.f32 %v2517, %v2518
    %v2520 = vsel %vm131, %v2273, 0.0
    %v2521 = vadd.f32 %v2519, %v2520
    %v2522 = vrot.slane %v2521, 4
    %v2523 = vadd.f32 %v2521, %v2522
    %v2524 = vrot.slane %v2523, 2
    %v2525 = vadd.f32 %v2523, %v2524
    %v2526 = vrot.slane %v2525, 1
    %v2527 = vadd.f32 %v2525, %v2526
    %v2528 = vsel %vm131, %v2274, 0.0
    %v2529 = vsel %vm131, %v2275, 0.0
    %v2530 = vadd.f32 %v2528, %v2529
    %v2531 = vsel %vm131, %v2276, 0.0
    %v2532 = vadd.f32 %v2530, %v2531
    %v2533 = vsel %vm131, %v2277, 0.0
    %v2534 = vadd.f32 %v2532, %v2533
    %v2535 = vsel %vm131, %v2278, 0.0
    %v2536 = vadd.f32 %v2534, %v2535
    %v2537 = vsel %vm131, %v2279, 0.0
    %v2538 = vadd.f32 %v2536, %v2537
    %v2539 = vsel %vm131, %v2280, 0.0
    %v2540 = vadd.f32 %v2538, %v2539
    %v2541 = vsel %vm131, %v2281, 0.0
    %v2542 = vadd.f32 %v2540, %v2541
    %v2543 = vsel %vm131, %v2282, 0.0
    %v2544 = vadd.f32 %v2542, %v2543
    %v2545 = vsel %vm131, %v2283, 0.0
    %v2546 = vadd.f32 %v2544, %v2545
    %v2547 = vsel %vm131, %v2284, 0.0
    %v2548 = vadd.f32 %v2546, %v2547
    %v2549 = vsel %vm131, %v2285, 0.0
    %v2550 = vadd.f32 %v2548, %v2549
    %v2551 = vsel %vm131, %v2286, 0.0
    %v2552 = vadd.f32 %v2550, %v2551
    %v2553 = vsel %vm131, %v2287, 0.0
    %v2554 = vadd.f32 %v2552, %v2553
    %v2555 = vsel %vm131, %v2288, 0.0
    %v2556 = vadd.f32 %v2554, %v2555
    %v2557 = vsel %vm131, %v2289, 0.0
    %v2558 = vadd.f32 %v2556, %v2557
    %v2559 = vrot.slane %v2558, 4
    %v2560 = vadd.f32 %v2558, %v2559
    %v2561 = vrot.slane %v2560, 2
    %v2562 = vadd.f32 %v2560, %v2561
    %v2563 = vrot.slane %v2562, 1
    %v2564 = vadd.f32 %v2562, %v2563
    %v2565 = vsel %vm131, %v2290, 0.0
    %v2566 = vsel %vm131, %v2291, 0.0
    %v2567 = vadd.f32 %v2565, %v2566
    %v2568 = vsel %vm131, %v2292, 0.0
    %v2569 = vadd.f32 %v2567, %v2568
    %v2570 = vsel %vm131, %v2293, 0.0
    %v2571 = vadd.f32 %v2569, %v2570
    %v2572 = vsel %vm131, %v2294, 0.0
    %v2573 = vadd.f32 %v2571, %v2572
    %v2574 = vsel %vm131, %v2295, 0.0
    %v2575 = vadd.f32 %v2573, %v2574
    %v2576 = vsel %vm131, %v2296, 0.0
    %v2577 = vadd.f32 %v2575, %v2576
    %v2578 = vsel %vm131, %v2297, 0.0
    %v2579 = vadd.f32 %v2577, %v2578
    %v2580 = vsel %vm131, %v2298, 0.0
    %v2581 = vadd.f32 %v2579, %v2580
    %v2582 = vsel %vm131, %v2299, 0.0
    %v2583 = vadd.f32 %v2581, %v2582
    %v2584 = vsel %vm131, %v2300, 0.0
    %v2585 = vadd.f32 %v2583, %v2584
    %v2586 = vsel %vm131, %v2301, 0.0
    %v2587 = vadd.f32 %v2585, %v2586
    %v2588 = vsel %vm131, %v2302, 0.0
    %v2589 = vadd.f32 %v2587, %v2588
    %v2590 = vsel %vm131, %v2303, 0.0
    %v2591 = vadd.f32 %v2589, %v2590
    %v2592 = vsel %vm131, %v2304, 0.0
    %v2593 = vadd.f32 %v2591, %v2592
    %v2594 = vsel %vm131, %v2305, 0.0
    %v2595 = vadd.f32 %v2593, %v2594
    %v2596 = vrot.slane %v2595, 4
    %v2597 = vadd.f32 %v2595, %v2596
    %v2598 = vrot.slane %v2597, 2
    %v2599 = vadd.f32 %v2597, %v2598
    %v2600 = vrot.slane %v2599, 1
    %v2601 = vadd.f32 %v2599, %v2600
    %v2602 = vmul.f32 %v2342, 0.03125
    %v2603 = vmul.f32 %v2379, 0.03125
    %v2604 = vmul.f32 %v2416, 0.03125
    %v2605 = vmul.f32 %v2453, 0.03125
    %v2606 = vmul.f32 %v2490, 0.03125
    %v2607 = vmul.f32 %v2527, 0.03125
    %v2608 = vmul.f32 %v2564, 0.03125
    %v2609 = vmul.f32 %v2601, 0.03125
    %v2610 = vadd.f32 %v2602, 1e-05
    %v2611 = vadd.f32 %v2603, 1e-05
    %v2612 = vadd.f32 %v2604, 1e-05
    %v2613 = vadd.f32 %v2605, 1e-05
    %v2614 = vadd.f32 %v2606, 1e-05
    %v2615 = vadd.f32 %v2607, 1e-05
    %v2616 = vadd.f32 %v2608, 1e-05
    %v2617 = vadd.f32 %v2609, 1e-05
    %v2618 = vrsqrt.pop %v2610
    %v2619 = vmul.f32 %v2618, %v2610
    %v2620 = vmul.f32 %v2619, %v2618
    %v2621 = vmul.f32 0.5, %v2620
    %v2622 = vsub.f32 1.5, %v2621
    %v2623 = vmul.f32 %v2618, %v2622
    %vm2624 = vweird.f32 %v2610
    %vm2625 = vweird.f32 %v2618
    %vm2626 = vmor %vm2624, %vm2625
    %v2627 = vsel %vm2626, %v2618, %v2623
    %v2628 = vrsqrt.pop %v2611
    %v2629 = vmul.f32 %v2628, %v2611
    %v2630 = vmul.f32 %v2629, %v2628
    %v2631 = vmul.f32 0.5, %v2630
    %v2632 = vsub.f32 1.5, %v2631
    %v2633 = vmul.f32 %v2628, %v2632
    %vm2634 = vweird.f32 %v2611
    %vm2635 = vweird.f32 %v2628
    %vm2636 = vmor %vm2634, %vm2635
    %v2637 = vsel %vm2636, %v2628, %v2633
    %v2638 = vrsqrt.pop %v2612
    %v2639 = vmul.f32 %v2638, %v2612
    %v2640 = vmul.f32 %v2639, %v2638
    %v2641 = vmul.f32 0.5, %v2640
    %v2642 = vsub.f32 1.5, %v2641
    %v2643 = vmul.f32 %v2638, %v2642
    %vm2644 = vweird.f32 %v2612
    %vm2645 = vweird.f32 %v2638
    %vm2646 = vmor %vm2644, %vm2645
    %v2647 = vsel %vm2646, %v2638, %v2643
    %v2648 = vrsqrt.pop %v2613
    %v2649 = vmul.f32 %v2648, %v2613
    %v2650 = vmul.f32 %v2649, %v2648
    %v2651 = vmul.f32 0.5, %v2650
    %v2652 = vsub.f32 1.5, %v2651
    %v2653 = vmul.f32 %v2648, %v2652
    %vm2654 = vweird.f32 %v2613
    %vm2655 = vweird.f32 %v2648
    %vm2656 = vmor %vm2654, %vm2655
    %v2657 = vsel %vm2656, %v2648, %v2653
    %v2658 = vrsqrt.pop %v2614
    %v2659 = vmul.f32 %v2658, %v2614
    %v2660 = vmul.f32 %v2659, %v2658
    %v2661 = vmul.f32 0.5, %v2660
    %v2662 = vsub.f32 1.5, %v2661
    %v2663 = vmul.f32 %v2658, %v2662
    %vm2664 = vweird.f32 %v2614
    %vm2665 = vweird.f32 %v2658
    %vm2666 = vmor %vm2664, %vm2665
    %v2667 = vsel %vm2666, %v2658, %v2663
    %v2668 = vrsqrt.pop %v2615
    %v2669 = vmul.f32 %v2668, %v2615
    %v2670 = vmul.f32 %v2669, %v2668
    %v2671 = vmul.f32 0.5, %v2670
    %v2672 = vsub.f32 1.5, %v2671
    %v2673 = vmul.f32 %v2668, %v2672
    %vm2674 = vweird.f32 %v2615
    %vm2675 = vweird.f32 %v2668
    %vm2676 = vmor %vm2674, %vm2675
    %v2677 = vsel %vm2676, %v2668, %v2673
    %v2678 = vrsqrt.pop %v2616
    %v2679 = vmul.f32 %v2678, %v2616
    %v2680 = vmul.f32 %v2679, %v2678
    %v2681 = vmul.f32 0.5, %v2680
    %v2682 = vsub.f32 1.5, %v2681
    %v2683 = vmul.f32 %v2678, %v2682
    %vm2684 = vweird.f32 %v2616
    %vm2685 = vweird.f32 %v2678
    %vm2686 = vmor %vm2684, %vm2685
    %v2687 = vsel %vm2686, %v2678, %v2683
    %v2688 = vrsqrt.pop %v2617
    %v2689 = vmul.f32 %v2688, %v2617
    %v2690 = vmul.f32 %v2689, %v2688
    %v2691 = vmul.f32 0.5, %v2690
    %v2692 = vsub.f32 1.5, %v2691
    %v2693 = vmul.f32 %v2688, %v2692
    %vm2694 = vweird.f32 %v2617
    %vm2695 = vweird.f32 %v2688
    %vm2696 = vmor %vm2694, %vm2695
    %v2697 = vsel %vm2696, %v2688, %v2693
    %v2698 = vmul.f32 %v2050, %v2627
    %v2699 = vmul.f32 %v2051, %v2627
    %v2700 = vmul.f32 %v2052, %v2627
    %v2701 = vmul.f32 %v2053, %v2627
    %v2702 = vmul.f32 %v2054, %v2627
    %v2703 = vmul.f32 %v2055, %v2627
    %v2704 = vmul.f32 %v2056, %v2627
    %v2705 = vmul.f32 %v2057, %v2627
    %v2706 = vmul.f32 %v2058, %v2627
    %v2707 = vmul.f32 %v2059, %v2627
    %v2708 = vmul.f32 %v2060, %v2627
    %v2709 = vmul.f32 %v2061, %v2627
    %v2710 = vmul.f32 %v2062, %v2627
    %v2711 = vmul.f32 %v2063, %v2627
    %v2712 = vmul.f32 %v2064, %v2627
    %v2713 = vmul.f32 %v2065, %v2627
    %v2714 = vmul.f32 %v2066, %v2637
    %v2715 = vmul.f32 %v2067, %v2637
    %v2716 = vmul.f32 %v2068, %v2637
    %v2717 = vmul.f32 %v2069, %v2637
    %v2718 = vmul.f32 %v2070, %v2637
    %v2719 = vmul.f32 %v2071, %v2637
    %v2720 = vmul.f32 %v2072, %v2637
    %v2721 = vmul.f32 %v2073, %v2637
    %v2722 = vmul.f32 %v2074, %v2637
    %v2723 = vmul.f32 %v2075, %v2637
    %v2724 = vmul.f32 %v2076, %v2637
    %v2725 = vmul.f32 %v2077, %v2637
    %v2726 = vmul.f32 %v2078, %v2637
    %v2727 = vmul.f32 %v2079, %v2637
    %v2728 = vmul.f32 %v2080, %v2637
    %v2729 = vmul.f32 %v2081, %v2637
    %v2730 = vmul.f32 %v2082, %v2647
    %v2731 = vmul.f32 %v2083, %v2647
    %v2732 = vmul.f32 %v2084, %v2647
    %v2733 = vmul.f32 %v2085, %v2647
    %v2734 = vmul.f32 %v2086, %v2647
    %v2735 = vmul.f32 %v2087, %v2647
    %v2736 = vmul.f32 %v2088, %v2647
    %v2737 = vmul.f32 %v2089, %v2647
    %v2738 = vmul.f32 %v2090, %v2647
    %v2739 = vmul.f32 %v2091, %v2647
    %v2740 = vmul.f32 %v2092, %v2647
    %v2741 = vmul.f32 %v2093, %v2647
    %v2742 = vmul.f32 %v2094, %v2647
    %v2743 = vmul.f32 %v2095, %v2647
    %v2744 = vmul.f32 %v2096, %v2647
    %v2745 = vmul.f32 %v2097, %v2647
    %v2746 = vmul.f32 %v2098, %v2657
    %v2747 = vmul.f32 %v2099, %v2657
    %v2748 = vmul.f32 %v2100, %v2657
    %v2749 = vmul.f32 %v2101, %v2657
    %v2750 = vmul.f32 %v2102, %v2657
    %v2751 = vmul.f32 %v2103, %v2657
    %v2752 = vmul.f32 %v2104, %v2657
    %v2753 = vmul.f32 %v2105, %v2657
    %v2754 = vmul.f32 %v2106, %v2657
    %v2755 = vmul.f32 %v2107, %v2657
    %v2756 = vmul.f32 %v2108, %v2657
    %v2757 = vmul.f32 %v2109, %v2657
    %v2758 = vmul.f32 %v2110, %v2657
    %v2759 = vmul.f32 %v2111, %v2657
    %v2760 = vmul.f32 %v2112, %v2657
    %v2761 = vmul.f32 %v2113, %v2657
    %v2762 = vmul.f32 %v2114, %v2667
    %v2763 = vmul.f32 %v2115, %v2667
    %v2764 = vmul.f32 %v2116, %v2667
    %v2765 = vmul.f32 %v2117, %v2667
    %v2766 = vmul.f32 %v2118, %v2667
    %v2767 = vmul.f32 %v2119, %v2667
    %v2768 = vmul.f32 %v2120, %v2667
    %v2769 = vmul.f32 %v2121, %v2667
    %v2770 = vmul.f32 %v2122, %v2667
    %v2771 = vmul.f32 %v2123, %v2667
    %v2772 = vmul.f32 %v2124, %v2667
    %v2773 = vmul.f32 %v2125, %v2667
    %v2774 = vmul.f32 %v2126, %v2667
    %v2775 = vmul.f32 %v2127, %v2667
    %v2776 = vmul.f32 %v2128, %v2667
    %v2777 = vmul.f32 %v2129, %v2667
    %v2778 = vmul.f32 %v2130, %v2677
    %v2779 = vmul.f32 %v2131, %v2677
    %v2780 = vmul.f32 %v2132, %v2677
    %v2781 = vmul.f32 %v2133, %v2677
    %v2782 = vmul.f32 %v2134, %v2677
    %v2783 = vmul.f32 %v2135, %v2677
    %v2784 = vmul.f32 %v2136, %v2677
    %v2785 = vmul.f32 %v2137, %v2677
    %v2786 = vmul.f32 %v2138, %v2677
    %v2787 = vmul.f32 %v2139, %v2677
    %v2788 = vmul.f32 %v2140, %v2677
    %v2789 = vmul.f32 %v2141, %v2677
    %v2790 = vmul.f32 %v2142, %v2677
    %v2791 = vmul.f32 %v2143, %v2677
    %v2792 = vmul.f32 %v2144, %v2677
    %v2793 = vmul.f32 %v2145, %v2677
    %v2794 = vmul.f32 %v2146, %v2687
    %v2795 = vmul.f32 %v2147, %v2687
    %v2796 = vmul.f32 %v2148, %v2687
    %v2797 = vmul.f32 %v2149, %v2687
    %v2798 = vmul.f32 %v2150, %v2687
    %v2799 = vmul.f32 %v2151, %v2687
    %v2800 = vmul.f32 %v2152, %v2687
    %v2801 = vmul.f32 %v2153, %v2687
    %v2802 = vmul.f32 %v2154, %v2687
    %v2803 = vmul.f32 %v2155, %v2687
    %v2804 = vmul.f32 %v2156, %v2687
    %v2805 = vmul.f32 %v2157, %v2687
    %v2806 = vmul.f32 %v2158, %v2687
    %v2807 = vmul.f32 %v2159, %v2687
    %v2808 = vmul.f32 %v2160, %v2687
    %v2809 = vmul.f32 %v2161, %v2687
    %v2810 = vmul.f32 %v2162, %v2697
    %v2811 = vmul.f32 %v2163, %v2697
    %v2812 = vmul.f32 %v2164, %v2697
    %v2813 = vmul.f32 %v2165, %v2697
    %v2814 = vmul.f32 %v2166, %v2697
    %v2815 = vmul.f32 %v2167, %v2697
    %v2816 = vmul.f32 %v2168, %v2697
    %v2817 = vmul.f32 %v2169, %v2697
    %v2818 = vmul.f32 %v2170, %v2697
    %v2819 = vmul.f32 %v2171, %v2697
    %v2820 = vmul.f32 %v2172, %v2697
    %v2821 = vmul.f32 %v2173, %v2697
    %v2822 = vmul.f32 %v2174, %v2697
    %v2823 = vmul.f32 %v2175, %v2697
    %v2824 = vmul.f32 %v2176, %v2697
    %v2825 = vmul.f32 %v2177, %v2697
    %2827 = vset.pattern.permute.xlu0 0
    %2828 = vperm.xlu0 %2827, %v686
    %v2829 = vpop.permute.xlu0 %2828
    %2832 = vset.pattern.permute.xlu0 0
    %2833 = vperm.xlu0 %2832, %v687
    %v2834 = vpop.permute.xlu0 %2833
    %2837 = vset.pattern.permute.xlu0 0
    %2838 = vperm.xlu0 %2837, %v688
    %v2839 = vpop.permute.xlu0 %2838
    %2842 = vset.pattern.permute.xlu0 0
    %2843 = vperm.xlu0 %2842, %v689
    %v2844 = vpop.permute.xlu0 %2843
    %2847 = vset.pattern.permute.xlu0 0
    %2848 = vperm.xlu0 %2847, %v690
    %v2849 = vpop.permute.xlu0 %2848
    %2852 = vset.pattern.permute.xlu0 0
    %2853 = vperm.xlu0 %2852, %v691
    %v2854 = vpop.permute.xlu0 %2853
    %2857 = vset.pattern.permute.xlu0 0
    %2858 = vperm.xlu0 %2857, %v692
    %v2859 = vpop.permute.xlu0 %2858
    %2862 = vset.pattern.permute.xlu0 0
    %2863 = vperm.xlu0 %2862, %v693
    %v2864 = vpop.permute.xlu0 %2863
    %2867 = vset.pattern.permute.xlu0 0
    %2868 = vperm.xlu0 %2867, %v694
    %v2869 = vpop.permute.xlu0 %2868
    %2872 = vset.pattern.permute.xlu0 0
    %2873 = vperm.xlu0 %2872, %v695
    %v2874 = vpop.permute.xlu0 %2873
    %2877 = vset.pattern.permute.xlu0 0
    %2878 = vperm.xlu0 %2877, %v696
    %v2879 = vpop.permute.xlu0 %2878
    %2882 = vset.pattern.permute.xlu0 0
    %2883 = vperm.xlu0 %2882, %v697
    %v2884 = vpop.permute.xlu0 %2883
    %2887 = vset.pattern.permute.xlu0 0
    %2888 = vperm.xlu0 %2887, %v698
    %v2889 = vpop.permute.xlu0 %2888
    %2892 = vset.pattern.permute.xlu0 0
    %2893 = vperm.xlu0 %2892, %v699
    %v2894 = vpop.permute.xlu0 %2893
    %2897 = vset.pattern.permute.xlu0 0
    %2898 = vperm.xlu0 %2897, %v700
    %v2899 = vpop.permute.xlu0 %2898
    %2902 = vset.pattern.permute.xlu0 0
    %2903 = vperm.xlu0 %2902, %v701
    %v2904 = vpop.permute.xlu0 %2903
    %v2906 = vmul.f32 %v2698, %v2829
    %v2907 = vmul.f32 %v2699, %v2834
    %v2908 = vmul.f32 %v2700, %v2839
    %v2909 = vmul.f32 %v2701, %v2844
    %v2910 = vmul.f32 %v2702, %v2849
    %v2911 = vmul.f32 %v2703, %v2854
    %v2912 = vmul.f32 %v2704, %v2859
    %v2913 = vmul.f32 %v2705, %v2864
    %v2914 = vmul.f32 %v2706, %v2869
    %v2915 = vmul.f32 %v2707, %v2874
    %v2916 = vmul.f32 %v2708, %v2879
    %v2917 = vmul.f32 %v2709, %v2884
    %v2918 = vmul.f32 %v2710, %v2889
    %v2919 = vmul.f32 %v2711, %v2894
    %v2920 = vmul.f32 %v2712, %v2899
    %v2921 = vmul.f32 %v2713, %v2904
    %v2922 = vmul.f32 %v2714, %v2829
    %v2923 = vmul.f32 %v2715, %v2834
    %v2924 = vmul.f32 %v2716, %v2839
    %v2925 = vmul.f32 %v2717, %v2844
    %v2926 = vmul.f32 %v2718, %v2849
    %v2927 = vmul.f32 %v2719, %v2854
    %v2928 = vmul.f32 %v2720, %v2859
    %v2929 = vmul.f32 %v2721, %v2864
    %v2930 = vmul.f32 %v2722, %v2869
    %v2931 = vmul.f32 %v2723, %v2874
    %v2932 = vmul.f32 %v2724, %v2879
    %v2933 = vmul.f32 %v2725, %v2884
    %v2934 = vmul.f32 %v2726, %v2889
    %v2935 = vmul.f32 %v2727, %v2894
    %v2936 = vmul.f32 %v2728, %v2899
    %v2937 = vmul.f32 %v2729, %v2904
    %v2938 = vmul.f32 %v2730, %v2829
    %v2939 = vmul.f32 %v2731, %v2834
    %v2940 = vmul.f32 %v2732, %v2839
    %v2941 = vmul.f32 %v2733, %v2844
    %v2942 = vmul.f32 %v2734, %v2849
    %v2943 = vmul.f32 %v2735, %v2854
    %v2944 = vmul.f32 %v2736, %v2859
    %v2945 = vmul.f32 %v2737, %v2864
    %v2946 = vmul.f32 %v2738, %v2869
    %v2947 = vmul.f32 %v2739, %v2874
    %v2948 = vmul.f32 %v2740, %v2879
    %v2949 = vmul.f32 %v2741, %v2884
    %v2950 = vmul.f32 %v2742, %v2889
    %v2951 = vmul.f32 %v2743, %v2894
    %v2952 = vmul.f32 %v2744, %v2899
    %v2953 = vmul.f32 %v2745, %v2904
    %v2954 = vmul.f32 %v2746, %v2829
    %v2955 = vmul.f32 %v2747, %v2834
    %v2956 = vmul.f32 %v2748, %v2839
    %v2957 = vmul.f32 %v2749, %v2844
    %v2958 = vmul.f32 %v2750, %v2849
    %v2959 = vmul.f32 %v2751, %v2854
    %v2960 = vmul.f32 %v2752, %v2859
    %v2961 = vmul.f32 %v2753, %v2864
    %v2962 = vmul.f32 %v2754, %v2869
    %v2963 = vmul.f32 %v2755, %v2874
    %v2964 = vmul.f32 %v2756, %v2879
    %v2965 = vmul.f32 %v2757, %v2884
    %v2966 = vmul.f32 %v2758, %v2889
    %v2967 = vmul.f32 %v2759, %v2894
    %v2968 = vmul.f32 %v2760, %v2899
    %v2969 = vmul.f32 %v2761, %v2904
    %v2970 = vmul.f32 %v2762, %v2829
    %v2971 = vmul.f32 %v2763, %v2834
    %v2972 = vmul.f32 %v2764, %v2839
    %v2973 = vmul.f32 %v2765, %v2844
    %v2974 = vmul.f32 %v2766, %v2849
    %v2975 = vmul.f32 %v2767, %v2854
    %v2976 = vmul.f32 %v2768, %v2859
    %v2977 = vmul.f32 %v2769, %v2864
    %v2978 = vmul.f32 %v2770, %v2869
    %v2979 = vmul.f32 %v2771, %v2874
    %v2980 = vmul.f32 %v2772, %v2879
    %v2981 = vmul.f32 %v2773, %v2884
    %v2982 = vmul.f32 %v2774, %v2889
    %v2983 = vmul.f32 %v2775, %v2894
    %v2984 = vmul.f32 %v2776, %v2899
    %v2985 = vmul.f32 %v2777, %v2904
    %v2986 = vmul.f32 %v2778, %v2829
    %v2987 = vmul.f32 %v2779, %v2834
    %v2988 = vmul.f32 %v2780, %v2839
    %v2989 = vmul.f32 %v2781, %v2844
    %v2990 = vmul.f32 %v2782, %v2849
    %v2991 = vmul.f32 %v2783, %v2854
    %v2992 = vmul.f32 %v2784, %v2859
    %v2993 = vmul.f32 %v2785, %v2864
    %v2994 = vmul.f32 %v2786, %v2869
    %v2995 = vmul.f32 %v2787, %v2874
    %v2996 = vmul.f32 %v2788, %v2879
    %v2997 = vmul.f32 %v2789, %v2884
    %v2998 = vmul.f32 %v2790, %v2889
    %v2999 = vmul.f32 %v2791, %v2894
    %v3000 = vmul.f32 %v2792, %v2899
    %v3001 = vmul.f32 %v2793, %v2904
    %v3002 = vmul.f32 %v2794, %v2829
    %v3003 = vmul.f32 %v2795, %v2834
    %v3004 = vmul.f32 %v2796, %v2839
    %v3005 = vmul.f32 %v2797, %v2844
    %v3006 = vmul.f32 %v2798, %v2849
    %v3007 = vmul.f32 %v2799, %v2854
    %v3008 = vmul.f32 %v2800, %v2859
    %v3009 = vmul.f32 %v2801, %v2864
    %v3010 = vmul.f32 %v2802, %v2869
    %v3011 = vmul.f32 %v2803, %v2874
    %v3012 = vmul.f32 %v2804, %v2879
    %v3013 = vmul.f32 %v2805, %v2884
    %v3014 = vmul.f32 %v2806, %v2889
    %v3015 = vmul.f32 %v2807, %v2894
    %v3016 = vmul.f32 %v2808, %v2899
    %v3017 = vmul.f32 %v2809, %v2904
    %v3018 = vmul.f32 %v2810, %v2829
    %v3019 = vmul.f32 %v2811, %v2834
    %v3020 = vmul.f32 %v2812, %v2839
    %v3021 = vmul.f32 %v2813, %v2844
    %v3022 = vmul.f32 %v2814, %v2849
    %v3023 = vmul.f32 %v2815, %v2854
    %v3024 = vmul.f32 %v2816, %v2859
    %v3025 = vmul.f32 %v2817, %v2864
    %v3026 = vmul.f32 %v2818, %v2869
    %v3027 = vmul.f32 %v2819, %v2874
    %v3028 = vmul.f32 %v2820, %v2879
    %v3029 = vmul.f32 %v2821, %v2884
    %v3030 = vmul.f32 %v2822, %v2889
    %v3031 = vmul.f32 %v2823, %v2894
    %v3032 = vmul.f32 %v2824, %v2899
    %v3033 = vmul.f32 %v2825, %v2904
    %3034 = vset.pattern.permute.xlu0 1
    %3035 = vperm.xlu0 %3034, %v686
    %v3036 = vpop.permute.xlu0 %3035
    %3038 = vset.pattern.permute.xlu0 1
    %3039 = vperm.xlu0 %3038, %v687
    %v3040 = vpop.permute.xlu0 %3039
    %3042 = vset.pattern.permute.xlu0 1
    %3043 = vperm.xlu0 %3042, %v688
    %v3044 = vpop.permute.xlu0 %3043
    %3046 = vset.pattern.permute.xlu0 1
    %3047 = vperm.xlu0 %3046, %v689
    %v3048 = vpop.permute.xlu0 %3047
    %3050 = vset.pattern.permute.xlu0 1
    %3051 = vperm.xlu0 %3050, %v690
    %v3052 = vpop.permute.xlu0 %3051
    %3054 = vset.pattern.permute.xlu0 1
    %3055 = vperm.xlu0 %3054, %v691
    %v3056 = vpop.permute.xlu0 %3055
    %3058 = vset.pattern.permute.xlu0 1
    %3059 = vperm.xlu0 %3058, %v692
    %v3060 = vpop.permute.xlu0 %3059
    %3062 = vset.pattern.permute.xlu0 1
    %3063 = vperm.xlu0 %3062, %v693
    %v3064 = vpop.permute.xlu0 %3063
    %3066 = vset.pattern.permute.xlu0 1
    %3067 = vperm.xlu0 %3066, %v694
    %v3068 = vpop.permute.xlu0 %3067
    %3070 = vset.pattern.permute.xlu0 1
    %3071 = vperm.xlu0 %3070, %v695
    %v3072 = vpop.permute.xlu0 %3071
    %3074 = vset.pattern.permute.xlu0 1
    %3075 = vperm.xlu0 %3074, %v696
    %v3076 = vpop.permute.xlu0 %3075
    %3078 = vset.pattern.permute.xlu0 1
    %3079 = vperm.xlu0 %3078, %v697
    %v3080 = vpop.permute.xlu0 %3079
    %3082 = vset.pattern.permute.xlu0 1
    %3083 = vperm.xlu0 %3082, %v698
    %v3084 = vpop.permute.xlu0 %3083
    %3086 = vset.pattern.permute.xlu0 1
    %3087 = vperm.xlu0 %3086, %v699
    %v3088 = vpop.permute.xlu0 %3087
    %3090 = vset.pattern.permute.xlu0 1
    %3091 = vperm.xlu0 %3090, %v700
    %v3092 = vpop.permute.xlu0 %3091
    %3094 = vset.pattern.permute.xlu0 1
    %3095 = vperm.xlu0 %3094, %v701
    %v3096 = vpop.permute.xlu0 %3095
    %v3098 = vadd.f32 %v2906, %v3036
    %v3099 = vadd.f32 %v2907, %v3040
    %v3100 = vadd.f32 %v2908, %v3044
    %v3101 = vadd.f32 %v2909, %v3048
    %v3102 = vadd.f32 %v2910, %v3052
    %v3103 = vadd.f32 %v2911, %v3056
    %v3104 = vadd.f32 %v2912, %v3060
    %v3105 = vadd.f32 %v2913, %v3064
    %v3106 = vadd.f32 %v2914, %v3068
    %v3107 = vadd.f32 %v2915, %v3072
    %v3108 = vadd.f32 %v2916, %v3076
    %v3109 = vadd.f32 %v2917, %v3080
    %v3110 = vadd.f32 %v2918, %v3084
    %v3111 = vadd.f32 %v2919, %v3088
    %v3112 = vadd.f32 %v2920, %v3092
    %v3113 = vadd.f32 %v2921, %v3096
    %v3114 = vadd.f32 %v2922, %v3036
    %v3115 = vadd.f32 %v2923, %v3040
    %v3116 = vadd.f32 %v2924, %v3044
    %v3117 = vadd.f32 %v2925, %v3048
    %v3118 = vadd.f32 %v2926, %v3052
    %v3119 = vadd.f32 %v2927, %v3056
    %v3120 = vadd.f32 %v2928, %v3060
    %v3121 = vadd.f32 %v2929, %v3064
    %v3122 = vadd.f32 %v2930, %v3068
    %v3123 = vadd.f32 %v2931, %v3072
    %v3124 = vadd.f32 %v2932, %v3076
    %v3125 = vadd.f32 %v2933, %v3080
    %v3126 = vadd.f32 %v2934, %v3084
    %v3127 = vadd.f32 %v2935, %v3088
    %v3128 = vadd.f32 %v2936, %v3092
    %v3129 = vadd.f32 %v2937, %v3096
    %v3130 = vadd.f32 %v2938, %v3036
    %v3131 = vadd.f32 %v2939, %v3040
    %v3132 = vadd.f32 %v2940, %v3044
    %v3133 = vadd.f32 %v2941, %v3048
    %v3134 = vadd.f32 %v2942, %v3052
    %v3135 = vadd.f32 %v2943, %v3056
    %v3136 = vadd.f32 %v2944, %v3060
    %v3137 = vadd.f32 %v2945, %v3064
    %v3138 = vadd.f32 %v2946, %v3068
    %v3139 = vadd.f32 %v2947, %v3072
    %v3140 = vadd.f32 %v2948, %v3076
    %v3141 = vadd.f32 %v2949, %v3080
    %v3142 = vadd.f32 %v2950, %v3084
    %v3143 = vadd.f32 %v2951, %v3088
    %v3144 = vadd.f32 %v2952, %v3092
    %v3145 = vadd.f32 %v2953, %v3096
    %v3146 = vadd.f32 %v2954, %v3036
    %v3147 = vadd.f32 %v2955, %v3040
    %v3148 = vadd.f32 %v2956, %v3044
    %v3149 = vadd.f32 %v2957, %v3048
    %v3150 = vadd.f32 %v2958, %v3052
    %v3151 = vadd.f32 %v2959, %v3056
    %v3152 = vadd.f32 %v2960, %v3060
    %v3153 = vadd.f32 %v2961, %v3064
    %v3154 = vadd.f32 %v2962, %v3068
    %v3155 = vadd.f32 %v2963, %v3072
    %v3156 = vadd.f32 %v2964, %v3076
    %v3157 = vadd.f32 %v2965, %v3080
    %v3158 = vadd.f32 %v2966, %v3084
    %v3159 = vadd.f32 %v2967, %v3088
    %v3160 = vadd.f32 %v2968, %v3092
    %v3161 = vadd.f32 %v2969, %v3096
    %v3162 = vadd.f32 %v2970, %v3036
    %v3163 = vadd.f32 %v2971, %v3040
    %v3164 = vadd.f32 %v2972, %v3044
    %v3165 = vadd.f32 %v2973, %v3048
    %v3166 = vadd.f32 %v2974, %v3052
    %v3167 = vadd.f32 %v2975, %v3056
    %v3168 = vadd.f32 %v2976, %v3060
    %v3169 = vadd.f32 %v2977, %v3064
    %v3170 = vadd.f32 %v2978, %v3068
    %v3171 = vadd.f32 %v2979, %v3072
    %v3172 = vadd.f32 %v2980, %v3076
    %v3173 = vadd.f32 %v2981, %v3080
    %v3174 = vadd.f32 %v2982, %v3084
    %v3175 = vadd.f32 %v2983, %v3088
    %v3176 = vadd.f32 %v2984, %v3092
    %v3177 = vadd.f32 %v2985, %v3096
    %v3178 = vadd.f32 %v2986, %v3036
    %v3179 = vadd.f32 %v2987, %v3040
    %v3180 = vadd.f32 %v2988, %v3044
    %v3181 = vadd.f32 %v2989, %v3048
    %v3182 = vadd.f32 %v2990, %v3052
    %v3183 = vadd.f32 %v2991, %v3056
    %v3184 = vadd.f32 %v2992, %v3060
    %v3185 = vadd.f32 %v2993, %v3064
    %v3186 = vadd.f32 %v2994, %v3068
    %v3187 = vadd.f32 %v2995, %v3072
    %v3188 = vadd.f32 %v2996, %v3076
    %v3189 = vadd.f32 %v2997, %v3080
    %v3190 = vadd.f32 %v2998, %v3084
    %v3191 = vadd.f32 %v2999, %v3088
    %v3192 = vadd.f32 %v3000, %v3092
    %v3193 = vadd.f32 %v3001, %v3096
    %v3194 = vadd.f32 %v3002, %v3036
    %v3195 = vadd.f32 %v3003, %v3040
    %v3196 = vadd.f32 %v3004, %v3044
    %v3197 = vadd.f32 %v3005, %v3048
    %v3198 = vadd.f32 %v3006, %v3052
    %v3199 = vadd.f32 %v3007, %v3056
    %v3200 = vadd.f32 %v3008, %v3060
    %v3201 = vadd.f32 %v3009, %v3064
    %v3202 = vadd.f32 %v3010, %v3068
    %v3203 = vadd.f32 %v3011, %v3072
    %v3204 = vadd.f32 %v3012, %v3076
    %v3205 = vadd.f32 %v3013, %v3080
    %v3206 = vadd.f32 %v3014, %v3084
    %v3207 = vadd.f32 %v3015, %v3088
    %v3208 = vadd.f32 %v3016, %v3092
    %v3209 = vadd.f32 %v3017, %v3096
    %v3210 = vadd.f32 %v3018, %v3036
    %v3211 = vadd.f32 %v3019, %v3040
    %v3212 = vadd.f32 %v3020, %v3044
    %v3213 = vadd.f32 %v3021, %v3048
    %v3214 = vadd.f32 %v3022, %v3052
    %v3215 = vadd.f32 %v3023, %v3056
    %v3216 = vadd.f32 %v3024, %v3060
    %v3217 = vadd.f32 %v3025, %v3064
    %v3218 = vadd.f32 %v3026, %v3068
    %v3219 = vadd.f32 %v3027, %v3072
    %v3220 = vadd.f32 %v3028, %v3076
    %v3221 = vadd.f32 %v3029, %v3080
    %v3222 = vadd.f32 %v3030, %v3084
    %v3223 = vadd.f32 %v3031, %v3088
    %v3224 = vadd.f32 %v3032, %v3092
    %v3225 = vadd.f32 %v3033, %v3096
    %v3226 = vadd.f32 %v491, %v3098
    %v3227 = vadd.f32 %v492, %v3099
    %v3228 = vadd.f32 %v493, %v3100
    %v3229 = vadd.f32 %v494, %v3101
    %v3230 = vadd.f32 %v495, %v3102
    %v3231 = vadd.f32 %v496, %v3103
    %v3232 = vadd.f32 %v497, %v3104
    %v3233 = vadd.f32 %v498, %v3105
    %v3234 = vadd.f32 %v499, %v3106
    %v3235 = vadd.f32 %v500, %v3107
    %v3236 = vadd.f32 %v501, %v3108
    %v3237 = vadd.f32 %v502, %v3109
    %v3238 = vadd.f32 %v503, %v3110
    %v3239 = vadd.f32 %v504, %v3111
    %v3240 = vadd.f32 %v505, %v3112
    %v3241 = vadd.f32 %v506, %v3113
    %v3242 = vadd.f32 %v507, %v3114
    %v3243 = vadd.f32 %v508, %v3115
    %v3244 = vadd.f32 %v509, %v3116
    %v3245 = vadd.f32 %v510, %v3117
    %v3246 = vadd.f32 %v511, %v3118
    %v3247 = vadd.f32 %v512, %v3119
    %v3248 = vadd.f32 %v513, %v3120
    %v3249 = vadd.f32 %v514, %v3121
    %v3250 = vadd.f32 %v515, %v3122
    %v3251 = vadd.f32 %v516, %v3123
    %v3252 = vadd.f32 %v517, %v3124
    %v3253 = vadd.f32 %v518, %v3125
    %v3254 = vadd.f32 %v519, %v3126
    %v3255 = vadd.f32 %v520, %v3127
    %v3256 = vadd.f32 %v521, %v3128
    %v3257 = vadd.f32 %v522, %v3129
    %v3258 = vadd.f32 %v523, %v3130
    %v3259 = vadd.f32 %v524, %v3131
    %v3260 = vadd.f32 %v525, %v3132
    %v3261 = vadd.f32 %v526, %v3133
    %v3262 = vadd.f32 %v527, %v3134
    %v3263 = vadd.f32 %v528, %v3135
    %v3264 = vadd.f32 %v529, %v3136
    %v3265 = vadd.f32 %v530, %v3137
    %v3266 = vadd.f32 %v531, %v3138
    %v3267 = vadd.f32 %v532, %v3139
    %v3268 = vadd.f32 %v533, %v3140
    %v3269 = vadd.f32 %v534, %v3141
    %v3270 = vadd.f32 %v535, %v3142
    %v3271 = vadd.f32 %v536, %v3143
    %v3272 = vadd.f32 %v537, %v3144
    %v3273 = vadd.f32 %v538, %v3145
    %v3274 = vadd.f32 %v539, %v3146
    %v3275 = vadd.f32 %v540, %v3147
    %v3276 = vadd.f32 %v541, %v3148
    %v3277 = vadd.f32 %v542, %v3149
    %v3278 = vadd.f32 %v543, %v3150
    %v3279 = vadd.f32 %v544, %v3151
    %v3280 = vadd.f32 %v545, %v3152
    %v3281 = vadd.f32 %v546, %v3153
    %v3282 = vadd.f32 %v547, %v3154
    %v3283 = vadd.f32 %v548, %v3155
    %v3284 = vadd.f32 %v549, %v3156
    %v3285 = vadd.f32 %v550, %v3157
    %v3286 = vadd.f32 %v551, %v3158
    %v3287 = vadd.f32 %v552, %v3159
    %v3288 = vadd.f32 %v553, %v3160
    %v3289 = vadd.f32 %v554, %v3161
    %v3290 = vadd.f32 %v555, %v3162
    %v3291 = vadd.f32 %v556, %v3163
    %v3292 = vadd.f32 %v557, %v3164
    %v3293 = vadd.f32 %v558, %v3165
    %v3294 = vadd.f32 %v559, %v3166
    %v3295 = vadd.f32 %v560, %v3167
    %v3296 = vadd.f32 %v561, %v3168
    %v3297 = vadd.f32 %v562, %v3169
    %v3298 = vadd.f32 %v563, %v3170
    %v3299 = vadd.f32 %v564, %v3171
    %v3300 = vadd.f32 %v565, %v3172
    %v3301 = vadd.f32 %v566, %v3173
    %v3302 = vadd.f32 %v567, %v3174
    %v3303 = vadd.f32 %v568, %v3175
    %v3304 = vadd.f32 %v569, %v3176
    %v3305 = vadd.f32 %v570, %v3177
    %v3306 = vadd.f32 %v571, %v3178
    %v3307 = vadd.f32 %v572, %v3179
    %v3308 = vadd.f32 %v573, %v3180
    %v3309 = vadd.f32 %v574, %v3181
    %v3310 = vadd.f32 %v575, %v3182
    %v3311 = vadd.f32 %v576, %v3183
    %v3312 = vadd.f32 %v577, %v3184
    %v3313 = vadd.f32 %v578, %v3185
    %v3314 = vadd.f32 %v579, %v3186
    %v3315 = vadd.f32 %v580, %v3187
    %v3316 = vadd.f32 %v581, %v3188
    %v3317 = vadd.f32 %v582, %v3189
    %v3318 = vadd.f32 %v583, %v3190
    %v3319 = vadd.f32 %v584, %v3191
    %v3320 = vadd.f32 %v585, %v3192
    %v3321 = vadd.f32 %v586, %v3193
    %v3322 = vadd.f32 %v587, %v3194
    %v3323 = vadd.f32 %v588, %v3195
    %v3324 = vadd.f32 %v589, %v3196
    %v3325 = vadd.f32 %v590, %v3197
    %v3326 = vadd.f32 %v591, %v3198
    %v3327 = vadd.f32 %v592, %v3199
    %v3328 = vadd.f32 %v593, %v3200
    %v3329 = vadd.f32 %v594, %v3201
    %v3330 = vadd.f32 %v595, %v3202
    %v3331 = vadd.f32 %v596, %v3203
    %v3332 = vadd.f32 %v597, %v3204
    %v3333 = vadd.f32 %v598, %v3205
    %v3334 = vadd.f32 %v599, %v3206
    %v3335 = vadd.f32 %v600, %v3207
    %v3336 = vadd.f32 %v601, %v3208
    %v3337 = vadd.f32 %v602, %v3209
    %v3338 = vadd.f32 %v603, %v3210
    %v3339 = vadd.f32 %v604, %v3211
    %v3340 = vadd.f32 %v605, %v3212
    %v3341 = vadd.f32 %v606, %v3213
    %v3342 = vadd.f32 %v607, %v3214
    %v3343 = vadd.f32 %v608, %v3215
    %v3344 = vadd.f32 %v609, %v3216
    %v3345 = vadd.f32 %v610, %v3217
    %v3346 = vadd.f32 %v611, %v3218
    %v3347 = vadd.f32 %v612, %v3219
    %v3348 = vadd.f32 %v613, %v3220
    %v3349 = vadd.f32 %v614, %v3221
    %v3350 = vadd.f32 %v615, %v3222
    %v3351 = vadd.f32 %v616, %v3223
    %v3352 = vadd.f32 %v617, %v3224
    %v3353 = vadd.f32 %v618, %v3225
    %s3354 = scalar_lea.vmem %s3, 8
    %v3355 = vld [vmem:[%s3354] sm:$0xff]
    %s3356 = scalar_lea.vmem %s4, 1
    %v3357 = vld [vmem:[%s3356] sm:$0x1]
    %s3358 = scalar_lea.vmem %s5, 128
    %v3359 = vld [vmem:[%s3358] sm:$0xff]
    %v3360 = vld [vmem:[%s3358 + $0x8] sm:$0xff]
    %v3361 = vld [vmem:[%s3358 + $0x10] sm:$0xff]
    %v3362 = vld [vmem:[%s3358 + $0x18] sm:$0xff]
    %v3363 = vld [vmem:[%s3358 + $0x20] sm:$0xff]
    %v3364 = vld [vmem:[%s3358 + $0x28] sm:$0xff]
    %v3365 = vld [vmem:[%s3358 + $0x30] sm:$0xff]
    %v3366 = vld [vmem:[%s3358 + $0x38] sm:$0xff]
    %v3367 = vld [vmem:[%s3358 + $0x40] sm:$0xff]
    %v3368 = vld [vmem:[%s3358 + $0x48] sm:$0xff]
    %v3369 = vld [vmem:[%s3358 + $0x50] sm:$0xff]
    %v3370 = vld [vmem:[%s3358 + $0x58] sm:$0xff]
    %v3371 = vld [vmem:[%s3358 + $0x60] sm:$0xff]
    %v3372 = vld [vmem:[%s3358 + $0x68] sm:$0xff]
    %v3373 = vld [vmem:[%s3358 + $0x70] sm:$0xff]
    %v3374 = vld [vmem:[%s3358 + $0x78] sm:$0xff]
    %v3376 = vperm.slane %v3357, 0
    %v3379 = vsel %vm131, %v3226, 0
    %v3382 = vsel %vm131, %v3227, 0
    %v3385 = vsel %vm131, %v3228, 0
    %v3388 = vsel %vm131, %v3229, 0
    %v3391 = vsel %vm131, %v3230, 0
    %v3394 = vsel %vm131, %v3231, 0
    %v3397 = vsel %vm131, %v3232, 0
    %v3400 = vsel %vm131, %v3233, 0
    %v3403 = vsel %vm131, %v3234, 0
    %v3406 = vsel %vm131, %v3235, 0
    %v3409 = vsel %vm131, %v3236, 0
    %v3412 = vsel %vm131, %v3237, 0
    %v3415 = vsel %vm131, %v3238, 0
    %v3418 = vsel %vm131, %v3239, 0
    %v3421 = vsel %vm131, %v3240, 0
    %v3424 = vsel %vm131, %v3241, 0
    %v3427 = vsel %vm131, %v3242, 0
    %v3430 = vsel %vm131, %v3243, 0
    %v3433 = vsel %vm131, %v3244, 0
    %v3436 = vsel %vm131, %v3245, 0
    %v3439 = vsel %vm131, %v3246, 0
    %v3442 = vsel %vm131, %v3247, 0
    %v3445 = vsel %vm131, %v3248, 0
    %v3448 = vsel %vm131, %v3249, 0
    %v3451 = vsel %vm131, %v3250, 0
    %v3454 = vsel %vm131, %v3251, 0
    %v3457 = vsel %vm131, %v3252, 0
    %v3460 = vsel %vm131, %v3253, 0
    %v3463 = vsel %vm131, %v3254, 0
    %v3466 = vsel %vm131, %v3255, 0
    %v3469 = vsel %vm131, %v3256, 0
    %v3472 = vsel %vm131, %v3257, 0
    %v3475 = vsel %vm131, %v3258, 0
    %v3478 = vsel %vm131, %v3259, 0
    %v3481 = vsel %vm131, %v3260, 0
    %v3484 = vsel %vm131, %v3261, 0
    %v3487 = vsel %vm131, %v3262, 0
    %v3490 = vsel %vm131, %v3263, 0
    %v3493 = vsel %vm131, %v3264, 0
    %v3496 = vsel %vm131, %v3265, 0
    %v3499 = vsel %vm131, %v3266, 0
    %v3502 = vsel %vm131, %v3267, 0
    %v3505 = vsel %vm131, %v3268, 0
    %v3508 = vsel %vm131, %v3269, 0
    %v3511 = vsel %vm131, %v3270, 0
    %v3514 = vsel %vm131, %v3271, 0
    %v3517 = vsel %vm131, %v3272, 0
    %v3520 = vsel %vm131, %v3273, 0
    %v3523 = vsel %vm131, %v3274, 0
    %v3526 = vsel %vm131, %v3275, 0
    %v3529 = vsel %vm131, %v3276, 0
    %v3532 = vsel %vm131, %v3277, 0
    %v3535 = vsel %vm131, %v3278, 0
    %v3538 = vsel %vm131, %v3279, 0
    %v3541 = vsel %vm131, %v3280, 0
    %v3544 = vsel %vm131, %v3281, 0
    %v3547 = vsel %vm131, %v3282, 0
    %v3550 = vsel %vm131, %v3283, 0
    %v3553 = vsel %vm131, %v3284, 0
    %v3556 = vsel %vm131, %v3285, 0
    %v3559 = vsel %vm131, %v3286, 0
    %v3562 = vsel %vm131, %v3287, 0
    %v3565 = vsel %vm131, %v3288, 0
    %v3568 = vsel %vm131, %v3289, 0
    %v3571 = vsel %vm131, %v3290, 0
    %v3574 = vsel %vm131, %v3291, 0
    %v3577 = vsel %vm131, %v3292, 0
    %v3580 = vsel %vm131, %v3293, 0
    %v3583 = vsel %vm131, %v3294, 0
    %v3586 = vsel %vm131, %v3295, 0
    %v3589 = vsel %vm131, %v3296, 0
    %v3592 = vsel %vm131, %v3297, 0
    %v3595 = vsel %vm131, %v3298, 0
    %v3598 = vsel %vm131, %v3299, 0
    %v3601 = vsel %vm131, %v3300, 0
    %v3604 = vsel %vm131, %v3301, 0
    %v3607 = vsel %vm131, %v3302, 0
    %v3610 = vsel %vm131, %v3303, 0
    %v3613 = vsel %vm131, %v3304, 0
    %v3616 = vsel %vm131, %v3305, 0
    %v3619 = vsel %vm131, %v3306, 0
    %v3622 = vsel %vm131, %v3307, 0
    %v3625 = vsel %vm131, %v3308, 0
    %v3628 = vsel %vm131, %v3309, 0
    %v3631 = vsel %vm131, %v3310, 0
    %v3634 = vsel %vm131, %v3311, 0
    %v3637 = vsel %vm131, %v3312, 0
    %v3640 = vsel %vm131, %v3313, 0
    %v3643 = vsel %vm131, %v3314, 0
    %v3646 = vsel %vm131, %v3315, 0
    %v3649 = vsel %vm131, %v3316, 0
    %v3652 = vsel %vm131, %v3317, 0
    %v3655 = vsel %vm131, %v3318, 0
    %v3658 = vsel %vm131, %v3319, 0
    %v3661 = vsel %vm131, %v3320, 0
    %v3664 = vsel %vm131, %v3321, 0
    %v3667 = vsel %vm131, %v3322, 0
    %v3670 = vsel %vm131, %v3323, 0
    %v3673 = vsel %vm131, %v3324, 0
    %v3676 = vsel %vm131, %v3325, 0
    %v3679 = vsel %vm131, %v3326, 0
    %v3682 = vsel %vm131, %v3327, 0
    %v3685 = vsel %vm131, %v3328, 0
    %v3688 = vsel %vm131, %v3329, 0
    %v3691 = vsel %vm131, %v3330, 0
    %v3694 = vsel %vm131, %v3331, 0
    %v3697 = vsel %vm131, %v3332, 0
    %v3700 = vsel %vm131, %v3333, 0
    %v3703 = vsel %vm131, %v3334, 0
    %v3706 = vsel %vm131, %v3335, 0
    %v3709 = vsel %vm131, %v3336, 0
    %v3712 = vsel %vm131, %v3337, 0
    %v3715 = vsel %vm131, %v3338, 0
    %v3718 = vsel %vm131, %v3339, 0
    %v3721 = vsel %vm131, %v3340, 0
    %v3724 = vsel %vm131, %v3341, 0
    %v3727 = vsel %vm131, %v3342, 0
    %v3730 = vsel %vm131, %v3343, 0
    %v3733 = vsel %vm131, %v3344, 0
    %v3736 = vsel %vm131, %v3345, 0
    %v3739 = vsel %vm131, %v3346, 0
    %v3742 = vsel %vm131, %v3347, 0
    %v3745 = vsel %vm131, %v3348, 0
    %v3748 = vsel %vm131, %v3349, 0
    %v3751 = vsel %vm131, %v3350, 0
    %v3754 = vsel %vm131, %v3351, 0
    %v3757 = vsel %vm131, %v3352, 0
    %v3760 = vsel %vm131, %v3353, 0
    %3762 = vmatpush.msra.mxu0 0.0
    %3763 = vmatpush.msra.mxu0 0.0
    %3764 = vmatpush.msra.mxu0 0.0
    %3765 = vmatpush.msra.mxu0 0.0
    %3766 = vmatpush.msra.mxu0 0.0
    %3767 = vmatpush.msra.mxu0 0.0
    %3768 = vmatpush.msra.mxu0 0.0
    %3769 = vmatpush.msra.mxu0 0.0
    %3770 = vmatpush.msra.mxu0 0.0
    %3771 = vmatpush.msra.mxu0 0.0
    %3772 = vmatpush.msra.mxu0 0.0
    %3773 = vmatpush.msra.mxu0 0.0
    %3774 = vmatpush.msra.mxu0 0.0
    %3775 = vmatpush.msra.mxu0 0.0
    %3776 = vmatpush.msra.mxu0 0.0
    %3777 = vmatpush.msra.mxu0 %v3355
    %3778 = vmatmul.f32.gmra.mxu0 %v3379
    %v3779 = vpop.f32.mrf.mxu0
    %v3780 = vadd.f32 %v3376, %v3779
    %3781 = vmatmul.f32.gmra.mxu0 %v3382
    %v3782 = vpop.f32.mrf.mxu0
    %v3783 = vadd.f32 %v3376, %v3782
    %3784 = vmatmul.f32.gmra.mxu0 %v3385
    %v3785 = vpop.f32.mrf.mxu0
    %v3786 = vadd.f32 %v3376, %v3785
    %3787 = vmatmul.f32.gmra.mxu0 %v3388
    %v3788 = vpop.f32.mrf.mxu0
    %v3789 = vadd.f32 %v3376, %v3788
    %3790 = vmatmul.f32.gmra.mxu0 %v3391
    %v3791 = vpop.f32.mrf.mxu0
    %v3792 = vadd.f32 %v3376, %v3791
    %3793 = vmatmul.f32.gmra.mxu0 %v3394
    %v3794 = vpop.f32.mrf.mxu0
    %v3795 = vadd.f32 %v3376, %v3794
    %3796 = vmatmul.f32.gmra.mxu0 %v3397
    %v3797 = vpop.f32.mrf.mxu0
    %v3798 = vadd.f32 %v3376, %v3797
    %3799 = vmatmul.f32.gmra.mxu0 %v3400
    %v3800 = vpop.f32.mrf.mxu0
    %v3801 = vadd.f32 %v3376, %v3800
    %3802 = vmatmul.f32.gmra.mxu0 %v3403
    %v3803 = vpop.f32.mrf.mxu0
    %v3804 = vadd.f32 %v3376, %v3803
    %3805 = vmatmul.f32.gmra.mxu0 %v3406
    %v3806 = vpop.f32.mrf.mxu0
    %v3807 = vadd.f32 %v3376, %v3806
    %3808 = vmatmul.f32.gmra.mxu0 %v3409
    %v3809 = vpop.f32.mrf.mxu0
    %v3810 = vadd.f32 %v3376, %v3809
    %3811 = vmatmul.f32.gmra.mxu0 %v3412
    %v3812 = vpop.f32.mrf.mxu0
    %v3813 = vadd.f32 %v3376, %v3812
    %3814 = vmatmul.f32.gmra.mxu0 %v3415
    %v3815 = vpop.f32.mrf.mxu0
    %v3816 = vadd.f32 %v3376, %v3815
    %3817 = vmatmul.f32.gmra.mxu0 %v3418
    %v3818 = vpop.f32.mrf.mxu0
    %v3819 = vadd.f32 %v3376, %v3818
    %3820 = vmatmul.f32.gmra.mxu0 %v3421
    %v3821 = vpop.f32.mrf.mxu0
    %v3822 = vadd.f32 %v3376, %v3821
    %3823 = vmatmul.f32.gmra.mxu0 %v3424
    %v3824 = vpop.f32.mrf.mxu0
    %v3825 = vadd.f32 %v3376, %v3824
    %3826 = vmatmul.f32.gmra.mxu0 %v3427
    %v3827 = vpop.f32.mrf.mxu0
    %v3828 = vadd.f32 %v3376, %v3827
    %3829 = vmatmul.f32.gmra.mxu0 %v3430
    %v3830 = vpop.f32.mrf.mxu0
    %v3831 = vadd.f32 %v3376, %v3830
    %3832 = vmatmul.f32.gmra.mxu0 %v3433
    %v3833 = vpop.f32.mrf.mxu0
    %v3834 = vadd.f32 %v3376, %v3833
    %3835 = vmatmul.f32.gmra.mxu0 %v3436
    %v3836 = vpop.f32.mrf.mxu0
    %v3837 = vadd.f32 %v3376, %v3836
    %3838 = vmatmul.f32.gmra.mxu0 %v3439
    %v3839 = vpop.f32.mrf.mxu0
    %v3840 = vadd.f32 %v3376, %v3839
    %3841 = vmatmul.f32.gmra.mxu0 %v3442
    %v3842 = vpop.f32.mrf.mxu0
    %v3843 = vadd.f32 %v3376, %v3842
    %3844 = vmatmul.f32.gmra.mxu0 %v3445
    %v3845 = vpop.f32.mrf.mxu0
    %v3846 = vadd.f32 %v3376, %v3845
    %3847 = vmatmul.f32.gmra.mxu0 %v3448
    %v3848 = vpop.f32.mrf.mxu0
    %v3849 = vadd.f32 %v3376, %v3848
    %3850 = vmatmul.f32.gmra.mxu0 %v3451
    %v3851 = vpop.f32.mrf.mxu0
    %v3852 = vadd.f32 %v3376, %v3851
    %3853 = vmatmul.f32.gmra.mxu0 %v3454
    %v3854 = vpop.f32.mrf.mxu0
    %v3855 = vadd.f32 %v3376, %v3854
    %3856 = vmatmul.f32.gmra.mxu0 %v3457
    %v3857 = vpop.f32.mrf.mxu0
    %v3858 = vadd.f32 %v3376, %v3857
    %3859 = vmatmul.f32.gmra.mxu0 %v3460
    %v3860 = vpop.f32.mrf.mxu0
    %v3861 = vadd.f32 %v3376, %v3860
    %3862 = vmatmul.f32.gmra.mxu0 %v3463
    %v3863 = vpop.f32.mrf.mxu0
    %v3864 = vadd.f32 %v3376, %v3863
    %3865 = vmatmul.f32.gmra.mxu0 %v3466
    %v3866 = vpop.f32.mrf.mxu0
    %v3867 = vadd.f32 %v3376, %v3866
    %3868 = vmatmul.f32.gmra.mxu0 %v3469
    %v3869 = vpop.f32.mrf.mxu0
    %v3870 = vadd.f32 %v3376, %v3869
    %3871 = vmatmul.f32.gmra.mxu0 %v3472
    %v3872 = vpop.f32.mrf.mxu0
    %v3873 = vadd.f32 %v3376, %v3872
    %3874 = vmatmul.f32.gmra.mxu0 %v3475
    %v3875 = vpop.f32.mrf.mxu0
    %v3876 = vadd.f32 %v3376, %v3875
    %3877 = vmatmul.f32.gmra.mxu0 %v3478
    %v3878 = vpop.f32.mrf.mxu0
    %v3879 = vadd.f32 %v3376, %v3878
    %3880 = vmatmul.f32.gmra.mxu0 %v3481
    %v3881 = vpop.f32.mrf.mxu0
    %v3882 = vadd.f32 %v3376, %v3881
    %3883 = vmatmul.f32.gmra.mxu0 %v3484
    %v3884 = vpop.f32.mrf.mxu0
    %v3885 = vadd.f32 %v3376, %v3884
    %3886 = vmatmul.f32.gmra.mxu0 %v3487
    %v3887 = vpop.f32.mrf.mxu0
    %v3888 = vadd.f32 %v3376, %v3887
    %3889 = vmatmul.f32.gmra.mxu0 %v3490
    %v3890 = vpop.f32.mrf.mxu0
    %v3891 = vadd.f32 %v3376, %v3890
    %3892 = vmatmul.f32.gmra.mxu0 %v3493
    %v3893 = vpop.f32.mrf.mxu0
    %v3894 = vadd.f32 %v3376, %v3893
    %3895 = vmatmul.f32.gmra.mxu0 %v3496
    %v3896 = vpop.f32.mrf.mxu0
    %v3897 = vadd.f32 %v3376, %v3896
    %3898 = vmatmul.f32.gmra.mxu0 %v3499
    %v3899 = vpop.f32.mrf.mxu0
    %v3900 = vadd.f32 %v3376, %v3899
    %3901 = vmatmul.f32.gmra.mxu0 %v3502
    %v3902 = vpop.f32.mrf.mxu0
    %v3903 = vadd.f32 %v3376, %v3902
    %3904 = vmatmul.f32.gmra.mxu0 %v3505
    %v3905 = vpop.f32.mrf.mxu0
    %v3906 = vadd.f32 %v3376, %v3905
    %3907 = vmatmul.f32.gmra.mxu0 %v3508
    %v3908 = vpop.f32.mrf.mxu0
    %v3909 = vadd.f32 %v3376, %v3908
    %3910 = vmatmul.f32.gmra.mxu0 %v3511
    %v3911 = vpop.f32.mrf.mxu0
    %v3912 = vadd.f32 %v3376, %v3911
    %3913 = vmatmul.f32.gmra.mxu0 %v3514
    %v3914 = vpop.f32.mrf.mxu0
    %v3915 = vadd.f32 %v3376, %v3914
    %3916 = vmatmul.f32.gmra.mxu0 %v3517
    %v3917 = vpop.f32.mrf.mxu0
    %v3918 = vadd.f32 %v3376, %v3917
    %3919 = vmatmul.f32.gmra.mxu0 %v3520
    %v3920 = vpop.f32.mrf.mxu0
    %v3921 = vadd.f32 %v3376, %v3920
    %3922 = vmatmul.f32.gmra.mxu0 %v3523
    %v3923 = vpop.f32.mrf.mxu0
    %v3924 = vadd.f32 %v3376, %v3923
    %3925 = vmatmul.f32.gmra.mxu0 %v3526
    %v3926 = vpop.f32.mrf.mxu0
    %v3927 = vadd.f32 %v3376, %v3926
    %3928 = vmatmul.f32.gmra.mxu0 %v3529
    %v3929 = vpop.f32.mrf.mxu0
    %v3930 = vadd.f32 %v3376, %v3929
    %3931 = vmatmul.f32.gmra.mxu0 %v3532
    %v3932 = vpop.f32.mrf.mxu0
    %v3933 = vadd.f32 %v3376, %v3932
    %3934 = vmatmul.f32.gmra.mxu0 %v3535
    %v3935 = vpop.f32.mrf.mxu0
    %v3936 = vadd.f32 %v3376, %v3935
    %3937 = vmatmul.f32.gmra.mxu0 %v3538
    %v3938 = vpop.f32.mrf.mxu0
    %v3939 = vadd.f32 %v3376, %v3938
    %3940 = vmatmul.f32.gmra.mxu0 %v3541
    %v3941 = vpop.f32.mrf.mxu0
    %v3942 = vadd.f32 %v3376, %v3941
    %3943 = vmatmul.f32.gmra.mxu0 %v3544
    %v3944 = vpop.f32.mrf.mxu0
    %v3945 = vadd.f32 %v3376, %v3944
    %3946 = vmatmul.f32.gmra.mxu0 %v3547
    %v3947 = vpop.f32.mrf.mxu0
    %v3948 = vadd.f32 %v3376, %v3947
    %3949 = vmatmul.f32.gmra.mxu0 %v3550
    %v3950 = vpop.f32.mrf.mxu0
    %v3951 = vadd.f32 %v3376, %v3950
    %3952 = vmatmul.f32.gmra.mxu0 %v3553
    %v3953 = vpop.f32.mrf.mxu0
    %v3954 = vadd.f32 %v3376, %v3953
    %3955 = vmatmul.f32.gmra.mxu0 %v3556
    %v3956 = vpop.f32.mrf.mxu0
    %v3957 = vadd.f32 %v3376, %v3956
    %3958 = vmatmul.f32.gmra.mxu0 %v3559
    %v3959 = vpop.f32.mrf.mxu0
    %v3960 = vadd.f32 %v3376, %v3959
    %3961 = vmatmul.f32.gmra.mxu0 %v3562
    %v3962 = vpop.f32.mrf.mxu0
    %v3963 = vadd.f32 %v3376, %v3962
    %3964 = vmatmul.f32.gmra.mxu0 %v3565
    %v3965 = vpop.f32.mrf.mxu0
    %v3966 = vadd.f32 %v3376, %v3965
    %3967 = vmatmul.f32.gmra.mxu0 %v3568
    %v3968 = vpop.f32.mrf.mxu0
    %v3969 = vadd.f32 %v3376, %v3968
    %3970 = vmatmul.f32.gmra.mxu0 %v3571
    %v3971 = vpop.f32.mrf.mxu0
    %v3972 = vadd.f32 %v3376, %v3971
    %3973 = vmatmul.f32.gmra.mxu0 %v3574
    %v3974 = vpop.f32.mrf.mxu0
    %v3975 = vadd.f32 %v3376, %v3974
    %3976 = vmatmul.f32.gmra.mxu0 %v3577
    %v3977 = vpop.f32.mrf.mxu0
    %v3978 = vadd.f32 %v3376, %v3977
    %3979 = vmatmul.f32.gmra.mxu0 %v3580
    %v3980 = vpop.f32.mrf.mxu0
    %v3981 = vadd.f32 %v3376, %v3980
    %3982 = vmatmul.f32.gmra.mxu0 %v3583
    %v3983 = vpop.f32.mrf.mxu0
    %v3984 = vadd.f32 %v3376, %v3983
    %3985 = vmatmul.f32.gmra.mxu0 %v3586
    %v3986 = vpop.f32.mrf.mxu0
    %v3987 = vadd.f32 %v3376, %v3986
    %3988 = vmatmul.f32.gmra.mxu0 %v3589
    %v3989 = vpop.f32.mrf.mxu0
    %v3990 = vadd.f32 %v3376, %v3989
    %3991 = vmatmul.f32.gmra.mxu0 %v3592
    %v3992 = vpop.f32.mrf.mxu0
    %v3993 = vadd.f32 %v3376, %v3992
    %3994 = vmatmul.f32.gmra.mxu0 %v3595
    %v3995 = vpop.f32.mrf.mxu0
    %v3996 = vadd.f32 %v3376, %v3995
    %3997 = vmatmul.f32.gmra.mxu0 %v3598
    %v3998 = vpop.f32.mrf.mxu0
    %v3999 = vadd.f32 %v3376, %v3998
    %4000 = vmatmul.f32.gmra.mxu0 %v3601
    %v4001 = vpop.f32.mrf.mxu0
    %v4002 = vadd.f32 %v3376, %v4001
    %4003 = vmatmul.f32.gmra.mxu0 %v3604
    %v4004 = vpop.f32.mrf.mxu0
    %v4005 = vadd.f32 %v3376, %v4004
    %4006 = vmatmul.f32.gmra.mxu0 %v3607
    %v4007 = vpop.f32.mrf.mxu0
    %v4008 = vadd.f32 %v3376, %v4007
    %4009 = vmatmul.f32.gmra.mxu0 %v3610
    %v4010 = vpop.f32.mrf.mxu0
    %v4011 = vadd.f32 %v3376, %v4010
    %4012 = vmatmul.f32.gmra.mxu0 %v3613
    %v4013 = vpop.f32.mrf.mxu0
    %v4014 = vadd.f32 %v3376, %v4013
    %4015 = vmatmul.f32.gmra.mxu0 %v3616
    %v4016 = vpop.f32.mrf.mxu0
    %v4017 = vadd.f32 %v3376, %v4016
    %4018 = vmatmul.f32.gmra.mxu0 %v3619
    %v4019 = vpop.f32.mrf.mxu0
    %v4020 = vadd.f32 %v3376, %v4019
    %4021 = vmatmul.f32.gmra.mxu0 %v3622
    %v4022 = vpop.f32.mrf.mxu0
    %v4023 = vadd.f32 %v3376, %v4022
    %4024 = vmatmul.f32.gmra.mxu0 %v3625
    %v4025 = vpop.f32.mrf.mxu0
    %v4026 = vadd.f32 %v3376, %v4025
    %4027 = vmatmul.f32.gmra.mxu0 %v3628
    %v4028 = vpop.f32.mrf.mxu0
    %v4029 = vadd.f32 %v3376, %v4028
    %4030 = vmatmul.f32.gmra.mxu0 %v3631
    %v4031 = vpop.f32.mrf.mxu0
    %v4032 = vadd.f32 %v3376, %v4031
    %4033 = vmatmul.f32.gmra.mxu0 %v3634
    %v4034 = vpop.f32.mrf.mxu0
    %v4035 = vadd.f32 %v3376, %v4034
    %4036 = vmatmul.f32.gmra.mxu0 %v3637
    %v4037 = vpop.f32.mrf.mxu0
    %v4038 = vadd.f32 %v3376, %v4037
    %4039 = vmatmul.f32.gmra.mxu0 %v3640
    %v4040 = vpop.f32.mrf.mxu0
    %v4041 = vadd.f32 %v3376, %v4040
    %4042 = vmatmul.f32.gmra.mxu0 %v3643
    %v4043 = vpop.f32.mrf.mxu0
    %v4044 = vadd.f32 %v3376, %v4043
    %4045 = vmatmul.f32.gmra.mxu0 %v3646
    %v4046 = vpop.f32.mrf.mxu0
    %v4047 = vadd.f32 %v3376, %v4046
    %4048 = vmatmul.f32.gmra.mxu0 %v3649
    %v4049 = vpop.f32.mrf.mxu0
    %v4050 = vadd.f32 %v3376, %v4049
    %4051 = vmatmul.f32.gmra.mxu0 %v3652
    %v4052 = vpop.f32.mrf.mxu0
    %v4053 = vadd.f32 %v3376, %v4052
    %4054 = vmatmul.f32.gmra.mxu0 %v3655
    %v4055 = vpop.f32.mrf.mxu0
    %v4056 = vadd.f32 %v3376, %v4055
    %4057 = vmatmul.f32.gmra.mxu0 %v3658
    %v4058 = vpop.f32.mrf.mxu0
    %v4059 = vadd.f32 %v3376, %v4058
    %4060 = vmatmul.f32.gmra.mxu0 %v3661
    %v4061 = vpop.f32.mrf.mxu0
    %v4062 = vadd.f32 %v3376, %v4061
    %4063 = vmatmul.f32.gmra.mxu0 %v3664
    %v4064 = vpop.f32.mrf.mxu0
    %v4065 = vadd.f32 %v3376, %v4064
    %4066 = vmatmul.f32.gmra.mxu0 %v3667
    %v4067 = vpop.f32.mrf.mxu0
    %v4068 = vadd.f32 %v3376, %v4067
    %4069 = vmatmul.f32.gmra.mxu0 %v3670
    %v4070 = vpop.f32.mrf.mxu0
    %v4071 = vadd.f32 %v3376, %v4070
    %4072 = vmatmul.f32.gmra.mxu0 %v3673
    %v4073 = vpop.f32.mrf.mxu0
    %v4074 = vadd.f32 %v3376, %v4073
    %4075 = vmatmul.f32.gmra.mxu0 %v3676
    %v4076 = vpop.f32.mrf.mxu0
    %v4077 = vadd.f32 %v3376, %v4076
    %4078 = vmatmul.f32.gmra.mxu0 %v3679
    %v4079 = vpop.f32.mrf.mxu0
    %v4080 = vadd.f32 %v3376, %v4079
    %4081 = vmatmul.f32.gmra.mxu0 %v3682
    %v4082 = vpop.f32.mrf.mxu0
    %v4083 = vadd.f32 %v3376, %v4082
    %4084 = vmatmul.f32.gmra.mxu0 %v3685
    %v4085 = vpop.f32.mrf.mxu0
    %v4086 = vadd.f32 %v3376, %v4085
    %4087 = vmatmul.f32.gmra.mxu0 %v3688
    %v4088 = vpop.f32.mrf.mxu0
    %v4089 = vadd.f32 %v3376, %v4088
    %4090 = vmatmul.f32.gmra.mxu0 %v3691
    %v4091 = vpop.f32.mrf.mxu0
    %v4092 = vadd.f32 %v3376, %v4091
    %4093 = vmatmul.f32.gmra.mxu0 %v3694
    %v4094 = vpop.f32.mrf.mxu0
    %v4095 = vadd.f32 %v3376, %v4094
    %4096 = vmatmul.f32.gmra.mxu0 %v3697
    %v4097 = vpop.f32.mrf.mxu0
    %v4098 = vadd.f32 %v3376, %v4097
    %4099 = vmatmul.f32.gmra.mxu0 %v3700
    %v4100 = vpop.f32.mrf.mxu0
    %v4101 = vadd.f32 %v3376, %v4100
    %4102 = vmatmul.f32.gmra.mxu0 %v3703
    %v4103 = vpop.f32.mrf.mxu0
    %v4104 = vadd.f32 %v3376, %v4103
    %4105 = vmatmul.f32.gmra.mxu0 %v3706
    %v4106 = vpop.f32.mrf.mxu0
    %v4107 = vadd.f32 %v3376, %v4106
    %4108 = vmatmul.f32.gmra.mxu0 %v3709
    %v4109 = vpop.f32.mrf.mxu0
    %v4110 = vadd.f32 %v3376, %v4109
    %4111 = vmatmul.f32.gmra.mxu0 %v3712
    %v4112 = vpop.f32.mrf.mxu0
    %v4113 = vadd.f32 %v3376, %v4112
    %4114 = vmatmul.f32.gmra.mxu0 %v3715
    %v4115 = vpop.f32.mrf.mxu0
    %v4116 = vadd.f32 %v3376, %v4115
    %4117 = vmatmul.f32.gmra.mxu0 %v3718
    %v4118 = vpop.f32.mrf.mxu0
    %v4119 = vadd.f32 %v3376, %v4118
    %4120 = vmatmul.f32.gmra.mxu0 %v3721
    %v4121 = vpop.f32.mrf.mxu0
    %v4122 = vadd.f32 %v3376, %v4121
    %4123 = vmatmul.f32.gmra.mxu0 %v3724
    %v4124 = vpop.f32.mrf.mxu0
    %v4125 = vadd.f32 %v3376, %v4124
    %4126 = vmatmul.f32.gmra.mxu0 %v3727
    %v4127 = vpop.f32.mrf.mxu0
    %v4128 = vadd.f32 %v3376, %v4127
    %4129 = vmatmul.f32.gmra.mxu0 %v3730
    %v4130 = vpop.f32.mrf.mxu0
    %v4131 = vadd.f32 %v3376, %v4130
    %4132 = vmatmul.f32.gmra.mxu0 %v3733
    %v4133 = vpop.f32.mrf.mxu0
    %v4134 = vadd.f32 %v3376, %v4133
    %4135 = vmatmul.f32.gmra.mxu0 %v3736
    %v4136 = vpop.f32.mrf.mxu0
    %v4137 = vadd.f32 %v3376, %v4136
    %4138 = vmatmul.f32.gmra.mxu0 %v3739
    %v4139 = vpop.f32.mrf.mxu0
    %v4140 = vadd.f32 %v3376, %v4139
    %4141 = vmatmul.f32.gmra.mxu0 %v3742
    %v4142 = vpop.f32.mrf.mxu0
    %v4143 = vadd.f32 %v3376, %v4142
    %4144 = vmatmul.f32.gmra.mxu0 %v3745
    %v4145 = vpop.f32.mrf.mxu0
    %v4146 = vadd.f32 %v3376, %v4145
    %4147 = vmatmul.f32.gmra.mxu0 %v3748
    %v4148 = vpop.f32.mrf.mxu0
    %v4149 = vadd.f32 %v3376, %v4148
    %4150 = vmatmul.f32.gmra.mxu0 %v3751
    %v4151 = vpop.f32.mrf.mxu0
    %v4152 = vadd.f32 %v3376, %v4151
    %4153 = vmatmul.f32.gmra.mxu0 %v3754
    %v4154 = vpop.f32.mrf.mxu0
    %v4155 = vadd.f32 %v3376, %v4154
    %4156 = vmatmul.f32.gmra.mxu0 %v3757
    %v4157 = vpop.f32.mrf.mxu0
    %v4158 = vadd.f32 %v3376, %v4157
    %4159 = vmatmul.f32.gmra.mxu0 %v3760
    %v4160 = vpop.f32.mrf.mxu0
    %v4161 = vadd.f32 %v3376, %v4160
    %4162 = vdwg.mxu0
    %v4163 = vmul.f32 %v3780, %v668
    %v4164 = vmul.f32 %v3783, %v669
    %v4165 = vmul.f32 %v3786, %v670
    %v4166 = vmul.f32 %v3789, %v671
    %v4167 = vmul.f32 %v3792, %v672
    %v4168 = vmul.f32 %v3795, %v673
    %v4169 = vmul.f32 %v3798, %v674
    %v4170 = vmul.f32 %v3801, %v675
    %v4171 = vmul.f32 %v3804, %v676
    %v4172 = vmul.f32 %v3807, %v677
    %v4173 = vmul.f32 %v3810, %v678
    %v4174 = vmul.f32 %v3813, %v679
    %v4175 = vmul.f32 %v3816, %v680
    %v4176 = vmul.f32 %v3819, %v681
    %v4177 = vmul.f32 %v3822, %v682
    %v4178 = vmul.f32 %v3825, %v683
    %v4179 = vmul.f32 %v3828, %v668
    %v4180 = vmul.f32 %v3831, %v669
    %v4181 = vmul.f32 %v3834, %v670
    %v4182 = vmul.f32 %v3837, %v671
    %v4183 = vmul.f32 %v3840, %v672
    %v4184 = vmul.f32 %v3843, %v673
    %v4185 = vmul.f32 %v3846, %v674
    %v4186 = vmul.f32 %v3849, %v675
    %v4187 = vmul.f32 %v3852, %v676
    %v4188 = vmul.f32 %v3855, %v677
    %v4189 = vmul.f32 %v3858, %v678
    %v4190 = vmul.f32 %v3861, %v679
    %v4191 = vmul.f32 %v3864, %v680
    %v4192 = vmul.f32 %v3867, %v681
    %v4193 = vmul.f32 %v3870, %v682
    %v4194 = vmul.f32 %v3873, %v683
    %v4195 = vmul.f32 %v3876, %v668
    %v4196 = vmul.f32 %v3879, %v669
    %v4197 = vmul.f32 %v3882, %v670
    %v4198 = vmul.f32 %v3885, %v671
    %v4199 = vmul.f32 %v3888, %v672
    %v4200 = vmul.f32 %v3891, %v673
    %v4201 = vmul.f32 %v3894, %v674
    %v4202 = vmul.f32 %v3897, %v675
    %v4203 = vmul.f32 %v3900, %v676
    %v4204 = vmul.f32 %v3903, %v677
    %v4205 = vmul.f32 %v3906, %v678
    %v4206 = vmul.f32 %v3909, %v679
    %v4207 = vmul.f32 %v3912, %v680
    %v4208 = vmul.f32 %v3915, %v681
    %v4209 = vmul.f32 %v3918, %v682
    %v4210 = vmul.f32 %v3921, %v683
    %v4211 = vmul.f32 %v3924, %v668
    %v4212 = vmul.f32 %v3927, %v669
    %v4213 = vmul.f32 %v3930, %v670
    %v4214 = vmul.f32 %v3933, %v671
    %v4215 = vmul.f32 %v3936, %v672
    %v4216 = vmul.f32 %v3939, %v673
    %v4217 = vmul.f32 %v3942, %v674
    %v4218 = vmul.f32 %v3945, %v675
    %v4219 = vmul.f32 %v3948, %v676
    %v4220 = vmul.f32 %v3951, %v677
    %v4221 = vmul.f32 %v3954, %v678
    %v4222 = vmul.f32 %v3957, %v679
    %v4223 = vmul.f32 %v3960, %v680
    %v4224 = vmul.f32 %v3963, %v681
    %v4225 = vmul.f32 %v3966, %v682
    %v4226 = vmul.f32 %v3969, %v683
    %v4227 = vmul.f32 %v3972, %v668
    %v4228 = vmul.f32 %v3975, %v669
    %v4229 = vmul.f32 %v3978, %v670
    %v4230 = vmul.f32 %v3981, %v671
    %v4231 = vmul.f32 %v3984, %v672
    %v4232 = vmul.f32 %v3987, %v673
    %v4233 = vmul.f32 %v3990, %v674
    %v4234 = vmul.f32 %v3993, %v675
    %v4235 = vmul.f32 %v3996, %v676
    %v4236 = vmul.f32 %v3999, %v677
    %v4237 = vmul.f32 %v4002, %v678
    %v4238 = vmul.f32 %v4005, %v679
    %v4239 = vmul.f32 %v4008, %v680
    %v4240 = vmul.f32 %v4011, %v681
    %v4241 = vmul.f32 %v4014, %v682
    %v4242 = vmul.f32 %v4017, %v683
    %v4243 = vmul.f32 %v4020, %v668
    %v4244 = vmul.f32 %v4023, %v669
    %v4245 = vmul.f32 %v4026, %v670
    %v4246 = vmul.f32 %v4029, %v671
    %v4247 = vmul.f32 %v4032, %v672
    %v4248 = vmul.f32 %v4035, %v673
    %v4249 = vmul.f32 %v4038, %v674
    %v4250 = vmul.f32 %v4041, %v675
    %v4251 = vmul.f32 %v4044, %v676
    %v4252 = vmul.f32 %v4047, %v677
    %v4253 = vmul.f32 %v4050, %v678
    %v4254 = vmul.f32 %v4053, %v679
    %v4255 = vmul.f32 %v4056, %v680
    %v4256 = vmul.f32 %v4059, %v681
    %v4257 = vmul.f32 %v4062, %v682
    %v4258 = vmul.f32 %v4065, %v683
    %v4259 = vmul.f32 %v4068, %v668
    %v4260 = vmul.f32 %v4071, %v669
    %v4261 = vmul.f32 %v4074, %v670
    %v4262 = vmul.f32 %v4077, %v671
    %v4263 = vmul.f32 %v4080, %v672
    %v4264 = vmul.f32 %v4083, %v673
    %v4265 = vmul.f32 %v4086, %v674
    %v4266 = vmul.f32 %v4089, %v675
    %v4267 = vmul.f32 %v4092, %v676
    %v4268 = vmul.f32 %v4095, %v677
    %v4269 = vmul.f32 %v4098, %v678
    %v4270 = vmul.f32 %v4101, %v679
    %v4271 = vmul.f32 %v4104, %v680
    %v4272 = vmul.f32 %v4107, %v681
    %v4273 = vmul.f32 %v4110, %v682
    %v4274 = vmul.f32 %v4113, %v683
    %v4275 = vmul.f32 %v4116, %v668
    %v4276 = vmul.f32 %v4119, %v669
    %v4277 = vmul.f32 %v4122, %v670
    %v4278 = vmul.f32 %v4125, %v671
    %v4279 = vmul.f32 %v4128, %v672
    %v4280 = vmul.f32 %v4131, %v673
    %v4281 = vmul.f32 %v4134, %v674
    %v4282 = vmul.f32 %v4137, %v675
    %v4283 = vmul.f32 %v4140, %v676
    %v4284 = vmul.f32 %v4143, %v677
    %v4285 = vmul.f32 %v4146, %v678
    %v4286 = vmul.f32 %v4149, %v679
    %v4287 = vmul.f32 %v4152, %v680
    %v4288 = vmul.f32 %v4155, %v681
    %v4289 = vmul.f32 %v4158, %v682
    %v4290 = vmul.f32 %v4161, %v683
    %v4291 = vsel %vm131, %v4163, 0.0
    %v4292 = vsel %vm131, %v4164, 0.0
    %v4293 = vadd.f32 %v4291, %v4292
    %v4294 = vsel %vm131, %v4165, 0.0
    %v4295 = vadd.f32 %v4293, %v4294
    %v4296 = vsel %vm131, %v4166, 0.0
    %v4297 = vadd.f32 %v4295, %v4296
    %v4298 = vsel %vm131, %v4167, 0.0
    %v4299 = vadd.f32 %v4297, %v4298
    %v4300 = vsel %vm131, %v4168, 0.0
    %v4301 = vadd.f32 %v4299, %v4300
    %v4302 = vsel %vm131, %v4169, 0.0
    %v4303 = vadd.f32 %v4301, %v4302
    %v4304 = vsel %vm131, %v4170, 0.0
    %v4305 = vadd.f32 %v4303, %v4304
    %v4306 = vsel %vm131, %v4171, 0.0
    %v4307 = vadd.f32 %v4305, %v4306
    %v4308 = vsel %vm131, %v4172, 0.0
    %v4309 = vadd.f32 %v4307, %v4308
    %v4310 = vsel %vm131, %v4173, 0.0
    %v4311 = vadd.f32 %v4309, %v4310
    %v4312 = vsel %vm131, %v4174, 0.0
    %v4313 = vadd.f32 %v4311, %v4312
    %v4314 = vsel %vm131, %v4175, 0.0
    %v4315 = vadd.f32 %v4313, %v4314
    %v4316 = vsel %vm131, %v4176, 0.0
    %v4317 = vadd.f32 %v4315, %v4316
    %v4318 = vsel %vm131, %v4177, 0.0
    %v4319 = vadd.f32 %v4317, %v4318
    %v4320 = vsel %vm131, %v4178, 0.0
    %v4321 = vadd.f32 %v4319, %v4320
    %v4322 = vrot.slane %v4321, 4
    %v4323 = vadd.f32 %v4321, %v4322
    %v4324 = vrot.slane %v4323, 2
    %v4325 = vadd.f32 %v4323, %v4324
    %v4326 = vrot.slane %v4325, 1
    %v4327 = vadd.f32 %v4325, %v4326
    %v4328 = vsel %vm131, %v4179, 0.0
    %v4329 = vsel %vm131, %v4180, 0.0
    %v4330 = vadd.f32 %v4328, %v4329
    %v4331 = vsel %vm131, %v4181, 0.0
    %v4332 = vadd.f32 %v4330, %v4331
    %v4333 = vsel %vm131, %v4182, 0.0
    %v4334 = vadd.f32 %v4332, %v4333
    %v4335 = vsel %vm131, %v4183, 0.0
    %v4336 = vadd.f32 %v4334, %v4335
    %v4337 = vsel %vm131, %v4184, 0.0
    %v4338 = vadd.f32 %v4336, %v4337
    %v4339 = vsel %vm131, %v4185, 0.0
    %v4340 = vadd.f32 %v4338, %v4339
    %v4341 = vsel %vm131, %v4186, 0.0
    %v4342 = vadd.f32 %v4340, %v4341
    %v4343 = vsel %vm131, %v4187, 0.0
    %v4344 = vadd.f32 %v4342, %v4343
    %v4345 = vsel %vm131, %v4188, 0.0
    %v4346 = vadd.f32 %v4344, %v4345
    %v4347 = vsel %vm131, %v4189, 0.0
    %v4348 = vadd.f32 %v4346, %v4347
    %v4349 = vsel %vm131, %v4190, 0.0
    %v4350 = vadd.f32 %v4348, %v4349
    %v4351 = vsel %vm131, %v4191, 0.0
    %v4352 = vadd.f32 %v4350, %v4351
    %v4353 = vsel %vm131, %v4192, 0.0
    %v4354 = vadd.f32 %v4352, %v4353
    %v4355 = vsel %vm131, %v4193, 0.0
    %v4356 = vadd.f32 %v4354, %v4355
    %v4357 = vsel %vm131, %v4194, 0.0
    %v4358 = vadd.f32 %v4356, %v4357
    %v4359 = vrot.slane %v4358, 4
    %v4360 = vadd.f32 %v4358, %v4359
    %v4361 = vrot.slane %v4360, 2
    %v4362 = vadd.f32 %v4360, %v4361
    %v4363 = vrot.slane %v4362, 1
    %v4364 = vadd.f32 %v4362, %v4363
    %v4365 = vsel %vm131, %v4195, 0.0
    %v4366 = vsel %vm131, %v4196, 0.0
    %v4367 = vadd.f32 %v4365, %v4366
    %v4368 = vsel %vm131, %v4197, 0.0
    %v4369 = vadd.f32 %v4367, %v4368
    %v4370 = vsel %vm131, %v4198, 0.0
    %v4371 = vadd.f32 %v4369, %v4370
    %v4372 = vsel %vm131, %v4199, 0.0
    %v4373 = vadd.f32 %v4371, %v4372
    %v4374 = vsel %vm131, %v4200, 0.0
    %v4375 = vadd.f32 %v4373, %v4374
    %v4376 = vsel %vm131, %v4201, 0.0
    %v4377 = vadd.f32 %v4375, %v4376
    %v4378 = vsel %vm131, %v4202, 0.0
    %v4379 = vadd.f32 %v4377, %v4378
    %v4380 = vsel %vm131, %v4203, 0.0
    %v4381 = vadd.f32 %v4379, %v4380
    %v4382 = vsel %vm131, %v4204, 0.0
    %v4383 = vadd.f32 %v4381, %v4382
    %v4384 = vsel %vm131, %v4205, 0.0
    %v4385 = vadd.f32 %v4383, %v4384
    %v4386 = vsel %vm131, %v4206, 0.0
    %v4387 = vadd.f32 %v4385, %v4386
    %v4388 = vsel %vm131, %v4207, 0.0
    %v4389 = vadd.f32 %v4387, %v4388
    %v4390 = vsel %vm131, %v4208, 0.0
    %v4391 = vadd.f32 %v4389, %v4390
    %v4392 = vsel %vm131, %v4209, 0.0
    %v4393 = vadd.f32 %v4391, %v4392
    %v4394 = vsel %vm131, %v4210, 0.0
    %v4395 = vadd.f32 %v4393, %v4394
    %v4396 = vrot.slane %v4395, 4
    %v4397 = vadd.f32 %v4395, %v4396
    %v4398 = vrot.slane %v4397, 2
    %v4399 = vadd.f32 %v4397, %v4398
    %v4400 = vrot.slane %v4399, 1
    %v4401 = vadd.f32 %v4399, %v4400
    %v4402 = vsel %vm131, %v4211, 0.0
    %v4403 = vsel %vm131, %v4212, 0.0
    %v4404 = vadd.f32 %v4402, %v4403
    %v4405 = vsel %vm131, %v4213, 0.0
    %v4406 = vadd.f32 %v4404, %v4405
    %v4407 = vsel %vm131, %v4214, 0.0
    %v4408 = vadd.f32 %v4406, %v4407
    %v4409 = vsel %vm131, %v4215, 0.0
    %v4410 = vadd.f32 %v4408, %v4409
    %v4411 = vsel %vm131, %v4216, 0.0
    %v4412 = vadd.f32 %v4410, %v4411
    %v4413 = vsel %vm131, %v4217, 0.0
    %v4414 = vadd.f32 %v4412, %v4413
    %v4415 = vsel %vm131, %v4218, 0.0
    %v4416 = vadd.f32 %v4414, %v4415
    %v4417 = vsel %vm131, %v4219, 0.0
    %v4418 = vadd.f32 %v4416, %v4417
    %v4419 = vsel %vm131, %v4220, 0.0
    %v4420 = vadd.f32 %v4418, %v4419
    %v4421 = vsel %vm131, %v4221, 0.0
    %v4422 = vadd.f32 %v4420, %v4421
    %v4423 = vsel %vm131, %v4222, 0.0
    %v4424 = vadd.f32 %v4422, %v4423
    %v4425 = vsel %vm131, %v4223, 0.0
    %v4426 = vadd.f32 %v4424, %v4425
    %v4427 = vsel %vm131, %v4224, 0.0
    %v4428 = vadd.f32 %v4426, %v4427
    %v4429 = vsel %vm131, %v4225, 0.0
    %v4430 = vadd.f32 %v4428, %v4429
    %v4431 = vsel %vm131, %v4226, 0.0
    %v4432 = vadd.f32 %v4430, %v4431
    %v4433 = vrot.slane %v4432, 4
    %v4434 = vadd.f32 %v4432, %v4433
    %v4435 = vrot.slane %v4434, 2
    %v4436 = vadd.f32 %v4434, %v4435
    %v4437 = vrot.slane %v4436, 1
    %v4438 = vadd.f32 %v4436, %v4437
    %v4439 = vsel %vm131, %v4227, 0.0
    %v4440 = vsel %vm131, %v4228, 0.0
    %v4441 = vadd.f32 %v4439, %v4440
    %v4442 = vsel %vm131, %v4229, 0.0
    %v4443 = vadd.f32 %v4441, %v4442
    %v4444 = vsel %vm131, %v4230, 0.0
    %v4445 = vadd.f32 %v4443, %v4444
    %v4446 = vsel %vm131, %v4231, 0.0
    %v4447 = vadd.f32 %v4445, %v4446
    %v4448 = vsel %vm131, %v4232, 0.0
    %v4449 = vadd.f32 %v4447, %v4448
    %v4450 = vsel %vm131, %v4233, 0.0
    %v4451 = vadd.f32 %v4449, %v4450
    %v4452 = vsel %vm131, %v4234, 0.0
    %v4453 = vadd.f32 %v4451, %v4452
    %v4454 = vsel %vm131, %v4235, 0.0
    %v4455 = vadd.f32 %v4453, %v4454
    %v4456 = vsel %vm131, %v4236, 0.0
    %v4457 = vadd.f32 %v4455, %v4456
    %v4458 = vsel %vm131, %v4237, 0.0
    %v4459 = vadd.f32 %v4457, %v4458
    %v4460 = vsel %vm131, %v4238, 0.0
    %v4461 = vadd.f32 %v4459, %v4460
    %v4462 = vsel %vm131, %v4239, 0.0
    %v4463 = vadd.f32 %v4461, %v4462
    %v4464 = vsel %vm131, %v4240, 0.0
    %v4465 = vadd.f32 %v4463, %v4464
    %v4466 = vsel %vm131, %v4241, 0.0
    %v4467 = vadd.f32 %v4465, %v4466
    %v4468 = vsel %vm131, %v4242, 0.0
    %v4469 = vadd.f32 %v4467, %v4468
    %v4470 = vrot.slane %v4469, 4
    %v4471 = vadd.f32 %v4469, %v4470
    %v4472 = vrot.slane %v4471, 2
    %v4473 = vadd.f32 %v4471, %v4472
    %v4474 = vrot.slane %v4473, 1
    %v4475 = vadd.f32 %v4473, %v4474
    %v4476 = vsel %vm131, %v4243, 0.0
    %v4477 = vsel %vm131, %v4244, 0.0
    %v4478 = vadd.f32 %v4476, %v4477
    %v4479 = vsel %vm131, %v4245, 0.0
    %v4480 = vadd.f32 %v4478, %v4479
    %v4481 = vsel %vm131, %v4246, 0.0
    %v4482 = vadd.f32 %v4480, %v4481
    %v4483 = vsel %vm131, %v4247, 0.0
    %v4484 = vadd.f32 %v4482, %v4483
    %v4485 = vsel %vm131, %v4248, 0.0
    %v4486 = vadd.f32 %v4484, %v4485
    %v4487 = vsel %vm131, %v4249, 0.0
    %v4488 = vadd.f32 %v4486, %v4487
    %v4489 = vsel %vm131, %v4250, 0.0
    %v4490 = vadd.f32 %v4488, %v4489
    %v4491 = vsel %vm131, %v4251, 0.0
    %v4492 = vadd.f32 %v4490, %v4491
    %v4493 = vsel %vm131, %v4252, 0.0
    %v4494 = vadd.f32 %v4492, %v4493
    %v4495 = vsel %vm131, %v4253, 0.0
    %v4496 = vadd.f32 %v4494, %v4495
    %v4497 = vsel %vm131, %v4254, 0.0
    %v4498 = vadd.f32 %v4496, %v4497
    %v4499 = vsel %vm131, %v4255, 0.0
    %v4500 = vadd.f32 %v4498, %v4499
    %v4501 = vsel %vm131, %v4256, 0.0
    %v4502 = vadd.f32 %v4500, %v4501
    %v4503 = vsel %vm131, %v4257, 0.0
    %v4504 = vadd.f32 %v4502, %v4503
    %v4505 = vsel %vm131, %v4258, 0.0
    %v4506 = vadd.f32 %v4504, %v4505
    %v4507 = vrot.slane %v4506, 4
    %v4508 = vadd.f32 %v4506, %v4507
    %v4509 = vrot.slane %v4508, 2
    %v4510 = vadd.f32 %v4508, %v4509
    %v4511 = vrot.slane %v4510, 1
    %v4512 = vadd.f32 %v4510, %v4511
    %v4513 = vsel %vm131, %v4259, 0.0
    %v4514 = vsel %vm131, %v4260, 0.0
    %v4515 = vadd.f32 %v4513, %v4514
    %v4516 = vsel %vm131, %v4261, 0.0
    %v4517 = vadd.f32 %v4515, %v4516
    %v4518 = vsel %vm131, %v4262, 0.0
    %v4519 = vadd.f32 %v4517, %v4518
    %v4520 = vsel %vm131, %v4263, 0.0
    %v4521 = vadd.f32 %v4519, %v4520
    %v4522 = vsel %vm131, %v4264, 0.0
    %v4523 = vadd.f32 %v4521, %v4522
    %v4524 = vsel %vm131, %v4265, 0.0
    %v4525 = vadd.f32 %v4523, %v4524
    %v4526 = vsel %vm131, %v4266, 0.0
    %v4527 = vadd.f32 %v4525, %v4526
    %v4528 = vsel %vm131, %v4267, 0.0
    %v4529 = vadd.f32 %v4527, %v4528
    %v4530 = vsel %vm131, %v4268, 0.0
    %v4531 = vadd.f32 %v4529, %v4530
    %v4532 = vsel %vm131, %v4269, 0.0
    %v4533 = vadd.f32 %v4531, %v4532
    %v4534 = vsel %vm131, %v4270, 0.0
    %v4535 = vadd.f32 %v4533, %v4534
    %v4536 = vsel %vm131, %v4271, 0.0
    %v4537 = vadd.f32 %v4535, %v4536
    %v4538 = vsel %vm131, %v4272, 0.0
    %v4539 = vadd.f32 %v4537, %v4538
    %v4540 = vsel %vm131, %v4273, 0.0
    %v4541 = vadd.f32 %v4539, %v4540
    %v4542 = vsel %vm131, %v4274, 0.0
    %v4543 = vadd.f32 %v4541, %v4542
    %v4544 = vrot.slane %v4543, 4
    %v4545 = vadd.f32 %v4543, %v4544
    %v4546 = vrot.slane %v4545, 2
    %v4547 = vadd.f32 %v4545, %v4546
    %v4548 = vrot.slane %v4547, 1
    %v4549 = vadd.f32 %v4547, %v4548
    %v4550 = vsel %vm131, %v4275, 0.0
    %v4551 = vsel %vm131, %v4276, 0.0
    %v4552 = vadd.f32 %v4550, %v4551
    %v4553 = vsel %vm131, %v4277, 0.0
    %v4554 = vadd.f32 %v4552, %v4553
    %v4555 = vsel %vm131, %v4278, 0.0
    %v4556 = vadd.f32 %v4554, %v4555
    %v4557 = vsel %vm131, %v4279, 0.0
    %v4558 = vadd.f32 %v4556, %v4557
    %v4559 = vsel %vm131, %v4280, 0.0
    %v4560 = vadd.f32 %v4558, %v4559
    %v4561 = vsel %vm131, %v4281, 0.0
    %v4562 = vadd.f32 %v4560, %v4561
    %v4563 = vsel %vm131, %v4282, 0.0
    %v4564 = vadd.f32 %v4562, %v4563
    %v4565 = vsel %vm131, %v4283, 0.0
    %v4566 = vadd.f32 %v4564, %v4565
    %v4567 = vsel %vm131, %v4284, 0.0
    %v4568 = vadd.f32 %v4566, %v4567
    %v4569 = vsel %vm131, %v4285, 0.0
    %v4570 = vadd.f32 %v4568, %v4569
    %v4571 = vsel %vm131, %v4286, 0.0
    %v4572 = vadd.f32 %v4570, %v4571
    %v4573 = vsel %vm131, %v4287, 0.0
    %v4574 = vadd.f32 %v4572, %v4573
    %v4575 = vsel %vm131, %v4288, 0.0
    %v4576 = vadd.f32 %v4574, %v4575
    %v4577 = vsel %vm131, %v4289, 0.0
    %v4578 = vadd.f32 %v4576, %v4577
    %v4579 = vsel %vm131, %v4290, 0.0
    %v4580 = vadd.f32 %v4578, %v4579
    %v4581 = vrot.slane %v4580, 4
    %v4582 = vadd.f32 %v4580, %v4581
    %v4583 = vrot.slane %v4582, 2
    %v4584 = vadd.f32 %v4582, %v4583
    %v4585 = vrot.slane %v4584, 1
    %v4586 = vadd.f32 %v4584, %v4585
    %v4587 = vmul.f32 %v4327, 0.03125
    %v4588 = vmul.f32 %v4364, 0.03125
    %v4589 = vmul.f32 %v4401, 0.03125
    %v4590 = vmul.f32 %v4438, 0.03125
    %v4591 = vmul.f32 %v4475, 0.03125
    %v4592 = vmul.f32 %v4512, 0.03125
    %v4593 = vmul.f32 %v4549, 0.03125
    %v4594 = vmul.f32 %v4586, 0.03125
    %v4595 = vsub.f32 %v4163, %v4587
    %v4596 = vsub.f32 %v4164, %v4587
    %v4597 = vsub.f32 %v4165, %v4587
    %v4598 = vsub.f32 %v4166, %v4587
    %v4599 = vsub.f32 %v4167, %v4587
    %v4600 = vsub.f32 %v4168, %v4587
    %v4601 = vsub.f32 %v4169, %v4587
    %v4602 = vsub.f32 %v4170, %v4587
    %v4603 = vsub.f32 %v4171, %v4587
    %v4604 = vsub.f32 %v4172, %v4587
    %v4605 = vsub.f32 %v4173, %v4587
    %v4606 = vsub.f32 %v4174, %v4587
    %v4607 = vsub.f32 %v4175, %v4587
    %v4608 = vsub.f32 %v4176, %v4587
    %v4609 = vsub.f32 %v4177, %v4587
    %v4610 = vsub.f32 %v4178, %v4587
    %v4611 = vsub.f32 %v4179, %v4588
    %v4612 = vsub.f32 %v4180, %v4588
    %v4613 = vsub.f32 %v4181, %v4588
    %v4614 = vsub.f32 %v4182, %v4588
    %v4615 = vsub.f32 %v4183, %v4588
    %v4616 = vsub.f32 %v4184, %v4588
    %v4617 = vsub.f32 %v4185, %v4588
    %v4618 = vsub.f32 %v4186, %v4588
    %v4619 = vsub.f32 %v4187, %v4588
    %v4620 = vsub.f32 %v4188, %v4588
    %v4621 = vsub.f32 %v4189, %v4588
    %v4622 = vsub.f32 %v4190, %v4588
    %v4623 = vsub.f32 %v4191, %v4588
    %v4624 = vsub.f32 %v4192, %v4588
    %v4625 = vsub.f32 %v4193, %v4588
    %v4626 = vsub.f32 %v4194, %v4588
    %v4627 = vsub.f32 %v4195, %v4589
    %v4628 = vsub.f32 %v4196, %v4589
    %v4629 = vsub.f32 %v4197, %v4589
    %v4630 = vsub.f32 %v4198, %v4589
    %v4631 = vsub.f32 %v4199, %v4589
    %v4632 = vsub.f32 %v4200, %v4589
    %v4633 = vsub.f32 %v4201, %v4589
    %v4634 = vsub.f32 %v4202, %v4589
    %v4635 = vsub.f32 %v4203, %v4589
    %v4636 = vsub.f32 %v4204, %v4589
    %v4637 = vsub.f32 %v4205, %v4589
    %v4638 = vsub.f32 %v4206, %v4589
    %v4639 = vsub.f32 %v4207, %v4589
    %v4640 = vsub.f32 %v4208, %v4589
    %v4641 = vsub.f32 %v4209, %v4589
    %v4642 = vsub.f32 %v4210, %v4589
    %v4643 = vsub.f32 %v4211, %v4590
    %v4644 = vsub.f32 %v4212, %v4590
    %v4645 = vsub.f32 %v4213, %v4590
    %v4646 = vsub.f32 %v4214, %v4590
    %v4647 = vsub.f32 %v4215, %v4590
    %v4648 = vsub.f32 %v4216, %v4590
    %v4649 = vsub.f32 %v4217, %v4590
    %v4650 = vsub.f32 %v4218, %v4590
    %v4651 = vsub.f32 %v4219, %v4590
    %v4652 = vsub.f32 %v4220, %v4590
    %v4653 = vsub.f32 %v4221, %v4590
    %v4654 = vsub.f32 %v4222, %v4590
    %v4655 = vsub.f32 %v4223, %v4590
    %v4656 = vsub.f32 %v4224, %v4590
    %v4657 = vsub.f32 %v4225, %v4590
    %v4658 = vsub.f32 %v4226, %v4590
    %v4659 = vsub.f32 %v4227, %v4591
    %v4660 = vsub.f32 %v4228, %v4591
    %v4661 = vsub.f32 %v4229, %v4591
    %v4662 = vsub.f32 %v4230, %v4591
    %v4663 = vsub.f32 %v4231, %v4591
    %v4664 = vsub.f32 %v4232, %v4591
    %v4665 = vsub.f32 %v4233, %v4591
    %v4666 = vsub.f32 %v4234, %v4591
    %v4667 = vsub.f32 %v4235, %v4591
    %v4668 = vsub.f32 %v4236, %v4591
    %v4669 = vsub.f32 %v4237, %v4591
    %v4670 = vsub.f32 %v4238, %v4591
    %v4671 = vsub.f32 %v4239, %v4591
    %v4672 = vsub.f32 %v4240, %v4591
    %v4673 = vsub.f32 %v4241, %v4591
    %v4674 = vsub.f32 %v4242, %v4591
    %v4675 = vsub.f32 %v4243, %v4592
    %v4676 = vsub.f32 %v4244, %v4592
    %v4677 = vsub.f32 %v4245, %v4592
    %v4678 = vsub.f32 %v4246, %v4592
    %v4679 = vsub.f32 %v4247, %v4592
    %v4680 = vsub.f32 %v4248, %v4592
    %v4681 = vsub.f32 %v4249, %v4592
    %v4682 = vsub.f32 %v4250, %v4592
    %v4683 = vsub.f32 %v4251, %v4592
    %v4684 = vsub.f32 %v4252, %v4592
    %v4685 = vsub.f32 %v4253, %v4592
    %v4686 = vsub.f32 %v4254, %v4592
    %v4687 = vsub.f32 %v4255, %v4592
    %v4688 = vsub.f32 %v4256, %v4592
    %v4689 = vsub.f32 %v4257, %v4592
    %v4690 = vsub.f32 %v4258, %v4592
    %v4691 = vsub.f32 %v4259, %v4593
    %v4692 = vsub.f32 %v4260, %v4593
    %v4693 = vsub.f32 %v4261, %v4593
    %v4694 = vsub.f32 %v4262, %v4593
    %v4695 = vsub.f32 %v4263, %v4593
    %v4696 = vsub.f32 %v4264, %v4593
    %v4697 = vsub.f32 %v4265, %v4593
    %v4698 = vsub.f32 %v4266, %v4593
    %v4699 = vsub.f32 %v4267, %v4593
    %v4700 = vsub.f32 %v4268, %v4593
    %v4701 = vsub.f32 %v4269, %v4593
    %v4702 = vsub.f32 %v4270, %v4593
    %v4703 = vsub.f32 %v4271, %v4593
    %v4704 = vsub.f32 %v4272, %v4593
    %v4705 = vsub.f32 %v4273, %v4593
    %v4706 = vsub.f32 %v4274, %v4593
    %v4707 = vsub.f32 %v4275, %v4594
    %v4708 = vsub.f32 %v4276, %v4594
    %v4709 = vsub.f32 %v4277, %v4594
    %v4710 = vsub.f32 %v4278, %v4594
    %v4711 = vsub.f32 %v4279, %v4594
    %v4712 = vsub.f32 %v4280, %v4594
    %v4713 = vsub.f32 %v4281, %v4594
    %v4714 = vsub.f32 %v4282, %v4594
    %v4715 = vsub.f32 %v4283, %v4594
    %v4716 = vsub.f32 %v4284, %v4594
    %v4717 = vsub.f32 %v4285, %v4594
    %v4718 = vsub.f32 %v4286, %v4594
    %v4719 = vsub.f32 %v4287, %v4594
    %v4720 = vsub.f32 %v4288, %v4594
    %v4721 = vsub.f32 %v4289, %v4594
    %v4722 = vsub.f32 %v4290, %v4594
    %v4723 = vmul.f32 %v4595, %v668
    %v4724 = vmul.f32 %v4596, %v669
    %v4725 = vmul.f32 %v4597, %v670
    %v4726 = vmul.f32 %v4598, %v671
    %v4727 = vmul.f32 %v4599, %v672
    %v4728 = vmul.f32 %v4600, %v673
    %v4729 = vmul.f32 %v4601, %v674
    %v4730 = vmul.f32 %v4602, %v675
    %v4731 = vmul.f32 %v4603, %v676
    %v4732 = vmul.f32 %v4604, %v677
    %v4733 = vmul.f32 %v4605, %v678
    %v4734 = vmul.f32 %v4606, %v679
    %v4735 = vmul.f32 %v4607, %v680
    %v4736 = vmul.f32 %v4608, %v681
    %v4737 = vmul.f32 %v4609, %v682
    %v4738 = vmul.f32 %v4610, %v683
    %v4739 = vmul.f32 %v4611, %v668
    %v4740 = vmul.f32 %v4612, %v669
    %v4741 = vmul.f32 %v4613, %v670
    %v4742 = vmul.f32 %v4614, %v671
    %v4743 = vmul.f32 %v4615, %v672
    %v4744 = vmul.f32 %v4616, %v673
    %v4745 = vmul.f32 %v4617, %v674
    %v4746 = vmul.f32 %v4618, %v675
    %v4747 = vmul.f32 %v4619, %v676
    %v4748 = vmul.f32 %v4620, %v677
    %v4749 = vmul.f32 %v4621, %v678
    %v4750 = vmul.f32 %v4622, %v679
    %v4751 = vmul.f32 %v4623, %v680
    %v4752 = vmul.f32 %v4624, %v681
    %v4753 = vmul.f32 %v4625, %v682
    %v4754 = vmul.f32 %v4626, %v683
    %v4755 = vmul.f32 %v4627, %v668
    %v4756 = vmul.f32 %v4628, %v669
    %v4757 = vmul.f32 %v4629, %v670
    %v4758 = vmul.f32 %v4630, %v671
    %v4759 = vmul.f32 %v4631, %v672
    %v4760 = vmul.f32 %v4632, %v673
    %v4761 = vmul.f32 %v4633, %v674
    %v4762 = vmul.f32 %v4634, %v675
    %v4763 = vmul.f32 %v4635, %v676
    %v4764 = vmul.f32 %v4636, %v677
    %v4765 = vmul.f32 %v4637, %v678
    %v4766 = vmul.f32 %v4638, %v679
    %v4767 = vmul.f32 %v4639, %v680
    %v4768 = vmul.f32 %v4640, %v681
    %v4769 = vmul.f32 %v4641, %v682
    %v4770 = vmul.f32 %v4642, %v683
    %v4771 = vmul.f32 %v4643, %v668
    %v4772 = vmul.f32 %v4644, %v669
    %v4773 = vmul.f32 %v4645, %v670
    %v4774 = vmul.f32 %v4646, %v671
    %v4775 = vmul.f32 %v4647, %v672
    %v4776 = vmul.f32 %v4648, %v673
    %v4777 = vmul.f32 %v4649, %v674
    %v4778 = vmul.f32 %v4650, %v675
    %v4779 = vmul.f32 %v4651, %v676
    %v4780 = vmul.f32 %v4652, %v677
    %v4781 = vmul.f32 %v4653, %v678
    %v4782 = vmul.f32 %v4654, %v679
    %v4783 = vmul.f32 %v4655, %v680
    %v4784 = vmul.f32 %v4656, %v681
    %v4785 = vmul.f32 %v4657, %v682
    %v4786 = vmul.f32 %v4658, %v683
    %v4787 = vmul.f32 %v4659, %v668
    %v4788 = vmul.f32 %v4660, %v669
    %v4789 = vmul.f32 %v4661, %v670
    %v4790 = vmul.f32 %v4662, %v671
    %v4791 = vmul.f32 %v4663, %v672
    %v4792 = vmul.f32 %v4664, %v673
    %v4793 = vmul.f32 %v4665, %v674
    %v4794 = vmul.f32 %v4666, %v675
    %v4795 = vmul.f32 %v4667, %v676
    %v4796 = vmul.f32 %v4668, %v677
    %v4797 = vmul.f32 %v4669, %v678
    %v4798 = vmul.f32 %v4670, %v679
    %v4799 = vmul.f32 %v4671, %v680
    %v4800 = vmul.f32 %v4672, %v681
    %v4801 = vmul.f32 %v4673, %v682
    %v4802 = vmul.f32 %v4674, %v683
    %v4803 = vmul.f32 %v4675, %v668
    %v4804 = vmul.f32 %v4676, %v669
    %v4805 = vmul.f32 %v4677, %v670
    %v4806 = vmul.f32 %v4678, %v671
    %v4807 = vmul.f32 %v4679, %v672
    %v4808 = vmul.f32 %v4680, %v673
    %v4809 = vmul.f32 %v4681, %v674
    %v4810 = vmul.f32 %v4682, %v675
    %v4811 = vmul.f32 %v4683, %v676
    %v4812 = vmul.f32 %v4684, %v677
    %v4813 = vmul.f32 %v4685, %v678
    %v4814 = vmul.f32 %v4686, %v679
    %v4815 = vmul.f32 %v4687, %v680
    %v4816 = vmul.f32 %v4688, %v681
    %v4817 = vmul.f32 %v4689, %v682
    %v4818 = vmul.f32 %v4690, %v683
    %v4819 = vmul.f32 %v4691, %v668
    %v4820 = vmul.f32 %v4692, %v669
    %v4821 = vmul.f32 %v4693, %v670
    %v4822 = vmul.f32 %v4694, %v671
    %v4823 = vmul.f32 %v4695, %v672
    %v4824 = vmul.f32 %v4696, %v673
    %v4825 = vmul.f32 %v4697, %v674
    %v4826 = vmul.f32 %v4698, %v675
    %v4827 = vmul.f32 %v4699, %v676
    %v4828 = vmul.f32 %v4700, %v677
    %v4829 = vmul.f32 %v4701, %v678
    %v4830 = vmul.f32 %v4702, %v679
    %v4831 = vmul.f32 %v4703, %v680
    %v4832 = vmul.f32 %v4704, %v681
    %v4833 = vmul.f32 %v4705, %v682
    %v4834 = vmul.f32 %v4706, %v683
    %v4835 = vmul.f32 %v4707, %v668
    %v4836 = vmul.f32 %v4708, %v669
    %v4837 = vmul.f32 %v4709, %v670
    %v4838 = vmul.f32 %v4710, %v671
    %v4839 = vmul.f32 %v4711, %v672
    %v4840 = vmul.f32 %v4712, %v673
    %v4841 = vmul.f32 %v4713, %v674
    %v4842 = vmul.f32 %v4714, %v675
    %v4843 = vmul.f32 %v4715, %v676
    %v4844 = vmul.f32 %v4716, %v677
    %v4845 = vmul.f32 %v4717, %v678
    %v4846 = vmul.f32 %v4718, %v679
    %v4847 = vmul.f32 %v4719, %v680
    %v4848 = vmul.f32 %v4720, %v681
    %v4849 = vmul.f32 %v4721, %v682
    %v4850 = vmul.f32 %v4722, %v683
    %v4851 = vmul.f32 %v4723, %v4723
    %v4852 = vmul.f32 %v4724, %v4724
    %v4853 = vmul.f32 %v4725, %v4725
    %v4854 = vmul.f32 %v4726, %v4726
    %v4855 = vmul.f32 %v4727, %v4727
    %v4856 = vmul.f32 %v4728, %v4728
    %v4857 = vmul.f32 %v4729, %v4729
    %v4858 = vmul.f32 %v4730, %v4730
    %v4859 = vmul.f32 %v4731, %v4731
    %v4860 = vmul.f32 %v4732, %v4732
    %v4861 = vmul.f32 %v4733, %v4733
    %v4862 = vmul.f32 %v4734, %v4734
    %v4863 = vmul.f32 %v4735, %v4735
    %v4864 = vmul.f32 %v4736, %v4736
    %v4865 = vmul.f32 %v4737, %v4737
    %v4866 = vmul.f32 %v4738, %v4738
    %v4867 = vmul.f32 %v4739, %v4739
    %v4868 = vmul.f32 %v4740, %v4740
    %v4869 = vmul.f32 %v4741, %v4741
    %v4870 = vmul.f32 %v4742, %v4742
    %v4871 = vmul.f32 %v4743, %v4743
    %v4872 = vmul.f32 %v4744, %v4744
    %v4873 = vmul.f32 %v4745, %v4745
    %v4874 = vmul.f32 %v4746, %v4746
    %v4875 = vmul.f32 %v4747, %v4747
    %v4876 = vmul.f32 %v4748, %v4748
    %v4877 = vmul.f32 %v4749, %v4749
    %v4878 = vmul.f32 %v4750, %v4750
    %v4879 = vmul.f32 %v4751, %v4751
    %v4880 = vmul.f32 %v4752, %v4752
    %v4881 = vmul.f32 %v4753, %v4753
    %v4882 = vmul.f32 %v4754, %v4754
    %v4883 = vmul.f32 %v4755, %v4755
    %v4884 = vmul.f32 %v4756, %v4756
    %v4885 = vmul.f32 %v4757, %v4757
    %v4886 = vmul.f32 %v4758, %v4758
    %v4887 = vmul.f32 %v4759, %v4759
    %v4888 = vmul.f32 %v4760, %v4760
    %v4889 = vmul.f32 %v4761, %v4761
    %v4890 = vmul.f32 %v4762, %v4762
    %v4891 = vmul.f32 %v4763, %v4763
    %v4892 = vmul.f32 %v4764, %v4764
    %v4893 = vmul.f32 %v4765, %v4765
    %v4894 = vmul.f32 %v4766, %v4766
    %v4895 = vmul.f32 %v4767, %v4767
    %v4896 = vmul.f32 %v4768, %v4768
    %v4897 = vmul.f32 %v4769, %v4769
    %v4898 = vmul.f32 %v4770, %v4770
    %v4899 = vmul.f32 %v4771, %v4771
    %v4900 = vmul.f32 %v4772, %v4772
    %v4901 = vmul.f32 %v4773, %v4773
    %v4902 = vmul.f32 %v4774, %v4774
    %v4903 = vmul.f32 %v4775, %v4775
    %v4904 = vmul.f32 %v4776, %v4776
    %v4905 = vmul.f32 %v4777, %v4777
    %v4906 = vmul.f32 %v4778, %v4778
    %v4907 = vmul.f32 %v4779, %v4779
    %v4908 = vmul.f32 %v4780, %v4780
    %v4909 = vmul.f32 %v4781, %v4781
    %v4910 = vmul.f32 %v4782, %v4782
    %v4911 = vmul.f32 %v4783, %v4783
    %v4912 = vmul.f32 %v4784, %v4784
    %v4913 = vmul.f32 %v4785, %v4785
    %v4914 = vmul.f32 %v4786, %v4786
    %v4915 = vmul.f32 %v4787, %v4787
    %v4916 = vmul.f32 %v4788, %v4788
    %v4917 = vmul.f32 %v4789, %v4789
    %v4918 = vmul.f32 %v4790, %v4790
    %v4919 = vmul.f32 %v4791, %v4791
    %v4920 = vmul.f32 %v4792, %v4792
    %v4921 = vmul.f32 %v4793, %v4793
    %v4922 = vmul.f32 %v4794, %v4794
    %v4923 = vmul.f32 %v4795, %v4795
    %v4924 = vmul.f32 %v4796, %v4796
    %v4925 = vmul.f32 %v4797, %v4797
    %v4926 = vmul.f32 %v4798, %v4798
    %v4927 = vmul.f32 %v4799, %v4799
    %v4928 = vmul.f32 %v4800, %v4800
    %v4929 = vmul.f32 %v4801, %v4801
    %v4930 = vmul.f32 %v4802, %v4802
    %v4931 = vmul.f32 %v4803, %v4803
    %v4932 = vmul.f32 %v4804, %v4804
    %v4933 = vmul.f32 %v4805, %v4805
    %v4934 = vmul.f32 %v4806, %v4806
    %v4935 = vmul.f32 %v4807, %v4807
    %v4936 = vmul.f32 %v4808, %v4808
    %v4937 = vmul.f32 %v4809, %v4809
    %v4938 = vmul.f32 %v4810, %v4810
    %v4939 = vmul.f32 %v4811, %v4811
    %v4940 = vmul.f32 %v4812, %v4812
    %v4941 = vmul.f32 %v4813, %v4813
    %v4942 = vmul.f32 %v4814, %v4814
    %v4943 = vmul.f32 %v4815, %v4815
    %v4944 = vmul.f32 %v4816, %v4816
    %v4945 = vmul.f32 %v4817, %v4817
    %v4946 = vmul.f32 %v4818, %v4818
    %v4947 = vmul.f32 %v4819, %v4819
    %v4948 = vmul.f32 %v4820, %v4820
    %v4949 = vmul.f32 %v4821, %v4821
    %v4950 = vmul.f32 %v4822, %v4822
    %v4951 = vmul.f32 %v4823, %v4823
    %v4952 = vmul.f32 %v4824, %v4824
    %v4953 = vmul.f32 %v4825, %v4825
    %v4954 = vmul.f32 %v4826, %v4826
    %v4955 = vmul.f32 %v4827, %v4827
    %v4956 = vmul.f32 %v4828, %v4828
    %v4957 = vmul.f32 %v4829, %v4829
    %v4958 = vmul.f32 %v4830, %v4830
    %v4959 = vmul.f32 %v4831, %v4831
    %v4960 = vmul.f32 %v4832, %v4832
    %v4961 = vmul.f32 %v4833, %v4833
    %v4962 = vmul.f32 %v4834, %v4834
    %v4963 = vmul.f32 %v4835, %v4835
    %v4964 = vmul.f32 %v4836, %v4836
    %v4965 = vmul.f32 %v4837, %v4837
    %v4966 = vmul.f32 %v4838, %v4838
    %v4967 = vmul.f32 %v4839, %v4839
    %v4968 = vmul.f32 %v4840, %v4840
    %v4969 = vmul.f32 %v4841, %v4841
    %v4970 = vmul.f32 %v4842, %v4842
    %v4971 = vmul.f32 %v4843, %v4843
    %v4972 = vmul.f32 %v4844, %v4844
    %v4973 = vmul.f32 %v4845, %v4845
    %v4974 = vmul.f32 %v4846, %v4846
    %v4975 = vmul.f32 %v4847, %v4847
    %v4976 = vmul.f32 %v4848, %v4848
    %v4977 = vmul.f32 %v4849, %v4849
    %v4978 = vmul.f32 %v4850, %v4850
    %v4979 = vsel %vm131, %v4851, 0.0
    %v4980 = vsel %vm131, %v4852, 0.0
    %v4981 = vadd.f32 %v4979, %v4980
    %v4982 = vsel %vm131, %v4853, 0.0
    %v4983 = vadd.f32 %v4981, %v4982
    %v4984 = vsel %vm131, %v4854, 0.0
    %v4985 = vadd.f32 %v4983, %v4984
    %v4986 = vsel %vm131, %v4855, 0.0
    %v4987 = vadd.f32 %v4985, %v4986
    %v4988 = vsel %vm131, %v4856, 0.0
    %v4989 = vadd.f32 %v4987, %v4988
    %v4990 = vsel %vm131, %v4857, 0.0
    %v4991 = vadd.f32 %v4989, %v4990
    %v4992 = vsel %vm131, %v4858, 0.0
    %v4993 = vadd.f32 %v4991, %v4992
    %v4994 = vsel %vm131, %v4859, 0.0
    %v4995 = vadd.f32 %v4993, %v4994
    %v4996 = vsel %vm131, %v4860, 0.0
    %v4997 = vadd.f32 %v4995, %v4996
    %v4998 = vsel %vm131, %v4861, 0.0
    %v4999 = vadd.f32 %v4997, %v4998
    %v5000 = vsel %vm131, %v4862, 0.0
    %v5001 = vadd.f32 %v4999, %v5000
    %v5002 = vsel %vm131, %v4863, 0.0
    %v5003 = vadd.f32 %v5001, %v5002
    %v5004 = vsel %vm131, %v4864, 0.0
    %v5005 = vadd.f32 %v5003, %v5004
    %v5006 = vsel %vm131, %v4865, 0.0
    %v5007 = vadd.f32 %v5005, %v5006
    %v5008 = vsel %vm131, %v4866, 0.0
    %v5009 = vadd.f32 %v5007, %v5008
    %v5010 = vrot.slane %v5009, 4
    %v5011 = vadd.f32 %v5009, %v5010
    %v5012 = vrot.slane %v5011, 2
    %v5013 = vadd.f32 %v5011, %v5012
    %v5014 = vrot.slane %v5013, 1
    %v5015 = vadd.f32 %v5013, %v5014
    %v5016 = vsel %vm131, %v4867, 0.0
    %v5017 = vsel %vm131, %v4868, 0.0
    %v5018 = vadd.f32 %v5016, %v5017
    %v5019 = vsel %vm131, %v4869, 0.0
    %v5020 = vadd.f32 %v5018, %v5019
    %v5021 = vsel %vm131, %v4870, 0.0
    %v5022 = vadd.f32 %v5020, %v5021
    %v5023 = vsel %vm131, %v4871, 0.0
    %v5024 = vadd.f32 %v5022, %v5023
    %v5025 = vsel %vm131, %v4872, 0.0
    %v5026 = vadd.f32 %v5024, %v5025
    %v5027 = vsel %vm131, %v4873, 0.0
    %v5028 = vadd.f32 %v5026, %v5027
    %v5029 = vsel %vm131, %v4874, 0.0
    %v5030 = vadd.f32 %v5028, %v5029
    %v5031 = vsel %vm131, %v4875, 0.0
    %v5032 = vadd.f32 %v5030, %v5031
    %v5033 = vsel %vm131, %v4876, 0.0
    %v5034 = vadd.f32 %v5032, %v5033
    %v5035 = vsel %vm131, %v4877, 0.0
    %v5036 = vadd.f32 %v5034, %v5035
    %v5037 = vsel %vm131, %v4878, 0.0
    %v5038 = vadd.f32 %v5036, %v5037
    %v5039 = vsel %vm131, %v4879, 0.0
    %v5040 = vadd.f32 %v5038, %v5039
    %v5041 = vsel %vm131, %v4880, 0.0
    %v5042 = vadd.f32 %v5040, %v5041
    %v5043 = vsel %vm131, %v4881, 0.0
    %v5044 = vadd.f32 %v5042, %v5043
    %v5045 = vsel %vm131, %v4882, 0.0
    %v5046 = vadd.f32 %v5044, %v5045
    %v5047 = vrot.slane %v5046, 4
    %v5048 = vadd.f32 %v5046, %v5047
    %v5049 = vrot.slane %v5048, 2
    %v5050 = vadd.f32 %v5048, %v5049
    %v5051 = vrot.slane %v5050, 1
    %v5052 = vadd.f32 %v5050, %v5051
    %v5053 = vsel %vm131, %v4883, 0.0
    %v5054 = vsel %vm131, %v4884, 0.0
    %v5055 = vadd.f32 %v5053, %v5054
    %v5056 = vsel %vm131, %v4885, 0.0
    %v5057 = vadd.f32 %v5055, %v5056
    %v5058 = vsel %vm131, %v4886, 0.0
    %v5059 = vadd.f32 %v5057, %v5058
    %v5060 = vsel %vm131, %v4887, 0.0
    %v5061 = vadd.f32 %v5059, %v5060
    %v5062 = vsel %vm131, %v4888, 0.0
    %v5063 = vadd.f32 %v5061, %v5062
    %v5064 = vsel %vm131, %v4889, 0.0
    %v5065 = vadd.f32 %v5063, %v5064
    %v5066 = vsel %vm131, %v4890, 0.0
    %v5067 = vadd.f32 %v5065, %v5066
    %v5068 = vsel %vm131, %v4891, 0.0
    %v5069 = vadd.f32 %v5067, %v5068
    %v5070 = vsel %vm131, %v4892, 0.0
    %v5071 = vadd.f32 %v5069, %v5070
    %v5072 = vsel %vm131, %v4893, 0.0
    %v5073 = vadd.f32 %v5071, %v5072
    %v5074 = vsel %vm131, %v4894, 0.0
    %v5075 = vadd.f32 %v5073, %v5074
    %v5076 = vsel %vm131, %v4895, 0.0
    %v5077 = vadd.f32 %v5075, %v5076
    %v5078 = vsel %vm131, %v4896, 0.0
    %v5079 = vadd.f32 %v5077, %v5078
    %v5080 = vsel %vm131, %v4897, 0.0
    %v5081 = vadd.f32 %v5079, %v5080
    %v5082 = vsel %vm131, %v4898, 0.0
    %v5083 = vadd.f32 %v5081, %v5082
    %v5084 = vrot.slane %v5083, 4
    %v5085 = vadd.f32 %v5083, %v5084
    %v5086 = vrot.slane %v5085, 2
    %v5087 = vadd.f32 %v5085, %v5086
    %v5088 = vrot.slane %v5087, 1
    %v5089 = vadd.f32 %v5087, %v5088
    %v5090 = vsel %vm131, %v4899, 0.0
    %v5091 = vsel %vm131, %v4900, 0.0
    %v5092 = vadd.f32 %v5090, %v5091
    %v5093 = vsel %vm131, %v4901, 0.0
    %v5094 = vadd.f32 %v5092, %v5093
    %v5095 = vsel %vm131, %v4902, 0.0
    %v5096 = vadd.f32 %v5094, %v5095
    %v5097 = vsel %vm131, %v4903, 0.0
    %v5098 = vadd.f32 %v5096, %v5097
    %v5099 = vsel %vm131, %v4904, 0.0
    %v5100 = vadd.f32 %v5098, %v5099
    %v5101 = vsel %vm131, %v4905, 0.0
    %v5102 = vadd.f32 %v5100, %v5101
    %v5103 = vsel %vm131, %v4906, 0.0
    %v5104 = vadd.f32 %v5102, %v5103
    %v5105 = vsel %vm131, %v4907, 0.0
    %v5106 = vadd.f32 %v5104, %v5105
    %v5107 = vsel %vm131, %v4908, 0.0
    %v5108 = vadd.f32 %v5106, %v5107
    %v5109 = vsel %vm131, %v4909, 0.0
    %v5110 = vadd.f32 %v5108, %v5109
    %v5111 = vsel %vm131, %v4910, 0.0
    %v5112 = vadd.f32 %v5110, %v5111
    %v5113 = vsel %vm131, %v4911, 0.0
    %v5114 = vadd.f32 %v5112, %v5113
    %v5115 = vsel %vm131, %v4912, 0.0
    %v5116 = vadd.f32 %v5114, %v5115
    %v5117 = vsel %vm131, %v4913, 0.0
    %v5118 = vadd.f32 %v5116, %v5117
    %v5119 = vsel %vm131, %v4914, 0.0
    %v5120 = vadd.f32 %v5118, %v5119
    %v5121 = vrot.slane %v5120, 4
    %v5122 = vadd.f32 %v5120, %v5121
    %v5123 = vrot.slane %v5122, 2
    %v5124 = vadd.f32 %v5122, %v5123
    %v5125 = vrot.slane %v5124, 1
    %v5126 = vadd.f32 %v5124, %v5125
    %v5127 = vsel %vm131, %v4915, 0.0
    %v5128 = vsel %vm131, %v4916, 0.0
    %v5129 = vadd.f32 %v5127, %v5128
    %v5130 = vsel %vm131, %v4917, 0.0
    %v5131 = vadd.f32 %v5129, %v5130
    %v5132 = vsel %vm131, %v4918, 0.0
    %v5133 = vadd.f32 %v5131, %v5132
    %v5134 = vsel %vm131, %v4919, 0.0
    %v5135 = vadd.f32 %v5133, %v5134
    %v5136 = vsel %vm131, %v4920, 0.0
    %v5137 = vadd.f32 %v5135, %v5136
    %v5138 = vsel %vm131, %v4921, 0.0
    %v5139 = vadd.f32 %v5137, %v5138
    %v5140 = vsel %vm131, %v4922, 0.0
    %v5141 = vadd.f32 %v5139, %v5140
    %v5142 = vsel %vm131, %v4923, 0.0
    %v5143 = vadd.f32 %v5141, %v5142
    %v5144 = vsel %vm131, %v4924, 0.0
    %v5145 = vadd.f32 %v5143, %v5144
    %v5146 = vsel %vm131, %v4925, 0.0
    %v5147 = vadd.f32 %v5145, %v5146
    %v5148 = vsel %vm131, %v4926, 0.0
    %v5149 = vadd.f32 %v5147, %v5148
    %v5150 = vsel %vm131, %v4927, 0.0
    %v5151 = vadd.f32 %v5149, %v5150
    %v5152 = vsel %vm131, %v4928, 0.0
    %v5153 = vadd.f32 %v5151, %v5152
    %v5154 = vsel %vm131, %v4929, 0.0
    %v5155 = vadd.f32 %v5153, %v5154
    %v5156 = vsel %vm131, %v4930, 0.0
    %v5157 = vadd.f32 %v5155, %v5156
    %v5158 = vrot.slane %v5157, 4
    %v5159 = vadd.f32 %v5157, %v5158
    %v5160 = vrot.slane %v5159, 2
    %v5161 = vadd.f32 %v5159, %v5160
    %v5162 = vrot.slane %v5161, 1
    %v5163 = vadd.f32 %v5161, %v5162
    %v5164 = vsel %vm131, %v4931, 0.0
    %v5165 = vsel %vm131, %v4932, 0.0
    %v5166 = vadd.f32 %v5164, %v5165
    %v5167 = vsel %vm131, %v4933, 0.0
    %v5168 = vadd.f32 %v5166, %v5167
    %v5169 = vsel %vm131, %v4934, 0.0
    %v5170 = vadd.f32 %v5168, %v5169
    %v5171 = vsel %vm131, %v4935, 0.0
    %v5172 = vadd.f32 %v5170, %v5171
    %v5173 = vsel %vm131, %v4936, 0.0
    %v5174 = vadd.f32 %v5172, %v5173
    %v5175 = vsel %vm131, %v4937, 0.0
    %v5176 = vadd.f32 %v5174, %v5175
    %v5177 = vsel %vm131, %v4938, 0.0
    %v5178 = vadd.f32 %v5176, %v5177
    %v5179 = vsel %vm131, %v4939, 0.0
    %v5180 = vadd.f32 %v5178, %v5179
    %v5181 = vsel %vm131, %v4940, 0.0
    %v5182 = vadd.f32 %v5180, %v5181
    %v5183 = vsel %vm131, %v4941, 0.0
    %v5184 = vadd.f32 %v5182, %v5183
    %v5185 = vsel %vm131, %v4942, 0.0
    %v5186 = vadd.f32 %v5184, %v5185
    %v5187 = vsel %vm131, %v4943, 0.0
    %v5188 = vadd.f32 %v5186, %v5187
    %v5189 = vsel %vm131, %v4944, 0.0
    %v5190 = vadd.f32 %v5188, %v5189
    %v5191 = vsel %vm131, %v4945, 0.0
    %v5192 = vadd.f32 %v5190, %v5191
    %v5193 = vsel %vm131, %v4946, 0.0
    %v5194 = vadd.f32 %v5192, %v5193
    %v5195 = vrot.slane %v5194, 4
    %v5196 = vadd.f32 %v5194, %v5195
    %v5197 = vrot.slane %v5196, 2
    %v5198 = vadd.f32 %v5196, %v5197
    %v5199 = vrot.slane %v5198, 1
    %v5200 = vadd.f32 %v5198, %v5199
    %v5201 = vsel %vm131, %v4947, 0.0
    %v5202 = vsel %vm131, %v4948, 0.0
    %v5203 = vadd.f32 %v5201, %v5202
    %v5204 = vsel %vm131, %v4949, 0.0
    %v5205 = vadd.f32 %v5203, %v5204
    %v5206 = vsel %vm131, %v4950, 0.0
    %v5207 = vadd.f32 %v5205, %v5206
    %v5208 = vsel %vm131, %v4951, 0.0
    %v5209 = vadd.f32 %v5207, %v5208
    %v5210 = vsel %vm131, %v4952, 0.0
    %v5211 = vadd.f32 %v5209, %v5210
    %v5212 = vsel %vm131, %v4953, 0.0
    %v5213 = vadd.f32 %v5211, %v5212
    %v5214 = vsel %vm131, %v4954, 0.0
    %v5215 = vadd.f32 %v5213, %v5214
    %v5216 = vsel %vm131, %v4955, 0.0
    %v5217 = vadd.f32 %v5215, %v5216
    %v5218 = vsel %vm131, %v4956, 0.0
    %v5219 = vadd.f32 %v5217, %v5218
    %v5220 = vsel %vm131, %v4957, 0.0
    %v5221 = vadd.f32 %v5219, %v5220
    %v5222 = vsel %vm131, %v4958, 0.0
    %v5223 = vadd.f32 %v5221, %v5222
    %v5224 = vsel %vm131, %v4959, 0.0
    %v5225 = vadd.f32 %v5223, %v5224
    %v5226 = vsel %vm131, %v4960, 0.0
    %v5227 = vadd.f32 %v5225, %v5226
    %v5228 = vsel %vm131, %v4961, 0.0
    %v5229 = vadd.f32 %v5227, %v5228
    %v5230 = vsel %vm131, %v4962, 0.0
    %v5231 = vadd.f32 %v5229, %v5230
    %v5232 = vrot.slane %v5231, 4
    %v5233 = vadd.f32 %v5231, %v5232
    %v5234 = vrot.slane %v5233, 2
    %v5235 = vadd.f32 %v5233, %v5234
    %v5236 = vrot.slane %v5235, 1
    %v5237 = vadd.f32 %v5235, %v5236
    %v5238 = vsel %vm131, %v4963, 0.0
    %v5239 = vsel %vm131, %v4964, 0.0
    %v5240 = vadd.f32 %v5238, %v5239
    %v5241 = vsel %vm131, %v4965, 0.0
    %v5242 = vadd.f32 %v5240, %v5241
    %v5243 = vsel %vm131, %v4966, 0.0
    %v5244 = vadd.f32 %v5242, %v5243
    %v5245 = vsel %vm131, %v4967, 0.0
    %v5246 = vadd.f32 %v5244, %v5245
    %v5247 = vsel %vm131, %v4968, 0.0
    %v5248 = vadd.f32 %v5246, %v5247
    %v5249 = vsel %vm131, %v4969, 0.0
    %v5250 = vadd.f32 %v5248, %v5249
    %v5251 = vsel %vm131, %v4970, 0.0
    %v5252 = vadd.f32 %v5250, %v5251
    %v5253 = vsel %vm131, %v4971, 0.0
    %v5254 = vadd.f32 %v5252, %v5253
    %v5255 = vsel %vm131, %v4972, 0.0
    %v5256 = vadd.f32 %v5254, %v5255
    %v5257 = vsel %vm131, %v4973, 0.0
    %v5258 = vadd.f32 %v5256, %v5257
    %v5259 = vsel %vm131, %v4974, 0.0
    %v5260 = vadd.f32 %v5258, %v5259
    %v5261 = vsel %vm131, %v4975, 0.0
    %v5262 = vadd.f32 %v5260, %v5261
    %v5263 = vsel %vm131, %v4976, 0.0
    %v5264 = vadd.f32 %v5262, %v5263
    %v5265 = vsel %vm131, %v4977, 0.0
    %v5266 = vadd.f32 %v5264, %v5265
    %v5267 = vsel %vm131, %v4978, 0.0
    %v5268 = vadd.f32 %v5266, %v5267
    %v5269 = vrot.slane %v5268, 4
    %v5270 = vadd.f32 %v5268, %v5269
    %v5271 = vrot.slane %v5270, 2
    %v5272 = vadd.f32 %v5270, %v5271
    %v5273 = vrot.slane %v5272, 1
    %v5274 = vadd.f32 %v5272, %v5273
    %v5275 = vmul.f32 %v5015, 0.03125
    %v5276 = vmul.f32 %v5052, 0.03125
    %v5277 = vmul.f32 %v5089, 0.03125
    %v5278 = vmul.f32 %v5126, 0.03125
    %v5279 = vmul.f32 %v5163, 0.03125
    %v5280 = vmul.f32 %v5200, 0.03125
    %v5281 = vmul.f32 %v5237, 0.03125
    %v5282 = vmul.f32 %v5274, 0.03125
    %v5283 = vadd.f32 %v5275, 1e-05
    %v5284 = vadd.f32 %v5276, 1e-05
    %v5285 = vadd.f32 %v5277, 1e-05
    %v5286 = vadd.f32 %v5278, 1e-05
    %v5287 = vadd.f32 %v5279, 1e-05
    %v5288 = vadd.f32 %v5280, 1e-05
    %v5289 = vadd.f32 %v5281, 1e-05
    %v5290 = vadd.f32 %v5282, 1e-05
    %v5291 = vrsqrt.pop %v5283
    %v5292 = vmul.f32 %v5291, %v5283
    %v5293 = vmul.f32 %v5292, %v5291
    %v5294 = vmul.f32 0.5, %v5293
    %v5295 = vsub.f32 1.5, %v5294
    %v5296 = vmul.f32 %v5291, %v5295
    %vm5297 = vweird.f32 %v5283
    %vm5298 = vweird.f32 %v5291
    %vm5299 = vmor %vm5297, %vm5298
    %v5300 = vsel %vm5299, %v5291, %v5296
    %v5301 = vrsqrt.pop %v5284
    %v5302 = vmul.f32 %v5301, %v5284
    %v5303 = vmul.f32 %v5302, %v5301
    %v5304 = vmul.f32 0.5, %v5303
    %v5305 = vsub.f32 1.5, %v5304
    %v5306 = vmul.f32 %v5301, %v5305
    %vm5307 = vweird.f32 %v5284
    %vm5308 = vweird.f32 %v5301
    %vm5309 = vmor %vm5307, %vm5308
    %v5310 = vsel %vm5309, %v5301, %v5306
    %v5311 = vrsqrt.pop %v5285
    %v5312 = vmul.f32 %v5311, %v5285
    %v5313 = vmul.f32 %v5312, %v5311
    %v5314 = vmul.f32 0.5, %v5313
    %v5315 = vsub.f32 1.5, %v5314
    %v5316 = vmul.f32 %v5311, %v5315
    %vm5317 = vweird.f32 %v5285
    %vm5318 = vweird.f32 %v5311
    %vm5319 = vmor %vm5317, %vm5318
    %v5320 = vsel %vm5319, %v5311, %v5316
    %v5321 = vrsqrt.pop %v5286
    %v5322 = vmul.f32 %v5321, %v5286
    %v5323 = vmul.f32 %v5322, %v5321
    %v5324 = vmul.f32 0.5, %v5323
    %v5325 = vsub.f32 1.5, %v5324
    %v5326 = vmul.f32 %v5321, %v5325
    %vm5327 = vweird.f32 %v5286
    %vm5328 = vweird.f32 %v5321
    %vm5329 = vmor %vm5327, %vm5328
    %v5330 = vsel %vm5329, %v5321, %v5326
    %v5331 = vrsqrt.pop %v5287
    %v5332 = vmul.f32 %v5331, %v5287
    %v5333 = vmul.f32 %v5332, %v5331
    %v5334 = vmul.f32 0.5, %v5333
    %v5335 = vsub.f32 1.5, %v5334
    %v5336 = vmul.f32 %v5331, %v5335
    %vm5337 = vweird.f32 %v5287
    %vm5338 = vweird.f32 %v5331
    %vm5339 = vmor %vm5337, %vm5338
    %v5340 = vsel %vm5339, %v5331, %v5336
    %v5341 = vrsqrt.pop %v5288
    %v5342 = vmul.f32 %v5341, %v5288
    %v5343 = vmul.f32 %v5342, %v5341
    %v5344 = vmul.f32 0.5, %v5343
    %v5345 = vsub.f32 1.5, %v5344
    %v5346 = vmul.f32 %v5341, %v5345
    %vm5347 = vweird.f32 %v5288
    %vm5348 = vweird.f32 %v5341
    %vm5349 = vmor %vm5347, %vm5348
    %v5350 = vsel %vm5349, %v5341, %v5346
    %v5351 = vrsqrt.pop %v5289
    %v5352 = vmul.f32 %v5351, %v5289
    %v5353 = vmul.f32 %v5352, %v5351
    %v5354 = vmul.f32 0.5, %v5353
    %v5355 = vsub.f32 1.5, %v5354
    %v5356 = vmul.f32 %v5351, %v5355
    %vm5357 = vweird.f32 %v5289
    %vm5358 = vweird.f32 %v5351
    %vm5359 = vmor %vm5357, %vm5358
    %v5360 = vsel %vm5359, %v5351, %v5356
    %v5361 = vrsqrt.pop %v5290
    %v5362 = vmul.f32 %v5361, %v5290
    %v5363 = vmul.f32 %v5362, %v5361
    %v5364 = vmul.f32 0.5, %v5363
    %v5365 = vsub.f32 1.5, %v5364
    %v5366 = vmul.f32 %v5361, %v5365
    %vm5367 = vweird.f32 %v5290
    %vm5368 = vweird.f32 %v5361
    %vm5369 = vmor %vm5367, %vm5368
    %v5370 = vsel %vm5369, %v5361, %v5366
    %v5371 = vmul.f32 %v4723, %v5300
    %v5372 = vmul.f32 %v4724, %v5300
    %v5373 = vmul.f32 %v4725, %v5300
    %v5374 = vmul.f32 %v4726, %v5300
    %v5375 = vmul.f32 %v4727, %v5300
    %v5376 = vmul.f32 %v4728, %v5300
    %v5377 = vmul.f32 %v4729, %v5300
    %v5378 = vmul.f32 %v4730, %v5300
    %v5379 = vmul.f32 %v4731, %v5300
    %v5380 = vmul.f32 %v4732, %v5300
    %v5381 = vmul.f32 %v4733, %v5300
    %v5382 = vmul.f32 %v4734, %v5300
    %v5383 = vmul.f32 %v4735, %v5300
    %v5384 = vmul.f32 %v4736, %v5300
    %v5385 = vmul.f32 %v4737, %v5300
    %v5386 = vmul.f32 %v4738, %v5300
    %v5387 = vmul.f32 %v4739, %v5310
    %v5388 = vmul.f32 %v4740, %v5310
    %v5389 = vmul.f32 %v4741, %v5310
    %v5390 = vmul.f32 %v4742, %v5310
    %v5391 = vmul.f32 %v4743, %v5310
    %v5392 = vmul.f32 %v4744, %v5310
    %v5393 = vmul.f32 %v4745, %v5310
    %v5394 = vmul.f32 %v4746, %v5310
    %v5395 = vmul.f32 %v4747, %v5310
    %v5396 = vmul.f32 %v4748, %v5310
    %v5397 = vmul.f32 %v4749, %v5310
    %v5398 = vmul.f32 %v4750, %v5310
    %v5399 = vmul.f32 %v4751, %v5310
    %v5400 = vmul.f32 %v4752, %v5310
    %v5401 = vmul.f32 %v4753, %v5310
    %v5402 = vmul.f32 %v4754, %v5310
    %v5403 = vmul.f32 %v4755, %v5320
    %v5404 = vmul.f32 %v4756, %v5320
    %v5405 = vmul.f32 %v4757, %v5320
    %v5406 = vmul.f32 %v4758, %v5320
    %v5407 = vmul.f32 %v4759, %v5320
    %v5408 = vmul.f32 %v4760, %v5320
    %v5409 = vmul.f32 %v4761, %v5320
    %v5410 = vmul.f32 %v4762, %v5320
    %v5411 = vmul.f32 %v4763, %v5320
    %v5412 = vmul.f32 %v4764, %v5320
    %v5413 = vmul.f32 %v4765, %v5320
    %v5414 = vmul.f32 %v4766, %v5320
    %v5415 = vmul.f32 %v4767, %v5320
    %v5416 = vmul.f32 %v4768, %v5320
    %v5417 = vmul.f32 %v4769, %v5320
    %v5418 = vmul.f32 %v4770, %v5320
    %v5419 = vmul.f32 %v4771, %v5330
    %v5420 = vmul.f32 %v4772, %v5330
    %v5421 = vmul.f32 %v4773, %v5330
    %v5422 = vmul.f32 %v4774, %v5330
    %v5423 = vmul.f32 %v4775, %v5330
    %v5424 = vmul.f32 %v4776, %v5330
    %v5425 = vmul.f32 %v4777, %v5330
    %v5426 = vmul.f32 %v4778, %v5330
    %v5427 = vmul.f32 %v4779, %v5330
    %v5428 = vmul.f32 %v4780, %v5330
    %v5429 = vmul.f32 %v4781, %v5330
    %v5430 = vmul.f32 %v4782, %v5330
    %v5431 = vmul.f32 %v4783, %v5330
    %v5432 = vmul.f32 %v4784, %v5330
    %v5433 = vmul.f32 %v4785, %v5330
    %v5434 = vmul.f32 %v4786, %v5330
    %v5435 = vmul.f32 %v4787, %v5340
    %v5436 = vmul.f32 %v4788, %v5340
    %v5437 = vmul.f32 %v4789, %v5340
    %v5438 = vmul.f32 %v4790, %v5340
    %v5439 = vmul.f32 %v4791, %v5340
    %v5440 = vmul.f32 %v4792, %v5340
    %v5441 = vmul.f32 %v4793, %v5340
    %v5442 = vmul.f32 %v4794, %v5340
    %v5443 = vmul.f32 %v4795, %v5340
    %v5444 = vmul.f32 %v4796, %v5340
    %v5445 = vmul.f32 %v4797, %v5340
    %v5446 = vmul.f32 %v4798, %v5340
    %v5447 = vmul.f32 %v4799, %v5340
    %v5448 = vmul.f32 %v4800, %v5340
    %v5449 = vmul.f32 %v4801, %v5340
    %v5450 = vmul.f32 %v4802, %v5340
    %v5451 = vmul.f32 %v4803, %v5350
    %v5452 = vmul.f32 %v4804, %v5350
    %v5453 = vmul.f32 %v4805, %v5350
    %v5454 = vmul.f32 %v4806, %v5350
    %v5455 = vmul.f32 %v4807, %v5350
    %v5456 = vmul.f32 %v4808, %v5350
    %v5457 = vmul.f32 %v4809, %v5350
    %v5458 = vmul.f32 %v4810, %v5350
    %v5459 = vmul.f32 %v4811, %v5350
    %v5460 = vmul.f32 %v4812, %v5350
    %v5461 = vmul.f32 %v4813, %v5350
    %v5462 = vmul.f32 %v4814, %v5350
    %v5463 = vmul.f32 %v4815, %v5350
    %v5464 = vmul.f32 %v4816, %v5350
    %v5465 = vmul.f32 %v4817, %v5350
    %v5466 = vmul.f32 %v4818, %v5350
    %v5467 = vmul.f32 %v4819, %v5360
    %v5468 = vmul.f32 %v4820, %v5360
    %v5469 = vmul.f32 %v4821, %v5360
    %v5470 = vmul.f32 %v4822, %v5360
    %v5471 = vmul.f32 %v4823, %v5360
    %v5472 = vmul.f32 %v4824, %v5360
    %v5473 = vmul.f32 %v4825, %v5360
    %v5474 = vmul.f32 %v4826, %v5360
    %v5475 = vmul.f32 %v4827, %v5360
    %v5476 = vmul.f32 %v4828, %v5360
    %v5477 = vmul.f32 %v4829, %v5360
    %v5478 = vmul.f32 %v4830, %v5360
    %v5479 = vmul.f32 %v4831, %v5360
    %v5480 = vmul.f32 %v4832, %v5360
    %v5481 = vmul.f32 %v4833, %v5360
    %v5482 = vmul.f32 %v4834, %v5360
    %v5483 = vmul.f32 %v4835, %v5370
    %v5484 = vmul.f32 %v4836, %v5370
    %v5485 = vmul.f32 %v4837, %v5370
    %v5486 = vmul.f32 %v4838, %v5370
    %v5487 = vmul.f32 %v4839, %v5370
    %v5488 = vmul.f32 %v4840, %v5370
    %v5489 = vmul.f32 %v4841, %v5370
    %v5490 = vmul.f32 %v4842, %v5370
    %v5491 = vmul.f32 %v4843, %v5370
    %v5492 = vmul.f32 %v4844, %v5370
    %v5493 = vmul.f32 %v4845, %v5370
    %v5494 = vmul.f32 %v4846, %v5370
    %v5495 = vmul.f32 %v4847, %v5370
    %v5496 = vmul.f32 %v4848, %v5370
    %v5497 = vmul.f32 %v4849, %v5370
    %v5498 = vmul.f32 %v4850, %v5370
    %5500 = vset.pattern.permute.xlu0 0
    %5501 = vperm.xlu0 %5500, %v3359
    %v5502 = vpop.permute.xlu0 %5501
    %5505 = vset.pattern.permute.xlu0 0
    %5506 = vperm.xlu0 %5505, %v3360
    %v5507 = vpop.permute.xlu0 %5506
    %5510 = vset.pattern.permute.xlu0 0
    %5511 = vperm.xlu0 %5510, %v3361
    %v5512 = vpop.permute.xlu0 %5511
    %5515 = vset.pattern.permute.xlu0 0
    %5516 = vperm.xlu0 %5515, %v3362
    %v5517 = vpop.permute.xlu0 %5516
    %5520 = vset.pattern.permute.xlu0 0
    %5521 = vperm.xlu0 %5520, %v3363
    %v5522 = vpop.permute.xlu0 %5521
    %5525 = vset.pattern.permute.xlu0 0
    %5526 = vperm.xlu0 %5525, %v3364
    %v5527 = vpop.permute.xlu0 %5526
    %5530 = vset.pattern.permute.xlu0 0
    %5531 = vperm.xlu0 %5530, %v3365
    %v5532 = vpop.permute.xlu0 %5531
    %5535 = vset.pattern.permute.xlu0 0
    %5536 = vperm.xlu0 %5535, %v3366
    %v5537 = vpop.permute.xlu0 %5536
    %5540 = vset.pattern.permute.xlu0 0
    %5541 = vperm.xlu0 %5540, %v3367
    %v5542 = vpop.permute.xlu0 %5541
    %5545 = vset.pattern.permute.xlu0 0
    %5546 = vperm.xlu0 %5545, %v3368
    %v5547 = vpop.permute.xlu0 %5546
    %5550 = vset.pattern.permute.xlu0 0
    %5551 = vperm.xlu0 %5550, %v3369
    %v5552 = vpop.permute.xlu0 %5551
    %5555 = vset.pattern.permute.xlu0 0
    %5556 = vperm.xlu0 %5555, %v3370
    %v5557 = vpop.permute.xlu0 %5556
    %5560 = vset.pattern.permute.xlu0 0
    %5561 = vperm.xlu0 %5560, %v3371
    %v5562 = vpop.permute.xlu0 %5561
    %5565 = vset.pattern.permute.xlu0 0
    %5566 = vperm.xlu0 %5565, %v3372
    %v5567 = vpop.permute.xlu0 %5566
    %5570 = vset.pattern.permute.xlu0 0
    %5571 = vperm.xlu0 %5570, %v3373
    %v5572 = vpop.permute.xlu0 %5571
    %5575 = vset.pattern.permute.xlu0 0
    %5576 = vperm.xlu0 %5575, %v3374
    %v5577 = vpop.permute.xlu0 %5576
    %v5579 = vmul.f32 %v5371, %v5502
    %v5580 = vmul.f32 %v5372, %v5507
    %v5581 = vmul.f32 %v5373, %v5512
    %v5582 = vmul.f32 %v5374, %v5517
    %v5583 = vmul.f32 %v5375, %v5522
    %v5584 = vmul.f32 %v5376, %v5527
    %v5585 = vmul.f32 %v5377, %v5532
    %v5586 = vmul.f32 %v5378, %v5537
    %v5587 = vmul.f32 %v5379, %v5542
    %v5588 = vmul.f32 %v5380, %v5547
    %v5589 = vmul.f32 %v5381, %v5552
    %v5590 = vmul.f32 %v5382, %v5557
    %v5591 = vmul.f32 %v5383, %v5562
    %v5592 = vmul.f32 %v5384, %v5567
    %v5593 = vmul.f32 %v5385, %v5572
    %v5594 = vmul.f32 %v5386, %v5577
    %v5595 = vmul.f32 %v5387, %v5502
    %v5596 = vmul.f32 %v5388, %v5507
    %v5597 = vmul.f32 %v5389, %v5512
    %v5598 = vmul.f32 %v5390, %v5517
    %v5599 = vmul.f32 %v5391, %v5522
    %v5600 = vmul.f32 %v5392, %v5527
    %v5601 = vmul.f32 %v5393, %v5532
    %v5602 = vmul.f32 %v5394, %v5537
    %v5603 = vmul.f32 %v5395, %v5542
    %v5604 = vmul.f32 %v5396, %v5547
    %v5605 = vmul.f32 %v5397, %v5552
    %v5606 = vmul.f32 %v5398, %v5557
    %v5607 = vmul.f32 %v5399, %v5562
    %v5608 = vmul.f32 %v5400, %v5567
    %v5609 = vmul.f32 %v5401, %v5572
    %v5610 = vmul.f32 %v5402, %v5577
    %v5611 = vmul.f32 %v5403, %v5502
    %v5612 = vmul.f32 %v5404, %v5507
    %v5613 = vmul.f32 %v5405, %v5512
    %v5614 = vmul.f32 %v5406, %v5517
    %v5615 = vmul.f32 %v5407, %v5522
    %v5616 = vmul.f32 %v5408, %v5527
    %v5617 = vmul.f32 %v5409, %v5532
    %v5618 = vmul.f32 %v5410, %v5537
    %v5619 = vmul.f32 %v5411, %v5542
    %v5620 = vmul.f32 %v5412, %v5547
    %v5621 = vmul.f32 %v5413, %v5552
    %v5622 = vmul.f32 %v5414, %v5557
    %v5623 = vmul.f32 %v5415, %v5562
    %v5624 = vmul.f32 %v5416, %v5567
    %v5625 = vmul.f32 %v5417, %v5572
    %v5626 = vmul.f32 %v5418, %v5577
    %v5627 = vmul.f32 %v5419, %v5502
    %v5628 = vmul.f32 %v5420, %v5507
    %v5629 = vmul.f32 %v5421, %v5512
    %v5630 = vmul.f32 %v5422, %v5517
    %v5631 = vmul.f32 %v5423, %v5522
    %v5632 = vmul.f32 %v5424, %v5527
    %v5633 = vmul.f32 %v5425, %v5532
    %v5634 = vmul.f32 %v5426, %v5537
    %v5635 = vmul.f32 %v5427, %v5542
    %v5636 = vmul.f32 %v5428, %v5547
    %v5637 = vmul.f32 %v5429, %v5552
    %v5638 = vmul.f32 %v5430, %v5557
    %v5639 = vmul.f32 %v5431, %v5562
    %v5640 = vmul.f32 %v5432, %v5567
    %v5641 = vmul.f32 %v5433, %v5572
    %v5642 = vmul.f32 %v5434, %v5577
    %v5643 = vmul.f32 %v5435, %v5502
    %v5644 = vmul.f32 %v5436, %v5507
    %v5645 = vmul.f32 %v5437, %v5512
    %v5646 = vmul.f32 %v5438, %v5517
    %v5647 = vmul.f32 %v5439, %v5522
    %v5648 = vmul.f32 %v5440, %v5527
    %v5649 = vmul.f32 %v5441, %v5532
    %v5650 = vmul.f32 %v5442, %v5537
    %v5651 = vmul.f32 %v5443, %v5542
    %v5652 = vmul.f32 %v5444, %v5547
    %v5653 = vmul.f32 %v5445, %v5552
    %v5654 = vmul.f32 %v5446, %v5557
    %v5655 = vmul.f32 %v5447, %v5562
    %v5656 = vmul.f32 %v5448, %v5567
    %v5657 = vmul.f32 %v5449, %v5572
    %v5658 = vmul.f32 %v5450, %v5577
    %v5659 = vmul.f32 %v5451, %v5502
    %v5660 = vmul.f32 %v5452, %v5507
    %v5661 = vmul.f32 %v5453, %v5512
    %v5662 = vmul.f32 %v5454, %v5517
    %v5663 = vmul.f32 %v5455, %v5522
    %v5664 = vmul.f32 %v5456, %v5527
    %v5665 = vmul.f32 %v5457, %v5532
    %v5666 = vmul.f32 %v5458, %v5537
    %v5667 = vmul.f32 %v5459, %v5542
    %v5668 = vmul.f32 %v5460, %v5547
    %v5669 = vmul.f32 %v5461, %v5552
    %v5670 = vmul.f32 %v5462, %v5557
    %v5671 = vmul.f32 %v5463, %v5562
    %v5672 = vmul.f32 %v5464, %v5567
    %v5673 = vmul.f32 %v5465, %v5572
    %v5674 = vmul.f32 %v5466, %v5577
    %v5675 = vmul.f32 %v5467, %v5502
    %v5676 = vmul.f32 %v5468, %v5507
    %v5677 = vmul.f32 %v5469, %v5512
    %v5678 = vmul.f32 %v5470, %v5517
    %v5679 = vmul.f32 %v5471, %v5522
    %v5680 = vmul.f32 %v5472, %v5527
    %v5681 = vmul.f32 %v5473, %v5532
    %v5682 = vmul.f32 %v5474, %v5537
    %v5683 = vmul.f32 %v5475, %v5542
    %v5684 = vmul.f32 %v5476, %v5547
    %v5685 = vmul.f32 %v5477, %v5552
    %v5686 = vmul.f32 %v5478, %v5557
    %v5687 = vmul.f32 %v5479, %v5562
    %v5688 = vmul.f32 %v5480, %v5567
    %v5689 = vmul.f32 %v5481, %v5572
    %v5690 = vmul.f32 %v5482, %v5577
    %v5691 = vmul.f32 %v5483, %v5502
    %v5692 = vmul.f32 %v5484, %v5507
    %v5693 = vmul.f32 %v5485, %v5512
    %v5694 = vmul.f32 %v5486, %v5517
    %v5695 = vmul.f32 %v5487, %v5522
    %v5696 = vmul.f32 %v5488, %v5527
    %v5697 = vmul.f32 %v5489, %v5532
    %v5698 = vmul.f32 %v5490, %v5537
    %v5699 = vmul.f32 %v5491, %v5542
    %v5700 = vmul.f32 %v5492, %v5547
    %v5701 = vmul.f32 %v5493, %v5552
    %v5702 = vmul.f32 %v5494, %v5557
    %v5703 = vmul.f32 %v5495, %v5562
    %v5704 = vmul.f32 %v5496, %v5567
    %v5705 = vmul.f32 %v5497, %v5572
    %v5706 = vmul.f32 %v5498, %v5577
    %5707 = vset.pattern.permute.xlu0 1
    %5708 = vperm.xlu0 %5707, %v3359
    %v5709 = vpop.permute.xlu0 %5708
    %5711 = vset.pattern.permute.xlu0 1
    %5712 = vperm.xlu0 %5711, %v3360
    %v5713 = vpop.permute.xlu0 %5712
    %5715 = vset.pattern.permute.xlu0 1
    %5716 = vperm.xlu0 %5715, %v3361
    %v5717 = vpop.permute.xlu0 %5716
    %5719 = vset.pattern.permute.xlu0 1
    %5720 = vperm.xlu0 %5719, %v3362
    %v5721 = vpop.permute.xlu0 %5720
    %5723 = vset.pattern.permute.xlu0 1
    %5724 = vperm.xlu0 %5723, %v3363
    %v5725 = vpop.permute.xlu0 %5724
    %5727 = vset.pattern.permute.xlu0 1
    %5728 = vperm.xlu0 %5727, %v3364
    %v5729 = vpop.permute.xlu0 %5728
    %5731 = vset.pattern.permute.xlu0 1
    %5732 = vperm.xlu0 %5731, %v3365
    %v5733 = vpop.permute.xlu0 %5732
    %5735 = vset.pattern.permute.xlu0 1
    %5736 = vperm.xlu0 %5735, %v3366
    %v5737 = vpop.permute.xlu0 %5736
    %5739 = vset.pattern.permute.xlu0 1
    %5740 = vperm.xlu0 %5739, %v3367
    %v5741 = vpop.permute.xlu0 %5740
    %5743 = vset.pattern.permute.xlu0 1
    %5744 = vperm.xlu0 %5743, %v3368
    %v5745 = vpop.permute.xlu0 %5744
    %5747 = vset.pattern.permute.xlu0 1
    %5748 = vperm.xlu0 %5747, %v3369
    %v5749 = vpop.permute.xlu0 %5748
    %5751 = vset.pattern.permute.xlu0 1
    %5752 = vperm.xlu0 %5751, %v3370
    %v5753 = vpop.permute.xlu0 %5752
    %5755 = vset.pattern.permute.xlu0 1
    %5756 = vperm.xlu0 %5755, %v3371
    %v5757 = vpop.permute.xlu0 %5756
    %5759 = vset.pattern.permute.xlu0 1
    %5760 = vperm.xlu0 %5759, %v3372
    %v5761 = vpop.permute.xlu0 %5760
    %5763 = vset.pattern.permute.xlu0 1
    %5764 = vperm.xlu0 %5763, %v3373
    %v5765 = vpop.permute.xlu0 %5764
    %5767 = vset.pattern.permute.xlu0 1
    %5768 = vperm.xlu0 %5767, %v3374
    %v5769 = vpop.permute.xlu0 %5768
    %v5771 = vadd.f32 %v5579, %v5709
    %v5772 = vadd.f32 %v5580, %v5713
    %v5773 = vadd.f32 %v5581, %v5717
    %v5774 = vadd.f32 %v5582, %v5721
    %v5775 = vadd.f32 %v5583, %v5725
    %v5776 = vadd.f32 %v5584, %v5729
    %v5777 = vadd.f32 %v5585, %v5733
    %v5778 = vadd.f32 %v5586, %v5737
    %v5779 = vadd.f32 %v5587, %v5741
    %v5780 = vadd.f32 %v5588, %v5745
    %v5781 = vadd.f32 %v5589, %v5749
    %v5782 = vadd.f32 %v5590, %v5753
    %v5783 = vadd.f32 %v5591, %v5757
    %v5784 = vadd.f32 %v5592, %v5761
    %v5785 = vadd.f32 %v5593, %v5765
    %v5786 = vadd.f32 %v5594, %v5769
    %v5787 = vadd.f32 %v5595, %v5709
    %v5788 = vadd.f32 %v5596, %v5713
    %v5789 = vadd.f32 %v5597, %v5717
    %v5790 = vadd.f32 %v5598, %v5721
    %v5791 = vadd.f32 %v5599, %v5725
    %v5792 = vadd.f32 %v5600, %v5729
    %v5793 = vadd.f32 %v5601, %v5733
    %v5794 = vadd.f32 %v5602, %v5737
    %v5795 = vadd.f32 %v5603, %v5741
    %v5796 = vadd.f32 %v5604, %v5745
    %v5797 = vadd.f32 %v5605, %v5749
    %v5798 = vadd.f32 %v5606, %v5753
    %v5799 = vadd.f32 %v5607, %v5757
    %v5800 = vadd.f32 %v5608, %v5761
    %v5801 = vadd.f32 %v5609, %v5765
    %v5802 = vadd.f32 %v5610, %v5769
    %v5803 = vadd.f32 %v5611, %v5709
    %v5804 = vadd.f32 %v5612, %v5713
    %v5805 = vadd.f32 %v5613, %v5717
    %v5806 = vadd.f32 %v5614, %v5721
    %v5807 = vadd.f32 %v5615, %v5725
    %v5808 = vadd.f32 %v5616, %v5729
    %v5809 = vadd.f32 %v5617, %v5733
    %v5810 = vadd.f32 %v5618, %v5737
    %v5811 = vadd.f32 %v5619, %v5741
    %v5812 = vadd.f32 %v5620, %v5745
    %v5813 = vadd.f32 %v5621, %v5749
    %v5814 = vadd.f32 %v5622, %v5753
    %v5815 = vadd.f32 %v5623, %v5757
    %v5816 = vadd.f32 %v5624, %v5761
    %v5817 = vadd.f32 %v5625, %v5765
    %v5818 = vadd.f32 %v5626, %v5769
    %v5819 = vadd.f32 %v5627, %v5709
    %v5820 = vadd.f32 %v5628, %v5713
    %v5821 = vadd.f32 %v5629, %v5717
    %v5822 = vadd.f32 %v5630, %v5721
    %v5823 = vadd.f32 %v5631, %v5725
    %v5824 = vadd.f32 %v5632, %v5729
    %v5825 = vadd.f32 %v5633, %v5733
    %v5826 = vadd.f32 %v5634, %v5737
    %v5827 = vadd.f32 %v5635, %v5741
    %v5828 = vadd.f32 %v5636, %v5745
    %v5829 = vadd.f32 %v5637, %v5749
    %v5830 = vadd.f32 %v5638, %v5753
    %v5831 = vadd.f32 %v5639, %v5757
    %v5832 = vadd.f32 %v5640, %v5761
    %v5833 = vadd.f32 %v5641, %v5765
    %v5834 = vadd.f32 %v5642, %v5769
    %v5835 = vadd.f32 %v5643, %v5709
    %v5836 = vadd.f32 %v5644, %v5713
    %v5837 = vadd.f32 %v5645, %v5717
    %v5838 = vadd.f32 %v5646, %v5721
    %v5839 = vadd.f32 %v5647, %v5725
    %v5840 = vadd.f32 %v5648, %v5729
    %v5841 = vadd.f32 %v5649, %v5733
    %v5842 = vadd.f32 %v5650, %v5737
    %v5843 = vadd.f32 %v5651, %v5741
    %v5844 = vadd.f32 %v5652, %v5745
    %v5845 = vadd.f32 %v5653, %v5749
    %v5846 = vadd.f32 %v5654, %v5753
    %v5847 = vadd.f32 %v5655, %v5757
    %v5848 = vadd.f32 %v5656, %v5761
    %v5849 = vadd.f32 %v5657, %v5765
    %v5850 = vadd.f32 %v5658, %v5769
    %v5851 = vadd.f32 %v5659, %v5709
    %v5852 = vadd.f32 %v5660, %v5713
    %v5853 = vadd.f32 %v5661, %v5717
    %v5854 = vadd.f32 %v5662, %v5721
    %v5855 = vadd.f32 %v5663, %v5725
    %v5856 = vadd.f32 %v5664, %v5729
    %v5857 = vadd.f32 %v5665, %v5733
    %v5858 = vadd.f32 %v5666, %v5737
    %v5859 = vadd.f32 %v5667, %v5741
    %v5860 = vadd.f32 %v5668, %v5745
    %v5861 = vadd.f32 %v5669, %v5749
    %v5862 = vadd.f32 %v5670, %v5753
    %v5863 = vadd.f32 %v5671, %v5757
    %v5864 = vadd.f32 %v5672, %v5761
    %v5865 = vadd.f32 %v5673, %v5765
    %v5866 = vadd.f32 %v5674, %v5769
    %v5867 = vadd.f32 %v5675, %v5709
    %v5868 = vadd.f32 %v5676, %v5713
    %v5869 = vadd.f32 %v5677, %v5717
    %v5870 = vadd.f32 %v5678, %v5721
    %v5871 = vadd.f32 %v5679, %v5725
    %v5872 = vadd.f32 %v5680, %v5729
    %v5873 = vadd.f32 %v5681, %v5733
    %v5874 = vadd.f32 %v5682, %v5737
    %v5875 = vadd.f32 %v5683, %v5741
    %v5876 = vadd.f32 %v5684, %v5745
    %v5877 = vadd.f32 %v5685, %v5749
    %v5878 = vadd.f32 %v5686, %v5753
    %v5879 = vadd.f32 %v5687, %v5757
    %v5880 = vadd.f32 %v5688, %v5761
    %v5881 = vadd.f32 %v5689, %v5765
    %v5882 = vadd.f32 %v5690, %v5769
    %v5883 = vadd.f32 %v5691, %v5709
    %v5884 = vadd.f32 %v5692, %v5713
    %v5885 = vadd.f32 %v5693, %v5717
    %v5886 = vadd.f32 %v5694, %v5721
    %v5887 = vadd.f32 %v5695, %v5725
    %v5888 = vadd.f32 %v5696, %v5729
    %v5889 = vadd.f32 %v5697, %v5733
    %v5890 = vadd.f32 %v5698, %v5737
    %v5891 = vadd.f32 %v5699, %v5741
    %v5892 = vadd.f32 %v5700, %v5745
    %v5893 = vadd.f32 %v5701, %v5749
    %v5894 = vadd.f32 %v5702, %v5753
    %v5895 = vadd.f32 %v5703, %v5757
    %v5896 = vadd.f32 %v5704, %v5761
    %v5897 = vadd.f32 %v5705, %v5765
    %v5898 = vadd.f32 %v5706, %v5769
    %v5899 = vadd.f32 %v3226, %v5771
    %v5900 = vadd.f32 %v3227, %v5772
    %v5901 = vadd.f32 %v3228, %v5773
    %v5902 = vadd.f32 %v3229, %v5774
    %v5903 = vadd.f32 %v3230, %v5775
    %v5904 = vadd.f32 %v3231, %v5776
    %v5905 = vadd.f32 %v3232, %v5777
    %v5906 = vadd.f32 %v3233, %v5778
    %v5907 = vadd.f32 %v3234, %v5779
    %v5908 = vadd.f32 %v3235, %v5780
    %v5909 = vadd.f32 %v3236, %v5781
    %v5910 = vadd.f32 %v3237, %v5782
    %v5911 = vadd.f32 %v3238, %v5783
    %v5912 = vadd.f32 %v3239, %v5784
    %v5913 = vadd.f32 %v3240, %v5785
    %v5914 = vadd.f32 %v3241, %v5786
    %v5915 = vadd.f32 %v3242, %v5787
    %v5916 = vadd.f32 %v3243, %v5788
    %v5917 = vadd.f32 %v3244, %v5789
    %v5918 = vadd.f32 %v3245, %v5790
    %v5919 = vadd.f32 %v3246, %v5791
    %v5920 = vadd.f32 %v3247, %v5792
    %v5921 = vadd.f32 %v3248, %v5793
    %v5922 = vadd.f32 %v3249, %v5794
    %v5923 = vadd.f32 %v3250, %v5795
    %v5924 = vadd.f32 %v3251, %v5796
    %v5925 = vadd.f32 %v3252, %v5797
    %v5926 = vadd.f32 %v3253, %v5798
    %v5927 = vadd.f32 %v3254, %v5799
    %v5928 = vadd.f32 %v3255, %v5800
    %v5929 = vadd.f32 %v3256, %v5801
    %v5930 = vadd.f32 %v3257, %v5802
    %v5931 = vadd.f32 %v3258, %v5803
    %v5932 = vadd.f32 %v3259, %v5804
    %v5933 = vadd.f32 %v3260, %v5805
    %v5934 = vadd.f32 %v3261, %v5806
    %v5935 = vadd.f32 %v3262, %v5807
    %v5936 = vadd.f32 %v3263, %v5808
    %v5937 = vadd.f32 %v3264, %v5809
    %v5938 = vadd.f32 %v3265, %v5810
    %v5939 = vadd.f32 %v3266, %v5811
    %v5940 = vadd.f32 %v3267, %v5812
    %v5941 = vadd.f32 %v3268, %v5813
    %v5942 = vadd.f32 %v3269, %v5814
    %v5943 = vadd.f32 %v3270, %v5815
    %v5944 = vadd.f32 %v3271, %v5816
    %v5945 = vadd.f32 %v3272, %v5817
    %v5946 = vadd.f32 %v3273, %v5818
    %v5947 = vadd.f32 %v3274, %v5819
    %v5948 = vadd.f32 %v3275, %v5820
    %v5949 = vadd.f32 %v3276, %v5821
    %v5950 = vadd.f32 %v3277, %v5822
    %v5951 = vadd.f32 %v3278, %v5823
    %v5952 = vadd.f32 %v3279, %v5824
    %v5953 = vadd.f32 %v3280, %v5825
    %v5954 = vadd.f32 %v3281, %v5826
    %v5955 = vadd.f32 %v3282, %v5827
    %v5956 = vadd.f32 %v3283, %v5828
    %v5957 = vadd.f32 %v3284, %v5829
    %v5958 = vadd.f32 %v3285, %v5830
    %v5959 = vadd.f32 %v3286, %v5831
    %v5960 = vadd.f32 %v3287, %v5832
    %v5961 = vadd.f32 %v3288, %v5833
    %v5962 = vadd.f32 %v3289, %v5834
    %v5963 = vadd.f32 %v3290, %v5835
    %v5964 = vadd.f32 %v3291, %v5836
    %v5965 = vadd.f32 %v3292, %v5837
    %v5966 = vadd.f32 %v3293, %v5838
    %v5967 = vadd.f32 %v3294, %v5839
    %v5968 = vadd.f32 %v3295, %v5840
    %v5969 = vadd.f32 %v3296, %v5841
    %v5970 = vadd.f32 %v3297, %v5842
    %v5971 = vadd.f32 %v3298, %v5843
    %v5972 = vadd.f32 %v3299, %v5844
    %v5973 = vadd.f32 %v3300, %v5845
    %v5974 = vadd.f32 %v3301, %v5846
    %v5975 = vadd.f32 %v3302, %v5847
    %v5976 = vadd.f32 %v3303, %v5848
    %v5977 = vadd.f32 %v3304, %v5849
    %v5978 = vadd.f32 %v3305, %v5850
    %v5979 = vadd.f32 %v3306, %v5851
    %v5980 = vadd.f32 %v3307, %v5852
    %v5981 = vadd.f32 %v3308, %v5853
    %v5982 = vadd.f32 %v3309, %v5854
    %v5983 = vadd.f32 %v3310, %v5855
    %v5984 = vadd.f32 %v3311, %v5856
    %v5985 = vadd.f32 %v3312, %v5857
    %v5986 = vadd.f32 %v3313, %v5858
    %v5987 = vadd.f32 %v3314, %v5859
    %v5988 = vadd.f32 %v3315, %v5860
    %v5989 = vadd.f32 %v3316, %v5861
    %v5990 = vadd.f32 %v3317, %v5862
    %v5991 = vadd.f32 %v3318, %v5863
    %v5992 = vadd.f32 %v3319, %v5864
    %v5993 = vadd.f32 %v3320, %v5865
    %v5994 = vadd.f32 %v3321, %v5866
    %v5995 = vadd.f32 %v3322, %v5867
    %v5996 = vadd.f32 %v3323, %v5868
    %v5997 = vadd.f32 %v3324, %v5869
    %v5998 = vadd.f32 %v3325, %v5870
    %v5999 = vadd.f32 %v3326, %v5871
    %v6000 = vadd.f32 %v3327, %v5872
    %v6001 = vadd.f32 %v3328, %v5873
    %v6002 = vadd.f32 %v3329, %v5874
    %v6003 = vadd.f32 %v3330, %v5875
    %v6004 = vadd.f32 %v3331, %v5876
    %v6005 = vadd.f32 %v3332, %v5877
    %v6006 = vadd.f32 %v3333, %v5878
    %v6007 = vadd.f32 %v3334, %v5879
    %v6008 = vadd.f32 %v3335, %v5880
    %v6009 = vadd.f32 %v3336, %v5881
    %v6010 = vadd.f32 %v3337, %v5882
    %v6011 = vadd.f32 %v3338, %v5883
    %v6012 = vadd.f32 %v3339, %v5884
    %v6013 = vadd.f32 %v3340, %v5885
    %v6014 = vadd.f32 %v3341, %v5886
    %v6015 = vadd.f32 %v3342, %v5887
    %v6016 = vadd.f32 %v3343, %v5888
    %v6017 = vadd.f32 %v3344, %v5889
    %v6018 = vadd.f32 %v3345, %v5890
    %v6019 = vadd.f32 %v3346, %v5891
    %v6020 = vadd.f32 %v3347, %v5892
    %v6021 = vadd.f32 %v3348, %v5893
    %v6022 = vadd.f32 %v3349, %v5894
    %v6023 = vadd.f32 %v3350, %v5895
    %v6024 = vadd.f32 %v3351, %v5896
    %v6025 = vadd.f32 %v3352, %v5897
    %v6026 = vadd.f32 %v3353, %v5898
    %s6027 = scalar_lea.vmem %s3, 16
    %v6028 = vld [vmem:[%s6027] sm:$0xff]
    %s6029 = scalar_lea.vmem %s4, 2
    %v6030 = vld [vmem:[%s6029] sm:$0x1]
    %s6031 = scalar_lea.vmem %s5, 256
    %v6032 = vld [vmem:[%s6031] sm:$0xff]
    %v6033 = vld [vmem:[%s6031 + $0x8] sm:$0xff]
    %v6034 = vld [vmem:[%s6031 + $0x10] sm:$0xff]
    %v6035 = vld [vmem:[%s6031 + $0x18] sm:$0xff]
    %v6036 = vld [vmem:[%s6031 + $0x20] sm:$0xff]
    %v6037 = vld [vmem:[%s6031 + $0x28] sm:$0xff]
    %v6038 = vld [vmem:[%s6031 + $0x30] sm:$0xff]
    %v6039 = vld [vmem:[%s6031 + $0x38] sm:$0xff]
    %v6040 = vld [vmem:[%s6031 + $0x40] sm:$0xff]
    %v6041 = vld [vmem:[%s6031 + $0x48] sm:$0xff]
    %v6042 = vld [vmem:[%s6031 + $0x50] sm:$0xff]
    %v6043 = vld [vmem:[%s6031 + $0x58] sm:$0xff]
    %v6044 = vld [vmem:[%s6031 + $0x60] sm:$0xff]
    %v6045 = vld [vmem:[%s6031 + $0x68] sm:$0xff]
    %v6046 = vld [vmem:[%s6031 + $0x70] sm:$0xff]
    %v6047 = vld [vmem:[%s6031 + $0x78] sm:$0xff]
    %v6049 = vperm.slane %v6030, 0
    %v6052 = vsel %vm131, %v5899, 0
    %v6055 = vsel %vm131, %v5900, 0
    %v6058 = vsel %vm131, %v5901, 0
    %v6061 = vsel %vm131, %v5902, 0
    %v6064 = vsel %vm131, %v5903, 0
    %v6067 = vsel %vm131, %v5904, 0
    %v6070 = vsel %vm131, %v5905, 0
    %v6073 = vsel %vm131, %v5906, 0
    %v6076 = vsel %vm131, %v5907, 0
    %v6079 = vsel %vm131, %v5908, 0
    %v6082 = vsel %vm131, %v5909, 0
    %v6085 = vsel %vm131, %v5910, 0
    %v6088 = vsel %vm131, %v5911, 0
    %v6091 = vsel %vm131, %v5912, 0
    %v6094 = vsel %vm131, %v5913, 0
    %v6097 = vsel %vm131, %v5914, 0
    %v6100 = vsel %vm131, %v5915, 0
    %v6103 = vsel %vm131, %v5916, 0
    %v6106 = vsel %vm131, %v5917, 0
    %v6109 = vsel %vm131, %v5918, 0
    %v6112 = vsel %vm131, %v5919, 0
    %v6115 = vsel %vm131, %v5920, 0
    %v6118 = vsel %vm131, %v5921, 0
    %v6121 = vsel %vm131, %v5922, 0
    %v6124 = vsel %vm131, %v5923, 0
    %v6127 = vsel %vm131, %v5924, 0
    %v6130 = vsel %vm131, %v5925, 0
    %v6133 = vsel %vm131, %v5926, 0
    %v6136 = vsel %vm131, %v5927, 0
    %v6139 = vsel %vm131, %v5928, 0
    %v6142 = vsel %vm131, %v5929, 0
    %v6145 = vsel %vm131, %v5930, 0
    %v6148 = vsel %vm131, %v5931, 0
    %v6151 = vsel %vm131, %v5932, 0
    %v6154 = vsel %vm131, %v5933, 0
    %v6157 = vsel %vm131, %v5934, 0
    %v6160 = vsel %vm131, %v5935, 0
    %v6163 = vsel %vm131, %v5936, 0
    %v6166 = vsel %vm131, %v5937, 0
    %v6169 = vsel %vm131, %v5938, 0
    %v6172 = vsel %vm131, %v5939, 0
    %v6175 = vsel %vm131, %v5940, 0
    %v6178 = vsel %vm131, %v5941, 0
    %v6181 = vsel %vm131, %v5942, 0
    %v6184 = vsel %vm131, %v5943, 0
    %v6187 = vsel %vm131, %v5944, 0
    %v6190 = vsel %vm131, %v5945, 0
    %v6193 = vsel %vm131, %v5946, 0
    %v6196 = vsel %vm131, %v5947, 0
    %v6199 = vsel %vm131, %v5948, 0
    %v6202 = vsel %vm131, %v5949, 0
    %v6205 = vsel %vm131, %v5950, 0
    %v6208 = vsel %vm131, %v5951, 0
    %v6211 = vsel %vm131, %v5952, 0
    %v6214 = vsel %vm131, %v5953, 0
    %v6217 = vsel %vm131, %v5954, 0
    %v6220 = vsel %vm131, %v5955, 0
    %v6223 = vsel %vm131, %v5956, 0
    %v6226 = vsel %vm131, %v5957, 0
    %v6229 = vsel %vm131, %v5958, 0
    %v6232 = vsel %vm131, %v5959, 0
    %v6235 = vsel %vm131, %v5960, 0
    %v6238 = vsel %vm131, %v5961, 0
    %v6241 = vsel %vm131, %v5962, 0
    %v6244 = vsel %vm131, %v5963, 0
    %v6247 = vsel %vm131, %v5964, 0
    %v6250 = vsel %vm131, %v5965, 0
    %v6253 = vsel %vm131, %v5966, 0
    %v6256 = vsel %vm131, %v5967, 0
    %v6259 = vsel %vm131, %v5968, 0
    %v6262 = vsel %vm131, %v5969, 0
    %v6265 = vsel %vm131, %v5970, 0
    %v6268 = vsel %vm131, %v5971, 0
    %v6271 = vsel %vm131, %v5972, 0
    %v6274 = vsel %vm131, %v5973, 0
    %v6277 = vsel %vm131, %v5974, 0
    %v6280 = vsel %vm131, %v5975, 0
    %v6283 = vsel %vm131, %v5976, 0
    %v6286 = vsel %vm131, %v5977, 0
    %v6289 = vsel %vm131, %v5978, 0
    %v6292 = vsel %vm131, %v5979, 0
    %v6295 = vsel %vm131, %v5980, 0
    %v6298 = vsel %vm131, %v5981, 0
    %v6301 = vsel %vm131, %v5982, 0
    %v6304 = vsel %vm131, %v5983, 0
    %v6307 = vsel %vm131, %v5984, 0
    %v6310 = vsel %vm131, %v5985, 0
    %v6313 = vsel %vm131, %v5986, 0
    %v6316 = vsel %vm131, %v5987, 0
    %v6319 = vsel %vm131, %v5988, 0
    %v6322 = vsel %vm131, %v5989, 0
    %v6325 = vsel %vm131, %v5990, 0
    %v6328 = vsel %vm131, %v5991, 0
    %v6331 = vsel %vm131, %v5992, 0
    %v6334 = vsel %vm131, %v5993, 0
    %v6337 = vsel %vm131, %v5994, 0
    %v6340 = vsel %vm131, %v5995, 0
    %v6343 = vsel %vm131, %v5996, 0
    %v6346 = vsel %vm131, %v5997, 0
    %v6349 = vsel %vm131, %v5998, 0
    %v6352 = vsel %vm131, %v5999, 0
    %v6355 = vsel %vm131, %v6000, 0
    %v6358 = vsel %vm131, %v6001, 0
    %v6361 = vsel %vm131, %v6002, 0
    %v6364 = vsel %vm131, %v6003, 0
    %v6367 = vsel %vm131, %v6004, 0
    %v6370 = vsel %vm131, %v6005, 0
    %v6373 = vsel %vm131, %v6006, 0
    %v6376 = vsel %vm131, %v6007, 0
    %v6379 = vsel %vm131, %v6008, 0
    %v6382 = vsel %vm131, %v6009, 0
    %v6385 = vsel %vm131, %v6010, 0
    %v6388 = vsel %vm131, %v6011, 0
    %v6391 = vsel %vm131, %v6012, 0
    %v6394 = vsel %vm131, %v6013, 0
    %v6397 = vsel %vm131, %v6014, 0
    %v6400 = vsel %vm131, %v6015, 0
    %v6403 = vsel %vm131, %v6016, 0
    %v6406 = vsel %vm131, %v6017, 0
    %v6409 = vsel %vm131, %v6018, 0
    %v6412 = vsel %vm131, %v6019, 0
    %v6415 = vsel %vm131, %v6020, 0
    %v6418 = vsel %vm131, %v6021, 0
    %v6421 = vsel %vm131, %v6022, 0
    %v6424 = vsel %vm131, %v6023, 0
    %v6427 = vsel %vm131, %v6024, 0
    %v6430 = vsel %vm131, %v6025, 0
    %v6433 = vsel %vm131, %v6026, 0
    %6435 = vmatpush.msra.mxu0 0.0
    %6436 = vmatpush.msra.mxu0 0.0
    %6437 = vmatpush.msra.mxu0 0.0
    %6438 = vmatpush.msra.mxu0 0.0
    %6439 = vmatpush.msra.mxu0 0.0
    %6440 = vmatpush.msra.mxu0 0.0
    %6441 = vmatpush.msra.mxu0 0.0
    %6442 = vmatpush.msra.mxu0 0.0
    %6443 = vmatpush.msra.mxu0 0.0
    %6444 = vmatpush.msra.mxu0 0.0
    %6445 = vmatpush.msra.mxu0 0.0
    %6446 = vmatpush.msra.mxu0 0.0
    %6447 = vmatpush.msra.mxu0 0.0
    %6448 = vmatpush.msra.mxu0 0.0
    %6449 = vmatpush.msra.mxu0 0.0
    %6450 = vmatpush.msra.mxu0 %v6028
    %6451 = vmatmul.f32.gmra.mxu0 %v6052
    %v6452 = vpop.f32.mrf.mxu0
    %v6453 = vadd.f32 %v6049, %v6452
    %6454 = vmatmul.f32.gmra.mxu0 %v6055
    %v6455 = vpop.f32.mrf.mxu0
    %v6456 = vadd.f32 %v6049, %v6455
    %6457 = vmatmul.f32.gmra.mxu0 %v6058
    %v6458 = vpop.f32.mrf.mxu0
    %v6459 = vadd.f32 %v6049, %v6458
    %6460 = vmatmul.f32.gmra.mxu0 %v6061
    %v6461 = vpop.f32.mrf.mxu0
    %v6462 = vadd.f32 %v6049, %v6461
    %6463 = vmatmul.f32.gmra.mxu0 %v6064
    %v6464 = vpop.f32.mrf.mxu0
    %v6465 = vadd.f32 %v6049, %v6464
    %6466 = vmatmul.f32.gmra.mxu0 %v6067
    %v6467 = vpop.f32.mrf.mxu0
    %v6468 = vadd.f32 %v6049, %v6467
    %6469 = vmatmul.f32.gmra.mxu0 %v6070
    %v6470 = vpop.f32.mrf.mxu0
    %v6471 = vadd.f32 %v6049, %v6470
    %6472 = vmatmul.f32.gmra.mxu0 %v6073
    %v6473 = vpop.f32.mrf.mxu0
    %v6474 = vadd.f32 %v6049, %v6473
    %6475 = vmatmul.f32.gmra.mxu0 %v6076
    %v6476 = vpop.f32.mrf.mxu0
    %v6477 = vadd.f32 %v6049, %v6476
    %6478 = vmatmul.f32.gmra.mxu0 %v6079
    %v6479 = vpop.f32.mrf.mxu0
    %v6480 = vadd.f32 %v6049, %v6479
    %6481 = vmatmul.f32.gmra.mxu0 %v6082
    %v6482 = vpop.f32.mrf.mxu0
    %v6483 = vadd.f32 %v6049, %v6482
    %6484 = vmatmul.f32.gmra.mxu0 %v6085
    %v6485 = vpop.f32.mrf.mxu0
    %v6486 = vadd.f32 %v6049, %v6485
    %6487 = vmatmul.f32.gmra.mxu0 %v6088
    %v6488 = vpop.f32.mrf.mxu0
    %v6489 = vadd.f32 %v6049, %v6488
    %6490 = vmatmul.f32.gmra.mxu0 %v6091
    %v6491 = vpop.f32.mrf.mxu0
    %v6492 = vadd.f32 %v6049, %v6491
    %6493 = vmatmul.f32.gmra.mxu0 %v6094
    %v6494 = vpop.f32.mrf.mxu0
    %v6495 = vadd.f32 %v6049, %v6494
    %6496 = vmatmul.f32.gmra.mxu0 %v6097
    %v6497 = vpop.f32.mrf.mxu0
    %v6498 = vadd.f32 %v6049, %v6497
    %6499 = vmatmul.f32.gmra.mxu0 %v6100
    %v6500 = vpop.f32.mrf.mxu0
    %v6501 = vadd.f32 %v6049, %v6500
    %6502 = vmatmul.f32.gmra.mxu0 %v6103
    %v6503 = vpop.f32.mrf.mxu0
    %v6504 = vadd.f32 %v6049, %v6503
    %6505 = vmatmul.f32.gmra.mxu0 %v6106
    %v6506 = vpop.f32.mrf.mxu0
    %v6507 = vadd.f32 %v6049, %v6506
    %6508 = vmatmul.f32.gmra.mxu0 %v6109
    %v6509 = vpop.f32.mrf.mxu0
    %v6510 = vadd.f32 %v6049, %v6509
    %6511 = vmatmul.f32.gmra.mxu0 %v6112
    %v6512 = vpop.f32.mrf.mxu0
    %v6513 = vadd.f32 %v6049, %v6512
    %6514 = vmatmul.f32.gmra.mxu0 %v6115
    %v6515 = vpop.f32.mrf.mxu0
    %v6516 = vadd.f32 %v6049, %v6515
    %6517 = vmatmul.f32.gmra.mxu0 %v6118
    %v6518 = vpop.f32.mrf.mxu0
    %v6519 = vadd.f32 %v6049, %v6518
    %6520 = vmatmul.f32.gmra.mxu0 %v6121
    %v6521 = vpop.f32.mrf.mxu0
    %v6522 = vadd.f32 %v6049, %v6521
    %6523 = vmatmul.f32.gmra.mxu0 %v6124
    %v6524 = vpop.f32.mrf.mxu0
    %v6525 = vadd.f32 %v6049, %v6524
    %6526 = vmatmul.f32.gmra.mxu0 %v6127
    %v6527 = vpop.f32.mrf.mxu0
    %v6528 = vadd.f32 %v6049, %v6527
    %6529 = vmatmul.f32.gmra.mxu0 %v6130
    %v6530 = vpop.f32.mrf.mxu0
    %v6531 = vadd.f32 %v6049, %v6530
    %6532 = vmatmul.f32.gmra.mxu0 %v6133
    %v6533 = vpop.f32.mrf.mxu0
    %v6534 = vadd.f32 %v6049, %v6533
    %6535 = vmatmul.f32.gmra.mxu0 %v6136
    %v6536 = vpop.f32.mrf.mxu0
    %v6537 = vadd.f32 %v6049, %v6536
    %6538 = vmatmul.f32.gmra.mxu0 %v6139
    %v6539 = vpop.f32.mrf.mxu0
    %v6540 = vadd.f32 %v6049, %v6539
    %6541 = vmatmul.f32.gmra.mxu0 %v6142
    %v6542 = vpop.f32.mrf.mxu0
    %v6543 = vadd.f32 %v6049, %v6542
    %6544 = vmatmul.f32.gmra.mxu0 %v6145
    %v6545 = vpop.f32.mrf.mxu0
    %v6546 = vadd.f32 %v6049, %v6545
    %6547 = vmatmul.f32.gmra.mxu0 %v6148
    %v6548 = vpop.f32.mrf.mxu0
    %v6549 = vadd.f32 %v6049, %v6548
    %6550 = vmatmul.f32.gmra.mxu0 %v6151
    %v6551 = vpop.f32.mrf.mxu0
    %v6552 = vadd.f32 %v6049, %v6551
    %6553 = vmatmul.f32.gmra.mxu0 %v6154
    %v6554 = vpop.f32.mrf.mxu0
    %v6555 = vadd.f32 %v6049, %v6554
    %6556 = vmatmul.f32.gmra.mxu0 %v6157
    %v6557 = vpop.f32.mrf.mxu0
    %v6558 = vadd.f32 %v6049, %v6557
    %6559 = vmatmul.f32.gmra.mxu0 %v6160
    %v6560 = vpop.f32.mrf.mxu0
    %v6561 = vadd.f32 %v6049, %v6560
    %6562 = vmatmul.f32.gmra.mxu0 %v6163
    %v6563 = vpop.f32.mrf.mxu0
    %v6564 = vadd.f32 %v6049, %v6563
    %6565 = vmatmul.f32.gmra.mxu0 %v6166
    %v6566 = vpop.f32.mrf.mxu0
    %v6567 = vadd.f32 %v6049, %v6566
    %6568 = vmatmul.f32.gmra.mxu0 %v6169
    %v6569 = vpop.f32.mrf.mxu0
    %v6570 = vadd.f32 %v6049, %v6569
    %6571 = vmatmul.f32.gmra.mxu0 %v6172
    %v6572 = vpop.f32.mrf.mxu0
    %v6573 = vadd.f32 %v6049, %v6572
    %6574 = vmatmul.f32.gmra.mxu0 %v6175
    %v6575 = vpop.f32.mrf.mxu0
    %v6576 = vadd.f32 %v6049, %v6575
    %6577 = vmatmul.f32.gmra.mxu0 %v6178
    %v6578 = vpop.f32.mrf.mxu0
    %v6579 = vadd.f32 %v6049, %v6578
    %6580 = vmatmul.f32.gmra.mxu0 %v6181
    %v6581 = vpop.f32.mrf.mxu0
    %v6582 = vadd.f32 %v6049, %v6581
    %6583 = vmatmul.f32.gmra.mxu0 %v6184
    %v6584 = vpop.f32.mrf.mxu0
    %v6585 = vadd.f32 %v6049, %v6584
    %6586 = vmatmul.f32.gmra.mxu0 %v6187
    %v6587 = vpop.f32.mrf.mxu0
    %v6588 = vadd.f32 %v6049, %v6587
    %6589 = vmatmul.f32.gmra.mxu0 %v6190
    %v6590 = vpop.f32.mrf.mxu0
    %v6591 = vadd.f32 %v6049, %v6590
    %6592 = vmatmul.f32.gmra.mxu0 %v6193
    %v6593 = vpop.f32.mrf.mxu0
    %v6594 = vadd.f32 %v6049, %v6593
    %6595 = vmatmul.f32.gmra.mxu0 %v6196
    %v6596 = vpop.f32.mrf.mxu0
    %v6597 = vadd.f32 %v6049, %v6596
    %6598 = vmatmul.f32.gmra.mxu0 %v6199
    %v6599 = vpop.f32.mrf.mxu0
    %v6600 = vadd.f32 %v6049, %v6599
    %6601 = vmatmul.f32.gmra.mxu0 %v6202
    %v6602 = vpop.f32.mrf.mxu0
    %v6603 = vadd.f32 %v6049, %v6602
    %6604 = vmatmul.f32.gmra.mxu0 %v6205
    %v6605 = vpop.f32.mrf.mxu0
    %v6606 = vadd.f32 %v6049, %v6605
    %6607 = vmatmul.f32.gmra.mxu0 %v6208
    %v6608 = vpop.f32.mrf.mxu0
    %v6609 = vadd.f32 %v6049, %v6608
    %6610 = vmatmul.f32.gmra.mxu0 %v6211
    %v6611 = vpop.f32.mrf.mxu0
    %v6612 = vadd.f32 %v6049, %v6611
    %6613 = vmatmul.f32.gmra.mxu0 %v6214
    %v6614 = vpop.f32.mrf.mxu0
    %v6615 = vadd.f32 %v6049, %v6614
    %6616 = vmatmul.f32.gmra.mxu0 %v6217
    %v6617 = vpop.f32.mrf.mxu0
    %v6618 = vadd.f32 %v6049, %v6617
    %6619 = vmatmul.f32.gmra.mxu0 %v6220
    %v6620 = vpop.f32.mrf.mxu0
    %v6621 = vadd.f32 %v6049, %v6620
    %6622 = vmatmul.f32.gmra.mxu0 %v6223
    %v6623 = vpop.f32.mrf.mxu0
    %v6624 = vadd.f32 %v6049, %v6623
    %6625 = vmatmul.f32.gmra.mxu0 %v6226
    %v6626 = vpop.f32.mrf.mxu0
    %v6627 = vadd.f32 %v6049, %v6626
    %6628 = vmatmul.f32.gmra.mxu0 %v6229
    %v6629 = vpop.f32.mrf.mxu0
    %v6630 = vadd.f32 %v6049, %v6629
    %6631 = vmatmul.f32.gmra.mxu0 %v6232
    %v6632 = vpop.f32.mrf.mxu0
    %v6633 = vadd.f32 %v6049, %v6632
    %6634 = vmatmul.f32.gmra.mxu0 %v6235
    %v6635 = vpop.f32.mrf.mxu0
    %v6636 = vadd.f32 %v6049, %v6635
    %6637 = vmatmul.f32.gmra.mxu0 %v6238
    %v6638 = vpop.f32.mrf.mxu0
    %v6639 = vadd.f32 %v6049, %v6638
    %6640 = vmatmul.f32.gmra.mxu0 %v6241
    %v6641 = vpop.f32.mrf.mxu0
    %v6642 = vadd.f32 %v6049, %v6641
    %6643 = vmatmul.f32.gmra.mxu0 %v6244
    %v6644 = vpop.f32.mrf.mxu0
    %v6645 = vadd.f32 %v6049, %v6644
    %6646 = vmatmul.f32.gmra.mxu0 %v6247
    %v6647 = vpop.f32.mrf.mxu0
    %v6648 = vadd.f32 %v6049, %v6647
    %6649 = vmatmul.f32.gmra.mxu0 %v6250
    %v6650 = vpop.f32.mrf.mxu0
    %v6651 = vadd.f32 %v6049, %v6650
    %6652 = vmatmul.f32.gmra.mxu0 %v6253
    %v6653 = vpop.f32.mrf.mxu0
    %v6654 = vadd.f32 %v6049, %v6653
    %6655 = vmatmul.f32.gmra.mxu0 %v6256
    %v6656 = vpop.f32.mrf.mxu0
    %v6657 = vadd.f32 %v6049, %v6656
    %6658 = vmatmul.f32.gmra.mxu0 %v6259
    %v6659 = vpop.f32.mrf.mxu0
    %v6660 = vadd.f32 %v6049, %v6659
    %6661 = vmatmul.f32.gmra.mxu0 %v6262
    %v6662 = vpop.f32.mrf.mxu0
    %v6663 = vadd.f32 %v6049, %v6662
    %6664 = vmatmul.f32.gmra.mxu0 %v6265
    %v6665 = vpop.f32.mrf.mxu0
    %v6666 = vadd.f32 %v6049, %v6665
    %6667 = vmatmul.f32.gmra.mxu0 %v6268
    %v6668 = vpop.f32.mrf.mxu0
    %v6669 = vadd.f32 %v6049, %v6668
    %6670 = vmatmul.f32.gmra.mxu0 %v6271
    %v6671 = vpop.f32.mrf.mxu0
    %v6672 = vadd.f32 %v6049, %v6671
    %6673 = vmatmul.f32.gmra.mxu0 %v6274
    %v6674 = vpop.f32.mrf.mxu0
    %v6675 = vadd.f32 %v6049, %v6674
    %6676 = vmatmul.f32.gmra.mxu0 %v6277
    %v6677 = vpop.f32.mrf.mxu0
    %v6678 = vadd.f32 %v6049, %v6677
    %6679 = vmatmul.f32.gmra.mxu0 %v6280
    %v6680 = vpop.f32.mrf.mxu0
    %v6681 = vadd.f32 %v6049, %v6680
    %6682 = vmatmul.f32.gmra.mxu0 %v6283
    %v6683 = vpop.f32.mrf.mxu0
    %v6684 = vadd.f32 %v6049, %v6683
    %6685 = vmatmul.f32.gmra.mxu0 %v6286
    %v6686 = vpop.f32.mrf.mxu0
    %v6687 = vadd.f32 %v6049, %v6686
    %6688 = vmatmul.f32.gmra.mxu0 %v6289
    %v6689 = vpop.f32.mrf.mxu0
    %v6690 = vadd.f32 %v6049, %v6689
    %6691 = vmatmul.f32.gmra.mxu0 %v6292
    %v6692 = vpop.f32.mrf.mxu0
    %v6693 = vadd.f32 %v6049, %v6692
    %6694 = vmatmul.f32.gmra.mxu0 %v6295
    %v6695 = vpop.f32.mrf.mxu0
    %v6696 = vadd.f32 %v6049, %v6695
    %6697 = vmatmul.f32.gmra.mxu0 %v6298
    %v6698 = vpop.f32.mrf.mxu0
    %v6699 = vadd.f32 %v6049, %v6698
    %6700 = vmatmul.f32.gmra.mxu0 %v6301
    %v6701 = vpop.f32.mrf.mxu0
    %v6702 = vadd.f32 %v6049, %v6701
    %6703 = vmatmul.f32.gmra.mxu0 %v6304
    %v6704 = vpop.f32.mrf.mxu0
    %v6705 = vadd.f32 %v6049, %v6704
    %6706 = vmatmul.f32.gmra.mxu0 %v6307
    %v6707 = vpop.f32.mrf.mxu0
    %v6708 = vadd.f32 %v6049, %v6707
    %6709 = vmatmul.f32.gmra.mxu0 %v6310
    %v6710 = vpop.f32.mrf.mxu0
    %v6711 = vadd.f32 %v6049, %v6710
    %6712 = vmatmul.f32.gmra.mxu0 %v6313
    %v6713 = vpop.f32.mrf.mxu0
    %v6714 = vadd.f32 %v6049, %v6713
    %6715 = vmatmul.f32.gmra.mxu0 %v6316
    %v6716 = vpop.f32.mrf.mxu0
    %v6717 = vadd.f32 %v6049, %v6716
    %6718 = vmatmul.f32.gmra.mxu0 %v6319
    %v6719 = vpop.f32.mrf.mxu0
    %v6720 = vadd.f32 %v6049, %v6719
    %6721 = vmatmul.f32.gmra.mxu0 %v6322
    %v6722 = vpop.f32.mrf.mxu0
    %v6723 = vadd.f32 %v6049, %v6722
    %6724 = vmatmul.f32.gmra.mxu0 %v6325
    %v6725 = vpop.f32.mrf.mxu0
    %v6726 = vadd.f32 %v6049, %v6725
    %6727 = vmatmul.f32.gmra.mxu0 %v6328
    %v6728 = vpop.f32.mrf.mxu0
    %v6729 = vadd.f32 %v6049, %v6728
    %6730 = vmatmul.f32.gmra.mxu0 %v6331
    %v6731 = vpop.f32.mrf.mxu0
    %v6732 = vadd.f32 %v6049, %v6731
    %6733 = vmatmul.f32.gmra.mxu0 %v6334
    %v6734 = vpop.f32.mrf.mxu0
    %v6735 = vadd.f32 %v6049, %v6734
    %6736 = vmatmul.f32.gmra.mxu0 %v6337
    %v6737 = vpop.f32.mrf.mxu0
    %v6738 = vadd.f32 %v6049, %v6737
    %6739 = vmatmul.f32.gmra.mxu0 %v6340
    %v6740 = vpop.f32.mrf.mxu0
    %v6741 = vadd.f32 %v6049, %v6740
    %6742 = vmatmul.f32.gmra.mxu0 %v6343
    %v6743 = vpop.f32.mrf.mxu0
    %v6744 = vadd.f32 %v6049, %v6743
    %6745 = vmatmul.f32.gmra.mxu0 %v6346
    %v6746 = vpop.f32.mrf.mxu0
    %v6747 = vadd.f32 %v6049, %v6746
    %6748 = vmatmul.f32.gmra.mxu0 %v6349
    %v6749 = vpop.f32.mrf.mxu0
    %v6750 = vadd.f32 %v6049, %v6749
    %6751 = vmatmul.f32.gmra.mxu0 %v6352
    %v6752 = vpop.f32.mrf.mxu0
    %v6753 = vadd.f32 %v6049, %v6752
    %6754 = vmatmul.f32.gmra.mxu0 %v6355
    %v6755 = vpop.f32.mrf.mxu0
    %v6756 = vadd.f32 %v6049, %v6755
    %6757 = vmatmul.f32.gmra.mxu0 %v6358
    %v6758 = vpop.f32.mrf.mxu0
    %v6759 = vadd.f32 %v6049, %v6758
    %6760 = vmatmul.f32.gmra.mxu0 %v6361
    %v6761 = vpop.f32.mrf.mxu0
    %v6762 = vadd.f32 %v6049, %v6761
    %6763 = vmatmul.f32.gmra.mxu0 %v6364
    %v6764 = vpop.f32.mrf.mxu0
    %v6765 = vadd.f32 %v6049, %v6764
    %6766 = vmatmul.f32.gmra.mxu0 %v6367
    %v6767 = vpop.f32.mrf.mxu0
    %v6768 = vadd.f32 %v6049, %v6767
    %6769 = vmatmul.f32.gmra.mxu0 %v6370
    %v6770 = vpop.f32.mrf.mxu0
    %v6771 = vadd.f32 %v6049, %v6770
    %6772 = vmatmul.f32.gmra.mxu0 %v6373
    %v6773 = vpop.f32.mrf.mxu0
    %v6774 = vadd.f32 %v6049, %v6773
    %6775 = vmatmul.f32.gmra.mxu0 %v6376
    %v6776 = vpop.f32.mrf.mxu0
    %v6777 = vadd.f32 %v6049, %v6776
    %6778 = vmatmul.f32.gmra.mxu0 %v6379
    %v6779 = vpop.f32.mrf.mxu0
    %v6780 = vadd.f32 %v6049, %v6779
    %6781 = vmatmul.f32.gmra.mxu0 %v6382
    %v6782 = vpop.f32.mrf.mxu0
    %v6783 = vadd.f32 %v6049, %v6782
    %6784 = vmatmul.f32.gmra.mxu0 %v6385
    %v6785 = vpop.f32.mrf.mxu0
    %v6786 = vadd.f32 %v6049, %v6785
    %6787 = vmatmul.f32.gmra.mxu0 %v6388
    %v6788 = vpop.f32.mrf.mxu0
    %v6789 = vadd.f32 %v6049, %v6788
    %6790 = vmatmul.f32.gmra.mxu0 %v6391
    %v6791 = vpop.f32.mrf.mxu0
    %v6792 = vadd.f32 %v6049, %v6791
    %6793 = vmatmul.f32.gmra.mxu0 %v6394
    %v6794 = vpop.f32.mrf.mxu0
    %v6795 = vadd.f32 %v6049, %v6794
    %6796 = vmatmul.f32.gmra.mxu0 %v6397
    %v6797 = vpop.f32.mrf.mxu0
    %v6798 = vadd.f32 %v6049, %v6797
    %6799 = vmatmul.f32.gmra.mxu0 %v6400
    %v6800 = vpop.f32.mrf.mxu0
    %v6801 = vadd.f32 %v6049, %v6800
    %6802 = vmatmul.f32.gmra.mxu0 %v6403
    %v6803 = vpop.f32.mrf.mxu0
    %v6804 = vadd.f32 %v6049, %v6803
    %6805 = vmatmul.f32.gmra.mxu0 %v6406
    %v6806 = vpop.f32.mrf.mxu0
    %v6807 = vadd.f32 %v6049, %v6806
    %6808 = vmatmul.f32.gmra.mxu0 %v6409
    %v6809 = vpop.f32.mrf.mxu0
    %v6810 = vadd.f32 %v6049, %v6809
    %6811 = vmatmul.f32.gmra.mxu0 %v6412
    %v6812 = vpop.f32.mrf.mxu0
    %v6813 = vadd.f32 %v6049, %v6812
    %6814 = vmatmul.f32.gmra.mxu0 %v6415
    %v6815 = vpop.f32.mrf.mxu0
    %v6816 = vadd.f32 %v6049, %v6815
    %6817 = vmatmul.f32.gmra.mxu0 %v6418
    %v6818 = vpop.f32.mrf.mxu0
    %v6819 = vadd.f32 %v6049, %v6818
    %6820 = vmatmul.f32.gmra.mxu0 %v6421
    %v6821 = vpop.f32.mrf.mxu0
    %v6822 = vadd.f32 %v6049, %v6821
    %6823 = vmatmul.f32.gmra.mxu0 %v6424
    %v6824 = vpop.f32.mrf.mxu0
    %v6825 = vadd.f32 %v6049, %v6824
    %6826 = vmatmul.f32.gmra.mxu0 %v6427
    %v6827 = vpop.f32.mrf.mxu0
    %v6828 = vadd.f32 %v6049, %v6827
    %6829 = vmatmul.f32.gmra.mxu0 %v6430
    %v6830 = vpop.f32.mrf.mxu0
    %v6831 = vadd.f32 %v6049, %v6830
    %6832 = vmatmul.f32.gmra.mxu0 %v6433
    %v6833 = vpop.f32.mrf.mxu0
    %v6834 = vadd.f32 %v6049, %v6833
    %6835 = vdwg.mxu0
    %v6836 = vmul.f32 %v6453, %v668
    %v6837 = vmul.f32 %v6456, %v669
    %v6838 = vmul.f32 %v6459, %v670
    %v6839 = vmul.f32 %v6462, %v671
    %v6840 = vmul.f32 %v6465, %v672
    %v6841 = vmul.f32 %v6468, %v673
    %v6842 = vmul.f32 %v6471, %v674
    %v6843 = vmul.f32 %v6474, %v675
    %v6844 = vmul.f32 %v6477, %v676
    %v6845 = vmul.f32 %v6480, %v677
    %v6846 = vmul.f32 %v6483, %v678
    %v6847 = vmul.f32 %v6486, %v679
    %v6848 = vmul.f32 %v6489, %v680
    %v6849 = vmul.f32 %v6492, %v681
    %v6850 = vmul.f32 %v6495, %v682
    %v6851 = vmul.f32 %v6498, %v683
    %v6852 = vmul.f32 %v6501, %v668
    %v6853 = vmul.f32 %v6504, %v669
    %v6854 = vmul.f32 %v6507, %v670
    %v6855 = vmul.f32 %v6510, %v671
    %v6856 = vmul.f32 %v6513, %v672
    %v6857 = vmul.f32 %v6516, %v673
    %v6858 = vmul.f32 %v6519, %v674
    %v6859 = vmul.f32 %v6522, %v675
    %v6860 = vmul.f32 %v6525, %v676
    %v6861 = vmul.f32 %v6528, %v677
    %v6862 = vmul.f32 %v6531, %v678
    %v6863 = vmul.f32 %v6534, %v679
    %v6864 = vmul.f32 %v6537, %v680
    %v6865 = vmul.f32 %v6540, %v681
    %v6866 = vmul.f32 %v6543, %v682
    %v6867 = vmul.f32 %v6546, %v683
    %v6868 = vmul.f32 %v6549, %v668
    %v6869 = vmul.f32 %v6552, %v669
    %v6870 = vmul.f32 %v6555, %v670
    %v6871 = vmul.f32 %v6558, %v671
    %v6872 = vmul.f32 %v6561, %v672
    %v6873 = vmul.f32 %v6564, %v673
    %v6874 = vmul.f32 %v6567, %v674
    %v6875 = vmul.f32 %v6570, %v675
    %v6876 = vmul.f32 %v6573, %v676
    %v6877 = vmul.f32 %v6576, %v677
    %v6878 = vmul.f32 %v6579, %v678
    %v6879 = vmul.f32 %v6582, %v679
    %v6880 = vmul.f32 %v6585, %v680
    %v6881 = vmul.f32 %v6588, %v681
    %v6882 = vmul.f32 %v6591, %v682
    %v6883 = vmul.f32 %v6594, %v683
    %v6884 = vmul.f32 %v6597, %v668
    %v6885 = vmul.f32 %v6600, %v669
    %v6886 = vmul.f32 %v6603, %v670
    %v6887 = vmul.f32 %v6606, %v671
    %v6888 = vmul.f32 %v6609, %v672
    %v6889 = vmul.f32 %v6612, %v673
    %v6890 = vmul.f32 %v6615, %v674
    %v6891 = vmul.f32 %v6618, %v675
    %v6892 = vmul.f32 %v6621, %v676
    %v6893 = vmul.f32 %v6624, %v677
    %v6894 = vmul.f32 %v6627, %v678
    %v6895 = vmul.f32 %v6630, %v679
    %v6896 = vmul.f32 %v6633, %v680
    %v6897 = vmul.f32 %v6636, %v681
    %v6898 = vmul.f32 %v6639, %v682
    %v6899 = vmul.f32 %v6642, %v683
    %v6900 = vmul.f32 %v6645, %v668
    %v6901 = vmul.f32 %v6648, %v669
    %v6902 = vmul.f32 %v6651, %v670
    %v6903 = vmul.f32 %v6654, %v671
    %v6904 = vmul.f32 %v6657, %v672
    %v6905 = vmul.f32 %v6660, %v673
    %v6906 = vmul.f32 %v6663, %v674
    %v6907 = vmul.f32 %v6666, %v675
    %v6908 = vmul.f32 %v6669, %v676
    %v6909 = vmul.f32 %v6672, %v677
    %v6910 = vmul.f32 %v6675, %v678
    %v6911 = vmul.f32 %v6678, %v679
    %v6912 = vmul.f32 %v6681, %v680
    %v6913 = vmul.f32 %v6684, %v681
    %v6914 = vmul.f32 %v6687, %v682
    %v6915 = vmul.f32 %v6690, %v683
    %v6916 = vmul.f32 %v6693, %v668
    %v6917 = vmul.f32 %v6696, %v669
    %v6918 = vmul.f32 %v6699, %v670
    %v6919 = vmul.f32 %v6702, %v671
    %v6920 = vmul.f32 %v6705, %v672
    %v6921 = vmul.f32 %v6708, %v673
    %v6922 = vmul.f32 %v6711, %v674
    %v6923 = vmul.f32 %v6714, %v675
    %v6924 = vmul.f32 %v6717, %v676
    %v6925 = vmul.f32 %v6720, %v677
    %v6926 = vmul.f32 %v6723, %v678
    %v6927 = vmul.f32 %v6726, %v679
    %v6928 = vmul.f32 %v6729, %v680
    %v6929 = vmul.f32 %v6732, %v681
    %v6930 = vmul.f32 %v6735, %v682
    %v6931 = vmul.f32 %v6738, %v683
    %v6932 = vmul.f32 %v6741, %v668
    %v6933 = vmul.f32 %v6744, %v669
    %v6934 = vmul.f32 %v6747, %v670
    %v6935 = vmul.f32 %v6750, %v671
    %v6936 = vmul.f32 %v6753, %v672
    %v6937 = vmul.f32 %v6756, %v673
    %v6938 = vmul.f32 %v6759, %v674
    %v6939 = vmul.f32 %v6762, %v675
    %v6940 = vmul.f32 %v6765, %v676
    %v6941 = vmul.f32 %v6768, %v677
    %v6942 = vmul.f32 %v6771, %v678
    %v6943 = vmul.f32 %v6774, %v679
    %v6944 = vmul.f32 %v6777, %v680
    %v6945 = vmul.f32 %v6780, %v681
    %v6946 = vmul.f32 %v6783, %v682
    %v6947 = vmul.f32 %v6786, %v683
    %v6948 = vmul.f32 %v6789, %v668
    %v6949 = vmul.f32 %v6792, %v669
    %v6950 = vmul.f32 %v6795, %v670
    %v6951 = vmul.f32 %v6798, %v671
    %v6952 = vmul.f32 %v6801, %v672
    %v6953 = vmul.f32 %v6804, %v673
    %v6954 = vmul.f32 %v6807, %v674
    %v6955 = vmul.f32 %v6810, %v675
    %v6956 = vmul.f32 %v6813, %v676
    %v6957 = vmul.f32 %v6816, %v677
    %v6958 = vmul.f32 %v6819, %v678
    %v6959 = vmul.f32 %v6822, %v679
    %v6960 = vmul.f32 %v6825, %v680
    %v6961 = vmul.f32 %v6828, %v681
    %v6962 = vmul.f32 %v6831, %v682
    %v6963 = vmul.f32 %v6834, %v683
    %v6964 = vsel %vm131, %v6836, 0.0
    %v6965 = vsel %vm131, %v6837, 0.0
    %v6966 = vadd.f32 %v6964, %v6965
    %v6967 = vsel %vm131, %v6838, 0.0
    %v6968 = vadd.f32 %v6966, %v6967
    %v6969 = vsel %vm131, %v6839, 0.0
    %v6970 = vadd.f32 %v6968, %v6969
    %v6971 = vsel %vm131, %v6840, 0.0
    %v6972 = vadd.f32 %v6970, %v6971
    %v6973 = vsel %vm131, %v6841, 0.0
    %v6974 = vadd.f32 %v6972, %v6973
    %v6975 = vsel %vm131, %v6842, 0.0
    %v6976 = vadd.f32 %v6974, %v6975
    %v6977 = vsel %vm131, %v6843, 0.0
    %v6978 = vadd.f32 %v6976, %v6977
    %v6979 = vsel %vm131, %v6844, 0.0
    %v6980 = vadd.f32 %v6978, %v6979
    %v6981 = vsel %vm131, %v6845, 0.0
    %v6982 = vadd.f32 %v6980, %v6981
    %v6983 = vsel %vm131, %v6846, 0.0
    %v6984 = vadd.f32 %v6982, %v6983
    %v6985 = vsel %vm131, %v6847, 0.0
    %v6986 = vadd.f32 %v6984, %v6985
    %v6987 = vsel %vm131, %v6848, 0.0
    %v6988 = vadd.f32 %v6986, %v6987
    %v6989 = vsel %vm131, %v6849, 0.0
    %v6990 = vadd.f32 %v6988, %v6989
    %v6991 = vsel %vm131, %v6850, 0.0
    %v6992 = vadd.f32 %v6990, %v6991
    %v6993 = vsel %vm131, %v6851, 0.0
    %v6994 = vadd.f32 %v6992, %v6993
    %v6995 = vrot.slane %v6994, 4
    %v6996 = vadd.f32 %v6994, %v6995
    %v6997 = vrot.slane %v6996, 2
    %v6998 = vadd.f32 %v6996, %v6997
    %v6999 = vrot.slane %v6998, 1
    %v7000 = vadd.f32 %v6998, %v6999
    %v7001 = vsel %vm131, %v6852, 0.0
    %v7002 = vsel %vm131, %v6853, 0.0
    %v7003 = vadd.f32 %v7001, %v7002
    %v7004 = vsel %vm131, %v6854, 0.0
    %v7005 = vadd.f32 %v7003, %v7004
    %v7006 = vsel %vm131, %v6855, 0.0
    %v7007 = vadd.f32 %v7005, %v7006
    %v7008 = vsel %vm131, %v6856, 0.0
    %v7009 = vadd.f32 %v7007, %v7008
    %v7010 = vsel %vm131, %v6857, 0.0
    %v7011 = vadd.f32 %v7009, %v7010
    %v7012 = vsel %vm131, %v6858, 0.0
    %v7013 = vadd.f32 %v7011, %v7012
    %v7014 = vsel %vm131, %v6859, 0.0
    %v7015 = vadd.f32 %v7013, %v7014
    %v7016 = vsel %vm131, %v6860, 0.0
    %v7017 = vadd.f32 %v7015, %v7016
    %v7018 = vsel %vm131, %v6861, 0.0
    %v7019 = vadd.f32 %v7017, %v7018
    %v7020 = vsel %vm131, %v6862, 0.0
    %v7021 = vadd.f32 %v7019, %v7020
    %v7022 = vsel %vm131, %v6863, 0.0
    %v7023 = vadd.f32 %v7021, %v7022
    %v7024 = vsel %vm131, %v6864, 0.0
    %v7025 = vadd.f32 %v7023, %v7024
    %v7026 = vsel %vm131, %v6865, 0.0
    %v7027 = vadd.f32 %v7025, %v7026
    %v7028 = vsel %vm131, %v6866, 0.0
    %v7029 = vadd.f32 %v7027, %v7028
    %v7030 = vsel %vm131, %v6867, 0.0
    %v7031 = vadd.f32 %v7029, %v7030
    %v7032 = vrot.slane %v7031, 4
    %v7033 = vadd.f32 %v7031, %v7032
    %v7034 = vrot.slane %v7033, 2
    %v7035 = vadd.f32 %v7033, %v7034
    %v7036 = vrot.slane %v7035, 1
    %v7037 = vadd.f32 %v7035, %v7036
    %v7038 = vsel %vm131, %v6868, 0.0
    %v7039 = vsel %vm131, %v6869, 0.0
    %v7040 = vadd.f32 %v7038, %v7039
    %v7041 = vsel %vm131, %v6870, 0.0
    %v7042 = vadd.f32 %v7040, %v7041
    %v7043 = vsel %vm131, %v6871, 0.0
    %v7044 = vadd.f32 %v7042, %v7043
    %v7045 = vsel %vm131, %v6872, 0.0
    %v7046 = vadd.f32 %v7044, %v7045
    %v7047 = vsel %vm131, %v6873, 0.0
    %v7048 = vadd.f32 %v7046, %v7047
    %v7049 = vsel %vm131, %v6874, 0.0
    %v7050 = vadd.f32 %v7048, %v7049
    %v7051 = vsel %vm131, %v6875, 0.0
    %v7052 = vadd.f32 %v7050, %v7051
    %v7053 = vsel %vm131, %v6876, 0.0
    %v7054 = vadd.f32 %v7052, %v7053
    %v7055 = vsel %vm131, %v6877, 0.0
    %v7056 = vadd.f32 %v7054, %v7055
    %v7057 = vsel %vm131, %v6878, 0.0
    %v7058 = vadd.f32 %v7056, %v7057
    %v7059 = vsel %vm131, %v6879, 0.0
    %v7060 = vadd.f32 %v7058, %v7059
    %v7061 = vsel %vm131, %v6880, 0.0
    %v7062 = vadd.f32 %v7060, %v7061
    %v7063 = vsel %vm131, %v6881, 0.0
    %v7064 = vadd.f32 %v7062, %v7063
    %v7065 = vsel %vm131, %v6882, 0.0
    %v7066 = vadd.f32 %v7064, %v7065
    %v7067 = vsel %vm131, %v6883, 0.0
    %v7068 = vadd.f32 %v7066, %v7067
    %v7069 = vrot.slane %v7068, 4
    %v7070 = vadd.f32 %v7068, %v7069
    %v7071 = vrot.slane %v7070, 2
    %v7072 = vadd.f32 %v7070, %v7071
    %v7073 = vrot.slane %v7072, 1
    %v7074 = vadd.f32 %v7072, %v7073
    %v7075 = vsel %vm131, %v6884, 0.0
    %v7076 = vsel %vm131, %v6885, 0.0
    %v7077 = vadd.f32 %v7075, %v7076
    %v7078 = vsel %vm131, %v6886, 0.0
    %v7079 = vadd.f32 %v7077, %v7078
    %v7080 = vsel %vm131, %v6887, 0.0
    %v7081 = vadd.f32 %v7079, %v7080
    %v7082 = vsel %vm131, %v6888, 0.0
    %v7083 = vadd.f32 %v7081, %v7082
    %v7084 = vsel %vm131, %v6889, 0.0
    %v7085 = vadd.f32 %v7083, %v7084
    %v7086 = vsel %vm131, %v6890, 0.0
    %v7087 = vadd.f32 %v7085, %v7086
    %v7088 = vsel %vm131, %v6891, 0.0
    %v7089 = vadd.f32 %v7087, %v7088
    %v7090 = vsel %vm131, %v6892, 0.0
    %v7091 = vadd.f32 %v7089, %v7090
    %v7092 = vsel %vm131, %v6893, 0.0
    %v7093 = vadd.f32 %v7091, %v7092
    %v7094 = vsel %vm131, %v6894, 0.0
    %v7095 = vadd.f32 %v7093, %v7094
    %v7096 = vsel %vm131, %v6895, 0.0
    %v7097 = vadd.f32 %v7095, %v7096
    %v7098 = vsel %vm131, %v6896, 0.0
    %v7099 = vadd.f32 %v7097, %v7098
    %v7100 = vsel %vm131, %v6897, 0.0
    %v7101 = vadd.f32 %v7099, %v7100
    %v7102 = vsel %vm131, %v6898, 0.0
    %v7103 = vadd.f32 %v7101, %v7102
    %v7104 = vsel %vm131, %v6899, 0.0
    %v7105 = vadd.f32 %v7103, %v7104
    %v7106 = vrot.slane %v7105, 4
    %v7107 = vadd.f32 %v7105, %v7106
    %v7108 = vrot.slane %v7107, 2
    %v7109 = vadd.f32 %v7107, %v7108
    %v7110 = vrot.slane %v7109, 1
    %v7111 = vadd.f32 %v7109, %v7110
    %v7112 = vsel %vm131, %v6900, 0.0
    %v7113 = vsel %vm131, %v6901, 0.0
    %v7114 = vadd.f32 %v7112, %v7113
    %v7115 = vsel %vm131, %v6902, 0.0
    %v7116 = vadd.f32 %v7114, %v7115
    %v7117 = vsel %vm131, %v6903, 0.0
    %v7118 = vadd.f32 %v7116, %v7117
    %v7119 = vsel %vm131, %v6904, 0.0
    %v7120 = vadd.f32 %v7118, %v7119
    %v7121 = vsel %vm131, %v6905, 0.0
    %v7122 = vadd.f32 %v7120, %v7121
    %v7123 = vsel %vm131, %v6906, 0.0
    %v7124 = vadd.f32 %v7122, %v7123
    %v7125 = vsel %vm131, %v6907, 0.0
    %v7126 = vadd.f32 %v7124, %v7125
    %v7127 = vsel %vm131, %v6908, 0.0
    %v7128 = vadd.f32 %v7126, %v7127
    %v7129 = vsel %vm131, %v6909, 0.0
    %v7130 = vadd.f32 %v7128, %v7129
    %v7131 = vsel %vm131, %v6910, 0.0
    %v7132 = vadd.f32 %v7130, %v7131
    %v7133 = vsel %vm131, %v6911, 0.0
    %v7134 = vadd.f32 %v7132, %v7133
    %v7135 = vsel %vm131, %v6912, 0.0
    %v7136 = vadd.f32 %v7134, %v7135
    %v7137 = vsel %vm131, %v6913, 0.0
    %v7138 = vadd.f32 %v7136, %v7137
    %v7139 = vsel %vm131, %v6914, 0.0
    %v7140 = vadd.f32 %v7138, %v7139
    %v7141 = vsel %vm131, %v6915, 0.0
    %v7142 = vadd.f32 %v7140, %v7141
    %v7143 = vrot.slane %v7142, 4
    %v7144 = vadd.f32 %v7142, %v7143
    %v7145 = vrot.slane %v7144, 2
    %v7146 = vadd.f32 %v7144, %v7145
    %v7147 = vrot.slane %v7146, 1
    %v7148 = vadd.f32 %v7146, %v7147
    %v7149 = vsel %vm131, %v6916, 0.0
    %v7150 = vsel %vm131, %v6917, 0.0
    %v7151 = vadd.f32 %v7149, %v7150
    %v7152 = vsel %vm131, %v6918, 0.0
    %v7153 = vadd.f32 %v7151, %v7152
    %v7154 = vsel %vm131, %v6919, 0.0
    %v7155 = vadd.f32 %v7153, %v7154
    %v7156 = vsel %vm131, %v6920, 0.0
    %v7157 = vadd.f32 %v7155, %v7156
    %v7158 = vsel %vm131, %v6921, 0.0
    %v7159 = vadd.f32 %v7157, %v7158
    %v7160 = vsel %vm131, %v6922, 0.0
    %v7161 = vadd.f32 %v7159, %v7160
    %v7162 = vsel %vm131, %v6923, 0.0
    %v7163 = vadd.f32 %v7161, %v7162
    %v7164 = vsel %vm131, %v6924, 0.0
    %v7165 = vadd.f32 %v7163, %v7164
    %v7166 = vsel %vm131, %v6925, 0.0
    %v7167 = vadd.f32 %v7165, %v7166
    %v7168 = vsel %vm131, %v6926, 0.0
    %v7169 = vadd.f32 %v7167, %v7168
    %v7170 = vsel %vm131, %v6927, 0.0
    %v7171 = vadd.f32 %v7169, %v7170
    %v7172 = vsel %vm131, %v6928, 0.0
    %v7173 = vadd.f32 %v7171, %v7172
    %v7174 = vsel %vm131, %v6929, 0.0
    %v7175 = vadd.f32 %v7173, %v7174
    %v7176 = vsel %vm131, %v6930, 0.0
    %v7177 = vadd.f32 %v7175, %v7176
    %v7178 = vsel %vm131, %v6931, 0.0
    %v7179 = vadd.f32 %v7177, %v7178
    %v7180 = vrot.slane %v7179, 4
    %v7181 = vadd.f32 %v7179, %v7180
    %v7182 = vrot.slane %v7181, 2
    %v7183 = vadd.f32 %v7181, %v7182
    %v7184 = vrot.slane %v7183, 1
    %v7185 = vadd.f32 %v7183, %v7184
    %v7186 = vsel %vm131, %v6932, 0.0
    %v7187 = vsel %vm131, %v6933, 0.0
    %v7188 = vadd.f32 %v7186, %v7187
    %v7189 = vsel %vm131, %v6934, 0.0
    %v7190 = vadd.f32 %v7188, %v7189
    %v7191 = vsel %vm131, %v6935, 0.0
    %v7192 = vadd.f32 %v7190, %v7191
    %v7193 = vsel %vm131, %v6936, 0.0
    %v7194 = vadd.f32 %v7192, %v7193
    %v7195 = vsel %vm131, %v6937, 0.0
    %v7196 = vadd.f32 %v7194, %v7195
    %v7197 = vsel %vm131, %v6938, 0.0
    %v7198 = vadd.f32 %v7196, %v7197
    %v7199 = vsel %vm131, %v6939, 0.0
    %v7200 = vadd.f32 %v7198, %v7199
    %v7201 = vsel %vm131, %v6940, 0.0
    %v7202 = vadd.f32 %v7200, %v7201
    %v7203 = vsel %vm131, %v6941, 0.0
    %v7204 = vadd.f32 %v7202, %v7203
    %v7205 = vsel %vm131, %v6942, 0.0
    %v7206 = vadd.f32 %v7204, %v7205
    %v7207 = vsel %vm131, %v6943, 0.0
    %v7208 = vadd.f32 %v7206, %v7207
    %v7209 = vsel %vm131, %v6944, 0.0
    %v7210 = vadd.f32 %v7208, %v7209
    %v7211 = vsel %vm131, %v6945, 0.0
    %v7212 = vadd.f32 %v7210, %v7211
    %v7213 = vsel %vm131, %v6946, 0.0
    %v7214 = vadd.f32 %v7212, %v7213
    %v7215 = vsel %vm131, %v6947, 0.0
    %v7216 = vadd.f32 %v7214, %v7215
    %v7217 = vrot.slane %v7216, 4
    %v7218 = vadd.f32 %v7216, %v7217
    %v7219 = vrot.slane %v7218, 2
    %v7220 = vadd.f32 %v7218, %v7219
    %v7221 = vrot.slane %v7220, 1
    %v7222 = vadd.f32 %v7220, %v7221
    %v7223 = vsel %vm131, %v6948, 0.0
    %v7224 = vsel %vm131, %v6949, 0.0
    %v7225 = vadd.f32 %v7223, %v7224
    %v7226 = vsel %vm131, %v6950, 0.0
    %v7227 = vadd.f32 %v7225, %v7226
    %v7228 = vsel %vm131, %v6951, 0.0
    %v7229 = vadd.f32 %v7227, %v7228
    %v7230 = vsel %vm131, %v6952, 0.0
    %v7231 = vadd.f32 %v7229, %v7230
    %v7232 = vsel %vm131, %v6953, 0.0
    %v7233 = vadd.f32 %v7231, %v7232
    %v7234 = vsel %vm131, %v6954, 0.0
    %v7235 = vadd.f32 %v7233, %v7234
    %v7236 = vsel %vm131, %v6955, 0.0
    %v7237 = vadd.f32 %v7235, %v7236
    %v7238 = vsel %vm131, %v6956, 0.0
    %v7239 = vadd.f32 %v7237, %v7238
    %v7240 = vsel %vm131, %v6957, 0.0
    %v7241 = vadd.f32 %v7239, %v7240
    %v7242 = vsel %vm131, %v6958, 0.0
    %v7243 = vadd.f32 %v7241, %v7242
    %v7244 = vsel %vm131, %v6959, 0.0
    %v7245 = vadd.f32 %v7243, %v7244
    %v7246 = vsel %vm131, %v6960, 0.0
    %v7247 = vadd.f32 %v7245, %v7246
    %v7248 = vsel %vm131, %v6961, 0.0
    %v7249 = vadd.f32 %v7247, %v7248
    %v7250 = vsel %vm131, %v6962, 0.0
    %v7251 = vadd.f32 %v7249, %v7250
    %v7252 = vsel %vm131, %v6963, 0.0
    %v7253 = vadd.f32 %v7251, %v7252
    %v7254 = vrot.slane %v7253, 4
    %v7255 = vadd.f32 %v7253, %v7254
    %v7256 = vrot.slane %v7255, 2
    %v7257 = vadd.f32 %v7255, %v7256
    %v7258 = vrot.slane %v7257, 1
    %v7259 = vadd.f32 %v7257, %v7258
    %v7260 = vmul.f32 %v7000, 0.03125
    %v7261 = vmul.f32 %v7037, 0.03125
    %v7262 = vmul.f32 %v7074, 0.03125
    %v7263 = vmul.f32 %v7111, 0.03125
    %v7264 = vmul.f32 %v7148, 0.03125
    %v7265 = vmul.f32 %v7185, 0.03125
    %v7266 = vmul.f32 %v7222, 0.03125
    %v7267 = vmul.f32 %v7259, 0.03125
    %v7268 = vsub.f32 %v6836, %v7260
    %v7269 = vsub.f32 %v6837, %v7260
    %v7270 = vsub.f32 %v6838, %v7260
    %v7271 = vsub.f32 %v6839, %v7260
    %v7272 = vsub.f32 %v6840, %v7260
    %v7273 = vsub.f32 %v6841, %v7260
    %v7274 = vsub.f32 %v6842, %v7260
    %v7275 = vsub.f32 %v6843, %v7260
    %v7276 = vsub.f32 %v6844, %v7260
    %v7277 = vsub.f32 %v6845, %v7260
    %v7278 = vsub.f32 %v6846, %v7260
    %v7279 = vsub.f32 %v6847, %v7260
    %v7280 = vsub.f32 %v6848, %v7260
    %v7281 = vsub.f32 %v6849, %v7260
    %v7282 = vsub.f32 %v6850, %v7260
    %v7283 = vsub.f32 %v6851, %v7260
    %v7284 = vsub.f32 %v6852, %v7261
    %v7285 = vsub.f32 %v6853, %v7261
    %v7286 = vsub.f32 %v6854, %v7261
    %v7287 = vsub.f32 %v6855, %v7261
    %v7288 = vsub.f32 %v6856, %v7261
    %v7289 = vsub.f32 %v6857, %v7261
    %v7290 = vsub.f32 %v6858, %v7261
    %v7291 = vsub.f32 %v6859, %v7261
    %v7292 = vsub.f32 %v6860, %v7261
    %v7293 = vsub.f32 %v6861, %v7261
    %v7294 = vsub.f32 %v6862, %v7261
    %v7295 = vsub.f32 %v6863, %v7261
    %v7296 = vsub.f32 %v6864, %v7261
    %v7297 = vsub.f32 %v6865, %v7261
    %v7298 = vsub.f32 %v6866, %v7261
    %v7299 = vsub.f32 %v6867, %v7261
    %v7300 = vsub.f32 %v6868, %v7262
    %v7301 = vsub.f32 %v6869, %v7262
    %v7302 = vsub.f32 %v6870, %v7262
    %v7303 = vsub.f32 %v6871, %v7262
    %v7304 = vsub.f32 %v6872, %v7262
    %v7305 = vsub.f32 %v6873, %v7262
    %v7306 = vsub.f32 %v6874, %v7262
    %v7307 = vsub.f32 %v6875, %v7262
    %v7308 = vsub.f32 %v6876, %v7262
    %v7309 = vsub.f32 %v6877, %v7262
    %v7310 = vsub.f32 %v6878, %v7262
    %v7311 = vsub.f32 %v6879, %v7262
    %v7312 = vsub.f32 %v6880, %v7262
    %v7313 = vsub.f32 %v6881, %v7262
    %v7314 = vsub.f32 %v6882, %v7262
    %v7315 = vsub.f32 %v6883, %v7262
    %v7316 = vsub.f32 %v6884, %v7263
    %v7317 = vsub.f32 %v6885, %v7263
    %v7318 = vsub.f32 %v6886, %v7263
    %v7319 = vsub.f32 %v6887, %v7263
    %v7320 = vsub.f32 %v6888, %v7263
    %v7321 = vsub.f32 %v6889, %v7263
    %v7322 = vsub.f32 %v6890, %v7263
    %v7323 = vsub.f32 %v6891, %v7263
    %v7324 = vsub.f32 %v6892, %v7263
    %v7325 = vsub.f32 %v6893, %v7263
    %v7326 = vsub.f32 %v6894, %v7263
    %v7327 = vsub.f32 %v6895, %v7263
    %v7328 = vsub.f32 %v6896, %v7263
    %v7329 = vsub.f32 %v6897, %v7263
    %v7330 = vsub.f32 %v6898, %v7263
    %v7331 = vsub.f32 %v6899, %v7263
    %v7332 = vsub.f32 %v6900, %v7264
    %v7333 = vsub.f32 %v6901, %v7264
    %v7334 = vsub.f32 %v6902, %v7264
    %v7335 = vsub.f32 %v6903, %v7264
    %v7336 = vsub.f32 %v6904, %v7264
    %v7337 = vsub.f32 %v6905, %v7264
    %v7338 = vsub.f32 %v6906, %v7264
    %v7339 = vsub.f32 %v6907, %v7264
    %v7340 = vsub.f32 %v6908, %v7264
    %v7341 = vsub.f32 %v6909, %v7264
    %v7342 = vsub.f32 %v6910, %v7264
    %v7343 = vsub.f32 %v6911, %v7264
    %v7344 = vsub.f32 %v6912, %v7264
    %v7345 = vsub.f32 %v6913, %v7264
    %v7346 = vsub.f32 %v6914, %v7264
    %v7347 = vsub.f32 %v6915, %v7264
    %v7348 = vsub.f32 %v6916, %v7265
    %v7349 = vsub.f32 %v6917, %v7265
    %v7350 = vsub.f32 %v6918, %v7265
    %v7351 = vsub.f32 %v6919, %v7265
    %v7352 = vsub.f32 %v6920, %v7265
    %v7353 = vsub.f32 %v6921, %v7265
    %v7354 = vsub.f32 %v6922, %v7265
    %v7355 = vsub.f32 %v6923, %v7265
    %v7356 = vsub.f32 %v6924, %v7265
    %v7357 = vsub.f32 %v6925, %v7265
    %v7358 = vsub.f32 %v6926, %v7265
    %v7359 = vsub.f32 %v6927, %v7265
    %v7360 = vsub.f32 %v6928, %v7265
    %v7361 = vsub.f32 %v6929, %v7265
    %v7362 = vsub.f32 %v6930, %v7265
    %v7363 = vsub.f32 %v6931, %v7265
    %v7364 = vsub.f32 %v6932, %v7266
    %v7365 = vsub.f32 %v6933, %v7266
    %v7366 = vsub.f32 %v6934, %v7266
    %v7367 = vsub.f32 %v6935, %v7266
    %v7368 = vsub.f32 %v6936, %v7266
    %v7369 = vsub.f32 %v6937, %v7266
    %v7370 = vsub.f32 %v6938, %v7266
    %v7371 = vsub.f32 %v6939, %v7266
    %v7372 = vsub.f32 %v6940, %v7266
    %v7373 = vsub.f32 %v6941, %v7266
    %v7374 = vsub.f32 %v6942, %v7266
    %v7375 = vsub.f32 %v6943, %v7266
    %v7376 = vsub.f32 %v6944, %v7266
    %v7377 = vsub.f32 %v6945, %v7266
    %v7378 = vsub.f32 %v6946, %v7266
    %v7379 = vsub.f32 %v6947, %v7266
    %v7380 = vsub.f32 %v6948, %v7267
    %v7381 = vsub.f32 %v6949, %v7267
    %v7382 = vsub.f32 %v6950, %v7267
    %v7383 = vsub.f32 %v6951, %v7267
    %v7384 = vsub.f32 %v6952, %v7267
    %v7385 = vsub.f32 %v6953, %v7267
    %v7386 = vsub.f32 %v6954, %v7267
    %v7387 = vsub.f32 %v6955, %v7267
    %v7388 = vsub.f32 %v6956, %v7267
    %v7389 = vsub.f32 %v6957, %v7267
    %v7390 = vsub.f32 %v6958, %v7267
    %v7391 = vsub.f32 %v6959, %v7267
    %v7392 = vsub.f32 %v6960, %v7267
    %v7393 = vsub.f32 %v6961, %v7267
    %v7394 = vsub.f32 %v6962, %v7267
    %v7395 = vsub.f32 %v6963, %v7267
    %v7396 = vmul.f32 %v7268, %v668
    %v7397 = vmul.f32 %v7269, %v669
    %v7398 = vmul.f32 %v7270, %v670
    %v7399 = vmul.f32 %v7271, %v671
    %v7400 = vmul.f32 %v7272, %v672
    %v7401 = vmul.f32 %v7273, %v673
    %v7402 = vmul.f32 %v7274, %v674
    %v7403 = vmul.f32 %v7275, %v675
    %v7404 = vmul.f32 %v7276, %v676
    %v7405 = vmul.f32 %v7277, %v677
    %v7406 = vmul.f32 %v7278, %v678
    %v7407 = vmul.f32 %v7279, %v679
    %v7408 = vmul.f32 %v7280, %v680
    %v7409 = vmul.f32 %v7281, %v681
    %v7410 = vmul.f32 %v7282, %v682
    %v7411 = vmul.f32 %v7283, %v683
    %v7412 = vmul.f32 %v7284, %v668
    %v7413 = vmul.f32 %v7285, %v669
    %v7414 = vmul.f32 %v7286, %v670
    %v7415 = vmul.f32 %v7287, %v671
    %v7416 = vmul.f32 %v7288, %v672
    %v7417 = vmul.f32 %v7289, %v673
    %v7418 = vmul.f32 %v7290, %v674
    %v7419 = vmul.f32 %v7291, %v675
    %v7420 = vmul.f32 %v7292, %v676
    %v7421 = vmul.f32 %v7293, %v677
    %v7422 = vmul.f32 %v7294, %v678
    %v7423 = vmul.f32 %v7295, %v679
    %v7424 = vmul.f32 %v7296, %v680
    %v7425 = vmul.f32 %v7297, %v681
    %v7426 = vmul.f32 %v7298, %v682
    %v7427 = vmul.f32 %v7299, %v683
    %v7428 = vmul.f32 %v7300, %v668
    %v7429 = vmul.f32 %v7301, %v669
    %v7430 = vmul.f32 %v7302, %v670
    %v7431 = vmul.f32 %v7303, %v671
    %v7432 = vmul.f32 %v7304, %v672
    %v7433 = vmul.f32 %v7305, %v673
    %v7434 = vmul.f32 %v7306, %v674
    %v7435 = vmul.f32 %v7307, %v675
    %v7436 = vmul.f32 %v7308, %v676
    %v7437 = vmul.f32 %v7309, %v677
    %v7438 = vmul.f32 %v7310, %v678
    %v7439 = vmul.f32 %v7311, %v679
    %v7440 = vmul.f32 %v7312, %v680
    %v7441 = vmul.f32 %v7313, %v681
    %v7442 = vmul.f32 %v7314, %v682
    %v7443 = vmul.f32 %v7315, %v683
    %v7444 = vmul.f32 %v7316, %v668
    %v7445 = vmul.f32 %v7317, %v669
    %v7446 = vmul.f32 %v7318, %v670
    %v7447 = vmul.f32 %v7319, %v671
    %v7448 = vmul.f32 %v7320, %v672
    %v7449 = vmul.f32 %v7321, %v673
    %v7450 = vmul.f32 %v7322, %v674
    %v7451 = vmul.f32 %v7323, %v675
    %v7452 = vmul.f32 %v7324, %v676
    %v7453 = vmul.f32 %v7325, %v677
    %v7454 = vmul.f32 %v7326, %v678
    %v7455 = vmul.f32 %v7327, %v679
    %v7456 = vmul.f32 %v7328, %v680
    %v7457 = vmul.f32 %v7329, %v681
    %v7458 = vmul.f32 %v7330, %v682
    %v7459 = vmul.f32 %v7331, %v683
    %v7460 = vmul.f32 %v7332, %v668
    %v7461 = vmul.f32 %v7333, %v669
    %v7462 = vmul.f32 %v7334, %v670
    %v7463 = vmul.f32 %v7335, %v671
    %v7464 = vmul.f32 %v7336, %v672
    %v7465 = vmul.f32 %v7337, %v673
    %v7466 = vmul.f32 %v7338, %v674
    %v7467 = vmul.f32 %v7339, %v675
    %v7468 = vmul.f32 %v7340, %v676
    %v7469 = vmul.f32 %v7341, %v677
    %v7470 = vmul.f32 %v7342, %v678
    %v7471 = vmul.f32 %v7343, %v679
    %v7472 = vmul.f32 %v7344, %v680
    %v7473 = vmul.f32 %v7345, %v681
    %v7474 = vmul.f32 %v7346, %v682
    %v7475 = vmul.f32 %v7347, %v683
    %v7476 = vmul.f32 %v7348, %v668
    %v7477 = vmul.f32 %v7349, %v669
    %v7478 = vmul.f32 %v7350, %v670
    %v7479 = vmul.f32 %v7351, %v671
    %v7480 = vmul.f32 %v7352, %v672
    %v7481 = vmul.f32 %v7353, %v673
    %v7482 = vmul.f32 %v7354, %v674
    %v7483 = vmul.f32 %v7355, %v675
    %v7484 = vmul.f32 %v7356, %v676
    %v7485 = vmul.f32 %v7357, %v677
    %v7486 = vmul.f32 %v7358, %v678
    %v7487 = vmul.f32 %v7359, %v679
    %v7488 = vmul.f32 %v7360, %v680
    %v7489 = vmul.f32 %v7361, %v681
    %v7490 = vmul.f32 %v7362, %v682
    %v7491 = vmul.f32 %v7363, %v683
    %v7492 = vmul.f32 %v7364, %v668
    %v7493 = vmul.f32 %v7365, %v669
    %v7494 = vmul.f32 %v7366, %v670
    %v7495 = vmul.f32 %v7367, %v671
    %v7496 = vmul.f32 %v7368, %v672
    %v7497 = vmul.f32 %v7369, %v673
    %v7498 = vmul.f32 %v7370, %v674
    %v7499 = vmul.f32 %v7371, %v675
    %v7500 = vmul.f32 %v7372, %v676
    %v7501 = vmul.f32 %v7373, %v677
    %v7502 = vmul.f32 %v7374, %v678
    %v7503 = vmul.f32 %v7375, %v679
    %v7504 = vmul.f32 %v7376, %v680
    %v7505 = vmul.f32 %v7377, %v681
    %v7506 = vmul.f32 %v7378, %v682
    %v7507 = vmul.f32 %v7379, %v683
    %v7508 = vmul.f32 %v7380, %v668
    %v7509 = vmul.f32 %v7381, %v669
    %v7510 = vmul.f32 %v7382, %v670
    %v7511 = vmul.f32 %v7383, %v671
    %v7512 = vmul.f32 %v7384, %v672
    %v7513 = vmul.f32 %v7385, %v673
    %v7514 = vmul.f32 %v7386, %v674
    %v7515 = vmul.f32 %v7387, %v675
    %v7516 = vmul.f32 %v7388, %v676
    %v7517 = vmul.f32 %v7389, %v677
    %v7518 = vmul.f32 %v7390, %v678
    %v7519 = vmul.f32 %v7391, %v679
    %v7520 = vmul.f32 %v7392, %v680
    %v7521 = vmul.f32 %v7393, %v681
    %v7522 = vmul.f32 %v7394, %v682
    %v7523 = vmul.f32 %v7395, %v683
    %v7524 = vmul.f32 %v7396, %v7396
    %v7525 = vmul.f32 %v7397, %v7397
    %v7526 = vmul.f32 %v7398, %v7398
    %v7527 = vmul.f32 %v7399, %v7399
    %v7528 = vmul.f32 %v7400, %v7400
    %v7529 = vmul.f32 %v7401, %v7401
    %v7530 = vmul.f32 %v7402, %v7402
    %v7531 = vmul.f32 %v7403, %v7403
    %v7532 = vmul.f32 %v7404, %v7404
    %v7533 = vmul.f32 %v7405, %v7405
    %v7534 = vmul.f32 %v7406, %v7406
    %v7535 = vmul.f32 %v7407, %v7407
    %v7536 = vmul.f32 %v7408, %v7408
    %v7537 = vmul.f32 %v7409, %v7409
    %v7538 = vmul.f32 %v7410, %v7410
    %v7539 = vmul.f32 %v7411, %v7411
    %v7540 = vmul.f32 %v7412, %v7412
    %v7541 = vmul.f32 %v7413, %v7413
    %v7542 = vmul.f32 %v7414, %v7414
    %v7543 = vmul.f32 %v7415, %v7415
    %v7544 = vmul.f32 %v7416, %v7416
    %v7545 = vmul.f32 %v7417, %v7417
    %v7546 = vmul.f32 %v7418, %v7418
    %v7547 = vmul.f32 %v7419, %v7419
    %v7548 = vmul.f32 %v7420, %v7420
    %v7549 = vmul.f32 %v7421, %v7421
    %v7550 = vmul.f32 %v7422, %v7422
    %v7551 = vmul.f32 %v7423, %v7423
    %v7552 = vmul.f32 %v7424, %v7424
    %v7553 = vmul.f32 %v7425, %v7425
    %v7554 = vmul.f32 %v7426, %v7426
    %v7555 = vmul.f32 %v7427, %v7427
    %v7556 = vmul.f32 %v7428, %v7428
    %v7557 = vmul.f32 %v7429, %v7429
    %v7558 = vmul.f32 %v7430, %v7430
    %v7559 = vmul.f32 %v7431, %v7431
    %v7560 = vmul.f32 %v7432, %v7432
    %v7561 = vmul.f32 %v7433, %v7433
    %v7562 = vmul.f32 %v7434, %v7434
    %v7563 = vmul.f32 %v7435, %v7435
    %v7564 = vmul.f32 %v7436, %v7436
    %v7565 = vmul.f32 %v7437, %v7437
    %v7566 = vmul.f32 %v7438, %v7438
    %v7567 = vmul.f32 %v7439, %v7439
    %v7568 = vmul.f32 %v7440, %v7440
    %v7569 = vmul.f32 %v7441, %v7441
    %v7570 = vmul.f32 %v7442, %v7442
    %v7571 = vmul.f32 %v7443, %v7443
    %v7572 = vmul.f32 %v7444, %v7444
    %v7573 = vmul.f32 %v7445, %v7445
    %v7574 = vmul.f32 %v7446, %v7446
    %v7575 = vmul.f32 %v7447, %v7447
    %v7576 = vmul.f32 %v7448, %v7448
    %v7577 = vmul.f32 %v7449, %v7449
    %v7578 = vmul.f32 %v7450, %v7450
    %v7579 = vmul.f32 %v7451, %v7451
    %v7580 = vmul.f32 %v7452, %v7452
    %v7581 = vmul.f32 %v7453, %v7453
    %v7582 = vmul.f32 %v7454, %v7454
    %v7583 = vmul.f32 %v7455, %v7455
    %v7584 = vmul.f32 %v7456, %v7456
    %v7585 = vmul.f32 %v7457, %v7457
    %v7586 = vmul.f32 %v7458, %v7458
    %v7587 = vmul.f32 %v7459, %v7459
    %v7588 = vmul.f32 %v7460, %v7460
    %v7589 = vmul.f32 %v7461, %v7461
    %v7590 = vmul.f32 %v7462, %v7462
    %v7591 = vmul.f32 %v7463, %v7463
    %v7592 = vmul.f32 %v7464, %v7464
    %v7593 = vmul.f32 %v7465, %v7465
    %v7594 = vmul.f32 %v7466, %v7466
    %v7595 = vmul.f32 %v7467, %v7467
    %v7596 = vmul.f32 %v7468, %v7468
    %v7597 = vmul.f32 %v7469, %v7469
    %v7598 = vmul.f32 %v7470, %v7470
    %v7599 = vmul.f32 %v7471, %v7471
    %v7600 = vmul.f32 %v7472, %v7472
    %v7601 = vmul.f32 %v7473, %v7473
    %v7602 = vmul.f32 %v7474, %v7474
    %v7603 = vmul.f32 %v7475, %v7475
    %v7604 = vmul.f32 %v7476, %v7476
    %v7605 = vmul.f32 %v7477, %v7477
    %v7606 = vmul.f32 %v7478, %v7478
    %v7607 = vmul.f32 %v7479, %v7479
    %v7608 = vmul.f32 %v7480, %v7480
    %v7609 = vmul.f32 %v7481, %v7481
    %v7610 = vmul.f32 %v7482, %v7482
    %v7611 = vmul.f32 %v7483, %v7483
    %v7612 = vmul.f32 %v7484, %v7484
    %v7613 = vmul.f32 %v7485, %v7485
    %v7614 = vmul.f32 %v7486, %v7486
    %v7615 = vmul.f32 %v7487, %v7487
    %v7616 = vmul.f32 %v7488, %v7488
    %v7617 = vmul.f32 %v7489, %v7489
    %v7618 = vmul.f32 %v7490, %v7490
    %v7619 = vmul.f32 %v7491, %v7491
    %v7620 = vmul.f32 %v7492, %v7492
    %v7621 = vmul.f32 %v7493, %v7493
    %v7622 = vmul.f32 %v7494, %v7494
    %v7623 = vmul.f32 %v7495, %v7495
    %v7624 = vmul.f32 %v7496, %v7496
    %v7625 = vmul.f32 %v7497, %v7497
    %v7626 = vmul.f32 %v7498, %v7498
    %v7627 = vmul.f32 %v7499, %v7499
    %v7628 = vmul.f32 %v7500, %v7500
    %v7629 = vmul.f32 %v7501, %v7501
    %v7630 = vmul.f32 %v7502, %v7502
    %v7631 = vmul.f32 %v7503, %v7503
    %v7632 = vmul.f32 %v7504, %v7504
    %v7633 = vmul.f32 %v7505, %v7505
    %v7634 = vmul.f32 %v7506, %v7506
    %v7635 = vmul.f32 %v7507, %v7507
    %v7636 = vmul.f32 %v7508, %v7508
    %v7637 = vmul.f32 %v7509, %v7509
    %v7638 = vmul.f32 %v7510, %v7510
    %v7639 = vmul.f32 %v7511, %v7511
    %v7640 = vmul.f32 %v7512, %v7512
    %v7641 = vmul.f32 %v7513, %v7513
    %v7642 = vmul.f32 %v7514, %v7514
    %v7643 = vmul.f32 %v7515, %v7515
    %v7644 = vmul.f32 %v7516, %v7516
    %v7645 = vmul.f32 %v7517, %v7517
    %v7646 = vmul.f32 %v7518, %v7518
    %v7647 = vmul.f32 %v7519, %v7519
    %v7648 = vmul.f32 %v7520, %v7520
    %v7649 = vmul.f32 %v7521, %v7521
    %v7650 = vmul.f32 %v7522, %v7522
    %v7651 = vmul.f32 %v7523, %v7523
    %v7652 = vsel %vm131, %v7524, 0.0
    %v7653 = vsel %vm131, %v7525, 0.0
    %v7654 = vadd.f32 %v7652, %v7653
    %v7655 = vsel %vm131, %v7526, 0.0
    %v7656 = vadd.f32 %v7654, %v7655
    %v7657 = vsel %vm131, %v7527, 0.0
    %v7658 = vadd.f32 %v7656, %v7657
    %v7659 = vsel %vm131, %v7528, 0.0
    %v7660 = vadd.f32 %v7658, %v7659
    %v7661 = vsel %vm131, %v7529, 0.0
    %v7662 = vadd.f32 %v7660, %v7661
    %v7663 = vsel %vm131, %v7530, 0.0
    %v7664 = vadd.f32 %v7662, %v7663
    %v7665 = vsel %vm131, %v7531, 0.0
    %v7666 = vadd.f32 %v7664, %v7665
    %v7667 = vsel %vm131, %v7532, 0.0
    %v7668 = vadd.f32 %v7666, %v7667
    %v7669 = vsel %vm131, %v7533, 0.0
    %v7670 = vadd.f32 %v7668, %v7669
    %v7671 = vsel %vm131, %v7534, 0.0
    %v7672 = vadd.f32 %v7670, %v7671
    %v7673 = vsel %vm131, %v7535, 0.0
    %v7674 = vadd.f32 %v7672, %v7673
    %v7675 = vsel %vm131, %v7536, 0.0
    %v7676 = vadd.f32 %v7674, %v7675
    %v7677 = vsel %vm131, %v7537, 0.0
    %v7678 = vadd.f32 %v7676, %v7677
    %v7679 = vsel %vm131, %v7538, 0.0
    %v7680 = vadd.f32 %v7678, %v7679
    %v7681 = vsel %vm131, %v7539, 0.0
    %v7682 = vadd.f32 %v7680, %v7681
    %v7683 = vrot.slane %v7682, 4
    %v7684 = vadd.f32 %v7682, %v7683
    %v7685 = vrot.slane %v7684, 2
    %v7686 = vadd.f32 %v7684, %v7685
    %v7687 = vrot.slane %v7686, 1
    %v7688 = vadd.f32 %v7686, %v7687
    %v7689 = vsel %vm131, %v7540, 0.0
    %v7690 = vsel %vm131, %v7541, 0.0
    %v7691 = vadd.f32 %v7689, %v7690
    %v7692 = vsel %vm131, %v7542, 0.0
    %v7693 = vadd.f32 %v7691, %v7692
    %v7694 = vsel %vm131, %v7543, 0.0
    %v7695 = vadd.f32 %v7693, %v7694
    %v7696 = vsel %vm131, %v7544, 0.0
    %v7697 = vadd.f32 %v7695, %v7696
    %v7698 = vsel %vm131, %v7545, 0.0
    %v7699 = vadd.f32 %v7697, %v7698
    %v7700 = vsel %vm131, %v7546, 0.0
    %v7701 = vadd.f32 %v7699, %v7700
    %v7702 = vsel %vm131, %v7547, 0.0
    %v7703 = vadd.f32 %v7701, %v7702
    %v7704 = vsel %vm131, %v7548, 0.0
    %v7705 = vadd.f32 %v7703, %v7704
    %v7706 = vsel %vm131, %v7549, 0.0
    %v7707 = vadd.f32 %v7705, %v7706
    %v7708 = vsel %vm131, %v7550, 0.0
    %v7709 = vadd.f32 %v7707, %v7708
    %v7710 = vsel %vm131, %v7551, 0.0
    %v7711 = vadd.f32 %v7709, %v7710
    %v7712 = vsel %vm131, %v7552, 0.0
    %v7713 = vadd.f32 %v7711, %v7712
    %v7714 = vsel %vm131, %v7553, 0.0
    %v7715 = vadd.f32 %v7713, %v7714
    %v7716 = vsel %vm131, %v7554, 0.0
    %v7717 = vadd.f32 %v7715, %v7716
    %v7718 = vsel %vm131, %v7555, 0.0
    %v7719 = vadd.f32 %v7717, %v7718
    %v7720 = vrot.slane %v7719, 4
    %v7721 = vadd.f32 %v7719, %v7720
    %v7722 = vrot.slane %v7721, 2
    %v7723 = vadd.f32 %v7721, %v7722
    %v7724 = vrot.slane %v7723, 1
    %v7725 = vadd.f32 %v7723, %v7724
    %v7726 = vsel %vm131, %v7556, 0.0
    %v7727 = vsel %vm131, %v7557, 0.0
    %v7728 = vadd.f32 %v7726, %v7727
    %v7729 = vsel %vm131, %v7558, 0.0
    %v7730 = vadd.f32 %v7728, %v7729
    %v7731 = vsel %vm131, %v7559, 0.0
    %v7732 = vadd.f32 %v7730, %v7731
    %v7733 = vsel %vm131, %v7560, 0.0
    %v7734 = vadd.f32 %v7732, %v7733
    %v7735 = vsel %vm131, %v7561, 0.0
    %v7736 = vadd.f32 %v7734, %v7735
    %v7737 = vsel %vm131, %v7562, 0.0
    %v7738 = vadd.f32 %v7736, %v7737
    %v7739 = vsel %vm131, %v7563, 0.0
    %v7740 = vadd.f32 %v7738, %v7739
    %v7741 = vsel %vm131, %v7564, 0.0
    %v7742 = vadd.f32 %v7740, %v7741
    %v7743 = vsel %vm131, %v7565, 0.0
    %v7744 = vadd.f32 %v7742, %v7743
    %v7745 = vsel %vm131, %v7566, 0.0
    %v7746 = vadd.f32 %v7744, %v7745
    %v7747 = vsel %vm131, %v7567, 0.0
    %v7748 = vadd.f32 %v7746, %v7747
    %v7749 = vsel %vm131, %v7568, 0.0
    %v7750 = vadd.f32 %v7748, %v7749
    %v7751 = vsel %vm131, %v7569, 0.0
    %v7752 = vadd.f32 %v7750, %v7751
    %v7753 = vsel %vm131, %v7570, 0.0
    %v7754 = vadd.f32 %v7752, %v7753
    %v7755 = vsel %vm131, %v7571, 0.0
    %v7756 = vadd.f32 %v7754, %v7755
    %v7757 = vrot.slane %v7756, 4
    %v7758 = vadd.f32 %v7756, %v7757
    %v7759 = vrot.slane %v7758, 2
    %v7760 = vadd.f32 %v7758, %v7759
    %v7761 = vrot.slane %v7760, 1
    %v7762 = vadd.f32 %v7760, %v7761
    %v7763 = vsel %vm131, %v7572, 0.0
    %v7764 = vsel %vm131, %v7573, 0.0
    %v7765 = vadd.f32 %v7763, %v7764
    %v7766 = vsel %vm131, %v7574, 0.0
    %v7767 = vadd.f32 %v7765, %v7766
    %v7768 = vsel %vm131, %v7575, 0.0
    %v7769 = vadd.f32 %v7767, %v7768
    %v7770 = vsel %vm131, %v7576, 0.0
    %v7771 = vadd.f32 %v7769, %v7770
    %v7772 = vsel %vm131, %v7577, 0.0
    %v7773 = vadd.f32 %v7771, %v7772
    %v7774 = vsel %vm131, %v7578, 0.0
    %v7775 = vadd.f32 %v7773, %v7774
    %v7776 = vsel %vm131, %v7579, 0.0
    %v7777 = vadd.f32 %v7775, %v7776
    %v7778 = vsel %vm131, %v7580, 0.0
    %v7779 = vadd.f32 %v7777, %v7778
    %v7780 = vsel %vm131, %v7581, 0.0
    %v7781 = vadd.f32 %v7779, %v7780
    %v7782 = vsel %vm131, %v7582, 0.0
    %v7783 = vadd.f32 %v7781, %v7782
    %v7784 = vsel %vm131, %v7583, 0.0
    %v7785 = vadd.f32 %v7783, %v7784
    %v7786 = vsel %vm131, %v7584, 0.0
    %v7787 = vadd.f32 %v7785, %v7786
    %v7788 = vsel %vm131, %v7585, 0.0
    %v7789 = vadd.f32 %v7787, %v7788
    %v7790 = vsel %vm131, %v7586, 0.0
    %v7791 = vadd.f32 %v7789, %v7790
    %v7792 = vsel %vm131, %v7587, 0.0
    %v7793 = vadd.f32 %v7791, %v7792
    %v7794 = vrot.slane %v7793, 4
    %v7795 = vadd.f32 %v7793, %v7794
    %v7796 = vrot.slane %v7795, 2
    %v7797 = vadd.f32 %v7795, %v7796
    %v7798 = vrot.slane %v7797, 1
    %v7799 = vadd.f32 %v7797, %v7798
    %v7800 = vsel %vm131, %v7588, 0.0
    %v7801 = vsel %vm131, %v7589, 0.0
    %v7802 = vadd.f32 %v7800, %v7801
    %v7803 = vsel %vm131, %v7590, 0.0
    %v7804 = vadd.f32 %v7802, %v7803
    %v7805 = vsel %vm131, %v7591, 0.0
    %v7806 = vadd.f32 %v7804, %v7805
    %v7807 = vsel %vm131, %v7592, 0.0
    %v7808 = vadd.f32 %v7806, %v7807
    %v7809 = vsel %vm131, %v7593, 0.0
    %v7810 = vadd.f32 %v7808, %v7809
    %v7811 = vsel %vm131, %v7594, 0.0
    %v7812 = vadd.f32 %v7810, %v7811
    %v7813 = vsel %vm131, %v7595, 0.0
    %v7814 = vadd.f32 %v7812, %v7813
    %v7815 = vsel %vm131, %v7596, 0.0
    %v7816 = vadd.f32 %v7814, %v7815
    %v7817 = vsel %vm131, %v7597, 0.0
    %v7818 = vadd.f32 %v7816, %v7817
    %v7819 = vsel %vm131, %v7598, 0.0
    %v7820 = vadd.f32 %v7818, %v7819
    %v7821 = vsel %vm131, %v7599, 0.0
    %v7822 = vadd.f32 %v7820, %v7821
    %v7823 = vsel %vm131, %v7600, 0.0
    %v7824 = vadd.f32 %v7822, %v7823
    %v7825 = vsel %vm131, %v7601, 0.0
    %v7826 = vadd.f32 %v7824, %v7825
    %v7827 = vsel %vm131, %v7602, 0.0
    %v7828 = vadd.f32 %v7826, %v7827
    %v7829 = vsel %vm131, %v7603, 0.0
    %v7830 = vadd.f32 %v7828, %v7829
    %v7831 = vrot.slane %v7830, 4
    %v7832 = vadd.f32 %v7830, %v7831
    %v7833 = vrot.slane %v7832, 2
    %v7834 = vadd.f32 %v7832, %v7833
    %v7835 = vrot.slane %v7834, 1
    %v7836 = vadd.f32 %v7834, %v7835
    %v7837 = vsel %vm131, %v7604, 0.0
    %v7838 = vsel %vm131, %v7605, 0.0
    %v7839 = vadd.f32 %v7837, %v7838
    %v7840 = vsel %vm131, %v7606, 0.0
    %v7841 = vadd.f32 %v7839, %v7840
    %v7842 = vsel %vm131, %v7607, 0.0
    %v7843 = vadd.f32 %v7841, %v7842
    %v7844 = vsel %vm131, %v7608, 0.0
    %v7845 = vadd.f32 %v7843, %v7844
    %v7846 = vsel %vm131, %v7609, 0.0
    %v7847 = vadd.f32 %v7845, %v7846
    %v7848 = vsel %vm131, %v7610, 0.0
    %v7849 = vadd.f32 %v7847, %v7848
    %v7850 = vsel %vm131, %v7611, 0.0
    %v7851 = vadd.f32 %v7849, %v7850
    %v7852 = vsel %vm131, %v7612, 0.0
    %v7853 = vadd.f32 %v7851, %v7852
    %v7854 = vsel %vm131, %v7613, 0.0
    %v7855 = vadd.f32 %v7853, %v7854
    %v7856 = vsel %vm131, %v7614, 0.0
    %v7857 = vadd.f32 %v7855, %v7856
    %v7858 = vsel %vm131, %v7615, 0.0
    %v7859 = vadd.f32 %v7857, %v7858
    %v7860 = vsel %vm131, %v7616, 0.0
    %v7861 = vadd.f32 %v7859, %v7860
    %v7862 = vsel %vm131, %v7617, 0.0
    %v7863 = vadd.f32 %v7861, %v7862
    %v7864 = vsel %vm131, %v7618, 0.0
    %v7865 = vadd.f32 %v7863, %v7864
    %v7866 = vsel %vm131, %v7619, 0.0
    %v7867 = vadd.f32 %v7865, %v7866
    %v7868 = vrot.slane %v7867, 4
    %v7869 = vadd.f32 %v7867, %v7868
    %v7870 = vrot.slane %v7869, 2
    %v7871 = vadd.f32 %v7869, %v7870
    %v7872 = vrot.slane %v7871, 1
    %v7873 = vadd.f32 %v7871, %v7872
    %v7874 = vsel %vm131, %v7620, 0.0
    %v7875 = vsel %vm131, %v7621, 0.0
    %v7876 = vadd.f32 %v7874, %v7875
    %v7877 = vsel %vm131, %v7622, 0.0
    %v7878 = vadd.f32 %v7876, %v7877
    %v7879 = vsel %vm131, %v7623, 0.0
    %v7880 = vadd.f32 %v7878, %v7879
    %v7881 = vsel %vm131, %v7624, 0.0
    %v7882 = vadd.f32 %v7880, %v7881
    %v7883 = vsel %vm131, %v7625, 0.0
    %v7884 = vadd.f32 %v7882, %v7883
    %v7885 = vsel %vm131, %v7626, 0.0
    %v7886 = vadd.f32 %v7884, %v7885
    %v7887 = vsel %vm131, %v7627, 0.0
    %v7888 = vadd.f32 %v7886, %v7887
    %v7889 = vsel %vm131, %v7628, 0.0
    %v7890 = vadd.f32 %v7888, %v7889
    %v7891 = vsel %vm131, %v7629, 0.0
    %v7892 = vadd.f32 %v7890, %v7891
    %v7893 = vsel %vm131, %v7630, 0.0
    %v7894 = vadd.f32 %v7892, %v7893
    %v7895 = vsel %vm131, %v7631, 0.0
    %v7896 = vadd.f32 %v7894, %v7895
    %v7897 = vsel %vm131, %v7632, 0.0
    %v7898 = vadd.f32 %v7896, %v7897
    %v7899 = vsel %vm131, %v7633, 0.0
    %v7900 = vadd.f32 %v7898, %v7899
    %v7901 = vsel %vm131, %v7634, 0.0
    %v7902 = vadd.f32 %v7900, %v7901
    %v7903 = vsel %vm131, %v7635, 0.0
    %v7904 = vadd.f32 %v7902, %v7903
    %v7905 = vrot.slane %v7904, 4
    %v7906 = vadd.f32 %v7904, %v7905
    %v7907 = vrot.slane %v7906, 2
    %v7908 = vadd.f32 %v7906, %v7907
    %v7909 = vrot.slane %v7908, 1
    %v7910 = vadd.f32 %v7908, %v7909
    %v7911 = vsel %vm131, %v7636, 0.0
    %v7912 = vsel %vm131, %v7637, 0.0
    %v7913 = vadd.f32 %v7911, %v7912
    %v7914 = vsel %vm131, %v7638, 0.0
    %v7915 = vadd.f32 %v7913, %v7914
    %v7916 = vsel %vm131, %v7639, 0.0
    %v7917 = vadd.f32 %v7915, %v7916
    %v7918 = vsel %vm131, %v7640, 0.0
    %v7919 = vadd.f32 %v7917, %v7918
    %v7920 = vsel %vm131, %v7641, 0.0
    %v7921 = vadd.f32 %v7919, %v7920
    %v7922 = vsel %vm131, %v7642, 0.0
    %v7923 = vadd.f32 %v7921, %v7922
    %v7924 = vsel %vm131, %v7643, 0.0
    %v7925 = vadd.f32 %v7923, %v7924
    %v7926 = vsel %vm131, %v7644, 0.0
    %v7927 = vadd.f32 %v7925, %v7926
    %v7928 = vsel %vm131, %v7645, 0.0
    %v7929 = vadd.f32 %v7927, %v7928
    %v7930 = vsel %vm131, %v7646, 0.0
    %v7931 = vadd.f32 %v7929, %v7930
    %v7932 = vsel %vm131, %v7647, 0.0
    %v7933 = vadd.f32 %v7931, %v7932
    %v7934 = vsel %vm131, %v7648, 0.0
    %v7935 = vadd.f32 %v7933, %v7934
    %v7936 = vsel %vm131, %v7649, 0.0
    %v7937 = vadd.f32 %v7935, %v7936
    %v7938 = vsel %vm131, %v7650, 0.0
    %v7939 = vadd.f32 %v7937, %v7938
    %v7940 = vsel %vm131, %v7651, 0.0
    %v7941 = vadd.f32 %v7939, %v7940
    %v7942 = vrot.slane %v7941, 4
    %v7943 = vadd.f32 %v7941, %v7942
    %v7944 = vrot.slane %v7943, 2
    %v7945 = vadd.f32 %v7943, %v7944
    %v7946 = vrot.slane %v7945, 1
    %v7947 = vadd.f32 %v7945, %v7946
    %v7948 = vmul.f32 %v7688, 0.03125
    %v7949 = vmul.f32 %v7725, 0.03125
    %v7950 = vmul.f32 %v7762, 0.03125
    %v7951 = vmul.f32 %v7799, 0.03125
    %v7952 = vmul.f32 %v7836, 0.03125
    %v7953 = vmul.f32 %v7873, 0.03125
    %v7954 = vmul.f32 %v7910, 0.03125
    %v7955 = vmul.f32 %v7947, 0.03125
    %v7956 = vadd.f32 %v7948, 1e-05
    %v7957 = vadd.f32 %v7949, 1e-05
    %v7958 = vadd.f32 %v7950, 1e-05
    %v7959 = vadd.f32 %v7951, 1e-05
    %v7960 = vadd.f32 %v7952, 1e-05
    %v7961 = vadd.f32 %v7953, 1e-05
    %v7962 = vadd.f32 %v7954, 1e-05
    %v7963 = vadd.f32 %v7955, 1e-05
    %v7964 = vrsqrt.pop %v7956
    %v7965 = vmul.f32 %v7964, %v7956
    %v7966 = vmul.f32 %v7965, %v7964
    %v7967 = vmul.f32 0.5, %v7966
    %v7968 = vsub.f32 1.5, %v7967
    %v7969 = vmul.f32 %v7964, %v7968
    %vm7970 = vweird.f32 %v7956
    %vm7971 = vweird.f32 %v7964
    %vm7972 = vmor %vm7970, %vm7971
    %v7973 = vsel %vm7972, %v7964, %v7969
    %v7974 = vrsqrt.pop %v7957
    %v7975 = vmul.f32 %v7974, %v7957
    %v7976 = vmul.f32 %v7975, %v7974
    %v7977 = vmul.f32 0.5, %v7976
    %v7978 = vsub.f32 1.5, %v7977
    %v7979 = vmul.f32 %v7974, %v7978
    %vm7980 = vweird.f32 %v7957
    %vm7981 = vweird.f32 %v7974
    %vm7982 = vmor %vm7980, %vm7981
    %v7983 = vsel %vm7982, %v7974, %v7979
    %v7984 = vrsqrt.pop %v7958
    %v7985 = vmul.f32 %v7984, %v7958
    %v7986 = vmul.f32 %v7985, %v7984
    %v7987 = vmul.f32 0.5, %v7986
    %v7988 = vsub.f32 1.5, %v7987
    %v7989 = vmul.f32 %v7984, %v7988
    %vm7990 = vweird.f32 %v7958
    %vm7991 = vweird.f32 %v7984
    %vm7992 = vmor %vm7990, %vm7991
    %v7993 = vsel %vm7992, %v7984, %v7989
    %v7994 = vrsqrt.pop %v7959
    %v7995 = vmul.f32 %v7994, %v7959
    %v7996 = vmul.f32 %v7995, %v7994
    %v7997 = vmul.f32 0.5, %v7996
    %v7998 = vsub.f32 1.5, %v7997
    %v7999 = vmul.f32 %v7994, %v7998
    %vm8000 = vweird.f32 %v7959
    %vm8001 = vweird.f32 %v7994
    %vm8002 = vmor %vm8000, %vm8001
    %v8003 = vsel %vm8002, %v7994, %v7999
    %v8004 = vrsqrt.pop %v7960
    %v8005 = vmul.f32 %v8004, %v7960
    %v8006 = vmul.f32 %v8005, %v8004
    %v8007 = vmul.f32 0.5, %v8006
    %v8008 = vsub.f32 1.5, %v8007
    %v8009 = vmul.f32 %v8004, %v8008
    %vm8010 = vweird.f32 %v7960
    %vm8011 = vweird.f32 %v8004
    %vm8012 = vmor %vm8010, %vm8011
    %v8013 = vsel %vm8012, %v8004, %v8009
    %v8014 = vrsqrt.pop %v7961
    %v8015 = vmul.f32 %v8014, %v7961
    %v8016 = vmul.f32 %v8015, %v8014
    %v8017 = vmul.f32 0.5, %v8016
    %v8018 = vsub.f32 1.5, %v8017
    %v8019 = vmul.f32 %v8014, %v8018
    %vm8020 = vweird.f32 %v7961
    %vm8021 = vweird.f32 %v8014
    %vm8022 = vmor %vm8020, %vm8021
    %v8023 = vsel %vm8022, %v8014, %v8019
    %v8024 = vrsqrt.pop %v7962
    %v8025 = vmul.f32 %v8024, %v7962
    %v8026 = vmul.f32 %v8025, %v8024
    %v8027 = vmul.f32 0.5, %v8026
    %v8028 = vsub.f32 1.5, %v8027
    %v8029 = vmul.f32 %v8024, %v8028
    %vm8030 = vweird.f32 %v7962
    %vm8031 = vweird.f32 %v8024
    %vm8032 = vmor %vm8030, %vm8031
    %v8033 = vsel %vm8032, %v8024, %v8029
    %v8034 = vrsqrt.pop %v7963
    %v8035 = vmul.f32 %v8034, %v7963
    %v8036 = vmul.f32 %v8035, %v8034
    %v8037 = vmul.f32 0.5, %v8036
    %v8038 = vsub.f32 1.5, %v8037
    %v8039 = vmul.f32 %v8034, %v8038
    %vm8040 = vweird.f32 %v7963
    %vm8041 = vweird.f32 %v8034
    %vm8042 = vmor %vm8040, %vm8041
    %v8043 = vsel %vm8042, %v8034, %v8039
    %v8044 = vmul.f32 %v7396, %v7973
    %v8045 = vmul.f32 %v7397, %v7973
    %v8046 = vmul.f32 %v7398, %v7973
    %v8047 = vmul.f32 %v7399, %v7973
    %v8048 = vmul.f32 %v7400, %v7973
    %v8049 = vmul.f32 %v7401, %v7973
    %v8050 = vmul.f32 %v7402, %v7973
    %v8051 = vmul.f32 %v7403, %v7973
    %v8052 = vmul.f32 %v7404, %v7973
    %v8053 = vmul.f32 %v7405, %v7973
    %v8054 = vmul.f32 %v7406, %v7973
    %v8055 = vmul.f32 %v7407, %v7973
    %v8056 = vmul.f32 %v7408, %v7973
    %v8057 = vmul.f32 %v7409, %v7973
    %v8058 = vmul.f32 %v7410, %v7973
    %v8059 = vmul.f32 %v7411, %v7973
    %v8060 = vmul.f32 %v7412, %v7983
    %v8061 = vmul.f32 %v7413, %v7983
    %v8062 = vmul.f32 %v7414, %v7983
    %v8063 = vmul.f32 %v7415, %v7983
    %v8064 = vmul.f32 %v7416, %v7983
    %v8065 = vmul.f32 %v7417, %v7983
    %v8066 = vmul.f32 %v7418, %v7983
    %v8067 = vmul.f32 %v7419, %v7983
    %v8068 = vmul.f32 %v7420, %v7983
    %v8069 = vmul.f32 %v7421, %v7983
    %v8070 = vmul.f32 %v7422, %v7983
    %v8071 = vmul.f32 %v7423, %v7983
    %v8072 = vmul.f32 %v7424, %v7983
    %v8073 = vmul.f32 %v7425, %v7983
    %v8074 = vmul.f32 %v7426, %v7983
    %v8075 = vmul.f32 %v7427, %v7983
    %v8076 = vmul.f32 %v7428, %v7993
    %v8077 = vmul.f32 %v7429, %v7993
    %v8078 = vmul.f32 %v7430, %v7993
    %v8079 = vmul.f32 %v7431, %v7993
    %v8080 = vmul.f32 %v7432, %v7993
    %v8081 = vmul.f32 %v7433, %v7993
    %v8082 = vmul.f32 %v7434, %v7993
    %v8083 = vmul.f32 %v7435, %v7993
    %v8084 = vmul.f32 %v7436, %v7993
    %v8085 = vmul.f32 %v7437, %v7993
    %v8086 = vmul.f32 %v7438, %v7993
    %v8087 = vmul.f32 %v7439, %v7993
    %v8088 = vmul.f32 %v7440, %v7993
    %v8089 = vmul.f32 %v7441, %v7993
    %v8090 = vmul.f32 %v7442, %v7993
    %v8091 = vmul.f32 %v7443, %v7993
    %v8092 = vmul.f32 %v7444, %v8003
    %v8093 = vmul.f32 %v7445, %v8003
    %v8094 = vmul.f32 %v7446, %v8003
    %v8095 = vmul.f32 %v7447, %v8003
    %v8096 = vmul.f32 %v7448, %v8003
    %v8097 = vmul.f32 %v7449, %v8003
    %v8098 = vmul.f32 %v7450, %v8003
    %v8099 = vmul.f32 %v7451, %v8003
    %v8100 = vmul.f32 %v7452, %v8003
    %v8101 = vmul.f32 %v7453, %v8003
    %v8102 = vmul.f32 %v7454, %v8003
    %v8103 = vmul.f32 %v7455, %v8003
    %v8104 = vmul.f32 %v7456, %v8003
    %v8105 = vmul.f32 %v7457, %v8003
    %v8106 = vmul.f32 %v7458, %v8003
    %v8107 = vmul.f32 %v7459, %v8003
    %v8108 = vmul.f32 %v7460, %v8013
    %v8109 = vmul.f32 %v7461, %v8013
    %v8110 = vmul.f32 %v7462, %v8013
    %v8111 = vmul.f32 %v7463, %v8013
    %v8112 = vmul.f32 %v7464, %v8013
    %v8113 = vmul.f32 %v7465, %v8013
    %v8114 = vmul.f32 %v7466, %v8013
    %v8115 = vmul.f32 %v7467, %v8013
    %v8116 = vmul.f32 %v7468, %v8013
    %v8117 = vmul.f32 %v7469, %v8013
    %v8118 = vmul.f32 %v7470, %v8013
    %v8119 = vmul.f32 %v7471, %v8013
    %v8120 = vmul.f32 %v7472, %v8013
    %v8121 = vmul.f32 %v7473, %v8013
    %v8122 = vmul.f32 %v7474, %v8013
    %v8123 = vmul.f32 %v7475, %v8013
    %v8124 = vmul.f32 %v7476, %v8023
    %v8125 = vmul.f32 %v7477, %v8023
    %v8126 = vmul.f32 %v7478, %v8023
    %v8127 = vmul.f32 %v7479, %v8023
    %v8128 = vmul.f32 %v7480, %v8023
    %v8129 = vmul.f32 %v7481, %v8023
    %v8130 = vmul.f32 %v7482, %v8023
    %v8131 = vmul.f32 %v7483, %v8023
    %v8132 = vmul.f32 %v7484, %v8023
    %v8133 = vmul.f32 %v7485, %v8023
    %v8134 = vmul.f32 %v7486, %v8023
    %v8135 = vmul.f32 %v7487, %v8023
    %v8136 = vmul.f32 %v7488, %v8023
    %v8137 = vmul.f32 %v7489, %v8023
    %v8138 = vmul.f32 %v7490, %v8023
    %v8139 = vmul.f32 %v7491, %v8023
    %v8140 = vmul.f32 %v7492, %v8033
    %v8141 = vmul.f32 %v7493, %v8033
    %v8142 = vmul.f32 %v7494, %v8033
    %v8143 = vmul.f32 %v7495, %v8033
    %v8144 = vmul.f32 %v7496, %v8033
    %v8145 = vmul.f32 %v7497, %v8033
    %v8146 = vmul.f32 %v7498, %v8033
    %v8147 = vmul.f32 %v7499, %v8033
    %v8148 = vmul.f32 %v7500, %v8033
    %v8149 = vmul.f32 %v7501, %v8033
    %v8150 = vmul.f32 %v7502, %v8033
    %v8151 = vmul.f32 %v7503, %v8033
    %v8152 = vmul.f32 %v7504, %v8033
    %v8153 = vmul.f32 %v7505, %v8033
    %v8154 = vmul.f32 %v7506, %v8033
    %v8155 = vmul.f32 %v7507, %v8033
    %v8156 = vmul.f32 %v7508, %v8043
    %v8157 = vmul.f32 %v7509, %v8043
    %v8158 = vmul.f32 %v7510, %v8043
    %v8159 = vmul.f32 %v7511, %v8043
    %v8160 = vmul.f32 %v7512, %v8043
    %v8161 = vmul.f32 %v7513, %v8043
    %v8162 = vmul.f32 %v7514, %v8043
    %v8163 = vmul.f32 %v7515, %v8043
    %v8164 = vmul.f32 %v7516, %v8043
    %v8165 = vmul.f32 %v7517, %v8043
    %v8166 = vmul.f32 %v7518, %v8043
    %v8167 = vmul.f32 %v7519, %v8043
    %v8168 = vmul.f32 %v7520, %v8043
    %v8169 = vmul.f32 %v7521, %v8043
    %v8170 = vmul.f32 %v7522, %v8043
    %v8171 = vmul.f32 %v7523, %v8043
    %8173 = vset.pattern.permute.xlu0 0
    %8174 = vperm.xlu0 %8173, %v6032
    %v8175 = vpop.permute.xlu0 %8174
    %8178 = vset.pattern.permute.xlu0 0
    %8179 = vperm.xlu0 %8178, %v6033
    %v8180 = vpop.permute.xlu0 %8179
    %8183 = vset.pattern.permute.xlu0 0
    %8184 = vperm.xlu0 %8183, %v6034
    %v8185 = vpop.permute.xlu0 %8184
    %8188 = vset.pattern.permute.xlu0 0
    %8189 = vperm.xlu0 %8188, %v6035
    %v8190 = vpop.permute.xlu0 %8189
    %8193 = vset.pattern.permute.xlu0 0
    %8194 = vperm.xlu0 %8193, %v6036
    %v8195 = vpop.permute.xlu0 %8194
    %8198 = vset.pattern.permute.xlu0 0
    %8199 = vperm.xlu0 %8198, %v6037
    %v8200 = vpop.permute.xlu0 %8199
    %8203 = vset.pattern.permute.xlu0 0
    %8204 = vperm.xlu0 %8203, %v6038
    %v8205 = vpop.permute.xlu0 %8204
    %8208 = vset.pattern.permute.xlu0 0
    %8209 = vperm.xlu0 %8208, %v6039
    %v8210 = vpop.permute.xlu0 %8209
    %8213 = vset.pattern.permute.xlu0 0
    %8214 = vperm.xlu0 %8213, %v6040
    %v8215 = vpop.permute.xlu0 %8214
    %8218 = vset.pattern.permute.xlu0 0
    %8219 = vperm.xlu0 %8218, %v6041
    %v8220 = vpop.permute.xlu0 %8219
    %8223 = vset.pattern.permute.xlu0 0
    %8224 = vperm.xlu0 %8223, %v6042
    %v8225 = vpop.permute.xlu0 %8224
    %8228 = vset.pattern.permute.xlu0 0
    %8229 = vperm.xlu0 %8228, %v6043
    %v8230 = vpop.permute.xlu0 %8229
    %8233 = vset.pattern.permute.xlu0 0
    %8234 = vperm.xlu0 %8233, %v6044
    %v8235 = vpop.permute.xlu0 %8234
    %8238 = vset.pattern.permute.xlu0 0
    %8239 = vperm.xlu0 %8238, %v6045
    %v8240 = vpop.permute.xlu0 %8239
    %8243 = vset.pattern.permute.xlu0 0
    %8244 = vperm.xlu0 %8243, %v6046
    %v8245 = vpop.permute.xlu0 %8244
    %8248 = vset.pattern.permute.xlu0 0
    %8249 = vperm.xlu0 %8248, %v6047
    %v8250 = vpop.permute.xlu0 %8249
    %v8252 = vmul.f32 %v8044, %v8175
    %v8253 = vmul.f32 %v8045, %v8180
    %v8254 = vmul.f32 %v8046, %v8185
    %v8255 = vmul.f32 %v8047, %v8190
    %v8256 = vmul.f32 %v8048, %v8195
    %v8257 = vmul.f32 %v8049, %v8200
    %v8258 = vmul.f32 %v8050, %v8205
    %v8259 = vmul.f32 %v8051, %v8210
    %v8260 = vmul.f32 %v8052, %v8215
    %v8261 = vmul.f32 %v8053, %v8220
    %v8262 = vmul.f32 %v8054, %v8225
    %v8263 = vmul.f32 %v8055, %v8230
    %v8264 = vmul.f32 %v8056, %v8235
    %v8265 = vmul.f32 %v8057, %v8240
    %v8266 = vmul.f32 %v8058, %v8245
    %v8267 = vmul.f32 %v8059, %v8250
    %v8268 = vmul.f32 %v8060, %v8175
    %v8269 = vmul.f32 %v8061, %v8180
    %v8270 = vmul.f32 %v8062, %v8185
    %v8271 = vmul.f32 %v8063, %v8190
    %v8272 = vmul.f32 %v8064, %v8195
    %v8273 = vmul.f32 %v8065, %v8200
    %v8274 = vmul.f32 %v8066, %v8205
    %v8275 = vmul.f32 %v8067, %v8210
    %v8276 = vmul.f32 %v8068, %v8215
    %v8277 = vmul.f32 %v8069, %v8220
    %v8278 = vmul.f32 %v8070, %v8225
    %v8279 = vmul.f32 %v8071, %v8230
    %v8280 = vmul.f32 %v8072, %v8235
    %v8281 = vmul.f32 %v8073, %v8240
    %v8282 = vmul.f32 %v8074, %v8245
    %v8283 = vmul.f32 %v8075, %v8250
    %v8284 = vmul.f32 %v8076, %v8175
    %v8285 = vmul.f32 %v8077, %v8180
    %v8286 = vmul.f32 %v8078, %v8185
    %v8287 = vmul.f32 %v8079, %v8190
    %v8288 = vmul.f32 %v8080, %v8195
    %v8289 = vmul.f32 %v8081, %v8200
    %v8290 = vmul.f32 %v8082, %v8205
    %v8291 = vmul.f32 %v8083, %v8210
    %v8292 = vmul.f32 %v8084, %v8215
    %v8293 = vmul.f32 %v8085, %v8220
    %v8294 = vmul.f32 %v8086, %v8225
    %v8295 = vmul.f32 %v8087, %v8230
    %v8296 = vmul.f32 %v8088, %v8235
    %v8297 = vmul.f32 %v8089, %v8240
    %v8298 = vmul.f32 %v8090, %v8245
    %v8299 = vmul.f32 %v8091, %v8250
    %v8300 = vmul.f32 %v8092, %v8175
    %v8301 = vmul.f32 %v8093, %v8180
    %v8302 = vmul.f32 %v8094, %v8185
    %v8303 = vmul.f32 %v8095, %v8190
    %v8304 = vmul.f32 %v8096, %v8195
    %v8305 = vmul.f32 %v8097, %v8200
    %v8306 = vmul.f32 %v8098, %v8205
    %v8307 = vmul.f32 %v8099, %v8210
    %v8308 = vmul.f32 %v8100, %v8215
    %v8309 = vmul.f32 %v8101, %v8220
    %v8310 = vmul.f32 %v8102, %v8225
    %v8311 = vmul.f32 %v8103, %v8230
    %v8312 = vmul.f32 %v8104, %v8235
    %v8313 = vmul.f32 %v8105, %v8240
    %v8314 = vmul.f32 %v8106, %v8245
    %v8315 = vmul.f32 %v8107, %v8250
    %v8316 = vmul.f32 %v8108, %v8175
    %v8317 = vmul.f32 %v8109, %v8180
    %v8318 = vmul.f32 %v8110, %v8185
    %v8319 = vmul.f32 %v8111, %v8190
    %v8320 = vmul.f32 %v8112, %v8195
    %v8321 = vmul.f32 %v8113, %v8200
    %v8322 = vmul.f32 %v8114, %v8205
    %v8323 = vmul.f32 %v8115, %v8210
    %v8324 = vmul.f32 %v8116, %v8215
    %v8325 = vmul.f32 %v8117, %v8220
    %v8326 = vmul.f32 %v8118, %v8225
    %v8327 = vmul.f32 %v8119, %v8230
    %v8328 = vmul.f32 %v8120, %v8235
    %v8329 = vmul.f32 %v8121, %v8240
    %v8330 = vmul.f32 %v8122, %v8245
    %v8331 = vmul.f32 %v8123, %v8250
    %v8332 = vmul.f32 %v8124, %v8175
    %v8333 = vmul.f32 %v8125, %v8180
    %v8334 = vmul.f32 %v8126, %v8185
    %v8335 = vmul.f32 %v8127, %v8190
    %v8336 = vmul.f32 %v8128, %v8195
    %v8337 = vmul.f32 %v8129, %v8200
    %v8338 = vmul.f32 %v8130, %v8205
    %v8339 = vmul.f32 %v8131, %v8210
    %v8340 = vmul.f32 %v8132, %v8215
    %v8341 = vmul.f32 %v8133, %v8220
    %v8342 = vmul.f32 %v8134, %v8225
    %v8343 = vmul.f32 %v8135, %v8230
    %v8344 = vmul.f32 %v8136, %v8235
    %v8345 = vmul.f32 %v8137, %v8240
    %v8346 = vmul.f32 %v8138, %v8245
    %v8347 = vmul.f32 %v8139, %v8250
    %v8348 = vmul.f32 %v8140, %v8175
    %v8349 = vmul.f32 %v8141, %v8180
    %v8350 = vmul.f32 %v8142, %v8185
    %v8351 = vmul.f32 %v8143, %v8190
    %v8352 = vmul.f32 %v8144, %v8195
    %v8353 = vmul.f32 %v8145, %v8200
    %v8354 = vmul.f32 %v8146, %v8205
    %v8355 = vmul.f32 %v8147, %v8210
    %v8356 = vmul.f32 %v8148, %v8215
    %v8357 = vmul.f32 %v8149, %v8220
    %v8358 = vmul.f32 %v8150, %v8225
    %v8359 = vmul.f32 %v8151, %v8230
    %v8360 = vmul.f32 %v8152, %v8235
    %v8361 = vmul.f32 %v8153, %v8240
    %v8362 = vmul.f32 %v8154, %v8245
    %v8363 = vmul.f32 %v8155, %v8250
    %v8364 = vmul.f32 %v8156, %v8175
    %v8365 = vmul.f32 %v8157, %v8180
    %v8366 = vmul.f32 %v8158, %v8185
    %v8367 = vmul.f32 %v8159, %v8190
    %v8368 = vmul.f32 %v8160, %v8195
    %v8369 = vmul.f32 %v8161, %v8200
    %v8370 = vmul.f32 %v8162, %v8205
    %v8371 = vmul.f32 %v8163, %v8210
    %v8372 = vmul.f32 %v8164, %v8215
    %v8373 = vmul.f32 %v8165, %v8220
    %v8374 = vmul.f32 %v8166, %v8225
    %v8375 = vmul.f32 %v8167, %v8230
    %v8376 = vmul.f32 %v8168, %v8235
    %v8377 = vmul.f32 %v8169, %v8240
    %v8378 = vmul.f32 %v8170, %v8245
    %v8379 = vmul.f32 %v8171, %v8250
    %8380 = vset.pattern.permute.xlu0 1
    %8381 = vperm.xlu0 %8380, %v6032
    %v8382 = vpop.permute.xlu0 %8381
    %8384 = vset.pattern.permute.xlu0 1
    %8385 = vperm.xlu0 %8384, %v6033
    %v8386 = vpop.permute.xlu0 %8385
    %8388 = vset.pattern.permute.xlu0 1
    %8389 = vperm.xlu0 %8388, %v6034
    %v8390 = vpop.permute.xlu0 %8389
    %8392 = vset.pattern.permute.xlu0 1
    %8393 = vperm.xlu0 %8392, %v6035
    %v8394 = vpop.permute.xlu0 %8393
    %8396 = vset.pattern.permute.xlu0 1
    %8397 = vperm.xlu0 %8396, %v6036
    %v8398 = vpop.permute.xlu0 %8397
    %8400 = vset.pattern.permute.xlu0 1
    %8401 = vperm.xlu0 %8400, %v6037
    %v8402 = vpop.permute.xlu0 %8401
    %8404 = vset.pattern.permute.xlu0 1
    %8405 = vperm.xlu0 %8404, %v6038
    %v8406 = vpop.permute.xlu0 %8405
    %8408 = vset.pattern.permute.xlu0 1
    %8409 = vperm.xlu0 %8408, %v6039
    %v8410 = vpop.permute.xlu0 %8409
    %8412 = vset.pattern.permute.xlu0 1
    %8413 = vperm.xlu0 %8412, %v6040
    %v8414 = vpop.permute.xlu0 %8413
    %8416 = vset.pattern.permute.xlu0 1
    %8417 = vperm.xlu0 %8416, %v6041
    %v8418 = vpop.permute.xlu0 %8417
    %8420 = vset.pattern.permute.xlu0 1
    %8421 = vperm.xlu0 %8420, %v6042
    %v8422 = vpop.permute.xlu0 %8421
    %8424 = vset.pattern.permute.xlu0 1
    %8425 = vperm.xlu0 %8424, %v6043
    %v8426 = vpop.permute.xlu0 %8425
    %8428 = vset.pattern.permute.xlu0 1
    %8429 = vperm.xlu0 %8428, %v6044
    %v8430 = vpop.permute.xlu0 %8429
    %8432 = vset.pattern.permute.xlu0 1
    %8433 = vperm.xlu0 %8432, %v6045
    %v8434 = vpop.permute.xlu0 %8433
    %8436 = vset.pattern.permute.xlu0 1
    %8437 = vperm.xlu0 %8436, %v6046
    %v8438 = vpop.permute.xlu0 %8437
    %8440 = vset.pattern.permute.xlu0 1
    %8441 = vperm.xlu0 %8440, %v6047
    %v8442 = vpop.permute.xlu0 %8441
    %v8444 = vadd.f32 %v8252, %v8382
    %v8445 = vadd.f32 %v8253, %v8386
    %v8446 = vadd.f32 %v8254, %v8390
    %v8447 = vadd.f32 %v8255, %v8394
    %v8448 = vadd.f32 %v8256, %v8398
    %v8449 = vadd.f32 %v8257, %v8402
    %v8450 = vadd.f32 %v8258, %v8406
    %v8451 = vadd.f32 %v8259, %v8410
    %v8452 = vadd.f32 %v8260, %v8414
    %v8453 = vadd.f32 %v8261, %v8418
    %v8454 = vadd.f32 %v8262, %v8422
    %v8455 = vadd.f32 %v8263, %v8426
    %v8456 = vadd.f32 %v8264, %v8430
    %v8457 = vadd.f32 %v8265, %v8434
    %v8458 = vadd.f32 %v8266, %v8438
    %v8459 = vadd.f32 %v8267, %v8442
    %v8460 = vadd.f32 %v8268, %v8382
    %v8461 = vadd.f32 %v8269, %v8386
    %v8462 = vadd.f32 %v8270, %v8390
    %v8463 = vadd.f32 %v8271, %v8394
    %v8464 = vadd.f32 %v8272, %v8398
    %v8465 = vadd.f32 %v8273, %v8402
    %v8466 = vadd.f32 %v8274, %v8406
    %v8467 = vadd.f32 %v8275, %v8410
    %v8468 = vadd.f32 %v8276, %v8414
    %v8469 = vadd.f32 %v8277, %v8418
    %v8470 = vadd.f32 %v8278, %v8422
    %v8471 = vadd.f32 %v8279, %v8426
    %v8472 = vadd.f32 %v8280, %v8430
    %v8473 = vadd.f32 %v8281, %v8434
    %v8474 = vadd.f32 %v8282, %v8438
    %v8475 = vadd.f32 %v8283, %v8442
    %v8476 = vadd.f32 %v8284, %v8382
    %v8477 = vadd.f32 %v8285, %v8386
    %v8478 = vadd.f32 %v8286, %v8390
    %v8479 = vadd.f32 %v8287, %v8394
    %v8480 = vadd.f32 %v8288, %v8398
    %v8481 = vadd.f32 %v8289, %v8402
    %v8482 = vadd.f32 %v8290, %v8406
    %v8483 = vadd.f32 %v8291, %v8410
    %v8484 = vadd.f32 %v8292, %v8414
    %v8485 = vadd.f32 %v8293, %v8418
    %v8486 = vadd.f32 %v8294, %v8422
    %v8487 = vadd.f32 %v8295, %v8426
    %v8488 = vadd.f32 %v8296, %v8430
    %v8489 = vadd.f32 %v8297, %v8434
    %v8490 = vadd.f32 %v8298, %v8438
    %v8491 = vadd.f32 %v8299, %v8442
    %v8492 = vadd.f32 %v8300, %v8382
    %v8493 = vadd.f32 %v8301, %v8386
    %v8494 = vadd.f32 %v8302, %v8390
    %v8495 = vadd.f32 %v8303, %v8394
    %v8496 = vadd.f32 %v8304, %v8398
    %v8497 = vadd.f32 %v8305, %v8402
    %v8498 = vadd.f32 %v8306, %v8406
    %v8499 = vadd.f32 %v8307, %v8410
    %v8500 = vadd.f32 %v8308, %v8414
    %v8501 = vadd.f32 %v8309, %v8418
    %v8502 = vadd.f32 %v8310, %v8422
    %v8503 = vadd.f32 %v8311, %v8426
    %v8504 = vadd.f32 %v8312, %v8430
    %v8505 = vadd.f32 %v8313, %v8434
    %v8506 = vadd.f32 %v8314, %v8438
    %v8507 = vadd.f32 %v8315, %v8442
    %v8508 = vadd.f32 %v8316, %v8382
    %v8509 = vadd.f32 %v8317, %v8386
    %v8510 = vadd.f32 %v8318, %v8390
    %v8511 = vadd.f32 %v8319, %v8394
    %v8512 = vadd.f32 %v8320, %v8398
    %v8513 = vadd.f32 %v8321, %v8402
    %v8514 = vadd.f32 %v8322, %v8406
    %v8515 = vadd.f32 %v8323, %v8410
    %v8516 = vadd.f32 %v8324, %v8414
    %v8517 = vadd.f32 %v8325, %v8418
    %v8518 = vadd.f32 %v8326, %v8422
    %v8519 = vadd.f32 %v8327, %v8426
    %v8520 = vadd.f32 %v8328, %v8430
    %v8521 = vadd.f32 %v8329, %v8434
    %v8522 = vadd.f32 %v8330, %v8438
    %v8523 = vadd.f32 %v8331, %v8442
    %v8524 = vadd.f32 %v8332, %v8382
    %v8525 = vadd.f32 %v8333, %v8386
    %v8526 = vadd.f32 %v8334, %v8390
    %v8527 = vadd.f32 %v8335, %v8394
    %v8528 = vadd.f32 %v8336, %v8398
    %v8529 = vadd.f32 %v8337, %v8402
    %v8530 = vadd.f32 %v8338, %v8406
    %v8531 = vadd.f32 %v8339, %v8410
    %v8532 = vadd.f32 %v8340, %v8414
    %v8533 = vadd.f32 %v8341, %v8418
    %v8534 = vadd.f32 %v8342, %v8422
    %v8535 = vadd.f32 %v8343, %v8426
    %v8536 = vadd.f32 %v8344, %v8430
    %v8537 = vadd.f32 %v8345, %v8434
    %v8538 = vadd.f32 %v8346, %v8438
    %v8539 = vadd.f32 %v8347, %v8442
    %v8540 = vadd.f32 %v8348, %v8382
    %v8541 = vadd.f32 %v8349, %v8386
    %v8542 = vadd.f32 %v8350, %v8390
    %v8543 = vadd.f32 %v8351, %v8394
    %v8544 = vadd.f32 %v8352, %v8398
    %v8545 = vadd.f32 %v8353, %v8402
    %v8546 = vadd.f32 %v8354, %v8406
    %v8547 = vadd.f32 %v8355, %v8410
    %v8548 = vadd.f32 %v8356, %v8414
    %v8549 = vadd.f32 %v8357, %v8418
    %v8550 = vadd.f32 %v8358, %v8422
    %v8551 = vadd.f32 %v8359, %v8426
    %v8552 = vadd.f32 %v8360, %v8430
    %v8553 = vadd.f32 %v8361, %v8434
    %v8554 = vadd.f32 %v8362, %v8438
    %v8555 = vadd.f32 %v8363, %v8442
    %v8556 = vadd.f32 %v8364, %v8382
    %v8557 = vadd.f32 %v8365, %v8386
    %v8558 = vadd.f32 %v8366, %v8390
    %v8559 = vadd.f32 %v8367, %v8394
    %v8560 = vadd.f32 %v8368, %v8398
    %v8561 = vadd.f32 %v8369, %v8402
    %v8562 = vadd.f32 %v8370, %v8406
    %v8563 = vadd.f32 %v8371, %v8410
    %v8564 = vadd.f32 %v8372, %v8414
    %v8565 = vadd.f32 %v8373, %v8418
    %v8566 = vadd.f32 %v8374, %v8422
    %v8567 = vadd.f32 %v8375, %v8426
    %v8568 = vadd.f32 %v8376, %v8430
    %v8569 = vadd.f32 %v8377, %v8434
    %v8570 = vadd.f32 %v8378, %v8438
    %v8571 = vadd.f32 %v8379, %v8442
    %v8572 = vadd.f32 %v5899, %v8444
    %v8573 = vadd.f32 %v5900, %v8445
    %v8574 = vadd.f32 %v5901, %v8446
    %v8575 = vadd.f32 %v5902, %v8447
    %v8576 = vadd.f32 %v5903, %v8448
    %v8577 = vadd.f32 %v5904, %v8449
    %v8578 = vadd.f32 %v5905, %v8450
    %v8579 = vadd.f32 %v5906, %v8451
    %v8580 = vadd.f32 %v5907, %v8452
    %v8581 = vadd.f32 %v5908, %v8453
    %v8582 = vadd.f32 %v5909, %v8454
    %v8583 = vadd.f32 %v5910, %v8455
    %v8584 = vadd.f32 %v5911, %v8456
    %v8585 = vadd.f32 %v5912, %v8457
    %v8586 = vadd.f32 %v5913, %v8458
    %v8587 = vadd.f32 %v5914, %v8459
    %v8588 = vadd.f32 %v5915, %v8460
    %v8589 = vadd.f32 %v5916, %v8461
    %v8590 = vadd.f32 %v5917, %v8462
    %v8591 = vadd.f32 %v5918, %v8463
    %v8592 = vadd.f32 %v5919, %v8464
    %v8593 = vadd.f32 %v5920, %v8465
    %v8594 = vadd.f32 %v5921, %v8466
    %v8595 = vadd.f32 %v5922, %v8467
    %v8596 = vadd.f32 %v5923, %v8468
    %v8597 = vadd.f32 %v5924, %v8469
    %v8598 = vadd.f32 %v5925, %v8470
    %v8599 = vadd.f32 %v5926, %v8471
    %v8600 = vadd.f32 %v5927, %v8472
    %v8601 = vadd.f32 %v5928, %v8473
    %v8602 = vadd.f32 %v5929, %v8474
    %v8603 = vadd.f32 %v5930, %v8475
    %v8604 = vadd.f32 %v5931, %v8476
    %v8605 = vadd.f32 %v5932, %v8477
    %v8606 = vadd.f32 %v5933, %v8478
    %v8607 = vadd.f32 %v5934, %v8479
    %v8608 = vadd.f32 %v5935, %v8480
    %v8609 = vadd.f32 %v5936, %v8481
    %v8610 = vadd.f32 %v5937, %v8482
    %v8611 = vadd.f32 %v5938, %v8483
    %v8612 = vadd.f32 %v5939, %v8484
    %v8613 = vadd.f32 %v5940, %v8485
    %v8614 = vadd.f32 %v5941, %v8486
    %v8615 = vadd.f32 %v5942, %v8487
    %v8616 = vadd.f32 %v5943, %v8488
    %v8617 = vadd.f32 %v5944, %v8489
    %v8618 = vadd.f32 %v5945, %v8490
    %v8619 = vadd.f32 %v5946, %v8491
    %v8620 = vadd.f32 %v5947, %v8492
    %v8621 = vadd.f32 %v5948, %v8493
    %v8622 = vadd.f32 %v5949, %v8494
    %v8623 = vadd.f32 %v5950, %v8495
    %v8624 = vadd.f32 %v5951, %v8496
    %v8625 = vadd.f32 %v5952, %v8497
    %v8626 = vadd.f32 %v5953, %v8498
    %v8627 = vadd.f32 %v5954, %v8499
    %v8628 = vadd.f32 %v5955, %v8500
    %v8629 = vadd.f32 %v5956, %v8501
    %v8630 = vadd.f32 %v5957, %v8502
    %v8631 = vadd.f32 %v5958, %v8503
    %v8632 = vadd.f32 %v5959, %v8504
    %v8633 = vadd.f32 %v5960, %v8505
    %v8634 = vadd.f32 %v5961, %v8506
    %v8635 = vadd.f32 %v5962, %v8507
    %v8636 = vadd.f32 %v5963, %v8508
    %v8637 = vadd.f32 %v5964, %v8509
    %v8638 = vadd.f32 %v5965, %v8510
    %v8639 = vadd.f32 %v5966, %v8511
    %v8640 = vadd.f32 %v5967, %v8512
    %v8641 = vadd.f32 %v5968, %v8513
    %v8642 = vadd.f32 %v5969, %v8514
    %v8643 = vadd.f32 %v5970, %v8515
    %v8644 = vadd.f32 %v5971, %v8516
    %v8645 = vadd.f32 %v5972, %v8517
    %v8646 = vadd.f32 %v5973, %v8518
    %v8647 = vadd.f32 %v5974, %v8519
    %v8648 = vadd.f32 %v5975, %v8520
    %v8649 = vadd.f32 %v5976, %v8521
    %v8650 = vadd.f32 %v5977, %v8522
    %v8651 = vadd.f32 %v5978, %v8523
    %v8652 = vadd.f32 %v5979, %v8524
    %v8653 = vadd.f32 %v5980, %v8525
    %v8654 = vadd.f32 %v5981, %v8526
    %v8655 = vadd.f32 %v5982, %v8527
    %v8656 = vadd.f32 %v5983, %v8528
    %v8657 = vadd.f32 %v5984, %v8529
    %v8658 = vadd.f32 %v5985, %v8530
    %v8659 = vadd.f32 %v5986, %v8531
    %v8660 = vadd.f32 %v5987, %v8532
    %v8661 = vadd.f32 %v5988, %v8533
    %v8662 = vadd.f32 %v5989, %v8534
    %v8663 = vadd.f32 %v5990, %v8535
    %v8664 = vadd.f32 %v5991, %v8536
    %v8665 = vadd.f32 %v5992, %v8537
    %v8666 = vadd.f32 %v5993, %v8538
    %v8667 = vadd.f32 %v5994, %v8539
    %v8668 = vadd.f32 %v5995, %v8540
    %v8669 = vadd.f32 %v5996, %v8541
    %v8670 = vadd.f32 %v5997, %v8542
    %v8671 = vadd.f32 %v5998, %v8543
    %v8672 = vadd.f32 %v5999, %v8544
    %v8673 = vadd.f32 %v6000, %v8545
    %v8674 = vadd.f32 %v6001, %v8546
    %v8675 = vadd.f32 %v6002, %v8547
    %v8676 = vadd.f32 %v6003, %v8548
    %v8677 = vadd.f32 %v6004, %v8549
    %v8678 = vadd.f32 %v6005, %v8550
    %v8679 = vadd.f32 %v6006, %v8551
    %v8680 = vadd.f32 %v6007, %v8552
    %v8681 = vadd.f32 %v6008, %v8553
    %v8682 = vadd.f32 %v6009, %v8554
    %v8683 = vadd.f32 %v6010, %v8555
    %v8684 = vadd.f32 %v6011, %v8556
    %v8685 = vadd.f32 %v6012, %v8557
    %v8686 = vadd.f32 %v6013, %v8558
    %v8687 = vadd.f32 %v6014, %v8559
    %v8688 = vadd.f32 %v6015, %v8560
    %v8689 = vadd.f32 %v6016, %v8561
    %v8690 = vadd.f32 %v6017, %v8562
    %v8691 = vadd.f32 %v6018, %v8563
    %v8692 = vadd.f32 %v6019, %v8564
    %v8693 = vadd.f32 %v6020, %v8565
    %v8694 = vadd.f32 %v6021, %v8566
    %v8695 = vadd.f32 %v6022, %v8567
    %v8696 = vadd.f32 %v6023, %v8568
    %v8697 = vadd.f32 %v6024, %v8569
    %v8698 = vadd.f32 %v6025, %v8570
    %v8699 = vadd.f32 %v6026, %v8571
    %8700 = vxpose.xlu0.b32.start [1/16] %v8572, 128
    %8701 = vxpose.xlu0.b32.cont [2/16] %v8573, 128
    %8702 = vxpose.xlu0.b32.cont [3/16] %v8574, 128
    %8703 = vxpose.xlu0.b32.cont [4/16] %v8575, 128
    %8704 = vxpose.xlu0.b32.cont [5/16] %v8576, 128
    %8705 = vxpose.xlu0.b32.cont [6/16] %v8577, 128
    %8706 = vxpose.xlu0.b32.cont [7/16] %v8578, 128
    %8707 = vxpose.xlu0.b32.cont [8/16] %v8579, 128
    %8708 = vxpose.xlu0.b32.cont [9/16] %v8580, 128
    %8709 = vxpose.xlu0.b32.cont [10/16] %v8581, 128
    %8710 = vxpose.xlu0.b32.cont [11/16] %v8582, 128
    %8711 = vxpose.xlu0.b32.cont [12/16] %v8583, 128
    %8712 = vxpose.xlu0.b32.cont [13/16] %v8584, 128
    %8713 = vxpose.xlu0.b32.cont [14/16] %v8585, 128
    %8714 = vxpose.xlu0.b32.cont [15/16] %v8586, 128
    %8715 = vxpose.xlu0.b32.end [16/16] %v8587, 128
    %v8716 = vpop.trf.xlu0
    %v8717 = vpop.trf.xlu0
    %v8718 = vpop.trf.xlu0
    %v8719 = vpop.trf.xlu0
    %v8720 = vpop.trf.xlu0
    %v8721 = vpop.trf.xlu0
    %v8722 = vpop.trf.xlu0
    %v8723 = vpop.trf.xlu0
    %v8724 = vpop.trf.xlu0
    %v8725 = vpop.trf.xlu0
    %v8726 = vpop.trf.xlu0
    %v8727 = vpop.trf.xlu0
    %v8728 = vpop.trf.xlu0
    %v8729 = vpop.trf.xlu0
    %v8730 = vpop.trf.xlu0
    %v8731 = vpop.trf.xlu0
    %8732 = vst [vmem:[#allocation3] sm:$0xff] %v8716
    %8733 = vxpose.xlu0.b32.start [1/16] %v8588, 128
    %8734 = vxpose.xlu0.b32.cont [2/16] %v8589, 128
    %8735 = vxpose.xlu0.b32.cont [3/16] %v8590, 128
    %8736 = vxpose.xlu0.b32.cont [4/16] %v8591, 128
    %8737 = vxpose.xlu0.b32.cont [5/16] %v8592, 128
    %8738 = vxpose.xlu0.b32.cont [6/16] %v8593, 128
    %8739 = vxpose.xlu0.b32.cont [7/16] %v8594, 128
    %8740 = vxpose.xlu0.b32.cont [8/16] %v8595, 128
    %8741 = vxpose.xlu0.b32.cont [9/16] %v8596, 128
    %8742 = vxpose.xlu0.b32.cont [10/16] %v8597, 128
    %8743 = vxpose.xlu0.b32.cont [11/16] %v8598, 128
    %8744 = vxpose.xlu0.b32.cont [12/16] %v8599, 128
    %8745 = vxpose.xlu0.b32.cont [13/16] %v8600, 128
    %8746 = vxpose.xlu0.b32.cont [14/16] %v8601, 128
    %8747 = vxpose.xlu0.b32.cont [15/16] %v8602, 128
    %8748 = vxpose.xlu0.b32.end [16/16] %v8603, 128
    %v8749 = vpop.trf.xlu0
    %v8750 = vpop.trf.xlu0
    %v8751 = vpop.trf.xlu0
    %v8752 = vpop.trf.xlu0
    %v8753 = vpop.trf.xlu0
    %v8754 = vpop.trf.xlu0
    %v8755 = vpop.trf.xlu0
    %v8756 = vpop.trf.xlu0
    %v8757 = vpop.trf.xlu0
    %v8758 = vpop.trf.xlu0
    %v8759 = vpop.trf.xlu0
    %v8760 = vpop.trf.xlu0
    %v8761 = vpop.trf.xlu0
    %v8762 = vpop.trf.xlu0
    %v8763 = vpop.trf.xlu0
    %v8764 = vpop.trf.xlu0
    %s8765 = scalar_lea.vmem [#allocation3], 8
    %8766 = vst [vmem:[%s8765] sm:$0xff] %v8749
    %8767 = vxpose.xlu0.b32.start [1/16] %v8604, 128
    %8768 = vxpose.xlu0.b32.cont [2/16] %v8605, 128
    %8769 = vxpose.xlu0.b32.cont [3/16] %v8606, 128
    %8770 = vxpose.xlu0.b32.cont [4/16] %v8607, 128
    %8771 = vxpose.xlu0.b32.cont [5/16] %v8608, 128
    %8772 = vxpose.xlu0.b32.cont [6/16] %v8609, 128
    %8773 = vxpose.xlu0.b32.cont [7/16] %v8610, 128
    %8774 = vxpose.xlu0.b32.cont [8/16] %v8611, 128
    %8775 = vxpose.xlu0.b32.cont [9/16] %v8612, 128
    %8776 = vxpose.xlu0.b32.cont [10/16] %v8613, 128
    %8777 = vxpose.xlu0.b32.cont [11/16] %v8614, 128
    %8778 = vxpose.xlu0.b32.cont [12/16] %v8615, 128
    %8779 = vxpose.xlu0.b32.cont [13/16] %v8616, 128
    %8780 = vxpose.xlu0.b32.cont [14/16] %v8617, 128
    %8781 = vxpose.xlu0.b32.cont [15/16] %v8618, 128
    %8782 = vxpose.xlu0.b32.end [16/16] %v8619, 128
    %v8783 = vpop.trf.xlu0
    %v8784 = vpop.trf.xlu0
    %v8785 = vpop.trf.xlu0
    %v8786 = vpop.trf.xlu0
    %v8787 = vpop.trf.xlu0
    %v8788 = vpop.trf.xlu0
    %v8789 = vpop.trf.xlu0
    %v8790 = vpop.trf.xlu0
    %v8791 = vpop.trf.xlu0
    %v8792 = vpop.trf.xlu0
    %v8793 = vpop.trf.xlu0
    %v8794 = vpop.trf.xlu0
    %v8795 = vpop.trf.xlu0
    %v8796 = vpop.trf.xlu0
    %v8797 = vpop.trf.xlu0
    %v8798 = vpop.trf.xlu0
    %s8799 = scalar_lea.vmem [#allocation3], 16
    %8800 = vst [vmem:[%s8799] sm:$0xff] %v8783
    %8801 = vxpose.xlu0.b32.start [1/16] %v8620, 128
    %8802 = vxpose.xlu0.b32.cont [2/16] %v8621, 128
    %8803 = vxpose.xlu0.b32.cont [3/16] %v8622, 128
    %8804 = vxpose.xlu0.b32.cont [4/16] %v8623, 128
    %8805 = vxpose.xlu0.b32.cont [5/16] %v8624, 128
    %8806 = vxpose.xlu0.b32.cont [6/16] %v8625, 128
    %8807 = vxpose.xlu0.b32.cont [7/16] %v8626, 128
    %8808 = vxpose.xlu0.b32.cont [8/16] %v8627, 128
    %8809 = vxpose.xlu0.b32.cont [9/16] %v8628, 128
    %8810 = vxpose.xlu0.b32.cont [10/16] %v8629, 128
    %8811 = vxpose.xlu0.b32.cont [11/16] %v8630, 128
    %8812 = vxpose.xlu0.b32.cont [12/16] %v8631, 128
    %8813 = vxpose.xlu0.b32.cont [13/16] %v8632, 128
    %8814 = vxpose.xlu0.b32.cont [14/16] %v8633, 128
    %8815 = vxpose.xlu0.b32.cont [15/16] %v8634, 128
    %8816 = vxpose.xlu0.b32.end [16/16] %v8635, 128
    %v8817 = vpop.trf.xlu0
    %v8818 = vpop.trf.xlu0
    %v8819 = vpop.trf.xlu0
    %v8820 = vpop.trf.xlu0
    %v8821 = vpop.trf.xlu0
    %v8822 = vpop.trf.xlu0
    %v8823 = vpop.trf.xlu0
    %v8824 = vpop.trf.xlu0
    %v8825 = vpop.trf.xlu0
    %v8826 = vpop.trf.xlu0
    %v8827 = vpop.trf.xlu0
    %v8828 = vpop.trf.xlu0
    %v8829 = vpop.trf.xlu0
    %v8830 = vpop.trf.xlu0
    %v8831 = vpop.trf.xlu0
    %v8832 = vpop.trf.xlu0
    %s8833 = scalar_lea.vmem [#allocation3], 24
    %8834 = vst [vmem:[%s8833] sm:$0xff] %v8817
    %8835 = vxpose.xlu0.b32.start [1/16] %v8636, 128
    %8836 = vxpose.xlu0.b32.cont [2/16] %v8637, 128
    %8837 = vxpose.xlu0.b32.cont [3/16] %v8638, 128
    %8838 = vxpose.xlu0.b32.cont [4/16] %v8639, 128
    %8839 = vxpose.xlu0.b32.cont [5/16] %v8640, 128
    %8840 = vxpose.xlu0.b32.cont [6/16] %v8641, 128
    %8841 = vxpose.xlu0.b32.cont [7/16] %v8642, 128
    %8842 = vxpose.xlu0.b32.cont [8/16] %v8643, 128
    %8843 = vxpose.xlu0.b32.cont [9/16] %v8644, 128
    %8844 = vxpose.xlu0.b32.cont [10/16] %v8645, 128
    %8845 = vxpose.xlu0.b32.cont [11/16] %v8646, 128
    %8846 = vxpose.xlu0.b32.cont [12/16] %v8647, 128
    %8847 = vxpose.xlu0.b32.cont [13/16] %v8648, 128
    %8848 = vxpose.xlu0.b32.cont [14/16] %v8649, 128
    %8849 = vxpose.xlu0.b32.cont [15/16] %v8650, 128
    %8850 = vxpose.xlu0.b32.end [16/16] %v8651, 128
    %v8851 = vpop.trf.xlu0
    %v8852 = vpop.trf.xlu0
    %v8853 = vpop.trf.xlu0
    %v8854 = vpop.trf.xlu0
    %v8855 = vpop.trf.xlu0
    %v8856 = vpop.trf.xlu0
    %v8857 = vpop.trf.xlu0
    %v8858 = vpop.trf.xlu0
    %v8859 = vpop.trf.xlu0
    %v8860 = vpop.trf.xlu0
    %v8861 = vpop.trf.xlu0
    %v8862 = vpop.trf.xlu0
    %v8863 = vpop.trf.xlu0
    %v8864 = vpop.trf.xlu0
    %v8865 = vpop.trf.xlu0
    %v8866 = vpop.trf.xlu0
    %s8867 = scalar_lea.vmem [#allocation3], 32
    %8868 = vst [vmem:[%s8867] sm:$0xff] %v8851
    %8869 = vxpose.xlu0.b32.start [1/16] %v8652, 128
    %8870 = vxpose.xlu0.b32.cont [2/16] %v8653, 128
    %8871 = vxpose.xlu0.b32.cont [3/16] %v8654, 128
    %8872 = vxpose.xlu0.b32.cont [4/16] %v8655, 128
    %8873 = vxpose.xlu0.b32.cont [5/16] %v8656, 128
    %8874 = vxpose.xlu0.b32.cont [6/16] %v8657, 128
    %8875 = vxpose.xlu0.b32.cont [7/16] %v8658, 128
    %8876 = vxpose.xlu0.b32.cont [8/16] %v8659, 128
    %8877 = vxpose.xlu0.b32.cont [9/16] %v8660, 128
    %8878 = vxpose.xlu0.b32.cont [10/16] %v8661, 128
    %8879 = vxpose.xlu0.b32.cont [11/16] %v8662, 128
    %8880 = vxpose.xlu0.b32.cont [12/16] %v8663, 128
    %8881 = vxpose.xlu0.b32.cont [13/16] %v8664, 128
    %8882 = vxpose.xlu0.b32.cont [14/16] %v8665, 128
    %8883 = vxpose.xlu0.b32.cont [15/16] %v8666, 128
    %8884 = vxpose.xlu0.b32.end [16/16] %v8667, 128
    %v8885 = vpop.trf.xlu0
    %v8886 = vpop.trf.xlu0
    %v8887 = vpop.trf.xlu0
    %v8888 = vpop.trf.xlu0
    %v8889 = vpop.trf.xlu0
    %v8890 = vpop.trf.xlu0
    %v8891 = vpop.trf.xlu0
    %v8892 = vpop.trf.xlu0
    %v8893 = vpop.trf.xlu0
    %v8894 = vpop.trf.xlu0
    %v8895 = vpop.trf.xlu0
    %v8896 = vpop.trf.xlu0
    %v8897 = vpop.trf.xlu0
    %v8898 = vpop.trf.xlu0
    %v8899 = vpop.trf.xlu0
    %v8900 = vpop.trf.xlu0
    %s8901 = scalar_lea.vmem [#allocation3], 40
    %8902 = vst [vmem:[%s8901] sm:$0xff] %v8885
    %8903 = vxpose.xlu0.b32.start [1/16] %v8668, 128
    %8904 = vxpose.xlu0.b32.cont [2/16] %v8669, 128
    %8905 = vxpose.xlu0.b32.cont [3/16] %v8670, 128
    %8906 = vxpose.xlu0.b32.cont [4/16] %v8671, 128
    %8907 = vxpose.xlu0.b32.cont [5/16] %v8672, 128
    %8908 = vxpose.xlu0.b32.cont [6/16] %v8673, 128
    %8909 = vxpose.xlu0.b32.cont [7/16] %v8674, 128
    %8910 = vxpose.xlu0.b32.cont [8/16] %v8675, 128
    %8911 = vxpose.xlu0.b32.cont [9/16] %v8676, 128
    %8912 = vxpose.xlu0.b32.cont [10/16] %v8677, 128
    %8913 = vxpose.xlu0.b32.cont [11/16] %v8678, 128
    %8914 = vxpose.xlu0.b32.cont [12/16] %v8679, 128
    %8915 = vxpose.xlu0.b32.cont [13/16] %v8680, 128
    %8916 = vxpose.xlu0.b32.cont [14/16] %v8681, 128
    %8917 = vxpose.xlu0.b32.cont [15/16] %v8682, 128
    %8918 = vxpose.xlu0.b32.end [16/16] %v8683, 128
    %v8919 = vpop.trf.xlu0
    %v8920 = vpop.trf.xlu0
    %v8921 = vpop.trf.xlu0
    %v8922 = vpop.trf.xlu0
    %v8923 = vpop.trf.xlu0
    %v8924 = vpop.trf.xlu0
    %v8925 = vpop.trf.xlu0
    %v8926 = vpop.trf.xlu0
    %v8927 = vpop.trf.xlu0
    %v8928 = vpop.trf.xlu0
    %v8929 = vpop.trf.xlu0
    %v8930 = vpop.trf.xlu0
    %v8931 = vpop.trf.xlu0
    %v8932 = vpop.trf.xlu0
    %v8933 = vpop.trf.xlu0
    %v8934 = vpop.trf.xlu0
    %s8935 = scalar_lea.vmem [#allocation3], 48
    %8936 = vst [vmem:[%s8935] sm:$0xff] %v8919
    %8937 = vxpose.xlu0.b32.start [1/16] %v8684, 128
    %8938 = vxpose.xlu0.b32.cont [2/16] %v8685, 128
    %8939 = vxpose.xlu0.b32.cont [3/16] %v8686, 128
    %8940 = vxpose.xlu0.b32.cont [4/16] %v8687, 128
    %8941 = vxpose.xlu0.b32.cont [5/16] %v8688, 128
    %8942 = vxpose.xlu0.b32.cont [6/16] %v8689, 128
    %8943 = vxpose.xlu0.b32.cont [7/16] %v8690, 128
    %8944 = vxpose.xlu0.b32.cont [8/16] %v8691, 128
    %8945 = vxpose.xlu0.b32.cont [9/16] %v8692, 128
    %8946 = vxpose.xlu0.b32.cont [10/16] %v8693, 128
    %8947 = vxpose.xlu0.b32.cont [11/16] %v8694, 128
    %8948 = vxpose.xlu0.b32.cont [12/16] %v8695, 128
    %8949 = vxpose.xlu0.b32.cont [13/16] %v8696, 128
    %8950 = vxpose.xlu0.b32.cont [14/16] %v8697, 128
    %8951 = vxpose.xlu0.b32.cont [15/16] %v8698, 128
    %8952 = vxpose.xlu0.b32.end [16/16] %v8699, 128
    %v8953 = vpop.trf.xlu0
    %v8954 = vpop.trf.xlu0
    %v8955 = vpop.trf.xlu0
    %v8956 = vpop.trf.xlu0
    %v8957 = vpop.trf.xlu0
    %v8958 = vpop.trf.xlu0
    %v8959 = vpop.trf.xlu0
    %v8960 = vpop.trf.xlu0
    %v8961 = vpop.trf.xlu0
    %v8962 = vpop.trf.xlu0
    %v8963 = vpop.trf.xlu0
    %v8964 = vpop.trf.xlu0
    %v8965 = vpop.trf.xlu0
    %v8966 = vpop.trf.xlu0
    %v8967 = vpop.trf.xlu0
    %v8968 = vpop.trf.xlu0
    %s8969 = scalar_lea.vmem [#allocation3], 56
    %8970 = vst [vmem:[%s8969] sm:$0xff] %v8953
    %v8971 = vld [vmem:[#allocation3] sm:$0xff]
    %v8972 = vld [vmem:[#allocation3 + $0x8] sm:$0xff]
    %v8973 = vld [vmem:[#allocation3 + $0x10] sm:$0xff]
    %v8974 = vld [vmem:[#allocation3 + $0x18] sm:$0xff]
    %v8975 = vld [vmem:[#allocation3 + $0x20] sm:$0xff]
    %v8976 = vld [vmem:[#allocation3 + $0x28] sm:$0xff]
    %v8977 = vld [vmem:[#allocation3 + $0x30] sm:$0xff]
    %v8978 = vld [vmem:[#allocation3 + $0x38] sm:$0xff]
    %v8979 = vld [vmem:[%s6] sm:$0xff]
    %v8980 = vld [vmem:[%s6 + $0x8] sm:$0xff]
    %v8981 = vld [vmem:[%s6 + $0x10] sm:$0xff]
    %v8982 = vld [vmem:[%s6 + $0x18] sm:$0xff]
    %v8983 = vld [vmem:[%s6 + $0x20] sm:$0xff]
    %v8984 = vld [vmem:[%s6 + $0x28] sm:$0xff]
    %v8985 = vld [vmem:[%s6 + $0x30] sm:$0xff]
    %v8986 = vld [vmem:[%s6 + $0x38] sm:$0xff]
    %v8987 = vld [vmem:[%s6 + $0x40] sm:$0xff]
    %v8988 = vld [vmem:[%s6 + $0x48] sm:$0xff]
    %v8989 = vld [vmem:[%s6 + $0x50] sm:$0xff]
    %v8990 = vld [vmem:[%s6 + $0x58] sm:$0xff]
    %v8991 = vld [vmem:[%s6 + $0x60] sm:$0xff]
    %v8992 = vld [vmem:[%s6 + $0x68] sm:$0xff]
    %v8993 = vld [vmem:[%s6 + $0x70] sm:$0xff]
    %v8994 = vld [vmem:[%s6 + $0x78] sm:$0xff]
    %v8995 = vld [vmem:[%s7] sm:$0x1]
    %v8997 = vperm.slane %v8995, 0
    %8999 = vmatpush.msra.mxu0 %v8994
    %9000 = vmatpush.msra.mxu0 %v8993
    %9001 = vmatpush.msra.mxu0 %v8992
    %9002 = vmatpush.msra.mxu0 %v8991
    %9003 = vmatpush.msra.mxu0 %v8990
    %9004 = vmatpush.msra.mxu0 %v8989
    %9005 = vmatpush.msra.mxu0 %v8988
    %9006 = vmatpush.msra.mxu0 %v8987
    %9007 = vmatpush.msra.mxu0 %v8986
    %9008 = vmatpush.msra.mxu0 %v8985
    %9009 = vmatpush.msra.mxu0 %v8984
    %9010 = vmatpush.msra.mxu0 %v8983
    %9011 = vmatpush.msra.mxu0 %v8982
    %9012 = vmatpush.msra.mxu0 %v8981
    %9013 = vmatpush.msra.mxu0 %v8980
    %9014 = vmatpush.msra.mxu0 %v8979
    %9015 = vmatmul.f32.gmra.mxu0 %v8971
    %v9016 = vpop.f32.mrf.mxu0
    %v9017 = vadd.f32 %v8997, %v9016
    %9018 = vmatmul.f32.gmra.mxu0 %v8972
    %v9019 = vpop.f32.mrf.mxu0
    %v9020 = vadd.f32 %v8997, %v9019
    %9021 = vmatmul.f32.gmra.mxu0 %v8973
    %v9022 = vpop.f32.mrf.mxu0
    %v9023 = vadd.f32 %v8997, %v9022
    %9024 = vmatmul.f32.gmra.mxu0 %v8974
    %v9025 = vpop.f32.mrf.mxu0
    %v9026 = vadd.f32 %v8997, %v9025
    %9027 = vmatmul.f32.gmra.mxu0 %v8975
    %v9028 = vpop.f32.mrf.mxu0
    %v9029 = vadd.f32 %v8997, %v9028
    %9030 = vmatmul.f32.gmra.mxu0 %v8976
    %v9031 = vpop.f32.mrf.mxu0
    %v9032 = vadd.f32 %v8997, %v9031
    %9033 = vmatmul.f32.gmra.mxu0 %v8977
    %v9034 = vpop.f32.mrf.mxu0
    %v9035 = vadd.f32 %v8997, %v9034
    %9036 = vmatmul.f32.gmra.mxu0 %v8978
    %v9037 = vpop.f32.mrf.mxu0
    %v9038 = vadd.f32 %v8997, %v9037
    %9039 = vdwg.mxu0
    %9040 = vst [vmem:[#allocation4] sm:$0xff] %v9017
    %9041 = vst [vmem:[#allocation4 + $0x8] sm:$0xff] %v9020
    %9042 = vst [vmem:[#allocation4 + $0x10] sm:$0xff] %v9023
    %9043 = vst [vmem:[#allocation4 + $0x18] sm:$0xff] %v9026
    %9044 = vst [vmem:[#allocation4 + $0x20] sm:$0xff] %v9029
    %9045 = vst [vmem:[#allocation4 + $0x28] sm:$0xff] %v9032
    %9046 = vst [vmem:[#allocation4 + $0x30] sm:$0xff] %v9035
    %9047 = vst [vmem:[#allocation4 + $0x38] sm:$0xff] %v9038
    // Predicated region
    $region34: #{tpu_custom_call.1} parent=1 // pred_check
      _
    $region35: #{tpu_custom_call.1} parent=1 // pred_check_branch
      %9049 = sbr.rel (0) target = $region37
    $region36: #{tpu_custom_call.1} parent=1 // pred_region
      %9051 = vsyncadd [#allocation5], 0
      %s9052 = sshll.u32 [#allocation4], 4
      %s9053 = int_to_ptr.vmem [resolvable:$true] %s9052
      %s9054 = sshll.u32 %s8, 4
      %s9055 = int_to_ptr.hbm [resolvable:$true] %s9054
      %9060 = dma.vmem_to_hbm [thread:$0]  %s9053, 1024, %s9055, [#allocation5], 128, 128, 8
    $region37: #{tpu_custom_call.1} parent=1 // pred_fallthru
      _
    // Predicated region
    $region38: #{tpu_custom_call.1} parent=1 // pred_check
      _
    $region39: #{tpu_custom_call.1} parent=1 // pred_check_branch
      %9062 = sbr.rel (0) target = $region41
    $region40: #{tpu_custom_call.1} parent=1 // pred_region
      %9064 = dma.done [#allocation5], 1024
    $region41: #{tpu_custom_call.1} parent=1 // pred_fallthru
      _
    %9065 = vsyncpa [#allocation5], 1

</llo_original>
